<compile_context>
chip_gen: v6e
topology: v6e:2x2x1
jax: 0.10.0
libtpu: 0.0.40
codegen_flags: <defaults>
</compile_context>

<pallas_src>
import functools

import jax
import jax.numpy as jnp
import numpy as np
from jax.experimental import pallas as pl
from jax.experimental.pallas import tpu as pltpu

_EPS = 1e-5      # nn.BatchNorm2d default eps
_CPAD = 128      # channels zero-padded to one full lane group inside the block
# TODO(synk): for later ResNet stages where Cout >= 128, pad Cout to a multiple
# of 256 so v6e/v7x's 256-wide MXU output tile is fully used (early blocks are
# memory-bound, so 128 is fine there).


def _residual_block_kernel(stride, x_ref, w1_ref, w2_ref,
                           g1_ref, b1_ref, g2_ref, b2_ref,
                           out_ref, xp_s, h1p_s):
    """Fused conv1-bn1-relu-conv2-bn2-add-relu on NHWC (C padded to 128)."""
    N, H, W, C = x_ref.shape                  # C == _CPAD
    _, Ho, Wo, _ = out_ref.shape
    rows = N * Ho * Wo
    f32 = jnp.float32
    bf16 = jnp.bfloat16

    def zero_halo_ring(buf):
        """Zero only the 1-pixel border of a halo buffer (4 thin stores)."""
        _, Hp, Wp, _ = buf.shape
        zrow = jnp.zeros((N, 1, Wp, C), bf16)
        buf[:, 0:1, :, :] = zrow
        buf[:, Hp - 1:Hp, :, :] = zrow
        zcol = jnp.zeros((N, Hp, 1, C), bf16)
        buf[:, :, 0:1, :] = zcol
        buf[:, :, Wp - 1:Wp, :] = zcol

    def conv3x3(src_ref, w_ref, s, Hout, Wout):
        """3x3 conv over a halo-padded bf16 NHWC ref as ONE fat MXU dot.

        All 9 taps are lane-concatenated into a (rows, 9*C) im2col slab and
        contracted against the (9*C, C) weight in a single dot (f32 acc).
        """
        cols = [None] * 9
        if s == 1:
            # 3 contiguous ref slabs (one per dx); dy windows are contiguous
            # sub-slices of the loaded slab along the cheap untiled H axis.
            for dx in range(3):
                wslab = src_ref[:, :, dx:dx + Wout, :]          # (N, Hp, Wout, C)
                for dy in range(3):
                    cols[dy * 3 + dx] = (
                        wslab[:, dy:dy + Hout, :, :].reshape(rows, C))
        else:
            # TODO(synk): stage a per-dx strided-W slab through a small VMEM
            # scratch ref to cut the 9 sublane-strided gathers to 3 on the
            # stride>1 path (strided value slices are avoided here for safe
            # lowering).
            for dy in range(3):
                for dx in range(3):
                    win = src_ref[:, pl.ds(dy, Hout, stride=s),
                                  pl.ds(dx, Wout, stride=s), :]
                    cols[dy * 3 + dx] = win.reshape(rows, C)
        col = jnp.concatenate(cols, axis=-1)                    # (rows, 9C) bf16
        return jnp.dot(col, w_ref[...], preferred_element_type=f32)

    def batchnorm(acc, g_ref, b_ref):
        """Two-pass training-mode batch stats; affine folded into scale/shift."""
        inv = 1.0 / rows
        mean = jnp.sum(acc, axis=0, keepdims=True) * inv
        d = acc - mean
        var = jnp.sum(d * d, axis=0, keepdims=True) * inv
        scale = g_ref[...] * jax.lax.rsqrt(var + _EPS)          # (1, C)
        return d * scale + b_ref[...]

    # ---- stage 0: bf16 halo-padded input in VMEM (ring-only zeroing) ----
    zero_halo_ring(xp_s)
    xp_s[:, 1:H + 1, 1:W + 1, :] = x_ref[...].astype(bf16)

    # ---- stage 1: conv1(stride) -> bn1 -> relu ; h1 never leaves VMEM ----
    h1 = jnp.maximum(
        batchnorm(conv3x3(xp_s, w1_ref, stride, Ho, Wo), g1_ref, b1_ref), 0.0)
    zero_halo_ring(h1p_s)
    h1p_s[:, 1:Ho + 1, 1:Wo + 1, :] = h1.astype(bf16).reshape(N, Ho, Wo, C)

    # ---- stage 2: conv2(stride=1) -> bn2 ----
    y = batchnorm(conv3x3(h1p_s, w2_ref, 1, Ho, Wo), g2_ref, b2_ref)

    # ---- shortcut: channel zero-pad already applied (pad-to-128); spatial
    #      stride == MaxPool2d(kernel=1, stride). f32 read from the input. ----
    if stride == 1:
        sc = x_ref[...]
    else:
        sc = x_ref[:, pl.ds(0, Ho, stride=stride), pl.ds(0, Wo, stride=stride), :]

    y = jnp.maximum(y + sc.reshape(rows, C), 0.0)
    out_ref[...] = y.reshape(N, Ho, Wo, C).astype(out_ref.dtype)  # lane-dense store


def _prep_weight(w_oihw, cpad):
    """OIHW -> HWIO -> pad Cin/Cout -> (9*cpad, cpad) bf16, K ordered (dy,dx,ci)."""
    co, ci, kh, kw = w_oihw.shape
    w = jnp.transpose(w_oihw, (2, 3, 1, 0)).astype(jnp.float32)
    w = jnp.pad(w, ((0, 0), (0, 0), (0, cpad - ci), (0, cpad - co)))
    return w.reshape(kh * kw * cpad, cpad).astype(jnp.bfloat16)


def _prep_affine(v, cpad):
    v = v.reshape(1, -1).astype(jnp.float32)
    return jnp.pad(v, ((0, 0), (0, cpad - v.shape[1])))


def residual_block_forward(x_nchw, params, *, stride=1, down_sample=False):
    """Forward pass of the PyTorch ResidualBlock. Input/output are NCHW."""
    del down_sample  # implied by channel zero-padding + spatial stride below
    x = jnp.transpose(x_nchw, (0, 2, 3, 1)).astype(jnp.float32)   # -> NHWC
    N, H, W, Cin = x.shape
    Cout = params["w1"].shape[0]
    C = _CPAD
    Ho = (H + 2 - 3) // stride + 1
    Wo = (W + 2 - 3) // stride + 1

    xp = jnp.pad(x, ((0, 0), (0, 0), (0, 0), (0, C - Cin)))   # lane-dense channels
    w1 = _prep_weight(params["w1"], C)
    w2 = _prep_weight(params["w2"], C)
    g1 = _prep_affine(params["gamma1"], C)
    b1 = _prep_affine(params["beta1"], C)
    g2 = _prep_affine(params["gamma2"], C)
    b2 = _prep_affine(params["beta2"], C)

    inputs = (xp, w1, w2, g1, b1, g2, b2)
    # Single-step kernel: no grid -> nothing to pipeline, so memory-space-only
    # BlockSpecs keep exactly one resident VMEM copy per operand (no default
    # double-buffering; matters on v7x's 64 MiB VMEM).
    # TODO(synk): at real CIFAR/ImageNet sizes, tile rows over a "parallel" grid
    # axis (v7x has 2 TensorCores) with two-phase BN statistics accumulated in
    # VMEM scratch across tiles before normalization.
    vmem_spec = pl.BlockSpec(memory_space=pltpu.MemorySpace.VMEM)
    out = pl.pallas_call(
        functools.partial(_residual_block_kernel, stride),
        out_shape=jax.ShapeDtypeStruct((N, Ho, Wo, C), jnp.float32),
        in_specs=[vmem_spec] * len(inputs),
        out_specs=vmem_spec,
        scratch_shapes=[pltpu.VMEM((N, H + 2, W + 2, C), jnp.bfloat16),
                        pltpu.VMEM((N, Ho + 2, Wo + 2, C), jnp.bfloat16)],
        compiler_params=pltpu.CompilerParams(
            vmem_limit_bytes=32 * 1024 * 1024),
    )(*inputs)

    out = out[..., :Cout]                       # drop channel lane padding
    return jnp.transpose(out, (0, 3, 1, 2))     # back to NCHW


# ---------------- pure-JAX reference (for correctness check) ----------------
def reference_forward(x, params, *, stride=1, down_sample=False):
    dn = ("NCHW", "OIHW", "NCHW")

    def conv(x, w, s):
        return jax.lax.conv_general_dilated(
            x, w, (s, s), ((1, 1), (1, 1)), dimension_numbers=dn,
            precision=jax.lax.Precision.HIGHEST)

    def bn(x, gamma, beta):
        mean = jnp.mean(x, axis=(0, 2, 3), keepdims=True)
        var = jnp.mean((x - mean) ** 2, axis=(0, 2, 3), keepdims=True)
        return ((x - mean) * jax.lax.rsqrt(var + _EPS)
                * gamma.reshape(1, -1, 1, 1) + beta.reshape(1, -1, 1, 1))

    out = jax.nn.relu(bn(conv(x, params["w1"], stride),
                         params["gamma1"], params["beta1"]))
    out = bn(conv(out, params["w2"], 1), params["gamma2"], params["beta2"])
    if down_sample:
        Cout, Cin = params["w1"].shape[0], x.shape[1]
        sc = jnp.pad(x, ((0, 0), (0, Cout - Cin), (0, 0), (0, 0)))
        sc = sc[:, :, ::stride, ::stride]
    else:
        sc = x
    return jax.nn.relu(out + sc)


def init_params(key, in_channels, out_channels):
    ks = jax.random.split(key, 6)
    return {
        "w1": jax.random.normal(ks[0], (out_channels, in_channels, 3, 3),
                                jnp.float32) / np.sqrt(9.0 * in_channels),
        "w2": jax.random.normal(ks[1], (out_channels, out_channels, 3, 3),
                                jnp.float32) / np.sqrt(9.0 * out_channels),
        "gamma1": 1.0 + 0.1 * jax.random.normal(ks[2], (out_channels,), jnp.float32),
        "beta1": 0.1 * jax.random.normal(ks[3], (out_channels,), jnp.float32),
        "gamma2": 1.0 + 0.1 * jax.random.normal(ks[4], (out_channels,), jnp.float32),
        "beta2": 0.1 * jax.random.normal(ks[5], (out_channels,), jnp.float32),
    }


if __name__ == "__main__":
    key = jax.random.PRNGKey(0)
    kx, kp1, kp2 = jax.random.split(key, 3)
    x = jax.random.normal(kx, (2, 4, 16, 16), jnp.float32)  # NCHW like PyTorch

    # bf16 MXU inputs / bf16 halo scratch (f32 accumulation, f32 BN) -> slightly
    # looser tolerance than the pure-f32 reference.
    RTOL = ATOL = 2e-2

    # Case 1: stride=1, no downsample (in_channels == out_channels == 4)
    p1 = init_params(kp1, 4, 4)
    y1 = jax.block_until_ready(
        residual_block_forward(x, p1, stride=1, down_sample=False))
    r1 = reference_forward(x, p1, stride=1, down_sample=False)
    np.testing.assert_allclose(np.asarray(y1), np.asarray(r1),
                               rtol=RTOL, atol=ATOL)
    assert y1.shape == (2, 4, 16, 16)

    # Case 2: stride=2 with IdentityPadding shortcut (4 -> 8 channels)
    p2 = init_params(kp2, 4, 8)
    y2 = jax.block_until_ready(
        residual_block_forward(x, p2, stride=2, down_sample=True))
    r2 = reference_forward(x, p2, stride=2, down_sample=True)
    np.testing.assert_allclose(np.asarray(y2), np.asarray(r2),
                               rtol=RTOL, atol=ATOL)
    assert y2.shape == (2, 8, 8, 8)

    print("KERNEL_OK")
</pallas_src>

<mosaic_0001>
module attributes {stable_mosaic.version = 11 : i64} {
  func.func @_residual_block_kernel(%arg0: memref<2x16x16x128xf32, #tpu.memory_space<vmem>>, %arg1: memref<1152x128xbf16, #tpu.memory_space<vmem>>, %arg2: memref<1152x128xbf16, #tpu.memory_space<vmem>>, %arg3: memref<1x128xf32, #tpu.memory_space<vmem>>, %arg4: memref<1x128xf32, #tpu.memory_space<vmem>>, %arg5: memref<1x128xf32, #tpu.memory_space<vmem>>, %arg6: memref<1x128xf32, #tpu.memory_space<vmem>>, %arg7: memref<2x16x16x128xf32, #tpu.memory_space<vmem>>, %arg8: memref<2x18x18x128xbf16, #tpu.memory_space<vmem>>, %arg9: memref<2x18x18x128xbf16, #tpu.memory_space<vmem>>) attributes {dimension_semantics = [], scalar_prefetch = 0 : i64, scratch_operands = 2 : i64, tpu.core_type = #tpu.core_type<tc>} {
    %cst = arith.constant 0.000000e+00 : bf16
    %0 = vector.broadcast %cst : bf16 to vector<2x1x18x128xbf16>
    %c0 = arith.constant 0 : index
    %c0_0 = arith.constant 0 : index
    %c0_1 = arith.constant 0 : index
    %c0_2 = arith.constant 0 : index
    %1 = vector.load %arg8[%c0, %c0_0, %c0_1, %c0_2] : memref<2x18x18x128xbf16, #tpu.memory_space<vmem>>, vector<2x1x18x128xbf16>
    tpu.vector_store %arg8[%c0, %c0_0, %c0_1, %c0_2], %0 {strides = array<i32>} : memref<2x18x18x128xbf16, #tpu.memory_space<vmem>>, vector<2x1x18x128xbf16>,
    %c0_3 = arith.constant 0 : index
    %c17 = arith.constant 17 : index
    %c0_4 = arith.constant 0 : index
    %c0_5 = arith.constant 0 : index
    %2 = vector.load %arg8[%c0_3, %c17, %c0_4, %c0_5] : memref<2x18x18x128xbf16, #tpu.memory_space<vmem>>, vector<2x1x18x128xbf16>
    tpu.vector_store %arg8[%c0_3, %c17, %c0_4, %c0_5], %0 {strides = array<i32>} : memref<2x18x18x128xbf16, #tpu.memory_space<vmem>>, vector<2x1x18x128xbf16>,
    %cst_6 = arith.constant 0.000000e+00 : bf16
    %3 = vector.broadcast %cst_6 : bf16 to vector<2x18x1x128xbf16>
    %c0_7 = arith.constant 0 : index
    %c0_8 = arith.constant 0 : index
    %c0_9 = arith.constant 0 : index
    %c0_10 = arith.constant 0 : index
    %4 = vector.load %arg8[%c0_7, %c0_8, %c0_9, %c0_10] : memref<2x18x18x128xbf16, #tpu.memory_space<vmem>>, vector<2x18x1x128xbf16>
    tpu.vector_store %arg8[%c0_7, %c0_8, %c0_9, %c0_10], %3 {strides = array<i32>} : memref<2x18x18x128xbf16, #tpu.memory_space<vmem>>, vector<2x18x1x128xbf16>,
    %c0_11 = arith.constant 0 : index
    %c0_12 = arith.constant 0 : index
    %c17_13 = arith.constant 17 : index
    %c0_14 = arith.constant 0 : index
    %5 = vector.load %arg8[%c0_11, %c0_12, %c17_13, %c0_14] : memref<2x18x18x128xbf16, #tpu.memory_space<vmem>>, vector<2x18x1x128xbf16>
    tpu.vector_store %arg8[%c0_11, %c0_12, %c17_13, %c0_14], %3 {strides = array<i32>} : memref<2x18x18x128xbf16, #tpu.memory_space<vmem>>, vector<2x18x1x128xbf16>,
    %c0_15 = arith.constant 0 : index
    %c0_16 = arith.constant 0 : index
    %c0_17 = arith.constant 0 : index
    %c0_18 = arith.constant 0 : index
    %6 = vector.load %arg0[%c0_15, %c0_16, %c0_17, %c0_18] : memref<2x16x16x128xf32, #tpu.memory_space<vmem>>, vector<2x16x16x128xf32>
    %7 = arith.truncf %6 : vector<2x16x16x128xf32> to vector<2x16x16x128xbf16>
    %c0_19 = arith.constant 0 : index
    %c1 = arith.constant 1 : index
    %c1_20 = arith.constant 1 : index
    %c0_21 = arith.constant 0 : index
    %8 = vector.load %arg8[%c0_19, %c1, %c1_20, %c0_21] : memref<2x18x18x128xbf16, #tpu.memory_space<vmem>>, vector<2x16x16x128xbf16>
    tpu.vector_store %arg8[%c0_19, %c1, %c1_20, %c0_21], %7 {strides = array<i32>} : memref<2x18x18x128xbf16, #tpu.memory_space<vmem>>, vector<2x16x16x128xbf16>,
    %c0_22 = arith.constant 0 : index
    %c0_23 = arith.constant 0 : index
    %c0_24 = arith.constant 0 : index
    %c0_25 = arith.constant 0 : index
    %9 = vector.load %arg8[%c0_22, %c0_23, %c0_24, %c0_25] : memref<2x18x18x128xbf16, #tpu.memory_space<vmem>>, vector<2x18x16x128xbf16>
    %10 = vector.extract_strided_slice %9 {offsets = [0, 0, 0, 0], sizes = [2, 16, 16, 128], strides = [1, 1, 1, 1]} : vector<2x18x16x128xbf16> to vector<2x16x16x128xbf16>
    %11 = vector.shape_cast %10 : vector<2x16x16x128xbf16> to vector<512x128xbf16>
    %12 = vector.extract_strided_slice %9 {offsets = [0, 1, 0, 0], sizes = [2, 16, 16, 128], strides = [1, 1, 1, 1]} : vector<2x18x16x128xbf16> to vector<2x16x16x128xbf16>
    %13 = vector.shape_cast %12 : vector<2x16x16x128xbf16> to vector<512x128xbf16>
    %14 = vector.extract_strided_slice %9 {offsets = [0, 2, 0, 0], sizes = [2, 16, 16, 128], strides = [1, 1, 1, 1]} : vector<2x18x16x128xbf16> to vector<2x16x16x128xbf16>
    %15 = vector.shape_cast %14 : vector<2x16x16x128xbf16> to vector<512x128xbf16>
    %c0_26 = arith.constant 0 : index
    %c0_27 = arith.constant 0 : index
    %c1_28 = arith.constant 1 : index
    %c0_29 = arith.constant 0 : index
    %16 = vector.load %arg8[%c0_26, %c0_27, %c1_28, %c0_29] : memref<2x18x18x128xbf16, #tpu.memory_space<vmem>>, vector<2x18x16x128xbf16>
    %17 = vector.extract_strided_slice %16 {offsets = [0, 0, 0, 0], sizes = [2, 16, 16, 128], strides = [1, 1, 1, 1]} : vector<2x18x16x128xbf16> to vector<2x16x16x128xbf16>
    %18 = vector.shape_cast %17 : vector<2x16x16x128xbf16> to vector<512x128xbf16>
    %19 = vector.extract_strided_slice %16 {offsets = [0, 1, 0, 0], sizes = [2, 16, 16, 128], strides = [1, 1, 1, 1]} : vector<2x18x16x128xbf16> to vector<2x16x16x128xbf16>
    %20 = vector.shape_cast %19 : vector<2x16x16x128xbf16> to vector<512x128xbf16>
    %21 = vector.extract_strided_slice %16 {offsets = [0, 2, 0, 0], sizes = [2, 16, 16, 128], strides = [1, 1, 1, 1]} : vector<2x18x16x128xbf16> to vector<2x16x16x128xbf16>
    %22 = vector.shape_cast %21 : vector<2x16x16x128xbf16> to vector<512x128xbf16>
    %c0_30 = arith.constant 0 : index
    %c0_31 = arith.constant 0 : index
    %c2 = arith.constant 2 : index
    %c0_32 = arith.constant 0 : index
    %23 = vector.load %arg8[%c0_30, %c0_31, %c2, %c0_32] : memref<2x18x18x128xbf16, #tpu.memory_space<vmem>>, vector<2x18x16x128xbf16>
    %24 = vector.extract_strided_slice %23 {offsets = [0, 0, 0, 0], sizes = [2, 16, 16, 128], strides = [1, 1, 1, 1]} : vector<2x18x16x128xbf16> to vector<2x16x16x128xbf16>
    %25 = vector.shape_cast %24 : vector<2x16x16x128xbf16> to vector<512x128xbf16>
    %26 = vector.extract_strided_slice %23 {offsets = [0, 1, 0, 0], sizes = [2, 16, 16, 128], strides = [1, 1, 1, 1]} : vector<2x18x16x128xbf16> to vector<2x16x16x128xbf16>
    %27 = vector.shape_cast %26 : vector<2x16x16x128xbf16> to vector<512x128xbf16>
    %28 = vector.extract_strided_slice %23 {offsets = [0, 2, 0, 0], sizes = [2, 16, 16, 128], strides = [1, 1, 1, 1]} : vector<2x18x16x128xbf16> to vector<2x16x16x128xbf16>
    %29 = vector.shape_cast %28 : vector<2x16x16x128xbf16> to vector<512x128xbf16>
    %30 = tpu.concatenate %11, %18, %25, %13, %20, %27, %15, %22, %29 in 1 : vector<512x128xbf16>, vector<512x128xbf16>, vector<512x128xbf16>, vector<512x128xbf16>, vector<512x128xbf16>, vector<512x128xbf16>, vector<512x128xbf16>, vector<512x128xbf16>, vector<512x128xbf16> -> vector<512x1152xbf16>
    %c0_33 = arith.constant 0 : index
    %c0_34 = arith.constant 0 : index
    %31 = vector.load %arg1[%c0_33, %c0_34] : memref<1152x128xbf16, #tpu.memory_space<vmem>>, vector<1152x128xbf16>
    %cst_35 = arith.constant dense<0.000000e+00> : vector<512x128xf32>
    %32 = tpu.matmul %30, %31, %cst_35 {dimension_numbers = #tpu.dot_dimension_numbers<[1], [0], [0], [1], [0, 0, 1, 1], [], []>} : vector<512x1152xbf16>, vector<1152x128xbf16>, vector<512x128xf32> -> vector<512x128xf32>
    %cst_36 = arith.constant dense<0.000000e+00> : vector<128xf32>
    %33 = vector.multi_reduction <add>, %32, %cst_36 [0] : vector<512x128xf32> to vector<128xf32>
    %34 = vector.shape_cast %33 : vector<128xf32> to vector<1x128xf32>
    %cst_37 = arith.constant 0.001953125 : f32
    %35 = vector.broadcast %cst_37 : f32 to vector<1x128xf32>
    %36 = arith.mulf %34, %35 : vector<1x128xf32>
    %37 = vector.broadcast %36 : vector<1x128xf32> to vector<512x128xf32>
    %38 = arith.subf %32, %37 : vector<512x128xf32>
    %39 = arith.mulf %38, %38 : vector<512x128xf32>
    %cst_38 = arith.constant dense<0.000000e+00> : vector<128xf32>
    %40 = vector.multi_reduction <add>, %39, %cst_38 [0] : vector<512x128xf32> to vector<128xf32>
    %41 = vector.shape_cast %40 : vector<128xf32> to vector<1x128xf32>
    %cst_39 = arith.constant 0.001953125 : f32
    %42 = vector.broadcast %cst_39 : f32 to vector<1x128xf32>
    %43 = arith.mulf %41, %42 : vector<1x128xf32>
    %c0_40 = arith.constant 0 : index
    %c0_41 = arith.constant 0 : index
    %44 = vector.load %arg3[%c0_40, %c0_41] : memref<1x128xf32, #tpu.memory_space<vmem>>, vector<1x128xf32>
    %cst_42 = arith.constant 9.99999974E-6 : f32
    %45 = vector.broadcast %cst_42 : f32 to vector<1x128xf32>
    %46 = arith.addf %43, %45 : vector<1x128xf32>
    %47 = math.rsqrt %46 : vector<1x128xf32>
    %48 = arith.mulf %44, %47 : vector<1x128xf32>
    %49 = vector.broadcast %48 : vector<1x128xf32> to vector<512x128xf32>
    %50 = arith.mulf %38, %49 : vector<512x128xf32>
    %c0_43 = arith.constant 0 : index
    %c0_44 = arith.constant 0 : index
    %51 = vector.load %arg4[%c0_43, %c0_44] : memref<1x128xf32, #tpu.memory_space<vmem>>, vector<1x128xf32>
    %52 = vector.broadcast %51 : vector<1x128xf32> to vector<512x128xf32>
    %53 = arith.addf %50, %52 : vector<512x128xf32>
    %cst_45 = arith.constant 0.000000e+00 : f32
    %54 = vector.broadcast %cst_45 : f32 to vector<512x128xf32>
    %55 = arith.maximumf %53, %54 : vector<512x128xf32>
    %cst_46 = arith.constant 0.000000e+00 : bf16
    %56 = vector.broadcast %cst_46 : bf16 to vector<2x1x18x128xbf16>
    %c0_47 = arith.constant 0 : index
    %c0_48 = arith.constant 0 : index
    %c0_49 = arith.constant 0 : index
    %c0_50 = arith.constant 0 : index
    %57 = vector.load %arg9[%c0_47, %c0_48, %c0_49, %c0_50] : memref<2x18x18x128xbf16, #tpu.memory_space<vmem>>, vector<2x1x18x128xbf16>
    tpu.vector_store %arg9[%c0_47, %c0_48, %c0_49, %c0_50], %56 {strides = array<i32>} : memref<2x18x18x128xbf16, #tpu.memory_space<vmem>>, vector<2x1x18x128xbf16>,
    %c0_51 = arith.constant 0 : index
    %c17_52 = arith.constant 17 : index
    %c0_53 = arith.constant 0 : index
    %c0_54 = arith.constant 0 : index
    %58 = vector.load %arg9[%c0_51, %c17_52, %c0_53, %c0_54] : memref<2x18x18x128xbf16, #tpu.memory_space<vmem>>, vector<2x1x18x128xbf16>
    tpu.vector_store %arg9[%c0_51, %c17_52, %c0_53, %c0_54], %56 {strides = array<i32>} : memref<2x18x18x128xbf16, #tpu.memory_space<vmem>>, vector<2x1x18x128xbf16>,
    %cst_55 = arith.constant 0.000000e+00 : bf16
    %59 = vector.broadcast %cst_55 : bf16 to vector<2x18x1x128xbf16>
    %c0_56 = arith.constant 0 : index
    %c0_57 = arith.constant 0 : index
    %c0_58 = arith.constant 0 : index
    %c0_59 = arith.constant 0 : index
    %60 = vector.load %arg9[%c0_56, %c0_57, %c0_58, %c0_59] : memref<2x18x18x128xbf16, #tpu.memory_space<vmem>>, vector<2x18x1x128xbf16>
    tpu.vector_store %arg9[%c0_56, %c0_57, %c0_58, %c0_59], %59 {strides = array<i32>} : memref<2x18x18x128xbf16, #tpu.memory_space<vmem>>, vector<2x18x1x128xbf16>,
    %c0_60 = arith.constant 0 : index
    %c0_61 = arith.constant 0 : index
    %c17_62 = arith.constant 17 : index
    %c0_63 = arith.constant 0 : index
    %61 = vector.load %arg9[%c0_60, %c0_61, %c17_62, %c0_63] : memref<2x18x18x128xbf16, #tpu.memory_space<vmem>>, vector<2x18x1x128xbf16>
    tpu.vector_store %arg9[%c0_60, %c0_61, %c17_62, %c0_63], %59 {strides = array<i32>} : memref<2x18x18x128xbf16, #tpu.memory_space<vmem>>, vector<2x18x1x128xbf16>,
    %62 = arith.truncf %55 : vector<512x128xf32> to vector<512x128xbf16>
    %63 = vector.shape_cast %62 : vector<512x128xbf16> to vector<2x16x16x128xbf16>
    %c0_64 = arith.constant 0 : index
    %c1_65 = arith.constant 1 : index
    %c1_66 = arith.constant 1 : index
    %c0_67 = arith.constant 0 : index
    %64 = vector.load %arg9[%c0_64, %c1_65, %c1_66, %c0_67] : memref<2x18x18x128xbf16, #tpu.memory_space<vmem>>, vector<2x16x16x128xbf16>
    tpu.vector_store %arg9[%c0_64, %c1_65, %c1_66, %c0_67], %63 {strides = array<i32>} : memref<2x18x18x128xbf16, #tpu.memory_space<vmem>>, vector<2x16x16x128xbf16>,
    %c0_68 = arith.constant 0 : index
    %c0_69 = arith.constant 0 : index
    %c0_70 = arith.constant 0 : index
    %c0_71 = arith.constant 0 : index
    %65 = vector.load %arg9[%c0_68, %c0_69, %c0_70, %c0_71] : memref<2x18x18x128xbf16, #tpu.memory_space<vmem>>, vector<2x18x16x128xbf16>
    %66 = vector.extract_strided_slice %65 {offsets = [0, 0, 0, 0], sizes = [2, 16, 16, 128], strides = [1, 1, 1, 1]} : vector<2x18x16x128xbf16> to vector<2x16x16x128xbf16>
    %67 = vector.shape_cast %66 : vector<2x16x16x128xbf16> to vector<512x128xbf16>
    %68 = vector.extract_strided_slice %65 {offsets = [0, 1, 0, 0], sizes = [2, 16, 16, 128], strides = [1, 1, 1, 1]} : vector<2x18x16x128xbf16> to vector<2x16x16x128xbf16>
    %69 = vector.shape_cast %68 : vector<2x16x16x128xbf16> to vector<512x128xbf16>
    %70 = vector.extract_strided_slice %65 {offsets = [0, 2, 0, 0], sizes = [2, 16, 16, 128], strides = [1, 1, 1, 1]} : vector<2x18x16x128xbf16> to vector<2x16x16x128xbf16>
    %71 = vector.shape_cast %70 : vector<2x16x16x128xbf16> to vector<512x128xbf16>
    %c0_72 = arith.constant 0 : index
    %c0_73 = arith.constant 0 : index
    %c1_74 = arith.constant 1 : index
    %c0_75 = arith.constant 0 : index
    %72 = vector.load %arg9[%c0_72, %c0_73, %c1_74, %c0_75] : memref<2x18x18x128xbf16, #tpu.memory_space<vmem>>, vector<2x18x16x128xbf16>
    %73 = vector.extract_strided_slice %72 {offsets = [0, 0, 0, 0], sizes = [2, 16, 16, 128], strides = [1, 1, 1, 1]} : vector<2x18x16x128xbf16> to vector<2x16x16x128xbf16>
    %74 = vector.shape_cast %73 : vector<2x16x16x128xbf16> to vector<512x128xbf16>
    %75 = vector.extract_strided_slice %72 {offsets = [0, 1, 0, 0], sizes = [2, 16, 16, 128], strides = [1, 1, 1, 1]} : vector<2x18x16x128xbf16> to vector<2x16x16x128xbf16>
    %76 = vector.shape_cast %75 : vector<2x16x16x128xbf16> to vector<512x128xbf16>
    %77 = vector.extract_strided_slice %72 {offsets = [0, 2, 0, 0], sizes = [2, 16, 16, 128], strides = [1, 1, 1, 1]} : vector<2x18x16x128xbf16> to vector<2x16x16x128xbf16>
    %78 = vector.shape_cast %77 : vector<2x16x16x128xbf16> to vector<512x128xbf16>
    %c0_76 = arith.constant 0 : index
    %c0_77 = arith.constant 0 : index
    %c2_78 = arith.constant 2 : index
    %c0_79 = arith.constant 0 : index
    %79 = vector.load %arg9[%c0_76, %c0_77, %c2_78, %c0_79] : memref<2x18x18x128xbf16, #tpu.memory_space<vmem>>, vector<2x18x16x128xbf16>
    %80 = vector.extract_strided_slice %79 {offsets = [0, 0, 0, 0], sizes = [2, 16, 16, 128], strides = [1, 1, 1, 1]} : vector<2x18x16x128xbf16> to vector<2x16x16x128xbf16>
    %81 = vector.shape_cast %80 : vector<2x16x16x128xbf16> to vector<512x128xbf16>
    %82 = vector.extract_strided_slice %79 {offsets = [0, 1, 0, 0], sizes = [2, 16, 16, 128], strides = [1, 1, 1, 1]} : vector<2x18x16x128xbf16> to vector<2x16x16x128xbf16>
    %83 = vector.shape_cast %82 : vector<2x16x16x128xbf16> to vector<512x128xbf16>
    %84 = vector.extract_strided_slice %79 {offsets = [0, 2, 0, 0], sizes = [2, 16, 16, 128], strides = [1, 1, 1, 1]} : vector<2x18x16x128xbf16> to vector<2x16x16x128xbf16>
    %85 = vector.shape_cast %84 : vector<2x16x16x128xbf16> to vector<512x128xbf16>
    %86 = tpu.concatenate %67, %74, %81, %69, %76, %83, %71, %78, %85 in 1 : vector<512x128xbf16>, vector<512x128xbf16>, vector<512x128xbf16>, vector<512x128xbf16>, vector<512x128xbf16>, vector<512x128xbf16>, vector<512x128xbf16>, vector<512x128xbf16>, vector<512x128xbf16> -> vector<512x1152xbf16>
    %c0_80 = arith.constant 0 : index
    %c0_81 = arith.constant 0 : index
    %87 = vector.load %arg2[%c0_80, %c0_81] : memref<1152x128xbf16, #tpu.memory_space<vmem>>, vector<1152x128xbf16>
    %cst_82 = arith.constant dense<0.000000e+00> : vector<512x128xf32>
    %88 = tpu.matmul %86, %87, %cst_82 {dimension_numbers = #tpu.dot_dimension_numbers<[1], [0], [0], [1], [0, 0, 1, 1], [], []>} : vector<512x1152xbf16>, vector<1152x128xbf16>, vector<512x128xf32> -> vector<512x128xf32>
    %cst_83 = arith.constant dense<0.000000e+00> : vector<128xf32>
    %89 = vector.multi_reduction <add>, %88, %cst_83 [0] : vector<512x128xf32> to vector<128xf32>
    %90 = vector.shape_cast %89 : vector<128xf32> to vector<1x128xf32>
    %cst_84 = arith.constant 0.001953125 : f32
    %91 = vector.broadcast %cst_84 : f32 to vector<1x128xf32>
    %92 = arith.mulf %90, %91 : vector<1x128xf32>
    %93 = vector.broadcast %92 : vector<1x128xf32> to vector<512x128xf32>
    %94 = arith.subf %88, %93 : vector<512x128xf32>
    %95 = arith.mulf %94, %94 : vector<512x128xf32>
    %cst_85 = arith.constant dense<0.000000e+00> : vector<128xf32>
    %96 = vector.multi_reduction <add>, %95, %cst_85 [0] : vector<512x128xf32> to vector<128xf32>
    %97 = vector.shape_cast %96 : vector<128xf32> to vector<1x128xf32>
    %cst_86 = arith.constant 0.001953125 : f32
    %98 = vector.broadcast %cst_86 : f32 to vector<1x128xf32>
    %99 = arith.mulf %97, %98 : vector<1x128xf32>
    %c0_87 = arith.constant 0 : index
    %c0_88 = arith.constant 0 : index
    %100 = vector.load %arg5[%c0_87, %c0_88] : memref<1x128xf32, #tpu.memory_space<vmem>>, vector<1x128xf32>
    %cst_89 = arith.constant 9.99999974E-6 : f32
    %101 = vector.broadcast %cst_89 : f32 to vector<1x128xf32>
    %102 = arith.addf %99, %101 : vector<1x128xf32>
    %103 = math.rsqrt %102 : vector<1x128xf32>
    %104 = arith.mulf %100, %103 : vector<1x128xf32>
    %105 = vector.broadcast %104 : vector<1x128xf32> to vector<512x128xf32>
    %106 = arith.mulf %94, %105 : vector<512x128xf32>
    %c0_90 = arith.constant 0 : index
    %c0_91 = arith.constant 0 : index
    %107 = vector.load %arg6[%c0_90, %c0_91] : memref<1x128xf32, #tpu.memory_space<vmem>>, vector<1x128xf32>
    %108 = vector.broadcast %107 : vector<1x128xf32> to vector<512x128xf32>
    %109 = arith.addf %106, %108 : vector<512x128xf32>
    %c0_92 = arith.constant 0 : index
    %c0_93 = arith.constant 0 : index
    %c0_94 = arith.constant 0 : index
    %c0_95 = arith.constant 0 : index
    %110 = vector.load %arg0[%c0_92, %c0_93, %c0_94, %c0_95] : memref<2x16x16x128xf32, #tpu.memory_space<vmem>>, vector<2x16x16x128xf32>
    %111 = vector.shape_cast %110 : vector<2x16x16x128xf32> to vector<512x128xf32>
    %112 = arith.addf %109, %111 : vector<512x128xf32>
    %cst_96 = arith.constant 0.000000e+00 : f32
    %113 = vector.broadcast %cst_96 : f32 to vector<512x128xf32>
    %114 = arith.maximumf %112, %113 : vector<512x128xf32>
    %115 = vector.shape_cast %114 : vector<512x128xf32> to vector<2x16x16x128xf32>
    %c0_97 = arith.constant 0 : index
    %c0_98 = arith.constant 0 : index
    %c0_99 = arith.constant 0 : index
    %c0_100 = arith.constant 0 : index
    %116 = vector.load %arg7[%c0_97, %c0_98, %c0_99, %c0_100] : memref<2x16x16x128xf32, #tpu.memory_space<vmem>>, vector<2x16x16x128xf32>
    tpu.vector_store %arg7[%c0_97, %c0_98, %c0_99, %c0_100], %115 {strides = array<i32>} : memref<2x16x16x128xf32, #tpu.memory_space<vmem>>, vector<2x16x16x128xf32>,
    return
  }
}

</mosaic_0001>

<llo_original>
// kernel: tpu_custom_call.1
$region0: #{tpu_custom_call.1}
  #allocation0 [shape = 'u32[]', space=smem, size = 0x4, offset = 0x4, fixed_abs, tag = 'smem constant byte address 0x4 - core index']
  #allocation1 [shape = 'u32[144,128]{1,0:T(1,128)}', space=vmem, size = 0x12000, scoped, tag = 'internal scratch']
  #allocation2 [shape = 'bf16[2,18,18,128]{3,2,1,0:T(8,128)(2,1)}', space=vmem, size = 0x36000, scoped, tag = 'scratch operand']
  #allocation3 [shape = 'bf16[2,18,18,128]{3,2,1,0:T(8,128)(2,1)}', space=vmem, size = 0x36000, scoped, tag = 'scratch operand']
  %s0 = inlined_call_operand.hbm [shape: f32[2,16,16,128], index: 0, kind: input, shape index: {}]
  %s1 = inlined_call_operand.hbm [shape: bf16[1152,128], index: 1, kind: input, shape index: {}]
  %s2 = inlined_call_operand.hbm [shape: bf16[1152,128], index: 2, kind: input, shape index: {}]
  %s3 = inlined_call_operand.vmem [shape: f32[1,128], index: 3, kind: input, shape index: {}]
  %s4 = inlined_call_operand.vmem [shape: f32[1,128], index: 4, kind: input, shape index: {}]
  %s5 = inlined_call_operand.vmem [shape: f32[1,128], index: 5, kind: input, shape index: {}]
  %s6 = inlined_call_operand.vmem [shape: f32[1,128], index: 6, kind: input, shape index: {}]
  %s7 = inlined_call_operand.hbm [shape: f32[2,16,16,128], index: 7, kind: output, shape index: {}]
  %s8 = sld [smem:[#allocation0]]
  $region50: #{tpu_custom_call.1} parent=0
    _
  %s10 = ssub.s32 1, %s8
  %s11 = scalar_select 0, %s10, %s8
  $region1: #{tpu_custom_call.1} parent=0
    #allocation4 [shape = 'u8[262144]{0}', space=vmem, size = 0x40000, scoped, tag = 'input window, operand 0, single buffered']
    #allocation5 [shape = 's32[1]{0}', space=sflag, size = 0x4, scoped, tag = 'scoped memory for tpu_custom_call.1']
    #allocation6 [shape = 's32[1]{0}', space=sflag, size = 0x4, scoped, tag = 'scoped memory for tpu_custom_call.1']
    #allocation7 [shape = 'u8[294912]{0}', space=vmem, size = 0x48000, scoped, tag = 'input window, operand 1, single buffered']
    #allocation8 [shape = 's32[1]{0}', space=sflag, size = 0x4, scoped, tag = 'scoped memory for tpu_custom_call.1']
    #allocation9 [shape = 'u8[294912]{0}', space=vmem, size = 0x48000, scoped, tag = 'input window, operand 2, single buffered']
    #allocation10 [shape = 'u8[262144]{0}', space=vmem, size = 0x40000, scoped, tag = 'output window, operand 0, single buffered']
    %12 = vsyncpa [#allocation5], 0
    %13 = vsyncpa [#allocation8], 0
    %14 = vsyncpa [#allocation6], 0
    // Predicated region
    $region2: #{tpu_custom_call.1} parent=1 // pred_check
      _
    $region3: #{tpu_custom_call.1} parent=1 // pred_check_branch
      %16 = sbr.rel (0) target = $region5
    $region4: #{tpu_custom_call.1} parent=1 // pred_region
      %s18 = ssub.s32 8192, 8192
      %19 = vsyncadd [#allocation5], %s18
      %s20 = sshll.u32 [#allocation4], 4
      %s21 = int_to_ptr.vmem [resolvable:$true] %s20
      %26 = dma.hbm_to_vmem [thread:$0]  %s0, 8192, %s21, [#allocation5], 128, 128, 8
    $region5: #{tpu_custom_call.1} parent=1 // pred_fallthru
      _
    // Predicated region
    $region6: #{tpu_custom_call.1} parent=1 // pred_check
      _
    $region7: #{tpu_custom_call.1} parent=1 // pred_check_branch
      %28 = sbr.rel (0) target = $region9
    $region8: #{tpu_custom_call.1} parent=1 // pred_region
      %s30 = ssub.s32 9216, 9216
      %31 = vsyncadd [#allocation8], %s30
      %s32 = sshll.u32 [#allocation7], 4
      %s33 = int_to_ptr.vmem [resolvable:$true] %s32
      %38 = dma.hbm_to_vmem [thread:$0]  %s1, 9216, %s33, [#allocation8], 64, 64, 4
    $region9: #{tpu_custom_call.1} parent=1 // pred_fallthru
      _
    // Predicated region
    $region10: #{tpu_custom_call.1} parent=1 // pred_check
      _
    $region11: #{tpu_custom_call.1} parent=1 // pred_check_branch
      %40 = sbr.rel (0) target = $region13
    $region12: #{tpu_custom_call.1} parent=1 // pred_region
      %s42 = ssub.s32 9216, 9216
      %43 = vsyncadd [#allocation8], %s42
      %s44 = sshll.u32 [#allocation9], 4
      %s45 = int_to_ptr.vmem [resolvable:$true] %s44
      %50 = dma.hbm_to_vmem [thread:$0]  %s2, 9216, %s45, [#allocation8], 64, 64, 4
    $region13: #{tpu_custom_call.1} parent=1 // pred_fallthru
      _
    // Predicated region
    $region14: #{tpu_custom_call.1} parent=1 // pred_check
      _
    $region15: #{tpu_custom_call.1} parent=1 // pred_check_branch
      %52 = sbr.rel (0) target = $region17
    $region16: #{tpu_custom_call.1} parent=1 // pred_region
      _
    $region17: #{tpu_custom_call.1} parent=1 // pred_fallthru
      _
    // Predicated region
    $region18: #{tpu_custom_call.1} parent=1 // pred_check
      _
    $region19: #{tpu_custom_call.1} parent=1 // pred_check_branch
      %54 = sbr.rel (0) target = $region21
    $region20: #{tpu_custom_call.1} parent=1 // pred_region
      _
    $region21: #{tpu_custom_call.1} parent=1 // pred_fallthru
      _
    // Predicated region
    $region22: #{tpu_custom_call.1} parent=1 // pred_check
      _
    $region23: #{tpu_custom_call.1} parent=1 // pred_check_branch
      %56 = sbr.rel (0) target = $region25
    $region24: #{tpu_custom_call.1} parent=1 // pred_region
      _
    $region25: #{tpu_custom_call.1} parent=1 // pred_fallthru
      _
    // Predicated region
    $region26: #{tpu_custom_call.1} parent=1 // pred_check
      _
    $region27: #{tpu_custom_call.1} parent=1 // pred_check_branch
      %58 = sbr.rel (0) target = $region29
    $region28: #{tpu_custom_call.1} parent=1 // pred_region
      _
    $region29: #{tpu_custom_call.1} parent=1 // pred_fallthru
      _
    // Predicated region
    $region30: #{tpu_custom_call.1} parent=1 // pred_check
      _
    $region31: #{tpu_custom_call.1} parent=1 // pred_check_branch
      %60 = sbr.rel (0) target = $region33
    $region32: #{tpu_custom_call.1} parent=1 // pred_region
      %61 = dma.done [#allocation5], 8192
    $region33: #{tpu_custom_call.1} parent=1 // pred_fallthru
      _
    // Predicated region
    $region34: #{tpu_custom_call.1} parent=1 // pred_check
      _
    $region35: #{tpu_custom_call.1} parent=1 // pred_check_branch
      %63 = sbr.rel (0) target = $region37
    $region36: #{tpu_custom_call.1} parent=1 // pred_region
      %64 = dma.done [#allocation8], 9216
    $region37: #{tpu_custom_call.1} parent=1 // pred_fallthru
      _
    // Predicated region
    $region38: #{tpu_custom_call.1} parent=1 // pred_check
      _
    $region39: #{tpu_custom_call.1} parent=1 // pred_check_branch
      %66 = sbr.rel (0) target = $region41
    $region40: #{tpu_custom_call.1} parent=1 // pred_region
      %67 = dma.done [#allocation8], 9216
    $region41: #{tpu_custom_call.1} parent=1 // pred_fallthru
      _
    %69 = vst [vmem:[#allocation2] sm:$0xf] 0
    %70 = vst [vmem:[#allocation2 + $0x4] sm:$0xf] 0
    %71 = vst [vmem:[#allocation2 + $0x8] sm:$0x1] 0
    %72 = vst [vmem:[#allocation2 + $0xd8] sm:$0xf] 0
    %73 = vst [vmem:[#allocation2 + $0xdc] sm:$0xf] 0
    %74 = vst [vmem:[#allocation2 + $0xe0] sm:$0x1] 0
    %s75 = scalar_lea.vmem [#allocation2], 204
    %76 = vst [vmem:[%s75] sm:$0xf] 0
    %77 = vst [vmem:[%s75 + $0x4] sm:$0xf] 0
    %78 = vst [vmem:[%s75 + $0x8] sm:$0x1] 0
    %79 = vst [vmem:[%s75 + $0xd8] sm:$0xf] 0
    %80 = vst [vmem:[%s75 + $0xdc] sm:$0xf] 0
    %81 = vst [vmem:[%s75 + $0xe0] sm:$0x1] 0
    %vm82 = vcmask 1040384
    %vm83 = vsmask.f32 256
    %vm84 = vmand %vm82, %vm83
    %v85 = vld [vmem:[#allocation2] sm:$0x1]
    %v86 = vsel %vm84, 0, %v85
    %87 = vst [vmem:[#allocation2] sm:$0x1] %v86
    %v88 = vld [vmem:[#allocation2 + $0xc] sm:$0x1]
    %v89 = vsel %vm84, 0, %v88
    %90 = vst [vmem:[#allocation2 + $0xc] sm:$0x1] %v89
    %v91 = vld [vmem:[#allocation2 + $0x18] sm:$0x1]
    %v92 = vsel %vm84, 0, %v91
    %93 = vst [vmem:[#allocation2 + $0x18] sm:$0x1] %v92
    %v94 = vld [vmem:[#allocation2 + $0x24] sm:$0x1]
    %v95 = vsel %vm84, 0, %v94
    %96 = vst [vmem:[#allocation2 + $0x24] sm:$0x1] %v95
    %v97 = vld [vmem:[#allocation2 + $0x30] sm:$0x1]
    %v98 = vsel %vm84, 0, %v97
    %99 = vst [vmem:[#allocation2 + $0x30] sm:$0x1] %v98
    %v100 = vld [vmem:[#allocation2 + $0x3c] sm:$0x1]
    %v101 = vsel %vm84, 0, %v100
    %102 = vst [vmem:[#allocation2 + $0x3c] sm:$0x1] %v101
    %v103 = vld [vmem:[#allocation2 + $0x48] sm:$0x1]
    %v104 = vsel %vm84, 0, %v103
    %105 = vst [vmem:[#allocation2 + $0x48] sm:$0x1] %v104
    %v106 = vld [vmem:[#allocation2 + $0x54] sm:$0x1]
    %v107 = vsel %vm84, 0, %v106
    %108 = vst [vmem:[#allocation2 + $0x54] sm:$0x1] %v107
    %v109 = vld [vmem:[#allocation2 + $0x60] sm:$0x1]
    %v110 = vsel %vm84, 0, %v109
    %111 = vst [vmem:[#allocation2 + $0x60] sm:$0x1] %v110
    %v112 = vld [vmem:[#allocation2 + $0x6c] sm:$0x1]
    %v113 = vsel %vm84, 0, %v112
    %114 = vst [vmem:[#allocation2 + $0x6c] sm:$0x1] %v113
    %v115 = vld [vmem:[#allocation2 + $0x78] sm:$0x1]
    %v116 = vsel %vm84, 0, %v115
    %117 = vst [vmem:[#allocation2 + $0x78] sm:$0x1] %v116
    %v118 = vld [vmem:[#allocation2 + $0x84] sm:$0x1]
    %v119 = vsel %vm84, 0, %v118
    %120 = vst [vmem:[#allocation2 + $0x84] sm:$0x1] %v119
    %v121 = vld [vmem:[#allocation2 + $0x90] sm:$0x1]
    %v122 = vsel %vm84, 0, %v121
    %123 = vst [vmem:[#allocation2 + $0x90] sm:$0x1] %v122
    %v124 = vld [vmem:[#allocation2 + $0x9c] sm:$0x1]
    %v125 = vsel %vm84, 0, %v124
    %126 = vst [vmem:[#allocation2 + $0x9c] sm:$0x1] %v125
    %v127 = vld [vmem:[#allocation2 + $0xa8] sm:$0x1]
    %v128 = vsel %vm84, 0, %v127
    %129 = vst [vmem:[#allocation2 + $0xa8] sm:$0x1] %v128
    %v130 = vld [vmem:[#allocation2 + $0xb4] sm:$0x1]
    %v131 = vsel %vm84, 0, %v130
    %132 = vst [vmem:[#allocation2 + $0xb4] sm:$0x1] %v131
    %v133 = vld [vmem:[#allocation2 + $0xc0] sm:$0x1]
    %v134 = vsel %vm84, 0, %v133
    %135 = vst [vmem:[#allocation2 + $0xc0] sm:$0x1] %v134
    %v136 = vld [vmem:[#allocation2 + $0xcc] sm:$0x1]
    %v137 = vsel %vm84, 0, %v136
    %138 = vst [vmem:[#allocation2 + $0xcc] sm:$0x1] %v137
    %v139 = vld [vmem:[#allocation2 + $0xd8] sm:$0x1]
    %v140 = vsel %vm84, 0, %v139
    %141 = vst [vmem:[#allocation2 + $0xd8] sm:$0x1] %v140
    %v142 = vld [vmem:[#allocation2 + $0xe4] sm:$0x1]
    %v143 = vsel %vm84, 0, %v142
    %144 = vst [vmem:[#allocation2 + $0xe4] sm:$0x1] %v143
    %v145 = vld [vmem:[#allocation2 + $0xf0] sm:$0x1]
    %v146 = vsel %vm84, 0, %v145
    %147 = vst [vmem:[#allocation2 + $0xf0] sm:$0x1] %v146
    %v148 = vld [vmem:[#allocation2 + $0xfc] sm:$0x1]
    %v149 = vsel %vm84, 0, %v148
    %150 = vst [vmem:[#allocation2 + $0xfc] sm:$0x1] %v149
    %v151 = vld [vmem:[#allocation2 + $0x108] sm:$0x1]
    %v152 = vsel %vm84, 0, %v151
    %153 = vst [vmem:[#allocation2 + $0x108] sm:$0x1] %v152
    %v154 = vld [vmem:[#allocation2 + $0x114] sm:$0x1]
    %v155 = vsel %vm84, 0, %v154
    %156 = vst [vmem:[#allocation2 + $0x114] sm:$0x1] %v155
    %v157 = vld [vmem:[#allocation2 + $0x120] sm:$0x1]
    %v158 = vsel %vm84, 0, %v157
    %159 = vst [vmem:[#allocation2 + $0x120] sm:$0x1] %v158
    %v160 = vld [vmem:[#allocation2 + $0x12c] sm:$0x1]
    %v161 = vsel %vm84, 0, %v160
    %162 = vst [vmem:[#allocation2 + $0x12c] sm:$0x1] %v161
    %v163 = vld [vmem:[#allocation2 + $0x138] sm:$0x1]
    %v164 = vsel %vm84, 0, %v163
    %165 = vst [vmem:[#allocation2 + $0x138] sm:$0x1] %v164
    %v166 = vld [vmem:[#allocation2 + $0x144] sm:$0x1]
    %v167 = vsel %vm84, 0, %v166
    %168 = vst [vmem:[#allocation2 + $0x144] sm:$0x1] %v167
    %v169 = vld [vmem:[#allocation2 + $0x150] sm:$0x1]
    %v170 = vsel %vm84, 0, %v169
    %171 = vst [vmem:[#allocation2 + $0x150] sm:$0x1] %v170
    %v172 = vld [vmem:[#allocation2 + $0x15c] sm:$0x1]
    %v173 = vsel %vm84, 0, %v172
    %174 = vst [vmem:[#allocation2 + $0x15c] sm:$0x1] %v173
    %v175 = vld [vmem:[#allocation2 + $0x168] sm:$0x1]
    %v176 = vsel %vm84, 0, %v175
    %177 = vst [vmem:[#allocation2 + $0x168] sm:$0x1] %v176
    %v178 = vld [vmem:[#allocation2 + $0x174] sm:$0x1]
    %v179 = vsel %vm84, 0, %v178
    %180 = vst [vmem:[#allocation2 + $0x174] sm:$0x1] %v179
    %v181 = vld [vmem:[#allocation2 + $0x180] sm:$0x1]
    %v182 = vsel %vm84, 0, %v181
    %183 = vst [vmem:[#allocation2 + $0x180] sm:$0x1] %v182
    %v184 = vld [vmem:[#allocation2 + $0x18c] sm:$0x1]
    %v185 = vsel %vm84, 0, %v184
    %186 = vst [vmem:[#allocation2 + $0x18c] sm:$0x1] %v185
    %v187 = vld [vmem:[#allocation2 + $0x198] sm:$0x1]
    %v188 = vsel %vm84, 0, %v187
    %189 = vst [vmem:[#allocation2 + $0x198] sm:$0x1] %v188
    %v190 = vld [vmem:[#allocation2 + $0x1a4] sm:$0x1]
    %v191 = vsel %vm84, 0, %v190
    %192 = vst [vmem:[#allocation2 + $0x1a4] sm:$0x1] %v191
    %vm193 = vsmask.f32 7938
    %vm194 = vmand %vm82, %vm193
    %v195 = vld [vmem:[#allocation2 + $0x8] sm:$0x1]
    %v196 = vsel %vm194, 0, %v195
    %197 = vst [vmem:[#allocation2 + $0x8] sm:$0x1] %v196
    %v198 = vld [vmem:[#allocation2 + $0x14] sm:$0x1]
    %v199 = vsel %vm194, 0, %v198
    %200 = vst [vmem:[#allocation2 + $0x14] sm:$0x1] %v199
    %v201 = vld [vmem:[#allocation2 + $0x20] sm:$0x1]
    %v202 = vsel %vm194, 0, %v201
    %203 = vst [vmem:[#allocation2 + $0x20] sm:$0x1] %v202
    %v204 = vld [vmem:[#allocation2 + $0x2c] sm:$0x1]
    %v205 = vsel %vm194, 0, %v204
    %206 = vst [vmem:[#allocation2 + $0x2c] sm:$0x1] %v205
    %v207 = vld [vmem:[#allocation2 + $0x38] sm:$0x1]
    %v208 = vsel %vm194, 0, %v207
    %209 = vst [vmem:[#allocation2 + $0x38] sm:$0x1] %v208
    %v210 = vld [vmem:[#allocation2 + $0x44] sm:$0x1]
    %v211 = vsel %vm194, 0, %v210
    %212 = vst [vmem:[#allocation2 + $0x44] sm:$0x1] %v211
    %v213 = vld [vmem:[#allocation2 + $0x50] sm:$0x1]
    %v214 = vsel %vm194, 0, %v213
    %215 = vst [vmem:[#allocation2 + $0x50] sm:$0x1] %v214
    %v216 = vld [vmem:[#allocation2 + $0x5c] sm:$0x1]
    %v217 = vsel %vm194, 0, %v216
    %218 = vst [vmem:[#allocation2 + $0x5c] sm:$0x1] %v217
    %v219 = vld [vmem:[#allocation2 + $0x68] sm:$0x1]
    %v220 = vsel %vm194, 0, %v219
    %221 = vst [vmem:[#allocation2 + $0x68] sm:$0x1] %v220
    %v222 = vld [vmem:[#allocation2 + $0x74] sm:$0x1]
    %v223 = vsel %vm194, 0, %v222
    %224 = vst [vmem:[#allocation2 + $0x74] sm:$0x1] %v223
    %v225 = vld [vmem:[#allocation2 + $0x80] sm:$0x1]
    %v226 = vsel %vm194, 0, %v225
    %227 = vst [vmem:[#allocation2 + $0x80] sm:$0x1] %v226
    %v228 = vld [vmem:[#allocation2 + $0x8c] sm:$0x1]
    %v229 = vsel %vm194, 0, %v228
    %230 = vst [vmem:[#allocation2 + $0x8c] sm:$0x1] %v229
    %v231 = vld [vmem:[#allocation2 + $0x98] sm:$0x1]
    %v232 = vsel %vm194, 0, %v231
    %233 = vst [vmem:[#allocation2 + $0x98] sm:$0x1] %v232
    %v234 = vld [vmem:[#allocation2 + $0xa4] sm:$0x1]
    %v235 = vsel %vm194, 0, %v234
    %236 = vst [vmem:[#allocation2 + $0xa4] sm:$0x1] %v235
    %v237 = vld [vmem:[#allocation2 + $0xb0] sm:$0x1]
    %v238 = vsel %vm194, 0, %v237
    %239 = vst [vmem:[#allocation2 + $0xb0] sm:$0x1] %v238
    %v240 = vld [vmem:[#allocation2 + $0xbc] sm:$0x1]
    %v241 = vsel %vm194, 0, %v240
    %242 = vst [vmem:[#allocation2 + $0xbc] sm:$0x1] %v241
    %v243 = vld [vmem:[#allocation2 + $0xc8] sm:$0x1]
    %v244 = vsel %vm194, 0, %v243
    %245 = vst [vmem:[#allocation2 + $0xc8] sm:$0x1] %v244
    %v246 = vld [vmem:[#allocation2 + $0xd4] sm:$0x1]
    %v247 = vsel %vm194, 0, %v246
    %248 = vst [vmem:[#allocation2 + $0xd4] sm:$0x1] %v247
    %v249 = vld [vmem:[#allocation2 + $0xe0] sm:$0x1]
    %v250 = vsel %vm194, 0, %v249
    %251 = vst [vmem:[#allocation2 + $0xe0] sm:$0x1] %v250
    %v252 = vld [vmem:[#allocation2 + $0xec] sm:$0x1]
    %v253 = vsel %vm194, 0, %v252
    %254 = vst [vmem:[#allocation2 + $0xec] sm:$0x1] %v253
    %v255 = vld [vmem:[#allocation2 + $0xf8] sm:$0x1]
    %v256 = vsel %vm194, 0, %v255
    %257 = vst [vmem:[#allocation2 + $0xf8] sm:$0x1] %v256
    %v258 = vld [vmem:[#allocation2 + $0x104] sm:$0x1]
    %v259 = vsel %vm194, 0, %v258
    %260 = vst [vmem:[#allocation2 + $0x104] sm:$0x1] %v259
    %v261 = vld [vmem:[#allocation2 + $0x110] sm:$0x1]
    %v262 = vsel %vm194, 0, %v261
    %263 = vst [vmem:[#allocation2 + $0x110] sm:$0x1] %v262
    %v264 = vld [vmem:[#allocation2 + $0x11c] sm:$0x1]
    %v265 = vsel %vm194, 0, %v264
    %266 = vst [vmem:[#allocation2 + $0x11c] sm:$0x1] %v265
    %v267 = vld [vmem:[#allocation2 + $0x128] sm:$0x1]
    %v268 = vsel %vm194, 0, %v267
    %269 = vst [vmem:[#allocation2 + $0x128] sm:$0x1] %v268
    %v270 = vld [vmem:[#allocation2 + $0x134] sm:$0x1]
    %v271 = vsel %vm194, 0, %v270
    %272 = vst [vmem:[#allocation2 + $0x134] sm:$0x1] %v271
    %v273 = vld [vmem:[#allocation2 + $0x140] sm:$0x1]
    %v274 = vsel %vm194, 0, %v273
    %275 = vst [vmem:[#allocation2 + $0x140] sm:$0x1] %v274
    %v276 = vld [vmem:[#allocation2 + $0x14c] sm:$0x1]
    %v277 = vsel %vm194, 0, %v276
    %278 = vst [vmem:[#allocation2 + $0x14c] sm:$0x1] %v277
    %v279 = vld [vmem:[#allocation2 + $0x158] sm:$0x1]
    %v280 = vsel %vm194, 0, %v279
    %281 = vst [vmem:[#allocation2 + $0x158] sm:$0x1] %v280
    %v282 = vld [vmem:[#allocation2 + $0x164] sm:$0x1]
    %v283 = vsel %vm194, 0, %v282
    %284 = vst [vmem:[#allocation2 + $0x164] sm:$0x1] %v283
    %v285 = vld [vmem:[#allocation2 + $0x170] sm:$0x1]
    %v286 = vsel %vm194, 0, %v285
    %287 = vst [vmem:[#allocation2 + $0x170] sm:$0x1] %v286
    %v288 = vld [vmem:[#allocation2 + $0x17c] sm:$0x1]
    %v289 = vsel %vm194, 0, %v288
    %290 = vst [vmem:[#allocation2 + $0x17c] sm:$0x1] %v289
    %v291 = vld [vmem:[#allocation2 + $0x188] sm:$0x1]
    %v292 = vsel %vm194, 0, %v291
    %293 = vst [vmem:[#allocation2 + $0x188] sm:$0x1] %v292
    %v294 = vld [vmem:[#allocation2 + $0x194] sm:$0x1]
    %v295 = vsel %vm194, 0, %v294
    %296 = vst [vmem:[#allocation2 + $0x194] sm:$0x1] %v295
    %v297 = vld [vmem:[#allocation2 + $0x1a0] sm:$0x1]
    %v298 = vsel %vm194, 0, %v297
    %299 = vst [vmem:[#allocation2 + $0x1a0] sm:$0x1] %v298
    %v300 = vld [vmem:[#allocation2 + $0x1ac] sm:$0x1]
    %v301 = vsel %vm194, 0, %v300
    %302 = vst [vmem:[#allocation2 + $0x1ac] sm:$0x1] %v301
    %v303 = vld [vmem:[#allocation4] sm:$0xff]
    %v304 = vld [vmem:[#allocation4 + $0x8] sm:$0xff]
    %v305 = vld [vmem:[#allocation4 + $0x10] sm:$0xff]
    %v306 = vld [vmem:[#allocation4 + $0x18] sm:$0xff]
    %v307 = vld [vmem:[#allocation4 + $0x20] sm:$0xff]
    %v308 = vld [vmem:[#allocation4 + $0x28] sm:$0xff]
    %v309 = vld [vmem:[#allocation4 + $0x30] sm:$0xff]
    %v310 = vld [vmem:[#allocation4 + $0x38] sm:$0xff]
    %v311 = vld [vmem:[#allocation4 + $0x40] sm:$0xff]
    %v312 = vld [vmem:[#allocation4 + $0x48] sm:$0xff]
    %v313 = vld [vmem:[#allocation4 + $0x50] sm:$0xff]
    %v314 = vld [vmem:[#allocation4 + $0x58] sm:$0xff]
    %v315 = vld [vmem:[#allocation4 + $0x60] sm:$0xff]
    %v316 = vld [vmem:[#allocation4 + $0x68] sm:$0xff]
    %v317 = vld [vmem:[#allocation4 + $0x70] sm:$0xff]
    %v318 = vld [vmem:[#allocation4 + $0x78] sm:$0xff]
    %v319 = vld [vmem:[#allocation4 + $0x80] sm:$0xff]
    %v320 = vld [vmem:[#allocation4 + $0x88] sm:$0xff]
    %v321 = vld [vmem:[#allocation4 + $0x90] sm:$0xff]
    %v322 = vld [vmem:[#allocation4 + $0x98] sm:$0xff]
    %v323 = vld [vmem:[#allocation4 + $0xa0] sm:$0xff]
    %v324 = vld [vmem:[#allocation4 + $0xa8] sm:$0xff]
    %v325 = vld [vmem:[#allocation4 + $0xb0] sm:$0xff]
    %v326 = vld [vmem:[#allocation4 + $0xb8] sm:$0xff]
    %v327 = vld [vmem:[#allocation4 + $0xc0] sm:$0xff]
    %v328 = vld [vmem:[#allocation4 + $0xc8] sm:$0xff]
    %v329 = vld [vmem:[#allocation4 + $0xd0] sm:$0xff]
    %v330 = vld [vmem:[#allocation4 + $0xd8] sm:$0xff]
    %v331 = vld [vmem:[#allocation4 + $0xe0] sm:$0xff]
    %v332 = vld [vmem:[#allocation4 + $0xe8] sm:$0xff]
    %v333 = vld [vmem:[#allocation4 + $0xf0] sm:$0xff]
    %v334 = vld [vmem:[#allocation4 + $0xf8] sm:$0xff]
    %v335 = vld [vmem:[#allocation4 + $0x100] sm:$0xff]
    %v336 = vld [vmem:[#allocation4 + $0x108] sm:$0xff]
    %v337 = vld [vmem:[#allocation4 + $0x110] sm:$0xff]
    %v338 = vld [vmem:[#allocation4 + $0x118] sm:$0xff]
    %v339 = vld [vmem:[#allocation4 + $0x120] sm:$0xff]
    %v340 = vld [vmem:[#allocation4 + $0x128] sm:$0xff]
    %v341 = vld [vmem:[#allocation4 + $0x130] sm:$0xff]
    %v342 = vld [vmem:[#allocation4 + $0x138] sm:$0xff]
    %v343 = vld [vmem:[#allocation4 + $0x140] sm:$0xff]
    %v344 = vld [vmem:[#allocation4 + $0x148] sm:$0xff]
    %v345 = vld [vmem:[#allocation4 + $0x150] sm:$0xff]
    %v346 = vld [vmem:[#allocation4 + $0x158] sm:$0xff]
    %v347 = vld [vmem:[#allocation4 + $0x160] sm:$0xff]
    %v348 = vld [vmem:[#allocation4 + $0x168] sm:$0xff]
    %v349 = vld [vmem:[#allocation4 + $0x170] sm:$0xff]
    %v350 = vld [vmem:[#allocation4 + $0x178] sm:$0xff]
    %v351 = vld [vmem:[#allocation4 + $0x180] sm:$0xff]
    %v352 = vld [vmem:[#allocation4 + $0x188] sm:$0xff]
    %v353 = vld [vmem:[#allocation4 + $0x190] sm:$0xff]
    %v354 = vld [vmem:[#allocation4 + $0x198] sm:$0xff]
    %v355 = vld [vmem:[#allocation4 + $0x1a0] sm:$0xff]
    %v356 = vld [vmem:[#allocation4 + $0x1a8] sm:$0xff]
    %v357 = vld [vmem:[#allocation4 + $0x1b0] sm:$0xff]
    %v358 = vld [vmem:[#allocation4 + $0x1b8] sm:$0xff]
    %v359 = vld [vmem:[#allocation4 + $0x1c0] sm:$0xff]
    %v360 = vld [vmem:[#allocation4 + $0x1c8] sm:$0xff]
    %v361 = vld [vmem:[#allocation4 + $0x1d0] sm:$0xff]
    %v362 = vld [vmem:[#allocation4 + $0x1d8] sm:$0xff]
    %v363 = vld [vmem:[#allocation4 + $0x1e0] sm:$0xff]
    %v364 = vld [vmem:[#allocation4 + $0x1e8] sm:$0xff]
    %v365 = vld [vmem:[#allocation4 + $0x1f0] sm:$0xff]
    %v366 = vld [vmem:[#allocation4 + $0x1f8] sm:$0xff]
    %v367 = vpack.c.bf16 %v304, %v303
    %v368 = vpack.c.bf16 %v306, %v305
    %v369 = vpack.c.bf16 %v308, %v307
    %v370 = vpack.c.bf16 %v310, %v309
    %v371 = vpack.c.bf16 %v312, %v311
    %v372 = vpack.c.bf16 %v314, %v313
    %v373 = vpack.c.bf16 %v316, %v315
    %v374 = vpack.c.bf16 %v318, %v317
    %v375 = vpack.c.bf16 %v320, %v319
    %v376 = vpack.c.bf16 %v322, %v321
    %v377 = vpack.c.bf16 %v324, %v323
    %v378 = vpack.c.bf16 %v326, %v325
    %v379 = vpack.c.bf16 %v328, %v327
    %v380 = vpack.c.bf16 %v330, %v329
    %v381 = vpack.c.bf16 %v332, %v331
    %v382 = vpack.c.bf16 %v334, %v333
    %v383 = vpack.c.bf16 %v336, %v335
    %v384 = vpack.c.bf16 %v338, %v337
    %v385 = vpack.c.bf16 %v340, %v339
    %v386 = vpack.c.bf16 %v342, %v341
    %v387 = vpack.c.bf16 %v344, %v343
    %v388 = vpack.c.bf16 %v346, %v345
    %v389 = vpack.c.bf16 %v348, %v347
    %v390 = vpack.c.bf16 %v350, %v349
    %v391 = vpack.c.bf16 %v352, %v351
    %v392 = vpack.c.bf16 %v354, %v353
    %v393 = vpack.c.bf16 %v356, %v355
    %v394 = vpack.c.bf16 %v358, %v357
    %v395 = vpack.c.bf16 %v360, %v359
    %v396 = vpack.c.bf16 %v362, %v361
    %v397 = vpack.c.bf16 %v364, %v363
    %v398 = vpack.c.bf16 %v366, %v365
    %v431 = vunpack.c.l.b16 %v367
    %v432 = vunpack.c.h.b16 %v367
    %v433 = vunpack.c.l.b16 %v368
    %v434 = vunpack.c.h.b16 %v368
    %v435 = vunpack.c.l.b16 %v369
    %v436 = vunpack.c.h.b16 %v369
    %v437 = vunpack.c.l.b16 %v370
    %v438 = vunpack.c.h.b16 %v370
    %v439 = vunpack.c.l.b16 %v371
    %v440 = vunpack.c.h.b16 %v371
    %v441 = vunpack.c.l.b16 %v372
    %v442 = vunpack.c.h.b16 %v372
    %v443 = vunpack.c.l.b16 %v373
    %v444 = vunpack.c.h.b16 %v373
    %v445 = vunpack.c.l.b16 %v374
    %v446 = vunpack.c.h.b16 %v374
    %v447 = vunpack.c.l.b16 %v375
    %v448 = vunpack.c.h.b16 %v375
    %v449 = vunpack.c.l.b16 %v376
    %v450 = vunpack.c.h.b16 %v376
    %v451 = vunpack.c.l.b16 %v377
    %v452 = vunpack.c.h.b16 %v377
    %v453 = vunpack.c.l.b16 %v378
    %v454 = vunpack.c.h.b16 %v378
    %v455 = vunpack.c.l.b16 %v379
    %v456 = vunpack.c.h.b16 %v379
    %v457 = vunpack.c.l.b16 %v380
    %v458 = vunpack.c.h.b16 %v380
    %v459 = vunpack.c.l.b16 %v381
    %v460 = vunpack.c.h.b16 %v381
    %v461 = vunpack.c.l.b16 %v382
    %v462 = vunpack.c.h.b16 %v382
    %v463 = vunpack.c.l.b16 %v383
    %v464 = vunpack.c.h.b16 %v383
    %v465 = vunpack.c.l.b16 %v384
    %v466 = vunpack.c.h.b16 %v384
    %v467 = vunpack.c.l.b16 %v385
    %v468 = vunpack.c.h.b16 %v385
    %v469 = vunpack.c.l.b16 %v386
    %v470 = vunpack.c.h.b16 %v386
    %v471 = vunpack.c.l.b16 %v387
    %v472 = vunpack.c.h.b16 %v387
    %v473 = vunpack.c.l.b16 %v388
    %v474 = vunpack.c.h.b16 %v388
    %v475 = vunpack.c.l.b16 %v389
    %v476 = vunpack.c.h.b16 %v389
    %v477 = vunpack.c.l.b16 %v390
    %v478 = vunpack.c.h.b16 %v390
    %v479 = vunpack.c.l.b16 %v391
    %v480 = vunpack.c.h.b16 %v391
    %v481 = vunpack.c.l.b16 %v392
    %v482 = vunpack.c.h.b16 %v392
    %v483 = vunpack.c.l.b16 %v393
    %v484 = vunpack.c.h.b16 %v393
    %v485 = vunpack.c.l.b16 %v394
    %v486 = vunpack.c.h.b16 %v394
    %v487 = vunpack.c.l.b16 %v395
    %v488 = vunpack.c.h.b16 %v395
    %v489 = vunpack.c.l.b16 %v396
    %v490 = vunpack.c.h.b16 %v396
    %v491 = vunpack.c.l.b16 %v397
    %v492 = vunpack.c.h.b16 %v397
    %v493 = vunpack.c.l.b16 %v398
    %v494 = vunpack.c.h.b16 %v398
    %v495 = vpack.c.b16 %v431, %v431
    %v496 = vpack.c.b16 %v432, %v432
    %v497 = vpack.c.b16 %v433, %v433
    %v498 = vpack.c.b16 %v434, %v434
    %v499 = vpack.c.b16 %v435, %v435
    %v500 = vpack.c.b16 %v436, %v436
    %v501 = vpack.c.b16 %v437, %v437
    %v502 = vpack.c.b16 %v438, %v438
    %v503 = vpack.c.b16 %v439, %v439
    %v504 = vpack.c.b16 %v440, %v440
    %v505 = vpack.c.b16 %v441, %v441
    %v506 = vpack.c.b16 %v442, %v442
    %v507 = vpack.c.b16 %v443, %v443
    %v508 = vpack.c.b16 %v444, %v444
    %v509 = vpack.c.b16 %v445, %v445
    %v510 = vpack.c.b16 %v446, %v446
    %v511 = vpack.c.b16 %v447, %v447
    %v512 = vpack.c.b16 %v448, %v448
    %v513 = vpack.c.b16 %v449, %v449
    %v514 = vpack.c.b16 %v450, %v450
    %v515 = vpack.c.b16 %v451, %v451
    %v516 = vpack.c.b16 %v452, %v452
    %v517 = vpack.c.b16 %v453, %v453
    %v518 = vpack.c.b16 %v454, %v454
    %v519 = vpack.c.b16 %v455, %v455
    %v520 = vpack.c.b16 %v456, %v456
    %v521 = vpack.c.b16 %v457, %v457
    %v522 = vpack.c.b16 %v458, %v458
    %v523 = vpack.c.b16 %v459, %v459
    %v524 = vpack.c.b16 %v460, %v460
    %v525 = vpack.c.b16 %v461, %v461
    %v526 = vpack.c.b16 %v462, %v462
    %v527 = vpack.c.b16 %v463, %v463
    %v528 = vpack.c.b16 %v464, %v464
    %v529 = vpack.c.b16 %v465, %v465
    %v530 = vpack.c.b16 %v466, %v466
    %v531 = vpack.c.b16 %v467, %v467
    %v532 = vpack.c.b16 %v468, %v468
    %v533 = vpack.c.b16 %v469, %v469
    %v534 = vpack.c.b16 %v470, %v470
    %v535 = vpack.c.b16 %v471, %v471
    %v536 = vpack.c.b16 %v472, %v472
    %v537 = vpack.c.b16 %v473, %v473
    %v538 = vpack.c.b16 %v474, %v474
    %v539 = vpack.c.b16 %v475, %v475
    %v540 = vpack.c.b16 %v476, %v476
    %v541 = vpack.c.b16 %v477, %v477
    %v542 = vpack.c.b16 %v478, %v478
    %v543 = vpack.c.b16 %v479, %v479
    %v544 = vpack.c.b16 %v480, %v480
    %v545 = vpack.c.b16 %v481, %v481
    %v546 = vpack.c.b16 %v482, %v482
    %v547 = vpack.c.b16 %v483, %v483
    %v548 = vpack.c.b16 %v484, %v484
    %v549 = vpack.c.b16 %v485, %v485
    %v550 = vpack.c.b16 %v486, %v486
    %v551 = vpack.c.b16 %v487, %v487
    %v552 = vpack.c.b16 %v488, %v488
    %v553 = vpack.c.b16 %v489, %v489
    %v554 = vpack.c.b16 %v490, %v490
    %v555 = vpack.c.b16 %v491, %v491
    %v556 = vpack.c.b16 %v492, %v492
    %v557 = vpack.c.b16 %v493, %v493
    %v558 = vpack.c.b16 %v494, %v494
    %vm559 = vsmask.f32 4368
    %vm560 = vmor %vm83, %vm559
    %v562 = vshrl.u32 %v495, 16
    %v564 = vrot.slane %v562, 7
    %v565 = vshll.u32 %v495, 16
    %v567 = vor.u32 %v564, %v565
    %v568 = vrot.slane %v564, 4
    %v570 = vshrl.u32 %v496, 16
    %v572 = vrot.slane %v570, 7
    %v573 = vshll.u32 %v496, 16
    %v575 = vor.u32 %v572, %v573
    %v576 = vsel %vm560, %v568, %v575
    %v577 = vrot.slane %v572, 4
    %v579 = vshrl.u32 %v497, 16
    %v581 = vrot.slane %v579, 7
    %v582 = vshll.u32 %v497, 16
    %v584 = vor.u32 %v581, %v582
    %v585 = vrot.slane %v581, 4
    %v587 = vshrl.u32 %v498, 16
    %v589 = vrot.slane %v587, 7
    %v590 = vshll.u32 %v498, 16
    %v592 = vor.u32 %v589, %v590
    %v593 = vsel %vm560, %v585, %v592
    %v594 = vrot.slane %v589, 4
    %v596 = vshrl.u32 %v499, 16
    %v598 = vrot.slane %v596, 7
    %v599 = vshll.u32 %v499, 16
    %v601 = vor.u32 %v598, %v599
    %v602 = vrot.slane %v598, 4
    %v604 = vshrl.u32 %v500, 16
    %v606 = vrot.slane %v604, 7
    %v607 = vshll.u32 %v500, 16
    %v609 = vor.u32 %v606, %v607
    %v610 = vsel %vm560, %v602, %v609
    %v611 = vrot.slane %v606, 4
    %v613 = vshrl.u32 %v501, 16
    %v615 = vrot.slane %v613, 7
    %v616 = vshll.u32 %v501, 16
    %v618 = vor.u32 %v615, %v616
    %v619 = vrot.slane %v615, 4
    %v621 = vshrl.u32 %v502, 16
    %v623 = vrot.slane %v621, 7
    %v624 = vshll.u32 %v502, 16
    %v626 = vor.u32 %v623, %v624
    %v627 = vsel %vm560, %v619, %v626
    %v628 = vrot.slane %v623, 4
    %v630 = vshrl.u32 %v503, 16
    %v632 = vrot.slane %v630, 7
    %v633 = vshll.u32 %v503, 16
    %v635 = vor.u32 %v632, %v633
    %v636 = vrot.slane %v632, 4
    %v638 = vshrl.u32 %v504, 16
    %v640 = vrot.slane %v638, 7
    %v641 = vshll.u32 %v504, 16
    %v643 = vor.u32 %v640, %v641
    %v644 = vsel %vm560, %v636, %v643
    %v645 = vrot.slane %v640, 4
    %v647 = vshrl.u32 %v505, 16
    %v649 = vrot.slane %v647, 7
    %v650 = vshll.u32 %v505, 16
    %v652 = vor.u32 %v649, %v650
    %v653 = vrot.slane %v649, 4
    %v655 = vshrl.u32 %v506, 16
    %v657 = vrot.slane %v655, 7
    %v658 = vshll.u32 %v506, 16
    %v660 = vor.u32 %v657, %v658
    %v661 = vsel %vm560, %v653, %v660
    %v662 = vrot.slane %v657, 4
    %v664 = vshrl.u32 %v507, 16
    %v666 = vrot.slane %v664, 7
    %v667 = vshll.u32 %v507, 16
    %v669 = vor.u32 %v666, %v667
    %v670 = vrot.slane %v666, 4
    %v672 = vshrl.u32 %v508, 16
    %v674 = vrot.slane %v672, 7
    %v675 = vshll.u32 %v508, 16
    %v677 = vor.u32 %v674, %v675
    %v678 = vsel %vm560, %v670, %v677
    %v679 = vrot.slane %v674, 4
    %v681 = vshrl.u32 %v509, 16
    %v683 = vrot.slane %v681, 7
    %v684 = vshll.u32 %v509, 16
    %v686 = vor.u32 %v683, %v684
    %v687 = vrot.slane %v683, 4
    %v689 = vshrl.u32 %v510, 16
    %v691 = vrot.slane %v689, 7
    %v692 = vshll.u32 %v510, 16
    %v694 = vor.u32 %v691, %v692
    %v695 = vsel %vm560, %v687, %v694
    %v696 = vrot.slane %v691, 4
    %v698 = vshrl.u32 %v511, 16
    %v700 = vrot.slane %v698, 7
    %v701 = vshll.u32 %v511, 16
    %v703 = vor.u32 %v700, %v701
    %v704 = vrot.slane %v700, 4
    %v706 = vshrl.u32 %v512, 16
    %v708 = vrot.slane %v706, 7
    %v709 = vshll.u32 %v512, 16
    %v711 = vor.u32 %v708, %v709
    %v712 = vsel %vm560, %v704, %v711
    %v713 = vrot.slane %v708, 4
    %v715 = vshrl.u32 %v513, 16
    %v717 = vrot.slane %v715, 7
    %v718 = vshll.u32 %v513, 16
    %v720 = vor.u32 %v717, %v718
    %v721 = vrot.slane %v717, 4
    %v723 = vshrl.u32 %v514, 16
    %v725 = vrot.slane %v723, 7
    %v726 = vshll.u32 %v514, 16
    %v728 = vor.u32 %v725, %v726
    %v729 = vsel %vm560, %v721, %v728
    %v730 = vrot.slane %v725, 4
    %v732 = vshrl.u32 %v515, 16
    %v734 = vrot.slane %v732, 7
    %v735 = vshll.u32 %v515, 16
    %v737 = vor.u32 %v734, %v735
    %v738 = vrot.slane %v734, 4
    %v740 = vshrl.u32 %v516, 16
    %v742 = vrot.slane %v740, 7
    %v743 = vshll.u32 %v516, 16
    %v745 = vor.u32 %v742, %v743
    %v746 = vsel %vm560, %v738, %v745
    %v747 = vrot.slane %v742, 4
    %v749 = vshrl.u32 %v517, 16
    %v751 = vrot.slane %v749, 7
    %v752 = vshll.u32 %v517, 16
    %v754 = vor.u32 %v751, %v752
    %v755 = vrot.slane %v751, 4
    %v757 = vshrl.u32 %v518, 16
    %v759 = vrot.slane %v757, 7
    %v760 = vshll.u32 %v518, 16
    %v762 = vor.u32 %v759, %v760
    %v763 = vsel %vm560, %v755, %v762
    %v764 = vrot.slane %v759, 4
    %v766 = vshrl.u32 %v519, 16
    %v768 = vrot.slane %v766, 7
    %v769 = vshll.u32 %v519, 16
    %v771 = vor.u32 %v768, %v769
    %v772 = vrot.slane %v768, 4
    %v774 = vshrl.u32 %v520, 16
    %v776 = vrot.slane %v774, 7
    %v777 = vshll.u32 %v520, 16
    %v779 = vor.u32 %v776, %v777
    %v780 = vsel %vm560, %v772, %v779
    %v781 = vrot.slane %v776, 4
    %v783 = vshrl.u32 %v521, 16
    %v785 = vrot.slane %v783, 7
    %v786 = vshll.u32 %v521, 16
    %v788 = vor.u32 %v785, %v786
    %v789 = vrot.slane %v785, 4
    %v791 = vshrl.u32 %v522, 16
    %v793 = vrot.slane %v791, 7
    %v794 = vshll.u32 %v522, 16
    %v796 = vor.u32 %v793, %v794
    %v797 = vsel %vm560, %v789, %v796
    %v798 = vrot.slane %v793, 4
    %v800 = vshrl.u32 %v523, 16
    %v802 = vrot.slane %v800, 7
    %v803 = vshll.u32 %v523, 16
    %v805 = vor.u32 %v802, %v803
    %v806 = vrot.slane %v802, 4
    %v808 = vshrl.u32 %v524, 16
    %v810 = vrot.slane %v808, 7
    %v811 = vshll.u32 %v524, 16
    %v813 = vor.u32 %v810, %v811
    %v814 = vsel %vm560, %v806, %v813
    %v815 = vrot.slane %v810, 4
    %v817 = vshrl.u32 %v525, 16
    %v819 = vrot.slane %v817, 7
    %v820 = vshll.u32 %v525, 16
    %v822 = vor.u32 %v819, %v820
    %v823 = vrot.slane %v819, 4
    %v825 = vshrl.u32 %v526, 16
    %v827 = vrot.slane %v825, 7
    %v828 = vshll.u32 %v526, 16
    %v830 = vor.u32 %v827, %v828
    %v831 = vsel %vm560, %v823, %v830
    %v832 = vrot.slane %v827, 4
    %v834 = vshrl.u32 %v527, 16
    %v836 = vrot.slane %v834, 7
    %v837 = vshll.u32 %v527, 16
    %v839 = vor.u32 %v836, %v837
    %v840 = vrot.slane %v836, 4
    %v842 = vshrl.u32 %v528, 16
    %v844 = vrot.slane %v842, 7
    %v845 = vshll.u32 %v528, 16
    %v847 = vor.u32 %v844, %v845
    %v848 = vsel %vm560, %v840, %v847
    %v849 = vrot.slane %v844, 4
    %v851 = vshrl.u32 %v529, 16
    %v853 = vrot.slane %v851, 7
    %v854 = vshll.u32 %v529, 16
    %v856 = vor.u32 %v853, %v854
    %v857 = vrot.slane %v853, 4
    %v859 = vshrl.u32 %v530, 16
    %v861 = vrot.slane %v859, 7
    %v862 = vshll.u32 %v530, 16
    %v864 = vor.u32 %v861, %v862
    %v865 = vsel %vm560, %v857, %v864
    %v866 = vrot.slane %v861, 4
    %v868 = vshrl.u32 %v531, 16
    %v870 = vrot.slane %v868, 7
    %v871 = vshll.u32 %v531, 16
    %v873 = vor.u32 %v870, %v871
    %v874 = vrot.slane %v870, 4
    %v876 = vshrl.u32 %v532, 16
    %v878 = vrot.slane %v876, 7
    %v879 = vshll.u32 %v532, 16
    %v881 = vor.u32 %v878, %v879
    %v882 = vsel %vm560, %v874, %v881
    %v883 = vrot.slane %v878, 4
    %v885 = vshrl.u32 %v533, 16
    %v887 = vrot.slane %v885, 7
    %v888 = vshll.u32 %v533, 16
    %v890 = vor.u32 %v887, %v888
    %v891 = vrot.slane %v887, 4
    %v893 = vshrl.u32 %v534, 16
    %v895 = vrot.slane %v893, 7
    %v896 = vshll.u32 %v534, 16
    %v898 = vor.u32 %v895, %v896
    %v899 = vsel %vm560, %v891, %v898
    %v900 = vrot.slane %v895, 4
    %v902 = vshrl.u32 %v535, 16
    %v904 = vrot.slane %v902, 7
    %v905 = vshll.u32 %v535, 16
    %v907 = vor.u32 %v904, %v905
    %v908 = vrot.slane %v904, 4
    %v910 = vshrl.u32 %v536, 16
    %v912 = vrot.slane %v910, 7
    %v913 = vshll.u32 %v536, 16
    %v915 = vor.u32 %v912, %v913
    %v916 = vsel %vm560, %v908, %v915
    %v917 = vrot.slane %v912, 4
    %v919 = vshrl.u32 %v537, 16
    %v921 = vrot.slane %v919, 7
    %v922 = vshll.u32 %v537, 16
    %v924 = vor.u32 %v921, %v922
    %v925 = vrot.slane %v921, 4
    %v927 = vshrl.u32 %v538, 16
    %v929 = vrot.slane %v927, 7
    %v930 = vshll.u32 %v538, 16
    %v932 = vor.u32 %v929, %v930
    %v933 = vsel %vm560, %v925, %v932
    %v934 = vrot.slane %v929, 4
    %v936 = vshrl.u32 %v539, 16
    %v938 = vrot.slane %v936, 7
    %v939 = vshll.u32 %v539, 16
    %v941 = vor.u32 %v938, %v939
    %v942 = vrot.slane %v938, 4
    %v944 = vshrl.u32 %v540, 16
    %v946 = vrot.slane %v944, 7
    %v947 = vshll.u32 %v540, 16
    %v949 = vor.u32 %v946, %v947
    %v950 = vsel %vm560, %v942, %v949
    %v951 = vrot.slane %v946, 4
    %v953 = vshrl.u32 %v541, 16
    %v955 = vrot.slane %v953, 7
    %v956 = vshll.u32 %v541, 16
    %v958 = vor.u32 %v955, %v956
    %v959 = vrot.slane %v955, 4
    %v961 = vshrl.u32 %v542, 16
    %v963 = vrot.slane %v961, 7
    %v964 = vshll.u32 %v542, 16
    %v966 = vor.u32 %v963, %v964
    %v967 = vsel %vm560, %v959, %v966
    %v968 = vrot.slane %v963, 4
    %v970 = vshrl.u32 %v543, 16
    %v972 = vrot.slane %v970, 7
    %v973 = vshll.u32 %v543, 16
    %v975 = vor.u32 %v972, %v973
    %v976 = vrot.slane %v972, 4
    %v978 = vshrl.u32 %v544, 16
    %v980 = vrot.slane %v978, 7
    %v981 = vshll.u32 %v544, 16
    %v983 = vor.u32 %v980, %v981
    %v984 = vsel %vm560, %v976, %v983
    %v985 = vrot.slane %v980, 4
    %v987 = vshrl.u32 %v545, 16
    %v989 = vrot.slane %v987, 7
    %v990 = vshll.u32 %v545, 16
    %v992 = vor.u32 %v989, %v990
    %v993 = vrot.slane %v989, 4
    %v995 = vshrl.u32 %v546, 16
    %v997 = vrot.slane %v995, 7
    %v998 = vshll.u32 %v546, 16
    %v1000 = vor.u32 %v997, %v998
    %v1001 = vsel %vm560, %v993, %v1000
    %v1002 = vrot.slane %v997, 4
    %v1004 = vshrl.u32 %v547, 16
    %v1006 = vrot.slane %v1004, 7
    %v1007 = vshll.u32 %v547, 16
    %v1009 = vor.u32 %v1006, %v1007
    %v1010 = vrot.slane %v1006, 4
    %v1012 = vshrl.u32 %v548, 16
    %v1014 = vrot.slane %v1012, 7
    %v1015 = vshll.u32 %v548, 16
    %v1017 = vor.u32 %v1014, %v1015
    %v1018 = vsel %vm560, %v1010, %v1017
    %v1019 = vrot.slane %v1014, 4
    %v1021 = vshrl.u32 %v549, 16
    %v1023 = vrot.slane %v1021, 7
    %v1024 = vshll.u32 %v549, 16
    %v1026 = vor.u32 %v1023, %v1024
    %v1027 = vrot.slane %v1023, 4
    %v1029 = vshrl.u32 %v550, 16
    %v1031 = vrot.slane %v1029, 7
    %v1032 = vshll.u32 %v550, 16
    %v1034 = vor.u32 %v1031, %v1032
    %v1035 = vsel %vm560, %v1027, %v1034
    %v1036 = vrot.slane %v1031, 4
    %v1038 = vshrl.u32 %v551, 16
    %v1040 = vrot.slane %v1038, 7
    %v1041 = vshll.u32 %v551, 16
    %v1043 = vor.u32 %v1040, %v1041
    %v1044 = vrot.slane %v1040, 4
    %v1046 = vshrl.u32 %v552, 16
    %v1048 = vrot.slane %v1046, 7
    %v1049 = vshll.u32 %v552, 16
    %v1051 = vor.u32 %v1048, %v1049
    %v1052 = vsel %vm560, %v1044, %v1051
    %v1053 = vrot.slane %v1048, 4
    %v1055 = vshrl.u32 %v553, 16
    %v1057 = vrot.slane %v1055, 7
    %v1058 = vshll.u32 %v553, 16
    %v1060 = vor.u32 %v1057, %v1058
    %v1061 = vrot.slane %v1057, 4
    %v1063 = vshrl.u32 %v554, 16
    %v1065 = vrot.slane %v1063, 7
    %v1066 = vshll.u32 %v554, 16
    %v1068 = vor.u32 %v1065, %v1066
    %v1069 = vsel %vm560, %v1061, %v1068
    %v1070 = vrot.slane %v1065, 4
    %v1072 = vshrl.u32 %v555, 16
    %v1074 = vrot.slane %v1072, 7
    %v1075 = vshll.u32 %v555, 16
    %v1077 = vor.u32 %v1074, %v1075
    %v1078 = vrot.slane %v1074, 4
    %v1080 = vshrl.u32 %v556, 16
    %v1082 = vrot.slane %v1080, 7
    %v1083 = vshll.u32 %v556, 16
    %v1085 = vor.u32 %v1082, %v1083
    %v1086 = vsel %vm560, %v1078, %v1085
    %v1087 = vrot.slane %v1082, 4
    %v1089 = vshrl.u32 %v557, 16
    %v1091 = vrot.slane %v1089, 7
    %v1092 = vshll.u32 %v557, 16
    %v1094 = vor.u32 %v1091, %v1092
    %v1095 = vrot.slane %v1091, 4
    %v1097 = vshrl.u32 %v558, 16
    %v1099 = vrot.slane %v1097, 7
    %v1100 = vshll.u32 %v558, 16
    %v1102 = vor.u32 %v1099, %v1100
    %v1103 = vsel %vm560, %v1095, %v1102
    %v1104 = vrot.slane %v1099, 4
    %s1201 = scalar_lea.vmem [#allocation2], 12
    %vm1202 = vcmask 1043456
    %vm1203 = vmand %vm1202, %vm193
    %v1204 = vld [vmem:[%s1201] sm:$0xf]
    %v1205 = vsel %vm1203, %v567, %v1204
    %1206 = vst [vmem:[%s1201] sm:$0xf] %v1205
    %1207 = vst [vmem:[%s1201 + $0x4] sm:$0xf] %v576
    %v1208 = vld [vmem:[%s1201 + $0x8] sm:$0x1]
    %v1209 = vsel %vm84, %v577, %v1208
    %1210 = vst [vmem:[%s1201 + $0x8] sm:$0x1] %v1209
    %v1211 = vld [vmem:[%s1201 + $0xc] sm:$0xf]
    %v1212 = vsel %vm1203, %v584, %v1211
    %1213 = vst [vmem:[%s1201 + $0xc] sm:$0xf] %v1212
    %1214 = vst [vmem:[%s1201 + $0x10] sm:$0xf] %v593
    %v1215 = vld [vmem:[%s1201 + $0x14] sm:$0x1]
    %v1216 = vsel %vm84, %v594, %v1215
    %1217 = vst [vmem:[%s1201 + $0x14] sm:$0x1] %v1216
    %v1218 = vld [vmem:[%s1201 + $0x18] sm:$0xf]
    %v1219 = vsel %vm1203, %v601, %v1218
    %1220 = vst [vmem:[%s1201 + $0x18] sm:$0xf] %v1219
    %1221 = vst [vmem:[%s1201 + $0x1c] sm:$0xf] %v610
    %v1222 = vld [vmem:[%s1201 + $0x20] sm:$0x1]
    %v1223 = vsel %vm84, %v611, %v1222
    %1224 = vst [vmem:[%s1201 + $0x20] sm:$0x1] %v1223
    %v1225 = vld [vmem:[%s1201 + $0x24] sm:$0xf]
    %v1226 = vsel %vm1203, %v618, %v1225
    %1227 = vst [vmem:[%s1201 + $0x24] sm:$0xf] %v1226
    %1228 = vst [vmem:[%s1201 + $0x28] sm:$0xf] %v627
    %v1229 = vld [vmem:[%s1201 + $0x2c] sm:$0x1]
    %v1230 = vsel %vm84, %v628, %v1229
    %1231 = vst [vmem:[%s1201 + $0x2c] sm:$0x1] %v1230
    %v1232 = vld [vmem:[%s1201 + $0x30] sm:$0xf]
    %v1233 = vsel %vm1203, %v635, %v1232
    %1234 = vst [vmem:[%s1201 + $0x30] sm:$0xf] %v1233
    %1235 = vst [vmem:[%s1201 + $0x34] sm:$0xf] %v644
    %v1236 = vld [vmem:[%s1201 + $0x38] sm:$0x1]
    %v1237 = vsel %vm84, %v645, %v1236
    %1238 = vst [vmem:[%s1201 + $0x38] sm:$0x1] %v1237
    %v1239 = vld [vmem:[%s1201 + $0x3c] sm:$0xf]
    %v1240 = vsel %vm1203, %v652, %v1239
    %1241 = vst [vmem:[%s1201 + $0x3c] sm:$0xf] %v1240
    %1242 = vst [vmem:[%s1201 + $0x40] sm:$0xf] %v661
    %v1243 = vld [vmem:[%s1201 + $0x44] sm:$0x1]
    %v1244 = vsel %vm84, %v662, %v1243
    %1245 = vst [vmem:[%s1201 + $0x44] sm:$0x1] %v1244
    %v1246 = vld [vmem:[%s1201 + $0x48] sm:$0xf]
    %v1247 = vsel %vm1203, %v669, %v1246
    %1248 = vst [vmem:[%s1201 + $0x48] sm:$0xf] %v1247
    %1249 = vst [vmem:[%s1201 + $0x4c] sm:$0xf] %v678
    %v1250 = vld [vmem:[%s1201 + $0x50] sm:$0x1]
    %v1251 = vsel %vm84, %v679, %v1250
    %1252 = vst [vmem:[%s1201 + $0x50] sm:$0x1] %v1251
    %v1253 = vld [vmem:[%s1201 + $0x54] sm:$0xf]
    %v1254 = vsel %vm1203, %v686, %v1253
    %1255 = vst [vmem:[%s1201 + $0x54] sm:$0xf] %v1254
    %1256 = vst [vmem:[%s1201 + $0x58] sm:$0xf] %v695
    %v1257 = vld [vmem:[%s1201 + $0x5c] sm:$0x1]
    %v1258 = vsel %vm84, %v696, %v1257
    %1259 = vst [vmem:[%s1201 + $0x5c] sm:$0x1] %v1258
    %v1260 = vld [vmem:[%s1201 + $0x60] sm:$0xf]
    %v1261 = vsel %vm1203, %v703, %v1260
    %1262 = vst [vmem:[%s1201 + $0x60] sm:$0xf] %v1261
    %1263 = vst [vmem:[%s1201 + $0x64] sm:$0xf] %v712
    %v1264 = vld [vmem:[%s1201 + $0x68] sm:$0x1]
    %v1265 = vsel %vm84, %v713, %v1264
    %1266 = vst [vmem:[%s1201 + $0x68] sm:$0x1] %v1265
    %v1267 = vld [vmem:[%s1201 + $0x6c] sm:$0xf]
    %v1268 = vsel %vm1203, %v720, %v1267
    %1269 = vst [vmem:[%s1201 + $0x6c] sm:$0xf] %v1268
    %1270 = vst [vmem:[%s1201 + $0x70] sm:$0xf] %v729
    %v1271 = vld [vmem:[%s1201 + $0x74] sm:$0x1]
    %v1272 = vsel %vm84, %v730, %v1271
    %1273 = vst [vmem:[%s1201 + $0x74] sm:$0x1] %v1272
    %v1274 = vld [vmem:[%s1201 + $0x78] sm:$0xf]
    %v1275 = vsel %vm1203, %v737, %v1274
    %1276 = vst [vmem:[%s1201 + $0x78] sm:$0xf] %v1275
    %1277 = vst [vmem:[%s1201 + $0x7c] sm:$0xf] %v746
    %v1278 = vld [vmem:[%s1201 + $0x80] sm:$0x1]
    %v1279 = vsel %vm84, %v747, %v1278
    %1280 = vst [vmem:[%s1201 + $0x80] sm:$0x1] %v1279
    %v1281 = vld [vmem:[%s1201 + $0x84] sm:$0xf]
    %v1282 = vsel %vm1203, %v754, %v1281
    %1283 = vst [vmem:[%s1201 + $0x84] sm:$0xf] %v1282
    %1284 = vst [vmem:[%s1201 + $0x88] sm:$0xf] %v763
    %v1285 = vld [vmem:[%s1201 + $0x8c] sm:$0x1]
    %v1286 = vsel %vm84, %v764, %v1285
    %1287 = vst [vmem:[%s1201 + $0x8c] sm:$0x1] %v1286
    %v1288 = vld [vmem:[%s1201 + $0x90] sm:$0xf]
    %v1289 = vsel %vm1203, %v771, %v1288
    %1290 = vst [vmem:[%s1201 + $0x90] sm:$0xf] %v1289
    %1291 = vst [vmem:[%s1201 + $0x94] sm:$0xf] %v780
    %v1292 = vld [vmem:[%s1201 + $0x98] sm:$0x1]
    %v1293 = vsel %vm84, %v781, %v1292
    %1294 = vst [vmem:[%s1201 + $0x98] sm:$0x1] %v1293
    %v1295 = vld [vmem:[%s1201 + $0x9c] sm:$0xf]
    %v1296 = vsel %vm1203, %v788, %v1295
    %1297 = vst [vmem:[%s1201 + $0x9c] sm:$0xf] %v1296
    %1298 = vst [vmem:[%s1201 + $0xa0] sm:$0xf] %v797
    %v1299 = vld [vmem:[%s1201 + $0xa4] sm:$0x1]
    %v1300 = vsel %vm84, %v798, %v1299
    %1301 = vst [vmem:[%s1201 + $0xa4] sm:$0x1] %v1300
    %v1302 = vld [vmem:[%s1201 + $0xa8] sm:$0xf]
    %v1303 = vsel %vm1203, %v805, %v1302
    %1304 = vst [vmem:[%s1201 + $0xa8] sm:$0xf] %v1303
    %1305 = vst [vmem:[%s1201 + $0xac] sm:$0xf] %v814
    %v1306 = vld [vmem:[%s1201 + $0xb0] sm:$0x1]
    %v1307 = vsel %vm84, %v815, %v1306
    %1308 = vst [vmem:[%s1201 + $0xb0] sm:$0x1] %v1307
    %v1309 = vld [vmem:[%s1201 + $0xb4] sm:$0xf]
    %v1310 = vsel %vm1203, %v822, %v1309
    %1311 = vst [vmem:[%s1201 + $0xb4] sm:$0xf] %v1310
    %1312 = vst [vmem:[%s1201 + $0xb8] sm:$0xf] %v831
    %v1313 = vld [vmem:[%s1201 + $0xbc] sm:$0x1]
    %v1314 = vsel %vm84, %v832, %v1313
    %1315 = vst [vmem:[%s1201 + $0xbc] sm:$0x1] %v1314
    %v1316 = vld [vmem:[%s1201 + $0xd8] sm:$0xf]
    %v1317 = vsel %vm1203, %v839, %v1316
    %1318 = vst [vmem:[%s1201 + $0xd8] sm:$0xf] %v1317
    %1319 = vst [vmem:[%s1201 + $0xdc] sm:$0xf] %v848
    %v1320 = vld [vmem:[%s1201 + $0xe0] sm:$0x1]
    %v1321 = vsel %vm84, %v849, %v1320
    %1322 = vst [vmem:[%s1201 + $0xe0] sm:$0x1] %v1321
    %v1323 = vld [vmem:[%s1201 + $0xe4] sm:$0xf]
    %v1324 = vsel %vm1203, %v856, %v1323
    %1325 = vst [vmem:[%s1201 + $0xe4] sm:$0xf] %v1324
    %1326 = vst [vmem:[%s1201 + $0xe8] sm:$0xf] %v865
    %v1327 = vld [vmem:[%s1201 + $0xec] sm:$0x1]
    %v1328 = vsel %vm84, %v866, %v1327
    %1329 = vst [vmem:[%s1201 + $0xec] sm:$0x1] %v1328
    %v1330 = vld [vmem:[%s1201 + $0xf0] sm:$0xf]
    %v1331 = vsel %vm1203, %v873, %v1330
    %1332 = vst [vmem:[%s1201 + $0xf0] sm:$0xf] %v1331
    %1333 = vst [vmem:[%s1201 + $0xf4] sm:$0xf] %v882
    %v1334 = vld [vmem:[%s1201 + $0xf8] sm:$0x1]
    %v1335 = vsel %vm84, %v883, %v1334
    %1336 = vst [vmem:[%s1201 + $0xf8] sm:$0x1] %v1335
    %v1337 = vld [vmem:[%s1201 + $0xfc] sm:$0xf]
    %v1338 = vsel %vm1203, %v890, %v1337
    %1339 = vst [vmem:[%s1201 + $0xfc] sm:$0xf] %v1338
    %1340 = vst [vmem:[%s1201 + $0x100] sm:$0xf] %v899
    %v1341 = vld [vmem:[%s1201 + $0x104] sm:$0x1]
    %v1342 = vsel %vm84, %v900, %v1341
    %1343 = vst [vmem:[%s1201 + $0x104] sm:$0x1] %v1342
    %v1344 = vld [vmem:[%s1201 + $0x108] sm:$0xf]
    %v1345 = vsel %vm1203, %v907, %v1344
    %1346 = vst [vmem:[%s1201 + $0x108] sm:$0xf] %v1345
    %1347 = vst [vmem:[%s1201 + $0x10c] sm:$0xf] %v916
    %v1348 = vld [vmem:[%s1201 + $0x110] sm:$0x1]
    %v1349 = vsel %vm84, %v917, %v1348
    %1350 = vst [vmem:[%s1201 + $0x110] sm:$0x1] %v1349
    %v1351 = vld [vmem:[%s1201 + $0x114] sm:$0xf]
    %v1352 = vsel %vm1203, %v924, %v1351
    %1353 = vst [vmem:[%s1201 + $0x114] sm:$0xf] %v1352
    %1354 = vst [vmem:[%s1201 + $0x118] sm:$0xf] %v933
    %v1355 = vld [vmem:[%s1201 + $0x11c] sm:$0x1]
    %v1356 = vsel %vm84, %v934, %v1355
    %1357 = vst [vmem:[%s1201 + $0x11c] sm:$0x1] %v1356
    %v1358 = vld [vmem:[%s1201 + $0x120] sm:$0xf]
    %v1359 = vsel %vm1203, %v941, %v1358
    %1360 = vst [vmem:[%s1201 + $0x120] sm:$0xf] %v1359
    %1361 = vst [vmem:[%s1201 + $0x124] sm:$0xf] %v950
    %v1362 = vld [vmem:[%s1201 + $0x128] sm:$0x1]
    %v1363 = vsel %vm84, %v951, %v1362
    %1364 = vst [vmem:[%s1201 + $0x128] sm:$0x1] %v1363
    %v1365 = vld [vmem:[%s1201 + $0x12c] sm:$0xf]
    %v1366 = vsel %vm1203, %v958, %v1365
    %1367 = vst [vmem:[%s1201 + $0x12c] sm:$0xf] %v1366
    %1368 = vst [vmem:[%s1201 + $0x130] sm:$0xf] %v967
    %v1369 = vld [vmem:[%s1201 + $0x134] sm:$0x1]
    %v1370 = vsel %vm84, %v968, %v1369
    %1371 = vst [vmem:[%s1201 + $0x134] sm:$0x1] %v1370
    %v1372 = vld [vmem:[%s1201 + $0x138] sm:$0xf]
    %v1373 = vsel %vm1203, %v975, %v1372
    %1374 = vst [vmem:[%s1201 + $0x138] sm:$0xf] %v1373
    %1375 = vst [vmem:[%s1201 + $0x13c] sm:$0xf] %v984
    %v1376 = vld [vmem:[%s1201 + $0x140] sm:$0x1]
    %v1377 = vsel %vm84, %v985, %v1376
    %1378 = vst [vmem:[%s1201 + $0x140] sm:$0x1] %v1377
    %v1379 = vld [vmem:[%s1201 + $0x144] sm:$0xf]
    %v1380 = vsel %vm1203, %v992, %v1379
    %1381 = vst [vmem:[%s1201 + $0x144] sm:$0xf] %v1380
    %1382 = vst [vmem:[%s1201 + $0x148] sm:$0xf] %v1001
    %v1383 = vld [vmem:[%s1201 + $0x14c] sm:$0x1]
    %v1384 = vsel %vm84, %v1002, %v1383
    %1385 = vst [vmem:[%s1201 + $0x14c] sm:$0x1] %v1384
    %v1386 = vld [vmem:[%s1201 + $0x150] sm:$0xf]
    %v1387 = vsel %vm1203, %v1009, %v1386
    %1388 = vst [vmem:[%s1201 + $0x150] sm:$0xf] %v1387
    %1389 = vst [vmem:[%s1201 + $0x154] sm:$0xf] %v1018
    %v1390 = vld [vmem:[%s1201 + $0x158] sm:$0x1]
    %v1391 = vsel %vm84, %v1019, %v1390
    %1392 = vst [vmem:[%s1201 + $0x158] sm:$0x1] %v1391
    %v1393 = vld [vmem:[%s1201 + $0x15c] sm:$0xf]
    %v1394 = vsel %vm1203, %v1026, %v1393
    %1395 = vst [vmem:[%s1201 + $0x15c] sm:$0xf] %v1394
    %1396 = vst [vmem:[%s1201 + $0x160] sm:$0xf] %v1035
    %v1397 = vld [vmem:[%s1201 + $0x164] sm:$0x1]
    %v1398 = vsel %vm84, %v1036, %v1397
    %1399 = vst [vmem:[%s1201 + $0x164] sm:$0x1] %v1398
    %v1400 = vld [vmem:[%s1201 + $0x168] sm:$0xf]
    %v1401 = vsel %vm1203, %v1043, %v1400
    %1402 = vst [vmem:[%s1201 + $0x168] sm:$0xf] %v1401
    %1403 = vst [vmem:[%s1201 + $0x16c] sm:$0xf] %v1052
    %v1404 = vld [vmem:[%s1201 + $0x170] sm:$0x1]
    %v1405 = vsel %vm84, %v1053, %v1404
    %1406 = vst [vmem:[%s1201 + $0x170] sm:$0x1] %v1405
    %v1407 = vld [vmem:[%s1201 + $0x174] sm:$0xf]
    %v1408 = vsel %vm1203, %v1060, %v1407
    %1409 = vst [vmem:[%s1201 + $0x174] sm:$0xf] %v1408
    %1410 = vst [vmem:[%s1201 + $0x178] sm:$0xf] %v1069
    %v1411 = vld [vmem:[%s1201 + $0x17c] sm:$0x1]
    %v1412 = vsel %vm84, %v1070, %v1411
    %1413 = vst [vmem:[%s1201 + $0x17c] sm:$0x1] %v1412
    %v1414 = vld [vmem:[%s1201 + $0x180] sm:$0xf]
    %v1415 = vsel %vm1203, %v1077, %v1414
    %1416 = vst [vmem:[%s1201 + $0x180] sm:$0xf] %v1415
    %1417 = vst [vmem:[%s1201 + $0x184] sm:$0xf] %v1086
    %v1418 = vld [vmem:[%s1201 + $0x188] sm:$0x1]
    %v1419 = vsel %vm84, %v1087, %v1418
    %1420 = vst [vmem:[%s1201 + $0x188] sm:$0x1] %v1419
    %v1421 = vld [vmem:[%s1201 + $0x18c] sm:$0xf]
    %v1422 = vsel %vm1203, %v1094, %v1421
    %1423 = vst [vmem:[%s1201 + $0x18c] sm:$0xf] %v1422
    %1424 = vst [vmem:[%s1201 + $0x190] sm:$0xf] %v1103
    %v1425 = vld [vmem:[%s1201 + $0x194] sm:$0x1]
    %v1426 = vsel %vm84, %v1104, %v1425
    %1427 = vst [vmem:[%s1201 + $0x194] sm:$0x1] %v1426
    %v1428 = vld [vmem:[#allocation2] sm:$0xf]
    %v1429 = vld [vmem:[#allocation2 + $0x4] sm:$0xf]
    %v1430 = vld [vmem:[#allocation2 + $0xc] sm:$0xf]
    %v1431 = vld [vmem:[#allocation2 + $0x10] sm:$0xf]
    %v1432 = vld [vmem:[#allocation2 + $0x18] sm:$0xf]
    %v1433 = vld [vmem:[#allocation2 + $0x1c] sm:$0xf]
    %v1434 = vld [vmem:[#allocation2 + $0x24] sm:$0xf]
    %v1435 = vld [vmem:[#allocation2 + $0x28] sm:$0xf]
    %v1436 = vld [vmem:[#allocation2 + $0x30] sm:$0xf]
    %v1437 = vld [vmem:[#allocation2 + $0x34] sm:$0xf]
    %v1438 = vld [vmem:[#allocation2 + $0x3c] sm:$0xf]
    %v1439 = vld [vmem:[#allocation2 + $0x40] sm:$0xf]
    %v1440 = vld [vmem:[#allocation2 + $0x48] sm:$0xf]
    %v1441 = vld [vmem:[#allocation2 + $0x4c] sm:$0xf]
    %v1442 = vld [vmem:[#allocation2 + $0x54] sm:$0xf]
    %v1443 = vld [vmem:[#allocation2 + $0x58] sm:$0xf]
    %v1444 = vld [vmem:[#allocation2 + $0x60] sm:$0xf]
    %v1445 = vld [vmem:[#allocation2 + $0x64] sm:$0xf]
    %v1446 = vld [vmem:[#allocation2 + $0x6c] sm:$0xf]
    %v1447 = vld [vmem:[#allocation2 + $0x70] sm:$0xf]
    %v1448 = vld [vmem:[#allocation2 + $0x78] sm:$0xf]
    %v1449 = vld [vmem:[#allocation2 + $0x7c] sm:$0xf]
    %v1450 = vld [vmem:[#allocation2 + $0x84] sm:$0xf]
    %v1451 = vld [vmem:[#allocation2 + $0x88] sm:$0xf]
    %v1452 = vld [vmem:[#allocation2 + $0x90] sm:$0xf]
    %v1453 = vld [vmem:[#allocation2 + $0x94] sm:$0xf]
    %v1454 = vld [vmem:[#allocation2 + $0x9c] sm:$0xf]
    %v1455 = vld [vmem:[#allocation2 + $0xa0] sm:$0xf]
    %v1456 = vld [vmem:[#allocation2 + $0xa8] sm:$0xf]
    %v1457 = vld [vmem:[#allocation2 + $0xac] sm:$0xf]
    %v1458 = vld [vmem:[#allocation2 + $0xb4] sm:$0xf]
    %v1459 = vld [vmem:[#allocation2 + $0xb8] sm:$0xf]
    %v1460 = vld [vmem:[#allocation2 + $0xc0] sm:$0xf]
    %v1461 = vld [vmem:[#allocation2 + $0xc4] sm:$0xf]
    %v1462 = vld [vmem:[#allocation2 + $0xcc] sm:$0xf]
    %v1463 = vld [vmem:[#allocation2 + $0xd0] sm:$0xf]
    %v1464 = vld [vmem:[#allocation2 + $0xd8] sm:$0xf]
    %v1465 = vld [vmem:[#allocation2 + $0xdc] sm:$0xf]
    %v1466 = vld [vmem:[#allocation2 + $0xe4] sm:$0xf]
    %v1467 = vld [vmem:[#allocation2 + $0xe8] sm:$0xf]
    %v1468 = vld [vmem:[#allocation2 + $0xf0] sm:$0xf]
    %v1469 = vld [vmem:[#allocation2 + $0xf4] sm:$0xf]
    %v1470 = vld [vmem:[#allocation2 + $0xfc] sm:$0xf]
    %v1471 = vld [vmem:[#allocation2 + $0x100] sm:$0xf]
    %v1472 = vld [vmem:[#allocation2 + $0x108] sm:$0xf]
    %v1473 = vld [vmem:[#allocation2 + $0x10c] sm:$0xf]
    %v1474 = vld [vmem:[#allocation2 + $0x114] sm:$0xf]
    %v1475 = vld [vmem:[#allocation2 + $0x118] sm:$0xf]
    %v1476 = vld [vmem:[#allocation2 + $0x120] sm:$0xf]
    %v1477 = vld [vmem:[#allocation2 + $0x124] sm:$0xf]
    %v1478 = vld [vmem:[#allocation2 + $0x12c] sm:$0xf]
    %v1479 = vld [vmem:[#allocation2 + $0x130] sm:$0xf]
    %v1480 = vld [vmem:[#allocation2 + $0x138] sm:$0xf]
    %v1481 = vld [vmem:[#allocation2 + $0x13c] sm:$0xf]
    %v1482 = vld [vmem:[#allocation2 + $0x144] sm:$0xf]
    %v1483 = vld [vmem:[#allocation2 + $0x148] sm:$0xf]
    %v1484 = vld [vmem:[#allocation2 + $0x150] sm:$0xf]
    %v1485 = vld [vmem:[#allocation2 + $0x154] sm:$0xf]
    %v1486 = vld [vmem:[#allocation2 + $0x15c] sm:$0xf]
    %v1487 = vld [vmem:[#allocation2 + $0x160] sm:$0xf]
    %v1488 = vld [vmem:[#allocation2 + $0x168] sm:$0xf]
    %v1489 = vld [vmem:[#allocation2 + $0x16c] sm:$0xf]
    %v1490 = vld [vmem:[#allocation2 + $0x174] sm:$0xf]
    %v1491 = vld [vmem:[#allocation2 + $0x178] sm:$0xf]
    %v1492 = vld [vmem:[#allocation2 + $0x180] sm:$0xf]
    %v1493 = vld [vmem:[#allocation2 + $0x184] sm:$0xf]
    %v1494 = vld [vmem:[#allocation2 + $0x18c] sm:$0xf]
    %v1495 = vld [vmem:[#allocation2 + $0x190] sm:$0xf]
    %v1496 = vld [vmem:[#allocation2 + $0x198] sm:$0xf]
    %v1497 = vld [vmem:[#allocation2 + $0x19c] sm:$0xf]
    %v1498 = vld [vmem:[#allocation2 + $0x1a4] sm:$0xf]
    %v1499 = vld [vmem:[#allocation2 + $0x1a8] sm:$0xf]
    %v1500 = vld [vmem:[#allocation2 + $0x8] sm:$0x1]
    %v1501 = vld [vmem:[#allocation2 + $0x14] sm:$0x1]
    %v1502 = vld [vmem:[#allocation2 + $0x20] sm:$0x1]
    %v1503 = vld [vmem:[#allocation2 + $0x2c] sm:$0x1]
    %v1504 = vld [vmem:[#allocation2 + $0x38] sm:$0x1]
    %v1505 = vld [vmem:[#allocation2 + $0x44] sm:$0x1]
    %v1506 = vld [vmem:[#allocation2 + $0x50] sm:$0x1]
    %v1507 = vld [vmem:[#allocation2 + $0x5c] sm:$0x1]
    %v1508 = vld [vmem:[#allocation2 + $0x68] sm:$0x1]
    %v1509 = vld [vmem:[#allocation2 + $0x74] sm:$0x1]
    %v1510 = vld [vmem:[#allocation2 + $0x80] sm:$0x1]
    %v1511 = vld [vmem:[#allocation2 + $0x8c] sm:$0x1]
    %v1512 = vld [vmem:[#allocation2 + $0x98] sm:$0x1]
    %v1513 = vld [vmem:[#allocation2 + $0xa4] sm:$0x1]
    %v1514 = vld [vmem:[#allocation2 + $0xb0] sm:$0x1]
    %v1515 = vld [vmem:[#allocation2 + $0xbc] sm:$0x1]
    %v1516 = vld [vmem:[#allocation2 + $0xc8] sm:$0x1]
    %v1517 = vld [vmem:[#allocation2 + $0xd4] sm:$0x1]
    %v1518 = vld [vmem:[#allocation2 + $0xe0] sm:$0x1]
    %v1519 = vld [vmem:[#allocation2 + $0xec] sm:$0x1]
    %v1520 = vld [vmem:[#allocation2 + $0xf8] sm:$0x1]
    %v1521 = vld [vmem:[#allocation2 + $0x104] sm:$0x1]
    %v1522 = vld [vmem:[#allocation2 + $0x110] sm:$0x1]
    %v1523 = vld [vmem:[#allocation2 + $0x11c] sm:$0x1]
    %v1524 = vld [vmem:[#allocation2 + $0x128] sm:$0x1]
    %v1525 = vld [vmem:[#allocation2 + $0x134] sm:$0x1]
    %v1526 = vld [vmem:[#allocation2 + $0x140] sm:$0x1]
    %v1527 = vld [vmem:[#allocation2 + $0x14c] sm:$0x1]
    %v1528 = vld [vmem:[#allocation2 + $0x158] sm:$0x1]
    %v1529 = vld [vmem:[#allocation2 + $0x164] sm:$0x1]
    %v1530 = vld [vmem:[#allocation2 + $0x170] sm:$0x1]
    %v1531 = vld [vmem:[#allocation2 + $0x17c] sm:$0x1]
    %v1532 = vld [vmem:[#allocation2 + $0x188] sm:$0x1]
    %v1533 = vld [vmem:[#allocation2 + $0x194] sm:$0x1]
    %v1534 = vld [vmem:[#allocation2 + $0x1a0] sm:$0x1]
    %v1535 = vld [vmem:[#allocation2 + $0x1ac] sm:$0x1]
    %vm1536 = vsmask.f32 3328
    %vm1537 = vsmask.f32 7440
    %vm1538 = vmor %vm1536, %vm1537
    %v1540 = vshrl.u32 %v1428, 16
    %v1542 = vrot.slane %v1540, 4
    %v1543 = vshll.u32 %v1428, 16
    %v1545 = vrot.slane %v1543, 5
    %v1546 = vor.u32 %v1542, %v1545
    %v1547 = vrot.slane %v1546, 4
    %v1549 = vshll.u32 %v1429, 16
    %v1551 = vrot.slane %v1549, 5
    %v1552 = vsel %vm1538, %v1547, %v1551
    %v1553 = vshrl.u32 %v1429, 16
    %v1555 = vrot.slane %v1553, 4
    %v1556 = vor.u32 %v1555, %v1551
    %v1557 = vrot.slane %v1556, 4
    %v1559 = vshll.u32 %v1500, 16
    %v1561 = vrot.slane %v1559, 5
    %v1562 = vsel %vm1538, %v1557, %v1561
    %v1564 = vshrl.u32 %v1430, 16
    %v1566 = vrot.slane %v1564, 4
    %v1567 = vshll.u32 %v1430, 16
    %v1569 = vrot.slane %v1567, 5
    %v1570 = vor.u32 %v1566, %v1569
    %v1571 = vrot.slane %v1570, 4
    %v1573 = vshll.u32 %v1431, 16
    %v1575 = vrot.slane %v1573, 5
    %v1576 = vsel %vm1538, %v1571, %v1575
    %v1577 = vshrl.u32 %v1431, 16
    %v1579 = vrot.slane %v1577, 4
    %v1580 = vor.u32 %v1579, %v1575
    %v1581 = vrot.slane %v1580, 4
    %v1583 = vshll.u32 %v1501, 16
    %v1585 = vrot.slane %v1583, 5
    %v1586 = vsel %vm1538, %v1581, %v1585
    %v1588 = vshrl.u32 %v1432, 16
    %v1590 = vrot.slane %v1588, 4
    %v1591 = vshll.u32 %v1432, 16
    %v1593 = vrot.slane %v1591, 5
    %v1594 = vor.u32 %v1590, %v1593
    %v1595 = vrot.slane %v1594, 4
    %v1597 = vshll.u32 %v1433, 16
    %v1599 = vrot.slane %v1597, 5
    %v1600 = vsel %vm1538, %v1595, %v1599
    %v1601 = vshrl.u32 %v1433, 16
    %v1603 = vrot.slane %v1601, 4
    %v1604 = vor.u32 %v1603, %v1599
    %v1605 = vrot.slane %v1604, 4
    %v1607 = vshll.u32 %v1502, 16
    %v1609 = vrot.slane %v1607, 5
    %v1610 = vsel %vm1538, %v1605, %v1609
    %v1612 = vshrl.u32 %v1434, 16
    %v1614 = vrot.slane %v1612, 4
    %v1615 = vshll.u32 %v1434, 16
    %v1617 = vrot.slane %v1615, 5
    %v1618 = vor.u32 %v1614, %v1617
    %v1619 = vrot.slane %v1618, 4
    %v1621 = vshll.u32 %v1435, 16
    %v1623 = vrot.slane %v1621, 5
    %v1624 = vsel %vm1538, %v1619, %v1623
    %v1625 = vshrl.u32 %v1435, 16
    %v1627 = vrot.slane %v1625, 4
    %v1628 = vor.u32 %v1627, %v1623
    %v1629 = vrot.slane %v1628, 4
    %v1631 = vshll.u32 %v1503, 16
    %v1633 = vrot.slane %v1631, 5
    %v1634 = vsel %vm1538, %v1629, %v1633
    %v1636 = vshrl.u32 %v1436, 16
    %v1638 = vrot.slane %v1636, 4
    %v1639 = vshll.u32 %v1436, 16
    %v1641 = vrot.slane %v1639, 5
    %v1642 = vor.u32 %v1638, %v1641
    %v1643 = vrot.slane %v1642, 4
    %v1645 = vshll.u32 %v1437, 16
    %v1647 = vrot.slane %v1645, 5
    %v1648 = vsel %vm1538, %v1643, %v1647
    %v1649 = vshrl.u32 %v1437, 16
    %v1651 = vrot.slane %v1649, 4
    %v1652 = vor.u32 %v1651, %v1647
    %v1653 = vrot.slane %v1652, 4
    %v1655 = vshll.u32 %v1504, 16
    %v1657 = vrot.slane %v1655, 5
    %v1658 = vsel %vm1538, %v1653, %v1657
    %v1660 = vshrl.u32 %v1438, 16
    %v1662 = vrot.slane %v1660, 4
    %v1663 = vshll.u32 %v1438, 16
    %v1665 = vrot.slane %v1663, 5
    %v1666 = vor.u32 %v1662, %v1665
    %v1667 = vrot.slane %v1666, 4
    %v1669 = vshll.u32 %v1439, 16
    %v1671 = vrot.slane %v1669, 5
    %v1672 = vsel %vm1538, %v1667, %v1671
    %v1673 = vshrl.u32 %v1439, 16
    %v1675 = vrot.slane %v1673, 4
    %v1676 = vor.u32 %v1675, %v1671
    %v1677 = vrot.slane %v1676, 4
    %v1679 = vshll.u32 %v1505, 16
    %v1681 = vrot.slane %v1679, 5
    %v1682 = vsel %vm1538, %v1677, %v1681
    %v1684 = vshrl.u32 %v1440, 16
    %v1686 = vrot.slane %v1684, 4
    %v1687 = vshll.u32 %v1440, 16
    %v1689 = vrot.slane %v1687, 5
    %v1690 = vor.u32 %v1686, %v1689
    %v1691 = vrot.slane %v1690, 4
    %v1693 = vshll.u32 %v1441, 16
    %v1695 = vrot.slane %v1693, 5
    %v1696 = vsel %vm1538, %v1691, %v1695
    %v1697 = vshrl.u32 %v1441, 16
    %v1699 = vrot.slane %v1697, 4
    %v1700 = vor.u32 %v1699, %v1695
    %v1701 = vrot.slane %v1700, 4
    %v1703 = vshll.u32 %v1506, 16
    %v1705 = vrot.slane %v1703, 5
    %v1706 = vsel %vm1538, %v1701, %v1705
    %v1708 = vshrl.u32 %v1442, 16
    %v1710 = vrot.slane %v1708, 4
    %v1711 = vshll.u32 %v1442, 16
    %v1713 = vrot.slane %v1711, 5
    %v1714 = vor.u32 %v1710, %v1713
    %v1715 = vrot.slane %v1714, 4
    %v1717 = vshll.u32 %v1443, 16
    %v1719 = vrot.slane %v1717, 5
    %v1720 = vsel %vm1538, %v1715, %v1719
    %v1721 = vshrl.u32 %v1443, 16
    %v1723 = vrot.slane %v1721, 4
    %v1724 = vor.u32 %v1723, %v1719
    %v1725 = vrot.slane %v1724, 4
    %v1727 = vshll.u32 %v1507, 16
    %v1729 = vrot.slane %v1727, 5
    %v1730 = vsel %vm1538, %v1725, %v1729
    %v1732 = vshrl.u32 %v1444, 16
    %v1734 = vrot.slane %v1732, 4
    %v1735 = vshll.u32 %v1444, 16
    %v1737 = vrot.slane %v1735, 5
    %v1738 = vor.u32 %v1734, %v1737
    %v1739 = vrot.slane %v1738, 4
    %v1741 = vshll.u32 %v1445, 16
    %v1743 = vrot.slane %v1741, 5
    %v1744 = vsel %vm1538, %v1739, %v1743
    %v1745 = vshrl.u32 %v1445, 16
    %v1747 = vrot.slane %v1745, 4
    %v1748 = vor.u32 %v1747, %v1743
    %v1749 = vrot.slane %v1748, 4
    %v1751 = vshll.u32 %v1508, 16
    %v1753 = vrot.slane %v1751, 5
    %v1754 = vsel %vm1538, %v1749, %v1753
    %v1756 = vshrl.u32 %v1446, 16
    %v1758 = vrot.slane %v1756, 4
    %v1759 = vshll.u32 %v1446, 16
    %v1761 = vrot.slane %v1759, 5
    %v1762 = vor.u32 %v1758, %v1761
    %v1763 = vrot.slane %v1762, 4
    %v1765 = vshll.u32 %v1447, 16
    %v1767 = vrot.slane %v1765, 5
    %v1768 = vsel %vm1538, %v1763, %v1767
    %v1769 = vshrl.u32 %v1447, 16
    %v1771 = vrot.slane %v1769, 4
    %v1772 = vor.u32 %v1771, %v1767
    %v1773 = vrot.slane %v1772, 4
    %v1775 = vshll.u32 %v1509, 16
    %v1777 = vrot.slane %v1775, 5
    %v1778 = vsel %vm1538, %v1773, %v1777
    %v1780 = vshrl.u32 %v1448, 16
    %v1782 = vrot.slane %v1780, 4
    %v1783 = vshll.u32 %v1448, 16
    %v1785 = vrot.slane %v1783, 5
    %v1786 = vor.u32 %v1782, %v1785
    %v1787 = vrot.slane %v1786, 4
    %v1789 = vshll.u32 %v1449, 16
    %v1791 = vrot.slane %v1789, 5
    %v1792 = vsel %vm1538, %v1787, %v1791
    %v1793 = vshrl.u32 %v1449, 16
    %v1795 = vrot.slane %v1793, 4
    %v1796 = vor.u32 %v1795, %v1791
    %v1797 = vrot.slane %v1796, 4
    %v1799 = vshll.u32 %v1510, 16
    %v1801 = vrot.slane %v1799, 5
    %v1802 = vsel %vm1538, %v1797, %v1801
    %v1804 = vshrl.u32 %v1450, 16
    %v1806 = vrot.slane %v1804, 4
    %v1807 = vshll.u32 %v1450, 16
    %v1809 = vrot.slane %v1807, 5
    %v1810 = vor.u32 %v1806, %v1809
    %v1811 = vrot.slane %v1810, 4
    %v1813 = vshll.u32 %v1451, 16
    %v1815 = vrot.slane %v1813, 5
    %v1816 = vsel %vm1538, %v1811, %v1815
    %v1817 = vshrl.u32 %v1451, 16
    %v1819 = vrot.slane %v1817, 4
    %v1820 = vor.u32 %v1819, %v1815
    %v1821 = vrot.slane %v1820, 4
    %v1823 = vshll.u32 %v1511, 16
    %v1825 = vrot.slane %v1823, 5
    %v1826 = vsel %vm1538, %v1821, %v1825
    %v1828 = vshrl.u32 %v1452, 16
    %v1830 = vrot.slane %v1828, 4
    %v1831 = vshll.u32 %v1452, 16
    %v1833 = vrot.slane %v1831, 5
    %v1834 = vor.u32 %v1830, %v1833
    %v1835 = vrot.slane %v1834, 4
    %v1837 = vshll.u32 %v1453, 16
    %v1839 = vrot.slane %v1837, 5
    %v1840 = vsel %vm1538, %v1835, %v1839
    %v1841 = vshrl.u32 %v1453, 16
    %v1843 = vrot.slane %v1841, 4
    %v1844 = vor.u32 %v1843, %v1839
    %v1845 = vrot.slane %v1844, 4
    %v1847 = vshll.u32 %v1512, 16
    %v1849 = vrot.slane %v1847, 5
    %v1850 = vsel %vm1538, %v1845, %v1849
    %v1852 = vshrl.u32 %v1454, 16
    %v1854 = vrot.slane %v1852, 4
    %v1855 = vshll.u32 %v1454, 16
    %v1857 = vrot.slane %v1855, 5
    %v1858 = vor.u32 %v1854, %v1857
    %v1859 = vrot.slane %v1858, 4
    %v1861 = vshll.u32 %v1455, 16
    %v1863 = vrot.slane %v1861, 5
    %v1864 = vsel %vm1538, %v1859, %v1863
    %v1865 = vshrl.u32 %v1455, 16
    %v1867 = vrot.slane %v1865, 4
    %v1868 = vor.u32 %v1867, %v1863
    %v1869 = vrot.slane %v1868, 4
    %v1871 = vshll.u32 %v1513, 16
    %v1873 = vrot.slane %v1871, 5
    %v1874 = vsel %vm1538, %v1869, %v1873
    %v1876 = vshrl.u32 %v1456, 16
    %v1878 = vrot.slane %v1876, 4
    %v1879 = vshll.u32 %v1456, 16
    %v1881 = vrot.slane %v1879, 5
    %v1882 = vor.u32 %v1878, %v1881
    %v1883 = vrot.slane %v1882, 4
    %v1885 = vshll.u32 %v1457, 16
    %v1887 = vrot.slane %v1885, 5
    %v1888 = vsel %vm1538, %v1883, %v1887
    %v1889 = vshrl.u32 %v1457, 16
    %v1891 = vrot.slane %v1889, 4
    %v1892 = vor.u32 %v1891, %v1887
    %v1893 = vrot.slane %v1892, 4
    %v1895 = vshll.u32 %v1514, 16
    %v1897 = vrot.slane %v1895, 5
    %v1898 = vsel %vm1538, %v1893, %v1897
    %v1900 = vshrl.u32 %v1458, 16
    %v1902 = vrot.slane %v1900, 4
    %v1903 = vshll.u32 %v1458, 16
    %v1905 = vrot.slane %v1903, 5
    %v1906 = vor.u32 %v1902, %v1905
    %v1907 = vrot.slane %v1906, 4
    %v1909 = vshll.u32 %v1459, 16
    %v1911 = vrot.slane %v1909, 5
    %v1912 = vsel %vm1538, %v1907, %v1911
    %v1913 = vshrl.u32 %v1459, 16
    %v1915 = vrot.slane %v1913, 4
    %v1916 = vor.u32 %v1915, %v1911
    %v1917 = vrot.slane %v1916, 4
    %v1919 = vshll.u32 %v1515, 16
    %v1921 = vrot.slane %v1919, 5
    %v1922 = vsel %vm1538, %v1917, %v1921
    %v1924 = vshrl.u32 %v1464, 16
    %v1926 = vrot.slane %v1924, 4
    %v1927 = vshll.u32 %v1464, 16
    %v1929 = vrot.slane %v1927, 5
    %v1930 = vor.u32 %v1926, %v1929
    %v1931 = vrot.slane %v1930, 4
    %v1933 = vshll.u32 %v1465, 16
    %v1935 = vrot.slane %v1933, 5
    %v1936 = vsel %vm1538, %v1931, %v1935
    %v1937 = vshrl.u32 %v1465, 16
    %v1939 = vrot.slane %v1937, 4
    %v1940 = vor.u32 %v1939, %v1935
    %v1941 = vrot.slane %v1940, 4
    %v1943 = vshll.u32 %v1518, 16
    %v1945 = vrot.slane %v1943, 5
    %v1946 = vsel %vm1538, %v1941, %v1945
    %v1948 = vshrl.u32 %v1466, 16
    %v1950 = vrot.slane %v1948, 4
    %v1951 = vshll.u32 %v1466, 16
    %v1953 = vrot.slane %v1951, 5
    %v1954 = vor.u32 %v1950, %v1953
    %v1955 = vrot.slane %v1954, 4
    %v1957 = vshll.u32 %v1467, 16
    %v1959 = vrot.slane %v1957, 5
    %v1960 = vsel %vm1538, %v1955, %v1959
    %v1961 = vshrl.u32 %v1467, 16
    %v1963 = vrot.slane %v1961, 4
    %v1964 = vor.u32 %v1963, %v1959
    %v1965 = vrot.slane %v1964, 4
    %v1967 = vshll.u32 %v1519, 16
    %v1969 = vrot.slane %v1967, 5
    %v1970 = vsel %vm1538, %v1965, %v1969
    %v1972 = vshrl.u32 %v1468, 16
    %v1974 = vrot.slane %v1972, 4
    %v1975 = vshll.u32 %v1468, 16
    %v1977 = vrot.slane %v1975, 5
    %v1978 = vor.u32 %v1974, %v1977
    %v1979 = vrot.slane %v1978, 4
    %v1981 = vshll.u32 %v1469, 16
    %v1983 = vrot.slane %v1981, 5
    %v1984 = vsel %vm1538, %v1979, %v1983
    %v1985 = vshrl.u32 %v1469, 16
    %v1987 = vrot.slane %v1985, 4
    %v1988 = vor.u32 %v1987, %v1983
    %v1989 = vrot.slane %v1988, 4
    %v1991 = vshll.u32 %v1520, 16
    %v1993 = vrot.slane %v1991, 5
    %v1994 = vsel %vm1538, %v1989, %v1993
    %v1996 = vshrl.u32 %v1470, 16
    %v1998 = vrot.slane %v1996, 4
    %v1999 = vshll.u32 %v1470, 16
    %v2001 = vrot.slane %v1999, 5
    %v2002 = vor.u32 %v1998, %v2001
    %v2003 = vrot.slane %v2002, 4
    %v2005 = vshll.u32 %v1471, 16
    %v2007 = vrot.slane %v2005, 5
    %v2008 = vsel %vm1538, %v2003, %v2007
    %v2009 = vshrl.u32 %v1471, 16
    %v2011 = vrot.slane %v2009, 4
    %v2012 = vor.u32 %v2011, %v2007
    %v2013 = vrot.slane %v2012, 4
    %v2015 = vshll.u32 %v1521, 16
    %v2017 = vrot.slane %v2015, 5
    %v2018 = vsel %vm1538, %v2013, %v2017
    %v2020 = vshrl.u32 %v1472, 16
    %v2022 = vrot.slane %v2020, 4
    %v2023 = vshll.u32 %v1472, 16
    %v2025 = vrot.slane %v2023, 5
    %v2026 = vor.u32 %v2022, %v2025
    %v2027 = vrot.slane %v2026, 4
    %v2029 = vshll.u32 %v1473, 16
    %v2031 = vrot.slane %v2029, 5
    %v2032 = vsel %vm1538, %v2027, %v2031
    %v2033 = vshrl.u32 %v1473, 16
    %v2035 = vrot.slane %v2033, 4
    %v2036 = vor.u32 %v2035, %v2031
    %v2037 = vrot.slane %v2036, 4
    %v2039 = vshll.u32 %v1522, 16
    %v2041 = vrot.slane %v2039, 5
    %v2042 = vsel %vm1538, %v2037, %v2041
    %v2044 = vshrl.u32 %v1474, 16
    %v2046 = vrot.slane %v2044, 4
    %v2047 = vshll.u32 %v1474, 16
    %v2049 = vrot.slane %v2047, 5
    %v2050 = vor.u32 %v2046, %v2049
    %v2051 = vrot.slane %v2050, 4
    %v2053 = vshll.u32 %v1475, 16
    %v2055 = vrot.slane %v2053, 5
    %v2056 = vsel %vm1538, %v2051, %v2055
    %v2057 = vshrl.u32 %v1475, 16
    %v2059 = vrot.slane %v2057, 4
    %v2060 = vor.u32 %v2059, %v2055
    %v2061 = vrot.slane %v2060, 4
    %v2063 = vshll.u32 %v1523, 16
    %v2065 = vrot.slane %v2063, 5
    %v2066 = vsel %vm1538, %v2061, %v2065
    %v2068 = vshrl.u32 %v1476, 16
    %v2070 = vrot.slane %v2068, 4
    %v2071 = vshll.u32 %v1476, 16
    %v2073 = vrot.slane %v2071, 5
    %v2074 = vor.u32 %v2070, %v2073
    %v2075 = vrot.slane %v2074, 4
    %v2077 = vshll.u32 %v1477, 16
    %v2079 = vrot.slane %v2077, 5
    %v2080 = vsel %vm1538, %v2075, %v2079
    %v2081 = vshrl.u32 %v1477, 16
    %v2083 = vrot.slane %v2081, 4
    %v2084 = vor.u32 %v2083, %v2079
    %v2085 = vrot.slane %v2084, 4
    %v2087 = vshll.u32 %v1524, 16
    %v2089 = vrot.slane %v2087, 5
    %v2090 = vsel %vm1538, %v2085, %v2089
    %v2092 = vshrl.u32 %v1478, 16
    %v2094 = vrot.slane %v2092, 4
    %v2095 = vshll.u32 %v1478, 16
    %v2097 = vrot.slane %v2095, 5
    %v2098 = vor.u32 %v2094, %v2097
    %v2099 = vrot.slane %v2098, 4
    %v2101 = vshll.u32 %v1479, 16
    %v2103 = vrot.slane %v2101, 5
    %v2104 = vsel %vm1538, %v2099, %v2103
    %v2105 = vshrl.u32 %v1479, 16
    %v2107 = vrot.slane %v2105, 4
    %v2108 = vor.u32 %v2107, %v2103
    %v2109 = vrot.slane %v2108, 4
    %v2111 = vshll.u32 %v1525, 16
    %v2113 = vrot.slane %v2111, 5
    %v2114 = vsel %vm1538, %v2109, %v2113
    %v2116 = vshrl.u32 %v1480, 16
    %v2118 = vrot.slane %v2116, 4
    %v2119 = vshll.u32 %v1480, 16
    %v2121 = vrot.slane %v2119, 5
    %v2122 = vor.u32 %v2118, %v2121
    %v2123 = vrot.slane %v2122, 4
    %v2125 = vshll.u32 %v1481, 16
    %v2127 = vrot.slane %v2125, 5
    %v2128 = vsel %vm1538, %v2123, %v2127
    %v2129 = vshrl.u32 %v1481, 16
    %v2131 = vrot.slane %v2129, 4
    %v2132 = vor.u32 %v2131, %v2127
    %v2133 = vrot.slane %v2132, 4
    %v2135 = vshll.u32 %v1526, 16
    %v2137 = vrot.slane %v2135, 5
    %v2138 = vsel %vm1538, %v2133, %v2137
    %v2140 = vshrl.u32 %v1482, 16
    %v2142 = vrot.slane %v2140, 4
    %v2143 = vshll.u32 %v1482, 16
    %v2145 = vrot.slane %v2143, 5
    %v2146 = vor.u32 %v2142, %v2145
    %v2147 = vrot.slane %v2146, 4
    %v2149 = vshll.u32 %v1483, 16
    %v2151 = vrot.slane %v2149, 5
    %v2152 = vsel %vm1538, %v2147, %v2151
    %v2153 = vshrl.u32 %v1483, 16
    %v2155 = vrot.slane %v2153, 4
    %v2156 = vor.u32 %v2155, %v2151
    %v2157 = vrot.slane %v2156, 4
    %v2159 = vshll.u32 %v1527, 16
    %v2161 = vrot.slane %v2159, 5
    %v2162 = vsel %vm1538, %v2157, %v2161
    %v2164 = vshrl.u32 %v1484, 16
    %v2166 = vrot.slane %v2164, 4
    %v2167 = vshll.u32 %v1484, 16
    %v2169 = vrot.slane %v2167, 5
    %v2170 = vor.u32 %v2166, %v2169
    %v2171 = vrot.slane %v2170, 4
    %v2173 = vshll.u32 %v1485, 16
    %v2175 = vrot.slane %v2173, 5
    %v2176 = vsel %vm1538, %v2171, %v2175
    %v2177 = vshrl.u32 %v1485, 16
    %v2179 = vrot.slane %v2177, 4
    %v2180 = vor.u32 %v2179, %v2175
    %v2181 = vrot.slane %v2180, 4
    %v2183 = vshll.u32 %v1528, 16
    %v2185 = vrot.slane %v2183, 5
    %v2186 = vsel %vm1538, %v2181, %v2185
    %v2188 = vshrl.u32 %v1486, 16
    %v2190 = vrot.slane %v2188, 4
    %v2191 = vshll.u32 %v1486, 16
    %v2193 = vrot.slane %v2191, 5
    %v2194 = vor.u32 %v2190, %v2193
    %v2195 = vrot.slane %v2194, 4
    %v2197 = vshll.u32 %v1487, 16
    %v2199 = vrot.slane %v2197, 5
    %v2200 = vsel %vm1538, %v2195, %v2199
    %v2201 = vshrl.u32 %v1487, 16
    %v2203 = vrot.slane %v2201, 4
    %v2204 = vor.u32 %v2203, %v2199
    %v2205 = vrot.slane %v2204, 4
    %v2207 = vshll.u32 %v1529, 16
    %v2209 = vrot.slane %v2207, 5
    %v2210 = vsel %vm1538, %v2205, %v2209
    %v2212 = vshrl.u32 %v1488, 16
    %v2214 = vrot.slane %v2212, 4
    %v2215 = vshll.u32 %v1488, 16
    %v2217 = vrot.slane %v2215, 5
    %v2218 = vor.u32 %v2214, %v2217
    %v2219 = vrot.slane %v2218, 4
    %v2221 = vshll.u32 %v1489, 16
    %v2223 = vrot.slane %v2221, 5
    %v2224 = vsel %vm1538, %v2219, %v2223
    %v2225 = vshrl.u32 %v1489, 16
    %v2227 = vrot.slane %v2225, 4
    %v2228 = vor.u32 %v2227, %v2223
    %v2229 = vrot.slane %v2228, 4
    %v2231 = vshll.u32 %v1530, 16
    %v2233 = vrot.slane %v2231, 5
    %v2234 = vsel %vm1538, %v2229, %v2233
    %v2236 = vshrl.u32 %v1490, 16
    %v2238 = vrot.slane %v2236, 4
    %v2239 = vshll.u32 %v1490, 16
    %v2241 = vrot.slane %v2239, 5
    %v2242 = vor.u32 %v2238, %v2241
    %v2243 = vrot.slane %v2242, 4
    %v2245 = vshll.u32 %v1491, 16
    %v2247 = vrot.slane %v2245, 5
    %v2248 = vsel %vm1538, %v2243, %v2247
    %v2249 = vshrl.u32 %v1491, 16
    %v2251 = vrot.slane %v2249, 4
    %v2252 = vor.u32 %v2251, %v2247
    %v2253 = vrot.slane %v2252, 4
    %v2255 = vshll.u32 %v1531, 16
    %v2257 = vrot.slane %v2255, 5
    %v2258 = vsel %vm1538, %v2253, %v2257
    %v2260 = vshrl.u32 %v1492, 16
    %v2262 = vrot.slane %v2260, 4
    %v2263 = vshll.u32 %v1492, 16
    %v2265 = vrot.slane %v2263, 5
    %v2266 = vor.u32 %v2262, %v2265
    %v2267 = vrot.slane %v2266, 4
    %v2269 = vshll.u32 %v1493, 16
    %v2271 = vrot.slane %v2269, 5
    %v2272 = vsel %vm1538, %v2267, %v2271
    %v2273 = vshrl.u32 %v1493, 16
    %v2275 = vrot.slane %v2273, 4
    %v2276 = vor.u32 %v2275, %v2271
    %v2277 = vrot.slane %v2276, 4
    %v2279 = vshll.u32 %v1532, 16
    %v2281 = vrot.slane %v2279, 5
    %v2282 = vsel %vm1538, %v2277, %v2281
    %v2284 = vshrl.u32 %v1494, 16
    %v2286 = vrot.slane %v2284, 4
    %v2287 = vshll.u32 %v1494, 16
    %v2289 = vrot.slane %v2287, 5
    %v2290 = vor.u32 %v2286, %v2289
    %v2291 = vrot.slane %v2290, 4
    %v2293 = vshll.u32 %v1495, 16
    %v2295 = vrot.slane %v2293, 5
    %v2296 = vsel %vm1538, %v2291, %v2295
    %v2297 = vshrl.u32 %v1495, 16
    %v2299 = vrot.slane %v2297, 4
    %v2300 = vor.u32 %v2299, %v2295
    %v2301 = vrot.slane %v2300, 4
    %v2303 = vshll.u32 %v1533, 16
    %v2305 = vrot.slane %v2303, 5
    %v2306 = vsel %vm1538, %v2301, %v2305
    %v2308 = vshrl.u32 %v1460, 16
    %v2310 = vrot.slane %v2308, 4
    %v2311 = vshll.u32 %v1460, 16
    %v2313 = vrot.slane %v2311, 5
    %v2314 = vor.u32 %v2310, %v2313
    %v2315 = vrot.slane %v2314, 4
    %v2317 = vshll.u32 %v1461, 16
    %v2319 = vrot.slane %v2317, 5
    %v2320 = vsel %vm1538, %v2315, %v2319
    %v2321 = vshrl.u32 %v1461, 16
    %v2323 = vrot.slane %v2321, 4
    %v2324 = vor.u32 %v2323, %v2319
    %v2325 = vrot.slane %v2324, 4
    %v2327 = vshll.u32 %v1516, 16
    %v2329 = vrot.slane %v2327, 5
    %v2330 = vsel %vm1538, %v2325, %v2329
    %v2332 = vshrl.u32 %v1496, 16
    %v2334 = vrot.slane %v2332, 4
    %v2335 = vshll.u32 %v1496, 16
    %v2337 = vrot.slane %v2335, 5
    %v2338 = vor.u32 %v2334, %v2337
    %v2339 = vrot.slane %v2338, 4
    %v2341 = vshll.u32 %v1497, 16
    %v2343 = vrot.slane %v2341, 5
    %v2344 = vsel %vm1538, %v2339, %v2343
    %v2345 = vshrl.u32 %v1497, 16
    %v2347 = vrot.slane %v2345, 4
    %v2348 = vor.u32 %v2347, %v2343
    %v2349 = vrot.slane %v2348, 4
    %v2351 = vshll.u32 %v1534, 16
    %v2353 = vrot.slane %v2351, 5
    %v2354 = vsel %vm1538, %v2349, %v2353
    %v2356 = vshrl.u32 %v1462, 16
    %v2358 = vrot.slane %v2356, 4
    %v2359 = vshll.u32 %v1462, 16
    %v2361 = vrot.slane %v2359, 5
    %v2362 = vor.u32 %v2358, %v2361
    %v2363 = vrot.slane %v2362, 4
    %v2365 = vshll.u32 %v1463, 16
    %v2367 = vrot.slane %v2365, 5
    %v2368 = vsel %vm1538, %v2363, %v2367
    %v2369 = vshrl.u32 %v1463, 16
    %v2371 = vrot.slane %v2369, 4
    %v2372 = vor.u32 %v2371, %v2367
    %v2373 = vrot.slane %v2372, 4
    %v2375 = vshll.u32 %v1517, 16
    %v2377 = vrot.slane %v2375, 5
    %v2378 = vsel %vm1538, %v2373, %v2377
    %v2380 = vshrl.u32 %v1498, 16
    %v2382 = vrot.slane %v2380, 4
    %v2383 = vshll.u32 %v1498, 16
    %v2385 = vrot.slane %v2383, 5
    %v2386 = vor.u32 %v2382, %v2385
    %v2387 = vrot.slane %v2386, 4
    %v2389 = vshll.u32 %v1499, 16
    %v2391 = vrot.slane %v2389, 5
    %v2392 = vsel %vm1538, %v2387, %v2391
    %v2393 = vshrl.u32 %v1499, 16
    %v2395 = vrot.slane %v2393, 4
    %v2396 = vor.u32 %v2395, %v2391
    %v2397 = vrot.slane %v2396, 4
    %v2399 = vshll.u32 %v1535, 16
    %v2401 = vrot.slane %v2399, 5
    %v2402 = vsel %vm1538, %v2397, %v2401
    %v2403 = vld [vmem:[#allocation2] sm:$0xe]
    %v2404 = vld [vmem:[#allocation2 + $0xc] sm:$0xe]
    %v2405 = vld [vmem:[#allocation2 + $0x18] sm:$0xe]
    %v2406 = vld [vmem:[#allocation2 + $0x24] sm:$0xe]
    %v2407 = vld [vmem:[#allocation2 + $0x30] sm:$0xe]
    %v2408 = vld [vmem:[#allocation2 + $0x3c] sm:$0xe]
    %v2409 = vld [vmem:[#allocation2 + $0x48] sm:$0xe]
    %v2410 = vld [vmem:[#allocation2 + $0x54] sm:$0xe]
    %v2411 = vld [vmem:[#allocation2 + $0x60] sm:$0xe]
    %v2412 = vld [vmem:[#allocation2 + $0x6c] sm:$0xe]
    %v2413 = vld [vmem:[#allocation2 + $0x78] sm:$0xe]
    %v2414 = vld [vmem:[#allocation2 + $0x84] sm:$0xe]
    %v2415 = vld [vmem:[#allocation2 + $0x90] sm:$0xe]
    %v2416 = vld [vmem:[#allocation2 + $0x9c] sm:$0xe]
    %v2417 = vld [vmem:[#allocation2 + $0xa8] sm:$0xe]
    %v2418 = vld [vmem:[#allocation2 + $0xb4] sm:$0xe]
    %v2419 = vld [vmem:[#allocation2 + $0xc0] sm:$0xe]
    %v2420 = vld [vmem:[#allocation2 + $0xcc] sm:$0xe]
    %v2421 = vld [vmem:[#allocation2 + $0xd8] sm:$0xe]
    %v2422 = vld [vmem:[#allocation2 + $0xe4] sm:$0xe]
    %v2423 = vld [vmem:[#allocation2 + $0xf0] sm:$0xe]
    %v2424 = vld [vmem:[#allocation2 + $0xfc] sm:$0xe]
    %v2425 = vld [vmem:[#allocation2 + $0x108] sm:$0xe]
    %v2426 = vld [vmem:[#allocation2 + $0x114] sm:$0xe]
    %v2427 = vld [vmem:[#allocation2 + $0x120] sm:$0xe]
    %v2428 = vld [vmem:[#allocation2 + $0x12c] sm:$0xe]
    %v2429 = vld [vmem:[#allocation2 + $0x138] sm:$0xe]
    %v2430 = vld [vmem:[#allocation2 + $0x144] sm:$0xe]
    %v2431 = vld [vmem:[#allocation2 + $0x150] sm:$0xe]
    %v2432 = vld [vmem:[#allocation2 + $0x15c] sm:$0xe]
    %v2433 = vld [vmem:[#allocation2 + $0x168] sm:$0xe]
    %v2434 = vld [vmem:[#allocation2 + $0x174] sm:$0xe]
    %v2435 = vld [vmem:[#allocation2 + $0x180] sm:$0xe]
    %v2436 = vld [vmem:[#allocation2 + $0x18c] sm:$0xe]
    %v2437 = vld [vmem:[#allocation2 + $0x198] sm:$0xe]
    %v2438 = vld [vmem:[#allocation2 + $0x1a4] sm:$0xe]
    %vm2535 = vcmask 1042432
    %vm2536 = vcmask 1046532
    %vm2537 = vmor %vm2535, %vm2536
    %v2538 = vrot.slane %v2403, 5
    %v2539 = vrot.slane %v2538, 4
    %v2540 = vrot.slane %v1429, 5
    %v2541 = vsel %vm2537, %v2539, %v2540
    %v2542 = vrot.slane %v2540, 4
    %v2543 = vrot.slane %v1500, 5
    %v2544 = vsel %vm2537, %v2542, %v2543
    %v2545 = vrot.slane %v2404, 5
    %v2546 = vrot.slane %v2545, 4
    %v2547 = vrot.slane %v1431, 5
    %v2548 = vsel %vm2537, %v2546, %v2547
    %v2549 = vrot.slane %v2547, 4
    %v2550 = vrot.slane %v1501, 5
    %v2551 = vsel %vm2537, %v2549, %v2550
    %v2552 = vrot.slane %v2405, 5
    %v2553 = vrot.slane %v2552, 4
    %v2554 = vrot.slane %v1433, 5
    %v2555 = vsel %vm2537, %v2553, %v2554
    %v2556 = vrot.slane %v2554, 4
    %v2557 = vrot.slane %v1502, 5
    %v2558 = vsel %vm2537, %v2556, %v2557
    %v2559 = vrot.slane %v2406, 5
    %v2560 = vrot.slane %v2559, 4
    %v2561 = vrot.slane %v1435, 5
    %v2562 = vsel %vm2537, %v2560, %v2561
    %v2563 = vrot.slane %v2561, 4
    %v2564 = vrot.slane %v1503, 5
    %v2565 = vsel %vm2537, %v2563, %v2564
    %v2566 = vrot.slane %v2407, 5
    %v2567 = vrot.slane %v2566, 4
    %v2568 = vrot.slane %v1437, 5
    %v2569 = vsel %vm2537, %v2567, %v2568
    %v2570 = vrot.slane %v2568, 4
    %v2571 = vrot.slane %v1504, 5
    %v2572 = vsel %vm2537, %v2570, %v2571
    %v2573 = vrot.slane %v2408, 5
    %v2574 = vrot.slane %v2573, 4
    %v2575 = vrot.slane %v1439, 5
    %v2576 = vsel %vm2537, %v2574, %v2575
    %v2577 = vrot.slane %v2575, 4
    %v2578 = vrot.slane %v1505, 5
    %v2579 = vsel %vm2537, %v2577, %v2578
    %v2580 = vrot.slane %v2409, 5
    %v2581 = vrot.slane %v2580, 4
    %v2582 = vrot.slane %v1441, 5
    %v2583 = vsel %vm2537, %v2581, %v2582
    %v2584 = vrot.slane %v2582, 4
    %v2585 = vrot.slane %v1506, 5
    %v2586 = vsel %vm2537, %v2584, %v2585
    %v2587 = vrot.slane %v2410, 5
    %v2588 = vrot.slane %v2587, 4
    %v2589 = vrot.slane %v1443, 5
    %v2590 = vsel %vm2537, %v2588, %v2589
    %v2591 = vrot.slane %v2589, 4
    %v2592 = vrot.slane %v1507, 5
    %v2593 = vsel %vm2537, %v2591, %v2592
    %v2594 = vrot.slane %v2411, 5
    %v2595 = vrot.slane %v2594, 4
    %v2596 = vrot.slane %v1445, 5
    %v2597 = vsel %vm2537, %v2595, %v2596
    %v2598 = vrot.slane %v2596, 4
    %v2599 = vrot.slane %v1508, 5
    %v2600 = vsel %vm2537, %v2598, %v2599
    %v2601 = vrot.slane %v2412, 5
    %v2602 = vrot.slane %v2601, 4
    %v2603 = vrot.slane %v1447, 5
    %v2604 = vsel %vm2537, %v2602, %v2603
    %v2605 = vrot.slane %v2603, 4
    %v2606 = vrot.slane %v1509, 5
    %v2607 = vsel %vm2537, %v2605, %v2606
    %v2608 = vrot.slane %v2413, 5
    %v2609 = vrot.slane %v2608, 4
    %v2610 = vrot.slane %v1449, 5
    %v2611 = vsel %vm2537, %v2609, %v2610
    %v2612 = vrot.slane %v2610, 4
    %v2613 = vrot.slane %v1510, 5
    %v2614 = vsel %vm2537, %v2612, %v2613
    %v2615 = vrot.slane %v2414, 5
    %v2616 = vrot.slane %v2615, 4
    %v2617 = vrot.slane %v1451, 5
    %v2618 = vsel %vm2537, %v2616, %v2617
    %v2619 = vrot.slane %v2617, 4
    %v2620 = vrot.slane %v1511, 5
    %v2621 = vsel %vm2537, %v2619, %v2620
    %v2622 = vrot.slane %v2415, 5
    %v2623 = vrot.slane %v2622, 4
    %v2624 = vrot.slane %v1453, 5
    %v2625 = vsel %vm2537, %v2623, %v2624
    %v2626 = vrot.slane %v2624, 4
    %v2627 = vrot.slane %v1512, 5
    %v2628 = vsel %vm2537, %v2626, %v2627
    %v2629 = vrot.slane %v2416, 5
    %v2630 = vrot.slane %v2629, 4
    %v2631 = vrot.slane %v1455, 5
    %v2632 = vsel %vm2537, %v2630, %v2631
    %v2633 = vrot.slane %v2631, 4
    %v2634 = vrot.slane %v1513, 5
    %v2635 = vsel %vm2537, %v2633, %v2634
    %v2636 = vrot.slane %v2417, 5
    %v2637 = vrot.slane %v2636, 4
    %v2638 = vrot.slane %v1457, 5
    %v2639 = vsel %vm2537, %v2637, %v2638
    %v2640 = vrot.slane %v2638, 4
    %v2641 = vrot.slane %v1514, 5
    %v2642 = vsel %vm2537, %v2640, %v2641
    %v2643 = vrot.slane %v2418, 5
    %v2644 = vrot.slane %v2643, 4
    %v2645 = vrot.slane %v1459, 5
    %v2646 = vsel %vm2537, %v2644, %v2645
    %v2647 = vrot.slane %v2645, 4
    %v2648 = vrot.slane %v1515, 5
    %v2649 = vsel %vm2537, %v2647, %v2648
    %v2650 = vrot.slane %v2421, 5
    %v2651 = vrot.slane %v2650, 4
    %v2652 = vrot.slane %v1465, 5
    %v2653 = vsel %vm2537, %v2651, %v2652
    %v2654 = vrot.slane %v2652, 4
    %v2655 = vrot.slane %v1518, 5
    %v2656 = vsel %vm2537, %v2654, %v2655
    %v2657 = vrot.slane %v2422, 5
    %v2658 = vrot.slane %v2657, 4
    %v2659 = vrot.slane %v1467, 5
    %v2660 = vsel %vm2537, %v2658, %v2659
    %v2661 = vrot.slane %v2659, 4
    %v2662 = vrot.slane %v1519, 5
    %v2663 = vsel %vm2537, %v2661, %v2662
    %v2664 = vrot.slane %v2423, 5
    %v2665 = vrot.slane %v2664, 4
    %v2666 = vrot.slane %v1469, 5
    %v2667 = vsel %vm2537, %v2665, %v2666
    %v2668 = vrot.slane %v2666, 4
    %v2669 = vrot.slane %v1520, 5
    %v2670 = vsel %vm2537, %v2668, %v2669
    %v2671 = vrot.slane %v2424, 5
    %v2672 = vrot.slane %v2671, 4
    %v2673 = vrot.slane %v1471, 5
    %v2674 = vsel %vm2537, %v2672, %v2673
    %v2675 = vrot.slane %v2673, 4
    %v2676 = vrot.slane %v1521, 5
    %v2677 = vsel %vm2537, %v2675, %v2676
    %v2678 = vrot.slane %v2425, 5
    %v2679 = vrot.slane %v2678, 4
    %v2680 = vrot.slane %v1473, 5
    %v2681 = vsel %vm2537, %v2679, %v2680
    %v2682 = vrot.slane %v2680, 4
    %v2683 = vrot.slane %v1522, 5
    %v2684 = vsel %vm2537, %v2682, %v2683
    %v2685 = vrot.slane %v2426, 5
    %v2686 = vrot.slane %v2685, 4
    %v2687 = vrot.slane %v1475, 5
    %v2688 = vsel %vm2537, %v2686, %v2687
    %v2689 = vrot.slane %v2687, 4
    %v2690 = vrot.slane %v1523, 5
    %v2691 = vsel %vm2537, %v2689, %v2690
    %v2692 = vrot.slane %v2427, 5
    %v2693 = vrot.slane %v2692, 4
    %v2694 = vrot.slane %v1477, 5
    %v2695 = vsel %vm2537, %v2693, %v2694
    %v2696 = vrot.slane %v2694, 4
    %v2697 = vrot.slane %v1524, 5
    %v2698 = vsel %vm2537, %v2696, %v2697
    %v2699 = vrot.slane %v2428, 5
    %v2700 = vrot.slane %v2699, 4
    %v2701 = vrot.slane %v1479, 5
    %v2702 = vsel %vm2537, %v2700, %v2701
    %v2703 = vrot.slane %v2701, 4
    %v2704 = vrot.slane %v1525, 5
    %v2705 = vsel %vm2537, %v2703, %v2704
    %v2706 = vrot.slane %v2429, 5
    %v2707 = vrot.slane %v2706, 4
    %v2708 = vrot.slane %v1481, 5
    %v2709 = vsel %vm2537, %v2707, %v2708
    %v2710 = vrot.slane %v2708, 4
    %v2711 = vrot.slane %v1526, 5
    %v2712 = vsel %vm2537, %v2710, %v2711
    %v2713 = vrot.slane %v2430, 5
    %v2714 = vrot.slane %v2713, 4
    %v2715 = vrot.slane %v1483, 5
    %v2716 = vsel %vm2537, %v2714, %v2715
    %v2717 = vrot.slane %v2715, 4
    %v2718 = vrot.slane %v1527, 5
    %v2719 = vsel %vm2537, %v2717, %v2718
    %v2720 = vrot.slane %v2431, 5
    %v2721 = vrot.slane %v2720, 4
    %v2722 = vrot.slane %v1485, 5
    %v2723 = vsel %vm2537, %v2721, %v2722
    %v2724 = vrot.slane %v2722, 4
    %v2725 = vrot.slane %v1528, 5
    %v2726 = vsel %vm2537, %v2724, %v2725
    %v2727 = vrot.slane %v2432, 5
    %v2728 = vrot.slane %v2727, 4
    %v2729 = vrot.slane %v1487, 5
    %v2730 = vsel %vm2537, %v2728, %v2729
    %v2731 = vrot.slane %v2729, 4
    %v2732 = vrot.slane %v1529, 5
    %v2733 = vsel %vm2537, %v2731, %v2732
    %v2734 = vrot.slane %v2433, 5
    %v2735 = vrot.slane %v2734, 4
    %v2736 = vrot.slane %v1489, 5
    %v2737 = vsel %vm2537, %v2735, %v2736
    %v2738 = vrot.slane %v2736, 4
    %v2739 = vrot.slane %v1530, 5
    %v2740 = vsel %vm2537, %v2738, %v2739
    %v2741 = vrot.slane %v2434, 5
    %v2742 = vrot.slane %v2741, 4
    %v2743 = vrot.slane %v1491, 5
    %v2744 = vsel %vm2537, %v2742, %v2743
    %v2745 = vrot.slane %v2743, 4
    %v2746 = vrot.slane %v1531, 5
    %v2747 = vsel %vm2537, %v2745, %v2746
    %v2748 = vrot.slane %v2435, 5
    %v2749 = vrot.slane %v2748, 4
    %v2750 = vrot.slane %v1493, 5
    %v2751 = vsel %vm2537, %v2749, %v2750
    %v2752 = vrot.slane %v2750, 4
    %v2753 = vrot.slane %v1532, 5
    %v2754 = vsel %vm2537, %v2752, %v2753
    %v2755 = vrot.slane %v2436, 5
    %v2756 = vrot.slane %v2755, 4
    %v2757 = vrot.slane %v1495, 5
    %v2758 = vsel %vm2537, %v2756, %v2757
    %v2759 = vrot.slane %v2757, 4
    %v2760 = vrot.slane %v1533, 5
    %v2761 = vsel %vm2537, %v2759, %v2760
    %v2768 = vrot.slane %v2419, 5
    %v2769 = vrot.slane %v2768, 4
    %v2770 = vrot.slane %v1461, 5
    %v2771 = vsel %vm2537, %v2769, %v2770
    %v2772 = vrot.slane %v2770, 4
    %v2773 = vrot.slane %v1516, 5
    %v2774 = vsel %vm2537, %v2772, %v2773
    %v2775 = vrot.slane %v2437, 5
    %v2776 = vrot.slane %v2775, 4
    %v2777 = vrot.slane %v1497, 5
    %v2778 = vsel %vm2537, %v2776, %v2777
    %v2779 = vrot.slane %v2777, 4
    %v2780 = vrot.slane %v1534, 5
    %v2781 = vsel %vm2537, %v2779, %v2780
    %v2788 = vrot.slane %v2420, 5
    %v2789 = vrot.slane %v2788, 4
    %v2790 = vrot.slane %v1463, 5
    %v2791 = vsel %vm2537, %v2789, %v2790
    %v2792 = vrot.slane %v2790, 4
    %v2793 = vrot.slane %v1517, 5
    %v2794 = vsel %vm2537, %v2792, %v2793
    %v2795 = vrot.slane %v2438, 5
    %v2796 = vrot.slane %v2795, 4
    %v2797 = vrot.slane %v1499, 5
    %v2798 = vsel %vm2537, %v2796, %v2797
    %v2799 = vrot.slane %v2797, 4
    %v2800 = vrot.slane %v1535, 5
    %v2801 = vsel %vm2537, %v2799, %v2800
    %v2834 = vunpack.c.l.b16 %v1428
    %v2835 = vunpack.c.l.b16 %v1429
    %v2836 = vunpack.c.l.b16 %v1430
    %v2837 = vunpack.c.l.b16 %v1431
    %v2838 = vunpack.c.l.b16 %v1432
    %v2839 = vunpack.c.l.b16 %v1433
    %v2840 = vunpack.c.l.b16 %v1434
    %v2841 = vunpack.c.l.b16 %v1435
    %v2842 = vunpack.c.l.b16 %v1436
    %v2843 = vunpack.c.l.b16 %v1437
    %v2844 = vunpack.c.l.b16 %v1438
    %v2845 = vunpack.c.l.b16 %v1439
    %v2846 = vunpack.c.l.b16 %v1440
    %v2847 = vunpack.c.l.b16 %v1441
    %v2848 = vunpack.c.l.b16 %v1442
    %v2849 = vunpack.c.l.b16 %v1443
    %v2850 = vunpack.c.l.b16 %v1444
    %v2851 = vunpack.c.l.b16 %v1445
    %v2852 = vunpack.c.l.b16 %v1446
    %v2853 = vunpack.c.l.b16 %v1447
    %v2854 = vunpack.c.l.b16 %v1448
    %v2855 = vunpack.c.l.b16 %v1449
    %v2856 = vunpack.c.l.b16 %v1450
    %v2857 = vunpack.c.l.b16 %v1451
    %v2858 = vunpack.c.l.b16 %v1452
    %v2859 = vunpack.c.l.b16 %v1453
    %v2860 = vunpack.c.l.b16 %v1454
    %v2861 = vunpack.c.l.b16 %v1455
    %v2862 = vunpack.c.l.b16 %v1456
    %v2863 = vunpack.c.l.b16 %v1457
    %v2864 = vunpack.c.l.b16 %v1458
    %v2865 = vunpack.c.l.b16 %v1459
    %v2866 = vunpack.c.l.b16 %v1464
    %v2867 = vunpack.c.l.b16 %v1465
    %v2868 = vunpack.c.l.b16 %v1466
    %v2869 = vunpack.c.l.b16 %v1467
    %v2870 = vunpack.c.l.b16 %v1468
    %v2871 = vunpack.c.l.b16 %v1469
    %v2872 = vunpack.c.l.b16 %v1470
    %v2873 = vunpack.c.l.b16 %v1471
    %v2874 = vunpack.c.l.b16 %v1472
    %v2875 = vunpack.c.l.b16 %v1473
    %v2876 = vunpack.c.l.b16 %v1474
    %v2877 = vunpack.c.l.b16 %v1475
    %v2878 = vunpack.c.l.b16 %v1476
    %v2879 = vunpack.c.l.b16 %v1477
    %v2880 = vunpack.c.l.b16 %v1478
    %v2881 = vunpack.c.l.b16 %v1479
    %v2882 = vunpack.c.l.b16 %v1480
    %v2883 = vunpack.c.l.b16 %v1481
    %v2884 = vunpack.c.l.b16 %v1482
    %v2885 = vunpack.c.l.b16 %v1483
    %v2886 = vunpack.c.l.b16 %v1484
    %v2887 = vunpack.c.l.b16 %v1485
    %v2888 = vunpack.c.l.b16 %v1486
    %v2889 = vunpack.c.l.b16 %v1487
    %v2890 = vunpack.c.l.b16 %v1488
    %v2891 = vunpack.c.l.b16 %v1489
    %v2892 = vunpack.c.l.b16 %v1490
    %v2893 = vunpack.c.l.b16 %v1491
    %v2894 = vunpack.c.l.b16 %v1492
    %v2895 = vunpack.c.l.b16 %v1493
    %v2896 = vunpack.c.l.b16 %v1494
    %v2897 = vunpack.c.l.b16 %v1495
    %v2898 = vpack.c.b16 %v2835, %v2834
    %v2899 = vpack.c.b16 %v2837, %v2836
    %v2900 = vpack.c.b16 %v2839, %v2838
    %v2901 = vpack.c.b16 %v2841, %v2840
    %v2902 = vpack.c.b16 %v2843, %v2842
    %v2903 = vpack.c.b16 %v2845, %v2844
    %v2904 = vpack.c.b16 %v2847, %v2846
    %v2905 = vpack.c.b16 %v2849, %v2848
    %v2906 = vpack.c.b16 %v2851, %v2850
    %v2907 = vpack.c.b16 %v2853, %v2852
    %v2908 = vpack.c.b16 %v2855, %v2854
    %v2909 = vpack.c.b16 %v2857, %v2856
    %v2910 = vpack.c.b16 %v2859, %v2858
    %v2911 = vpack.c.b16 %v2861, %v2860
    %v2912 = vpack.c.b16 %v2863, %v2862
    %v2913 = vpack.c.b16 %v2865, %v2864
    %v2914 = vpack.c.b16 %v2867, %v2866
    %v2915 = vpack.c.b16 %v2869, %v2868
    %v2916 = vpack.c.b16 %v2871, %v2870
    %v2917 = vpack.c.b16 %v2873, %v2872
    %v2918 = vpack.c.b16 %v2875, %v2874
    %v2919 = vpack.c.b16 %v2877, %v2876
    %v2920 = vpack.c.b16 %v2879, %v2878
    %v2921 = vpack.c.b16 %v2881, %v2880
    %v2922 = vpack.c.b16 %v2883, %v2882
    %v2923 = vpack.c.b16 %v2885, %v2884
    %v2924 = vpack.c.b16 %v2887, %v2886
    %v2925 = vpack.c.b16 %v2889, %v2888
    %v2926 = vpack.c.b16 %v2891, %v2890
    %v2927 = vpack.c.b16 %v2893, %v2892
    %v2928 = vpack.c.b16 %v2895, %v2894
    %v2929 = vpack.c.b16 %v2897, %v2896
    %v2962 = vunpack.c.l.b16 %v1552
    %v2963 = vunpack.c.l.b16 %v1562
    %v2964 = vunpack.c.l.b16 %v1576
    %v2965 = vunpack.c.l.b16 %v1586
    %v2966 = vunpack.c.l.b16 %v1600
    %v2967 = vunpack.c.l.b16 %v1610
    %v2968 = vunpack.c.l.b16 %v1624
    %v2969 = vunpack.c.l.b16 %v1634
    %v2970 = vunpack.c.l.b16 %v1648
    %v2971 = vunpack.c.l.b16 %v1658
    %v2972 = vunpack.c.l.b16 %v1672
    %v2973 = vunpack.c.l.b16 %v1682
    %v2974 = vunpack.c.l.b16 %v1696
    %v2975 = vunpack.c.l.b16 %v1706
    %v2976 = vunpack.c.l.b16 %v1720
    %v2977 = vunpack.c.l.b16 %v1730
    %v2978 = vunpack.c.l.b16 %v1744
    %v2979 = vunpack.c.l.b16 %v1754
    %v2980 = vunpack.c.l.b16 %v1768
    %v2981 = vunpack.c.l.b16 %v1778
    %v2982 = vunpack.c.l.b16 %v1792
    %v2983 = vunpack.c.l.b16 %v1802
    %v2984 = vunpack.c.l.b16 %v1816
    %v2985 = vunpack.c.l.b16 %v1826
    %v2986 = vunpack.c.l.b16 %v1840
    %v2987 = vunpack.c.l.b16 %v1850
    %v2988 = vunpack.c.l.b16 %v1864
    %v2989 = vunpack.c.l.b16 %v1874
    %v2990 = vunpack.c.l.b16 %v1888
    %v2991 = vunpack.c.l.b16 %v1898
    %v2992 = vunpack.c.l.b16 %v1912
    %v2993 = vunpack.c.l.b16 %v1922
    %v2994 = vunpack.c.l.b16 %v1936
    %v2995 = vunpack.c.l.b16 %v1946
    %v2996 = vunpack.c.l.b16 %v1960
    %v2997 = vunpack.c.l.b16 %v1970
    %v2998 = vunpack.c.l.b16 %v1984
    %v2999 = vunpack.c.l.b16 %v1994
    %v3000 = vunpack.c.l.b16 %v2008
    %v3001 = vunpack.c.l.b16 %v2018
    %v3002 = vunpack.c.l.b16 %v2032
    %v3003 = vunpack.c.l.b16 %v2042
    %v3004 = vunpack.c.l.b16 %v2056
    %v3005 = vunpack.c.l.b16 %v2066
    %v3006 = vunpack.c.l.b16 %v2080
    %v3007 = vunpack.c.l.b16 %v2090
    %v3008 = vunpack.c.l.b16 %v2104
    %v3009 = vunpack.c.l.b16 %v2114
    %v3010 = vunpack.c.l.b16 %v2128
    %v3011 = vunpack.c.l.b16 %v2138
    %v3012 = vunpack.c.l.b16 %v2152
    %v3013 = vunpack.c.l.b16 %v2162
    %v3014 = vunpack.c.l.b16 %v2176
    %v3015 = vunpack.c.l.b16 %v2186
    %v3016 = vunpack.c.l.b16 %v2200
    %v3017 = vunpack.c.l.b16 %v2210
    %v3018 = vunpack.c.l.b16 %v2224
    %v3019 = vunpack.c.l.b16 %v2234
    %v3020 = vunpack.c.l.b16 %v2248
    %v3021 = vunpack.c.l.b16 %v2258
    %v3022 = vunpack.c.l.b16 %v2272
    %v3023 = vunpack.c.l.b16 %v2282
    %v3024 = vunpack.c.l.b16 %v2296
    %v3025 = vunpack.c.l.b16 %v2306
    %v3026 = vpack.c.b16 %v2963, %v2962
    %v3027 = vpack.c.b16 %v2965, %v2964
    %v3028 = vpack.c.b16 %v2967, %v2966
    %v3029 = vpack.c.b16 %v2969, %v2968
    %v3030 = vpack.c.b16 %v2971, %v2970
    %v3031 = vpack.c.b16 %v2973, %v2972
    %v3032 = vpack.c.b16 %v2975, %v2974
    %v3033 = vpack.c.b16 %v2977, %v2976
    %v3034 = vpack.c.b16 %v2979, %v2978
    %v3035 = vpack.c.b16 %v2981, %v2980
    %v3036 = vpack.c.b16 %v2983, %v2982
    %v3037 = vpack.c.b16 %v2985, %v2984
    %v3038 = vpack.c.b16 %v2987, %v2986
    %v3039 = vpack.c.b16 %v2989, %v2988
    %v3040 = vpack.c.b16 %v2991, %v2990
    %v3041 = vpack.c.b16 %v2993, %v2992
    %v3042 = vpack.c.b16 %v2995, %v2994
    %v3043 = vpack.c.b16 %v2997, %v2996
    %v3044 = vpack.c.b16 %v2999, %v2998
    %v3045 = vpack.c.b16 %v3001, %v3000
    %v3046 = vpack.c.b16 %v3003, %v3002
    %v3047 = vpack.c.b16 %v3005, %v3004
    %v3048 = vpack.c.b16 %v3007, %v3006
    %v3049 = vpack.c.b16 %v3009, %v3008
    %v3050 = vpack.c.b16 %v3011, %v3010
    %v3051 = vpack.c.b16 %v3013, %v3012
    %v3052 = vpack.c.b16 %v3015, %v3014
    %v3053 = vpack.c.b16 %v3017, %v3016
    %v3054 = vpack.c.b16 %v3019, %v3018
    %v3055 = vpack.c.b16 %v3021, %v3020
    %v3056 = vpack.c.b16 %v3023, %v3022
    %v3057 = vpack.c.b16 %v3025, %v3024
    %v3090 = vunpack.c.l.b16 %v2541
    %v3091 = vunpack.c.l.b16 %v2544
    %v3092 = vunpack.c.l.b16 %v2548
    %v3093 = vunpack.c.l.b16 %v2551
    %v3094 = vunpack.c.l.b16 %v2555
    %v3095 = vunpack.c.l.b16 %v2558
    %v3096 = vunpack.c.l.b16 %v2562
    %v3097 = vunpack.c.l.b16 %v2565
    %v3098 = vunpack.c.l.b16 %v2569
    %v3099 = vunpack.c.l.b16 %v2572
    %v3100 = vunpack.c.l.b16 %v2576
    %v3101 = vunpack.c.l.b16 %v2579
    %v3102 = vunpack.c.l.b16 %v2583
    %v3103 = vunpack.c.l.b16 %v2586
    %v3104 = vunpack.c.l.b16 %v2590
    %v3105 = vunpack.c.l.b16 %v2593
    %v3106 = vunpack.c.l.b16 %v2597
    %v3107 = vunpack.c.l.b16 %v2600
    %v3108 = vunpack.c.l.b16 %v2604
    %v3109 = vunpack.c.l.b16 %v2607
    %v3110 = vunpack.c.l.b16 %v2611
    %v3111 = vunpack.c.l.b16 %v2614
    %v3112 = vunpack.c.l.b16 %v2618
    %v3113 = vunpack.c.l.b16 %v2621
    %v3114 = vunpack.c.l.b16 %v2625
    %v3115 = vunpack.c.l.b16 %v2628
    %v3116 = vunpack.c.l.b16 %v2632
    %v3117 = vunpack.c.l.b16 %v2635
    %v3118 = vunpack.c.l.b16 %v2639
    %v3119 = vunpack.c.l.b16 %v2642
    %v3120 = vunpack.c.l.b16 %v2646
    %v3121 = vunpack.c.l.b16 %v2649
    %v3122 = vunpack.c.l.b16 %v2653
    %v3123 = vunpack.c.l.b16 %v2656
    %v3124 = vunpack.c.l.b16 %v2660
    %v3125 = vunpack.c.l.b16 %v2663
    %v3126 = vunpack.c.l.b16 %v2667
    %v3127 = vunpack.c.l.b16 %v2670
    %v3128 = vunpack.c.l.b16 %v2674
    %v3129 = vunpack.c.l.b16 %v2677
    %v3130 = vunpack.c.l.b16 %v2681
    %v3131 = vunpack.c.l.b16 %v2684
    %v3132 = vunpack.c.l.b16 %v2688
    %v3133 = vunpack.c.l.b16 %v2691
    %v3134 = vunpack.c.l.b16 %v2695
    %v3135 = vunpack.c.l.b16 %v2698
    %v3136 = vunpack.c.l.b16 %v2702
    %v3137 = vunpack.c.l.b16 %v2705
    %v3138 = vunpack.c.l.b16 %v2709
    %v3139 = vunpack.c.l.b16 %v2712
    %v3140 = vunpack.c.l.b16 %v2716
    %v3141 = vunpack.c.l.b16 %v2719
    %v3142 = vunpack.c.l.b16 %v2723
    %v3143 = vunpack.c.l.b16 %v2726
    %v3144 = vunpack.c.l.b16 %v2730
    %v3145 = vunpack.c.l.b16 %v2733
    %v3146 = vunpack.c.l.b16 %v2737
    %v3147 = vunpack.c.l.b16 %v2740
    %v3148 = vunpack.c.l.b16 %v2744
    %v3149 = vunpack.c.l.b16 %v2747
    %v3150 = vunpack.c.l.b16 %v2751
    %v3151 = vunpack.c.l.b16 %v2754
    %v3152 = vunpack.c.l.b16 %v2758
    %v3153 = vunpack.c.l.b16 %v2761
    %v3154 = vpack.c.b16 %v3091, %v3090
    %v3155 = vpack.c.b16 %v3093, %v3092
    %v3156 = vpack.c.b16 %v3095, %v3094
    %v3157 = vpack.c.b16 %v3097, %v3096
    %v3158 = vpack.c.b16 %v3099, %v3098
    %v3159 = vpack.c.b16 %v3101, %v3100
    %v3160 = vpack.c.b16 %v3103, %v3102
    %v3161 = vpack.c.b16 %v3105, %v3104
    %v3162 = vpack.c.b16 %v3107, %v3106
    %v3163 = vpack.c.b16 %v3109, %v3108
    %v3164 = vpack.c.b16 %v3111, %v3110
    %v3165 = vpack.c.b16 %v3113, %v3112
    %v3166 = vpack.c.b16 %v3115, %v3114
    %v3167 = vpack.c.b16 %v3117, %v3116
    %v3168 = vpack.c.b16 %v3119, %v3118
    %v3169 = vpack.c.b16 %v3121, %v3120
    %v3170 = vpack.c.b16 %v3123, %v3122
    %v3171 = vpack.c.b16 %v3125, %v3124
    %v3172 = vpack.c.b16 %v3127, %v3126
    %v3173 = vpack.c.b16 %v3129, %v3128
    %v3174 = vpack.c.b16 %v3131, %v3130
    %v3175 = vpack.c.b16 %v3133, %v3132
    %v3176 = vpack.c.b16 %v3135, %v3134
    %v3177 = vpack.c.b16 %v3137, %v3136
    %v3178 = vpack.c.b16 %v3139, %v3138
    %v3179 = vpack.c.b16 %v3141, %v3140
    %v3180 = vpack.c.b16 %v3143, %v3142
    %v3181 = vpack.c.b16 %v3145, %v3144
    %v3182 = vpack.c.b16 %v3147, %v3146
    %v3183 = vpack.c.b16 %v3149, %v3148
    %v3184 = vpack.c.b16 %v3151, %v3150
    %v3185 = vpack.c.b16 %v3153, %v3152
    %v3220 = vunpack.c.l.b16 %v1460
    %v3221 = vunpack.c.l.b16 %v1461
    %v3222 = vunpack.c.l.b16 %v1496
    %v3223 = vunpack.c.l.b16 %v1497
    %v3224 = vpack.c.b16 %v3221, %v3220
    %v3225 = vpack.c.b16 %v3223, %v3222
    %v3228 = vunpack.c.l.b16 %v2320
    %v3229 = vunpack.c.l.b16 %v2330
    %v3230 = vunpack.c.l.b16 %v2344
    %v3231 = vunpack.c.l.b16 %v2354
    %v3232 = vpack.c.b16 %v3229, %v3228
    %v3233 = vpack.c.b16 %v3231, %v3230
    %v3236 = vunpack.c.l.b16 %v2771
    %v3237 = vunpack.c.l.b16 %v2774
    %v3238 = vunpack.c.l.b16 %v2778
    %v3239 = vunpack.c.l.b16 %v2781
    %v3240 = vpack.c.b16 %v3237, %v3236
    %v3241 = vpack.c.b16 %v3239, %v3238
    %v3246 = vunpack.c.l.b16 %v1462
    %v3247 = vunpack.c.l.b16 %v1463
    %v3248 = vunpack.c.l.b16 %v1498
    %v3249 = vunpack.c.l.b16 %v1499
    %v3250 = vpack.c.b16 %v3247, %v3246
    %v3251 = vpack.c.b16 %v3249, %v3248
    %v3254 = vunpack.c.l.b16 %v2368
    %v3255 = vunpack.c.l.b16 %v2378
    %v3256 = vunpack.c.l.b16 %v2392
    %v3257 = vunpack.c.l.b16 %v2402
    %v3258 = vpack.c.b16 %v3255, %v3254
    %v3259 = vpack.c.b16 %v3257, %v3256
    %v3262 = vunpack.c.l.b16 %v2791
    %v3263 = vunpack.c.l.b16 %v2794
    %v3264 = vunpack.c.l.b16 %v2798
    %v3265 = vunpack.c.l.b16 %v2801
    %v3266 = vpack.c.b16 %v3263, %v3262
    %v3267 = vpack.c.b16 %v3265, %v3264
    %v3270 = vld [vmem:[#allocation7] sm:$0xf]
    %v3271 = vld [vmem:[#allocation7 + $0x4] sm:$0xf]
    %v3272 = vld [vmem:[#allocation7 + $0x8] sm:$0xf]
    %v3273 = vld [vmem:[#allocation7 + $0xc] sm:$0xf]
    %v3274 = vld [vmem:[#allocation7 + $0x10] sm:$0xf]
    %v3275 = vld [vmem:[#allocation7 + $0x14] sm:$0xf]
    %v3276 = vld [vmem:[#allocation7 + $0x18] sm:$0xf]
    %v3277 = vld [vmem:[#allocation7 + $0x1c] sm:$0xf]
    %v3278 = vld [vmem:[#allocation7 + $0x20] sm:$0xf]
    %v3279 = vld [vmem:[#allocation7 + $0x24] sm:$0xf]
    %v3280 = vld [vmem:[#allocation7 + $0x28] sm:$0xf]
    %v3281 = vld [vmem:[#allocation7 + $0x2c] sm:$0xf]
    %v3282 = vld [vmem:[#allocation7 + $0x30] sm:$0xf]
    %v3283 = vld [vmem:[#allocation7 + $0x34] sm:$0xf]
    %v3284 = vld [vmem:[#allocation7 + $0x38] sm:$0xf]
    %v3285 = vld [vmem:[#allocation7 + $0x3c] sm:$0xf]
    %v3286 = vld [vmem:[#allocation7 + $0x40] sm:$0xf]
    %v3287 = vld [vmem:[#allocation7 + $0x44] sm:$0xf]
    %v3288 = vld [vmem:[#allocation7 + $0x48] sm:$0xf]
    %v3289 = vld [vmem:[#allocation7 + $0x4c] sm:$0xf]
    %v3290 = vld [vmem:[#allocation7 + $0x50] sm:$0xf]
    %v3291 = vld [vmem:[#allocation7 + $0x54] sm:$0xf]
    %v3292 = vld [vmem:[#allocation7 + $0x58] sm:$0xf]
    %v3293 = vld [vmem:[#allocation7 + $0x5c] sm:$0xf]
    %v3294 = vld [vmem:[#allocation7 + $0x60] sm:$0xf]
    %v3295 = vld [vmem:[#allocation7 + $0x64] sm:$0xf]
    %v3296 = vld [vmem:[#allocation7 + $0x68] sm:$0xf]
    %v3297 = vld [vmem:[#allocation7 + $0x6c] sm:$0xf]
    %v3298 = vld [vmem:[#allocation7 + $0x70] sm:$0xf]
    %v3299 = vld [vmem:[#allocation7 + $0x74] sm:$0xf]
    %v3300 = vld [vmem:[#allocation7 + $0x78] sm:$0xf]
    %v3301 = vld [vmem:[#allocation7 + $0x7c] sm:$0xf]
    %v3302 = vld [vmem:[#allocation7 + $0x80] sm:$0xf]
    %v3303 = vld [vmem:[#allocation7 + $0x84] sm:$0xf]
    %v3304 = vld [vmem:[#allocation7 + $0x88] sm:$0xf]
    %v3305 = vld [vmem:[#allocation7 + $0x8c] sm:$0xf]
    %v3306 = vld [vmem:[#allocation7 + $0x90] sm:$0xf]
    %v3307 = vld [vmem:[#allocation7 + $0x94] sm:$0xf]
    %v3308 = vld [vmem:[#allocation7 + $0x98] sm:$0xf]
    %v3309 = vld [vmem:[#allocation7 + $0x9c] sm:$0xf]
    %v3310 = vld [vmem:[#allocation7 + $0xa0] sm:$0xf]
    %v3311 = vld [vmem:[#allocation7 + $0xa4] sm:$0xf]
    %v3312 = vld [vmem:[#allocation7 + $0xa8] sm:$0xf]
    %v3313 = vld [vmem:[#allocation7 + $0xac] sm:$0xf]
    %v3314 = vld [vmem:[#allocation7 + $0xb0] sm:$0xf]
    %v3315 = vld [vmem:[#allocation7 + $0xb4] sm:$0xf]
    %v3316 = vld [vmem:[#allocation7 + $0xb8] sm:$0xf]
    %v3317 = vld [vmem:[#allocation7 + $0xbc] sm:$0xf]
    %v3318 = vld [vmem:[#allocation7 + $0xc0] sm:$0xf]
    %v3319 = vld [vmem:[#allocation7 + $0xc4] sm:$0xf]
    %v3320 = vld [vmem:[#allocation7 + $0xc8] sm:$0xf]
    %v3321 = vld [vmem:[#allocation7 + $0xcc] sm:$0xf]
    %v3322 = vld [vmem:[#allocation7 + $0xd0] sm:$0xf]
    %v3323 = vld [vmem:[#allocation7 + $0xd4] sm:$0xf]
    %v3324 = vld [vmem:[#allocation7 + $0xd8] sm:$0xf]
    %v3325 = vld [vmem:[#allocation7 + $0xdc] sm:$0xf]
    %v3326 = vld [vmem:[#allocation7 + $0xe0] sm:$0xf]
    %v3327 = vld [vmem:[#allocation7 + $0xe4] sm:$0xf]
    %v3328 = vld [vmem:[#allocation7 + $0xe8] sm:$0xf]
    %v3329 = vld [vmem:[#allocation7 + $0xec] sm:$0xf]
    %v3330 = vld [vmem:[#allocation7 + $0xf0] sm:$0xf]
    %v3331 = vld [vmem:[#allocation7 + $0xf4] sm:$0xf]
    %v3332 = vld [vmem:[#allocation7 + $0xf8] sm:$0xf]
    %v3333 = vld [vmem:[#allocation7 + $0xfc] sm:$0xf]
    %v3334 = vld [vmem:[#allocation7 + $0x100] sm:$0xf]
    %v3335 = vld [vmem:[#allocation7 + $0x104] sm:$0xf]
    %v3336 = vld [vmem:[#allocation7 + $0x108] sm:$0xf]
    %v3337 = vld [vmem:[#allocation7 + $0x10c] sm:$0xf]
    %v3338 = vld [vmem:[#allocation7 + $0x110] sm:$0xf]
    %v3339 = vld [vmem:[#allocation7 + $0x114] sm:$0xf]
    %v3340 = vld [vmem:[#allocation7 + $0x118] sm:$0xf]
    %v3341 = vld [vmem:[#allocation7 + $0x11c] sm:$0xf]
    %v3342 = vld [vmem:[#allocation7 + $0x120] sm:$0xf]
    %v3343 = vld [vmem:[#allocation7 + $0x124] sm:$0xf]
    %v3344 = vld [vmem:[#allocation7 + $0x128] sm:$0xf]
    %v3345 = vld [vmem:[#allocation7 + $0x12c] sm:$0xf]
    %v3346 = vld [vmem:[#allocation7 + $0x130] sm:$0xf]
    %v3347 = vld [vmem:[#allocation7 + $0x134] sm:$0xf]
    %v3348 = vld [vmem:[#allocation7 + $0x138] sm:$0xf]
    %v3349 = vld [vmem:[#allocation7 + $0x13c] sm:$0xf]
    %v3350 = vld [vmem:[#allocation7 + $0x140] sm:$0xf]
    %v3351 = vld [vmem:[#allocation7 + $0x144] sm:$0xf]
    %v3352 = vld [vmem:[#allocation7 + $0x148] sm:$0xf]
    %v3353 = vld [vmem:[#allocation7 + $0x14c] sm:$0xf]
    %v3354 = vld [vmem:[#allocation7 + $0x150] sm:$0xf]
    %v3355 = vld [vmem:[#allocation7 + $0x154] sm:$0xf]
    %v3356 = vld [vmem:[#allocation7 + $0x158] sm:$0xf]
    %v3357 = vld [vmem:[#allocation7 + $0x15c] sm:$0xf]
    %v3358 = vld [vmem:[#allocation7 + $0x160] sm:$0xf]
    %v3359 = vld [vmem:[#allocation7 + $0x164] sm:$0xf]
    %v3360 = vld [vmem:[#allocation7 + $0x168] sm:$0xf]
    %v3361 = vld [vmem:[#allocation7 + $0x16c] sm:$0xf]
    %v3362 = vld [vmem:[#allocation7 + $0x170] sm:$0xf]
    %v3363 = vld [vmem:[#allocation7 + $0x174] sm:$0xf]
    %v3364 = vld [vmem:[#allocation7 + $0x178] sm:$0xf]
    %v3365 = vld [vmem:[#allocation7 + $0x17c] sm:$0xf]
    %v3366 = vld [vmem:[#allocation7 + $0x180] sm:$0xf]
    %v3367 = vld [vmem:[#allocation7 + $0x184] sm:$0xf]
    %v3368 = vld [vmem:[#allocation7 + $0x188] sm:$0xf]
    %v3369 = vld [vmem:[#allocation7 + $0x18c] sm:$0xf]
    %v3370 = vld [vmem:[#allocation7 + $0x190] sm:$0xf]
    %v3371 = vld [vmem:[#allocation7 + $0x194] sm:$0xf]
    %v3372 = vld [vmem:[#allocation7 + $0x198] sm:$0xf]
    %v3373 = vld [vmem:[#allocation7 + $0x19c] sm:$0xf]
    %v3374 = vld [vmem:[#allocation7 + $0x1a0] sm:$0xf]
    %v3375 = vld [vmem:[#allocation7 + $0x1a4] sm:$0xf]
    %v3376 = vld [vmem:[#allocation7 + $0x1a8] sm:$0xf]
    %v3377 = vld [vmem:[#allocation7 + $0x1ac] sm:$0xf]
    %v3378 = vld [vmem:[#allocation7 + $0x1b0] sm:$0xf]
    %v3379 = vld [vmem:[#allocation7 + $0x1b4] sm:$0xf]
    %v3380 = vld [vmem:[#allocation7 + $0x1b8] sm:$0xf]
    %v3381 = vld [vmem:[#allocation7 + $0x1bc] sm:$0xf]
    %v3382 = vld [vmem:[#allocation7 + $0x1c0] sm:$0xf]
    %v3383 = vld [vmem:[#allocation7 + $0x1c4] sm:$0xf]
    %v3384 = vld [vmem:[#allocation7 + $0x1c8] sm:$0xf]
    %v3385 = vld [vmem:[#allocation7 + $0x1cc] sm:$0xf]
    %v3386 = vld [vmem:[#allocation7 + $0x1d0] sm:$0xf]
    %v3387 = vld [vmem:[#allocation7 + $0x1d4] sm:$0xf]
    %v3388 = vld [vmem:[#allocation7 + $0x1d8] sm:$0xf]
    %v3389 = vld [vmem:[#allocation7 + $0x1dc] sm:$0xf]
    %v3390 = vld [vmem:[#allocation7 + $0x1e0] sm:$0xf]
    %v3391 = vld [vmem:[#allocation7 + $0x1e4] sm:$0xf]
    %v3392 = vld [vmem:[#allocation7 + $0x1e8] sm:$0xf]
    %v3393 = vld [vmem:[#allocation7 + $0x1ec] sm:$0xf]
    %v3394 = vld [vmem:[#allocation7 + $0x1f0] sm:$0xf]
    %v3395 = vld [vmem:[#allocation7 + $0x1f4] sm:$0xf]
    %v3396 = vld [vmem:[#allocation7 + $0x1f8] sm:$0xf]
    %v3397 = vld [vmem:[#allocation7 + $0x1fc] sm:$0xf]
    %v3398 = vld [vmem:[#allocation7 + $0x200] sm:$0xf]
    %v3399 = vld [vmem:[#allocation7 + $0x204] sm:$0xf]
    %v3400 = vld [vmem:[#allocation7 + $0x208] sm:$0xf]
    %v3401 = vld [vmem:[#allocation7 + $0x20c] sm:$0xf]
    %v3402 = vld [vmem:[#allocation7 + $0x210] sm:$0xf]
    %v3403 = vld [vmem:[#allocation7 + $0x214] sm:$0xf]
    %v3404 = vld [vmem:[#allocation7 + $0x218] sm:$0xf]
    %v3405 = vld [vmem:[#allocation7 + $0x21c] sm:$0xf]
    %v3406 = vld [vmem:[#allocation7 + $0x220] sm:$0xf]
    %v3407 = vld [vmem:[#allocation7 + $0x224] sm:$0xf]
    %v3408 = vld [vmem:[#allocation7 + $0x228] sm:$0xf]
    %v3409 = vld [vmem:[#allocation7 + $0x22c] sm:$0xf]
    %v3410 = vld [vmem:[#allocation7 + $0x230] sm:$0xf]
    %v3411 = vld [vmem:[#allocation7 + $0x234] sm:$0xf]
    %v3412 = vld [vmem:[#allocation7 + $0x238] sm:$0xf]
    %v3413 = vld [vmem:[#allocation7 + $0x23c] sm:$0xf]
    %v3558 = vunpack.c.l.b16 %v3270
    %v3559 = vunpack.c.l.b16 %v3271
    %v3560 = vunpack.c.l.b16 %v3272
    %v3561 = vunpack.c.l.b16 %v3273
    %v3562 = vunpack.c.l.b16 %v3274
    %v3563 = vunpack.c.l.b16 %v3275
    %v3564 = vunpack.c.l.b16 %v3276
    %v3565 = vunpack.c.l.b16 %v3277
    %v3566 = vunpack.c.l.b16 %v3278
    %v3567 = vunpack.c.l.b16 %v3279
    %v3568 = vunpack.c.l.b16 %v3280
    %v3569 = vunpack.c.l.b16 %v3281
    %v3570 = vunpack.c.l.b16 %v3282
    %v3571 = vunpack.c.l.b16 %v3283
    %v3572 = vunpack.c.l.b16 %v3284
    %v3573 = vunpack.c.l.b16 %v3285
    %v3574 = vunpack.c.l.b16 %v3286
    %v3575 = vunpack.c.l.b16 %v3287
    %v3576 = vunpack.c.l.b16 %v3288
    %v3577 = vunpack.c.l.b16 %v3289
    %v3578 = vunpack.c.l.b16 %v3290
    %v3579 = vunpack.c.l.b16 %v3291
    %v3580 = vunpack.c.l.b16 %v3292
    %v3581 = vunpack.c.l.b16 %v3293
    %v3582 = vunpack.c.l.b16 %v3294
    %v3583 = vunpack.c.l.b16 %v3295
    %v3584 = vunpack.c.l.b16 %v3296
    %v3585 = vunpack.c.l.b16 %v3297
    %v3586 = vunpack.c.l.b16 %v3298
    %v3587 = vunpack.c.l.b16 %v3299
    %v3588 = vunpack.c.l.b16 %v3300
    %v3589 = vunpack.c.l.b16 %v3301
    %v3590 = vunpack.c.l.b16 %v3302
    %v3591 = vunpack.c.l.b16 %v3303
    %v3592 = vunpack.c.l.b16 %v3304
    %v3593 = vunpack.c.l.b16 %v3305
    %v3594 = vunpack.c.l.b16 %v3306
    %v3595 = vunpack.c.l.b16 %v3307
    %v3596 = vunpack.c.l.b16 %v3308
    %v3597 = vunpack.c.l.b16 %v3309
    %v3598 = vunpack.c.l.b16 %v3310
    %v3599 = vunpack.c.l.b16 %v3311
    %v3600 = vunpack.c.l.b16 %v3312
    %v3601 = vunpack.c.l.b16 %v3313
    %v3602 = vunpack.c.l.b16 %v3314
    %v3603 = vunpack.c.l.b16 %v3315
    %v3604 = vunpack.c.l.b16 %v3316
    %v3605 = vunpack.c.l.b16 %v3317
    %v3606 = vunpack.c.l.b16 %v3318
    %v3607 = vunpack.c.l.b16 %v3319
    %v3608 = vunpack.c.l.b16 %v3320
    %v3609 = vunpack.c.l.b16 %v3321
    %v3610 = vunpack.c.l.b16 %v3322
    %v3611 = vunpack.c.l.b16 %v3323
    %v3612 = vunpack.c.l.b16 %v3324
    %v3613 = vunpack.c.l.b16 %v3325
    %v3614 = vunpack.c.l.b16 %v3326
    %v3615 = vunpack.c.l.b16 %v3327
    %v3616 = vunpack.c.l.b16 %v3328
    %v3617 = vunpack.c.l.b16 %v3329
    %v3618 = vunpack.c.l.b16 %v3330
    %v3619 = vunpack.c.l.b16 %v3331
    %v3620 = vunpack.c.l.b16 %v3332
    %v3621 = vunpack.c.l.b16 %v3333
    %v3622 = vunpack.c.l.b16 %v3334
    %v3623 = vunpack.c.l.b16 %v3335
    %v3624 = vunpack.c.l.b16 %v3336
    %v3625 = vunpack.c.l.b16 %v3337
    %v3626 = vunpack.c.l.b16 %v3338
    %v3627 = vunpack.c.l.b16 %v3339
    %v3628 = vunpack.c.l.b16 %v3340
    %v3629 = vunpack.c.l.b16 %v3341
    %v3630 = vunpack.c.l.b16 %v3342
    %v3631 = vunpack.c.l.b16 %v3343
    %v3632 = vunpack.c.l.b16 %v3344
    %v3633 = vunpack.c.l.b16 %v3345
    %v3634 = vunpack.c.l.b16 %v3346
    %v3635 = vunpack.c.l.b16 %v3347
    %v3636 = vunpack.c.l.b16 %v3348
    %v3637 = vunpack.c.l.b16 %v3349
    %v3638 = vunpack.c.l.b16 %v3350
    %v3639 = vunpack.c.l.b16 %v3351
    %v3640 = vunpack.c.l.b16 %v3352
    %v3641 = vunpack.c.l.b16 %v3353
    %v3642 = vunpack.c.l.b16 %v3354
    %v3643 = vunpack.c.l.b16 %v3355
    %v3644 = vunpack.c.l.b16 %v3356
    %v3645 = vunpack.c.l.b16 %v3357
    %v3646 = vunpack.c.l.b16 %v3358
    %v3647 = vunpack.c.l.b16 %v3359
    %v3648 = vunpack.c.l.b16 %v3360
    %v3649 = vunpack.c.l.b16 %v3361
    %v3650 = vunpack.c.l.b16 %v3362
    %v3651 = vunpack.c.l.b16 %v3363
    %v3652 = vunpack.c.l.b16 %v3364
    %v3653 = vunpack.c.l.b16 %v3365
    %v3654 = vunpack.c.l.b16 %v3366
    %v3655 = vunpack.c.l.b16 %v3367
    %v3656 = vunpack.c.l.b16 %v3368
    %v3657 = vunpack.c.l.b16 %v3369
    %v3658 = vunpack.c.l.b16 %v3370
    %v3659 = vunpack.c.l.b16 %v3371
    %v3660 = vunpack.c.l.b16 %v3372
    %v3661 = vunpack.c.l.b16 %v3373
    %v3662 = vunpack.c.l.b16 %v3374
    %v3663 = vunpack.c.l.b16 %v3375
    %v3664 = vunpack.c.l.b16 %v3376
    %v3665 = vunpack.c.l.b16 %v3377
    %v3666 = vunpack.c.l.b16 %v3378
    %v3667 = vunpack.c.l.b16 %v3379
    %v3668 = vunpack.c.l.b16 %v3380
    %v3669 = vunpack.c.l.b16 %v3381
    %v3670 = vunpack.c.l.b16 %v3382
    %v3671 = vunpack.c.l.b16 %v3383
    %v3672 = vunpack.c.l.b16 %v3384
    %v3673 = vunpack.c.l.b16 %v3385
    %v3674 = vunpack.c.l.b16 %v3386
    %v3675 = vunpack.c.l.b16 %v3387
    %v3676 = vunpack.c.l.b16 %v3388
    %v3677 = vunpack.c.l.b16 %v3389
    %v3678 = vunpack.c.l.b16 %v3390
    %v3679 = vunpack.c.l.b16 %v3391
    %v3680 = vunpack.c.l.b16 %v3392
    %v3681 = vunpack.c.l.b16 %v3393
    %v3682 = vunpack.c.l.b16 %v3394
    %v3683 = vunpack.c.l.b16 %v3395
    %v3684 = vunpack.c.l.b16 %v3396
    %v3685 = vunpack.c.l.b16 %v3397
    %v3686 = vunpack.c.l.b16 %v3398
    %v3687 = vunpack.c.l.b16 %v3399
    %v3688 = vunpack.c.l.b16 %v3400
    %v3689 = vunpack.c.l.b16 %v3401
    %v3690 = vunpack.c.l.b16 %v3402
    %v3691 = vunpack.c.l.b16 %v3403
    %v3692 = vunpack.c.l.b16 %v3404
    %v3693 = vunpack.c.l.b16 %v3405
    %v3694 = vunpack.c.l.b16 %v3406
    %v3695 = vunpack.c.l.b16 %v3407
    %v3696 = vunpack.c.l.b16 %v3408
    %v3697 = vunpack.c.l.b16 %v3409
    %v3698 = vunpack.c.l.b16 %v3410
    %v3699 = vunpack.c.l.b16 %v3411
    %v3700 = vunpack.c.l.b16 %v3412
    %v3701 = vunpack.c.l.b16 %v3413
    %v3702 = vpack.c.b16 %v3559, %v3558
    %v3703 = vpack.c.b16 %v3561, %v3560
    %v3704 = vpack.c.b16 %v3563, %v3562
    %v3705 = vpack.c.b16 %v3565, %v3564
    %v3706 = vpack.c.b16 %v3567, %v3566
    %v3707 = vpack.c.b16 %v3569, %v3568
    %v3708 = vpack.c.b16 %v3571, %v3570
    %v3709 = vpack.c.b16 %v3573, %v3572
    %v3710 = vpack.c.b16 %v3575, %v3574
    %v3711 = vpack.c.b16 %v3577, %v3576
    %v3712 = vpack.c.b16 %v3579, %v3578
    %v3713 = vpack.c.b16 %v3581, %v3580
    %v3714 = vpack.c.b16 %v3583, %v3582
    %v3715 = vpack.c.b16 %v3585, %v3584
    %v3716 = vpack.c.b16 %v3587, %v3586
    %v3717 = vpack.c.b16 %v3589, %v3588
    %v3718 = vpack.c.b16 %v3591, %v3590
    %v3719 = vpack.c.b16 %v3593, %v3592
    %v3720 = vpack.c.b16 %v3595, %v3594
    %v3721 = vpack.c.b16 %v3597, %v3596
    %v3722 = vpack.c.b16 %v3599, %v3598
    %v3723 = vpack.c.b16 %v3601, %v3600
    %v3724 = vpack.c.b16 %v3603, %v3602
    %v3725 = vpack.c.b16 %v3605, %v3604
    %v3726 = vpack.c.b16 %v3607, %v3606
    %v3727 = vpack.c.b16 %v3609, %v3608
    %v3728 = vpack.c.b16 %v3611, %v3610
    %v3729 = vpack.c.b16 %v3613, %v3612
    %v3730 = vpack.c.b16 %v3615, %v3614
    %v3731 = vpack.c.b16 %v3617, %v3616
    %v3732 = vpack.c.b16 %v3619, %v3618
    %v3733 = vpack.c.b16 %v3621, %v3620
    %v3734 = vpack.c.b16 %v3623, %v3622
    %v3735 = vpack.c.b16 %v3625, %v3624
    %v3736 = vpack.c.b16 %v3627, %v3626
    %v3737 = vpack.c.b16 %v3629, %v3628
    %v3738 = vpack.c.b16 %v3631, %v3630
    %v3739 = vpack.c.b16 %v3633, %v3632
    %v3740 = vpack.c.b16 %v3635, %v3634
    %v3741 = vpack.c.b16 %v3637, %v3636
    %v3742 = vpack.c.b16 %v3639, %v3638
    %v3743 = vpack.c.b16 %v3641, %v3640
    %v3744 = vpack.c.b16 %v3643, %v3642
    %v3745 = vpack.c.b16 %v3645, %v3644
    %v3746 = vpack.c.b16 %v3647, %v3646
    %v3747 = vpack.c.b16 %v3649, %v3648
    %v3748 = vpack.c.b16 %v3651, %v3650
    %v3749 = vpack.c.b16 %v3653, %v3652
    %v3750 = vpack.c.b16 %v3655, %v3654
    %v3751 = vpack.c.b16 %v3657, %v3656
    %v3752 = vpack.c.b16 %v3659, %v3658
    %v3753 = vpack.c.b16 %v3661, %v3660
    %v3754 = vpack.c.b16 %v3663, %v3662
    %v3755 = vpack.c.b16 %v3665, %v3664
    %v3756 = vpack.c.b16 %v3667, %v3666
    %v3757 = vpack.c.b16 %v3669, %v3668
    %v3758 = vpack.c.b16 %v3671, %v3670
    %v3759 = vpack.c.b16 %v3673, %v3672
    %v3760 = vpack.c.b16 %v3675, %v3674
    %v3761 = vpack.c.b16 %v3677, %v3676
    %v3762 = vpack.c.b16 %v3679, %v3678
    %v3763 = vpack.c.b16 %v3681, %v3680
    %v3764 = vpack.c.b16 %v3683, %v3682
    %v3765 = vpack.c.b16 %v3685, %v3684
    %v3766 = vpack.c.b16 %v3687, %v3686
    %v3767 = vpack.c.b16 %v3689, %v3688
    %v3768 = vpack.c.b16 %v3691, %v3690
    %v3769 = vpack.c.b16 %v3693, %v3692
    %v3770 = vpack.c.b16 %v3695, %v3694
    %v3771 = vpack.c.b16 %v3697, %v3696
    %v3772 = vpack.c.b16 %v3699, %v3698
    %v3773 = vpack.c.b16 %v3701, %v3700
    %3846 = vmatprep.subr.bf16.mxu0 0
    %3847 = vmatpush1.bf16.msra.mxu0 %v3709
    %3848 = vmatprep.subr.bf16.mxu0 0
    %3849 = vmatpush1.bf16.msra.mxu0 %v3708
    %3850 = vmatprep.subr.bf16.mxu0 0
    %3851 = vmatpush1.bf16.msra.mxu0 %v3707
    %3852 = vmatprep.subr.bf16.mxu0 0
    %3853 = vmatpush1.bf16.msra.mxu0 %v3706
    %3854 = vmatprep.subr.bf16.mxu0 0
    %3855 = vmatpush1.bf16.msra.mxu0 %v3705
    %3856 = vmatprep.subr.bf16.mxu0 0
    %3857 = vmatpush1.bf16.msra.mxu0 %v3704
    %3858 = vmatprep.subr.bf16.mxu0 0
    %3859 = vmatpush1.bf16.msra.mxu0 %v3703
    %3860 = vmatprep.subr.bf16.mxu0 0
    %3861 = vmatpush1.bf16.msra.mxu0 %v3702
    %3862 = vmatprep.subr.bf16.mxu0 0
    %3863 = vmatpush2.bf16.msra.mxu0 %v3717
    %3864 = vmatprep.subr.bf16.mxu0 0
    %3865 = vmatpush2.bf16.msra.mxu0 %v3716
    %3866 = vmatprep.subr.bf16.mxu0 0
    %3867 = vmatpush2.bf16.msra.mxu0 %v3715
    %3868 = vmatprep.subr.bf16.mxu0 0
    %3869 = vmatpush2.bf16.msra.mxu0 %v3714
    %3870 = vmatprep.subr.bf16.mxu0 0
    %3871 = vmatpush2.bf16.msra.mxu0 %v3713
    %3872 = vmatprep.subr.bf16.mxu0 0
    %3873 = vmatpush2.bf16.msra.mxu0 %v3712
    %3874 = vmatprep.subr.bf16.mxu0 0
    %3875 = vmatpush2.bf16.msra.mxu0 %v3711
    %3876 = vmatprep.subr.bf16.mxu0 0
    %3877 = vmatpush2.bf16.msra.mxu0 %v3710
    %3878 = vmatprep.mubr.bf16.mxu0 %v3026
    %3879 = vmatmul.mubr.bf16.gmra.mxu0 %v2898
    %v3880 = vpop.f32.mrf.mxu0
    %v3881 = vadd.f32 0.0, %v3880
    %v3882 = vpop.f32.mrf.mxu0
    %v3883 = vpop.f32.mrf.mxu0
    %v3884 = vadd.f32 0.0, %v3883
    %v3885 = vpop.f32.mrf.mxu0
    %3886 = vmatprep.mubr.bf16.mxu0 %v3027
    %3887 = vmatmul.mubr.bf16.gmra.mxu0 %v2899
    %v3888 = vpop.f32.mrf.mxu0
    %v3889 = vadd.f32 0.0, %v3888
    %v3890 = vpop.f32.mrf.mxu0
    %v3891 = vpop.f32.mrf.mxu0
    %v3892 = vadd.f32 0.0, %v3891
    %v3893 = vpop.f32.mrf.mxu0
    %3894 = vmatprep.mubr.bf16.mxu0 %v3028
    %3895 = vmatmul.mubr.bf16.gmra.mxu0 %v2900
    %v3896 = vpop.f32.mrf.mxu0
    %v3897 = vadd.f32 0.0, %v3896
    %v3898 = vpop.f32.mrf.mxu0
    %v3899 = vpop.f32.mrf.mxu0
    %v3900 = vadd.f32 0.0, %v3899
    %v3901 = vpop.f32.mrf.mxu0
    %3902 = vmatprep.mubr.bf16.mxu0 %v3029
    %3903 = vmatmul.mubr.bf16.gmra.mxu0 %v2901
    %v3904 = vpop.f32.mrf.mxu0
    %v3905 = vadd.f32 0.0, %v3904
    %v3906 = vpop.f32.mrf.mxu0
    %v3907 = vpop.f32.mrf.mxu0
    %v3908 = vadd.f32 0.0, %v3907
    %v3909 = vpop.f32.mrf.mxu0
    %3910 = vmatprep.mubr.bf16.mxu0 %v3030
    %3911 = vmatmul.mubr.bf16.gmra.mxu0 %v2902
    %v3912 = vpop.f32.mrf.mxu0
    %v3913 = vadd.f32 0.0, %v3912
    %v3914 = vpop.f32.mrf.mxu0
    %v3915 = vpop.f32.mrf.mxu0
    %v3916 = vadd.f32 0.0, %v3915
    %v3917 = vpop.f32.mrf.mxu0
    %3918 = vmatprep.mubr.bf16.mxu0 %v3031
    %3919 = vmatmul.mubr.bf16.gmra.mxu0 %v2903
    %v3920 = vpop.f32.mrf.mxu0
    %v3921 = vadd.f32 0.0, %v3920
    %v3922 = vpop.f32.mrf.mxu0
    %v3923 = vpop.f32.mrf.mxu0
    %v3924 = vadd.f32 0.0, %v3923
    %v3925 = vpop.f32.mrf.mxu0
    %3926 = vmatprep.mubr.bf16.mxu0 %v3032
    %3927 = vmatmul.mubr.bf16.gmra.mxu0 %v2904
    %v3928 = vpop.f32.mrf.mxu0
    %v3929 = vadd.f32 0.0, %v3928
    %v3930 = vpop.f32.mrf.mxu0
    %v3931 = vpop.f32.mrf.mxu0
    %v3932 = vadd.f32 0.0, %v3931
    %v3933 = vpop.f32.mrf.mxu0
    %3934 = vmatprep.mubr.bf16.mxu0 %v3033
    %3935 = vmatmul.mubr.bf16.gmra.mxu0 %v2905
    %v3936 = vpop.f32.mrf.mxu0
    %v3937 = vadd.f32 0.0, %v3936
    %v3938 = vpop.f32.mrf.mxu0
    %v3939 = vpop.f32.mrf.mxu0
    %v3940 = vadd.f32 0.0, %v3939
    %v3941 = vpop.f32.mrf.mxu0
    %3942 = vmatprep.mubr.bf16.mxu0 %v3034
    %3943 = vmatmul.mubr.bf16.gmra.mxu0 %v2906
    %v3944 = vpop.f32.mrf.mxu0
    %v3945 = vadd.f32 0.0, %v3944
    %v3946 = vpop.f32.mrf.mxu0
    %v3947 = vpop.f32.mrf.mxu0
    %v3948 = vadd.f32 0.0, %v3947
    %v3949 = vpop.f32.mrf.mxu0
    %3950 = vmatprep.mubr.bf16.mxu0 %v3035
    %3951 = vmatmul.mubr.bf16.gmra.mxu0 %v2907
    %v3952 = vpop.f32.mrf.mxu0
    %v3953 = vadd.f32 0.0, %v3952
    %v3954 = vpop.f32.mrf.mxu0
    %v3955 = vpop.f32.mrf.mxu0
    %v3956 = vadd.f32 0.0, %v3955
    %v3957 = vpop.f32.mrf.mxu0
    %3958 = vmatprep.mubr.bf16.mxu0 %v3036
    %3959 = vmatmul.mubr.bf16.gmra.mxu0 %v2908
    %v3960 = vpop.f32.mrf.mxu0
    %v3961 = vadd.f32 0.0, %v3960
    %v3962 = vpop.f32.mrf.mxu0
    %v3963 = vpop.f32.mrf.mxu0
    %v3964 = vadd.f32 0.0, %v3963
    %v3965 = vpop.f32.mrf.mxu0
    %3966 = vmatprep.mubr.bf16.mxu0 %v3037
    %3967 = vmatmul.mubr.bf16.gmra.mxu0 %v2909
    %v3968 = vpop.f32.mrf.mxu0
    %v3969 = vadd.f32 0.0, %v3968
    %v3970 = vpop.f32.mrf.mxu0
    %v3971 = vpop.f32.mrf.mxu0
    %v3972 = vadd.f32 0.0, %v3971
    %v3973 = vpop.f32.mrf.mxu0
    %3974 = vmatprep.mubr.bf16.mxu0 %v3038
    %3975 = vmatmul.mubr.bf16.gmra.mxu0 %v2910
    %v3976 = vpop.f32.mrf.mxu0
    %v3977 = vadd.f32 0.0, %v3976
    %v3978 = vpop.f32.mrf.mxu0
    %v3979 = vpop.f32.mrf.mxu0
    %v3980 = vadd.f32 0.0, %v3979
    %v3981 = vpop.f32.mrf.mxu0
    %3982 = vmatprep.mubr.bf16.mxu0 %v3039
    %3983 = vmatmul.mubr.bf16.gmra.mxu0 %v2911
    %v3984 = vpop.f32.mrf.mxu0
    %v3985 = vadd.f32 0.0, %v3984
    %v3986 = vpop.f32.mrf.mxu0
    %v3987 = vpop.f32.mrf.mxu0
    %v3988 = vadd.f32 0.0, %v3987
    %v3989 = vpop.f32.mrf.mxu0
    %3990 = vmatprep.mubr.bf16.mxu0 %v3040
    %3991 = vmatmul.mubr.bf16.gmra.mxu0 %v2912
    %v3992 = vpop.f32.mrf.mxu0
    %v3993 = vadd.f32 0.0, %v3992
    %v3994 = vpop.f32.mrf.mxu0
    %v3995 = vpop.f32.mrf.mxu0
    %v3996 = vadd.f32 0.0, %v3995
    %v3997 = vpop.f32.mrf.mxu0
    %3998 = vmatprep.mubr.bf16.mxu0 %v3041
    %3999 = vmatmul.mubr.bf16.gmra.mxu0 %v2913
    %v4000 = vpop.f32.mrf.mxu0
    %v4001 = vadd.f32 0.0, %v4000
    %v4002 = vpop.f32.mrf.mxu0
    %v4003 = vpop.f32.mrf.mxu0
    %v4004 = vadd.f32 0.0, %v4003
    %v4005 = vpop.f32.mrf.mxu0
    %4006 = vmatprep.mubr.bf16.mxu0 %v3042
    %4007 = vmatmul.mubr.bf16.gmra.mxu0 %v2914
    %v4008 = vpop.f32.mrf.mxu0
    %v4009 = vadd.f32 0.0, %v4008
    %v4010 = vpop.f32.mrf.mxu0
    %v4011 = vpop.f32.mrf.mxu0
    %v4012 = vadd.f32 0.0, %v4011
    %v4013 = vpop.f32.mrf.mxu0
    %4014 = vmatprep.mubr.bf16.mxu0 %v3043
    %4015 = vmatmul.mubr.bf16.gmra.mxu0 %v2915
    %v4016 = vpop.f32.mrf.mxu0
    %v4017 = vadd.f32 0.0, %v4016
    %v4018 = vpop.f32.mrf.mxu0
    %v4019 = vpop.f32.mrf.mxu0
    %v4020 = vadd.f32 0.0, %v4019
    %v4021 = vpop.f32.mrf.mxu0
    %4022 = vmatprep.mubr.bf16.mxu0 %v3044
    %4023 = vmatmul.mubr.bf16.gmra.mxu0 %v2916
    %v4024 = vpop.f32.mrf.mxu0
    %v4025 = vadd.f32 0.0, %v4024
    %v4026 = vpop.f32.mrf.mxu0
    %v4027 = vpop.f32.mrf.mxu0
    %v4028 = vadd.f32 0.0, %v4027
    %v4029 = vpop.f32.mrf.mxu0
    %4030 = vmatprep.mubr.bf16.mxu0 %v3045
    %4031 = vmatmul.mubr.bf16.gmra.mxu0 %v2917
    %v4032 = vpop.f32.mrf.mxu0
    %v4033 = vadd.f32 0.0, %v4032
    %v4034 = vpop.f32.mrf.mxu0
    %v4035 = vpop.f32.mrf.mxu0
    %v4036 = vadd.f32 0.0, %v4035
    %v4037 = vpop.f32.mrf.mxu0
    %4038 = vmatprep.mubr.bf16.mxu0 %v3046
    %4039 = vmatmul.mubr.bf16.gmra.mxu0 %v2918
    %v4040 = vpop.f32.mrf.mxu0
    %v4041 = vadd.f32 0.0, %v4040
    %v4042 = vpop.f32.mrf.mxu0
    %v4043 = vpop.f32.mrf.mxu0
    %v4044 = vadd.f32 0.0, %v4043
    %v4045 = vpop.f32.mrf.mxu0
    %4046 = vmatprep.mubr.bf16.mxu0 %v3047
    %4047 = vmatmul.mubr.bf16.gmra.mxu0 %v2919
    %v4048 = vpop.f32.mrf.mxu0
    %v4049 = vadd.f32 0.0, %v4048
    %v4050 = vpop.f32.mrf.mxu0
    %v4051 = vpop.f32.mrf.mxu0
    %v4052 = vadd.f32 0.0, %v4051
    %v4053 = vpop.f32.mrf.mxu0
    %4054 = vmatprep.mubr.bf16.mxu0 %v3048
    %4055 = vmatmul.mubr.bf16.gmra.mxu0 %v2920
    %v4056 = vpop.f32.mrf.mxu0
    %v4057 = vadd.f32 0.0, %v4056
    %v4058 = vpop.f32.mrf.mxu0
    %v4059 = vpop.f32.mrf.mxu0
    %v4060 = vadd.f32 0.0, %v4059
    %v4061 = vpop.f32.mrf.mxu0
    %4062 = vmatprep.mubr.bf16.mxu0 %v3049
    %4063 = vmatmul.mubr.bf16.gmra.mxu0 %v2921
    %v4064 = vpop.f32.mrf.mxu0
    %v4065 = vadd.f32 0.0, %v4064
    %v4066 = vpop.f32.mrf.mxu0
    %v4067 = vpop.f32.mrf.mxu0
    %v4068 = vadd.f32 0.0, %v4067
    %v4069 = vpop.f32.mrf.mxu0
    %4070 = vmatprep.mubr.bf16.mxu0 %v3050
    %4071 = vmatmul.mubr.bf16.gmra.mxu0 %v2922
    %v4072 = vpop.f32.mrf.mxu0
    %v4073 = vadd.f32 0.0, %v4072
    %v4074 = vpop.f32.mrf.mxu0
    %v4075 = vpop.f32.mrf.mxu0
    %v4076 = vadd.f32 0.0, %v4075
    %v4077 = vpop.f32.mrf.mxu0
    %4078 = vmatprep.mubr.bf16.mxu0 %v3051
    %4079 = vmatmul.mubr.bf16.gmra.mxu0 %v2923
    %v4080 = vpop.f32.mrf.mxu0
    %v4081 = vadd.f32 0.0, %v4080
    %v4082 = vpop.f32.mrf.mxu0
    %v4083 = vpop.f32.mrf.mxu0
    %v4084 = vadd.f32 0.0, %v4083
    %v4085 = vpop.f32.mrf.mxu0
    %4086 = vmatprep.mubr.bf16.mxu0 %v3052
    %4087 = vmatmul.mubr.bf16.gmra.mxu0 %v2924
    %v4088 = vpop.f32.mrf.mxu0
    %v4089 = vadd.f32 0.0, %v4088
    %v4090 = vpop.f32.mrf.mxu0
    %v4091 = vpop.f32.mrf.mxu0
    %v4092 = vadd.f32 0.0, %v4091
    %v4093 = vpop.f32.mrf.mxu0
    %4094 = vmatprep.mubr.bf16.mxu0 %v3053
    %4095 = vmatmul.mubr.bf16.gmra.mxu0 %v2925
    %v4096 = vpop.f32.mrf.mxu0
    %v4097 = vadd.f32 0.0, %v4096
    %v4098 = vpop.f32.mrf.mxu0
    %v4099 = vpop.f32.mrf.mxu0
    %v4100 = vadd.f32 0.0, %v4099
    %v4101 = vpop.f32.mrf.mxu0
    %4102 = vmatprep.mubr.bf16.mxu0 %v3054
    %4103 = vmatmul.mubr.bf16.gmra.mxu0 %v2926
    %v4104 = vpop.f32.mrf.mxu0
    %v4105 = vadd.f32 0.0, %v4104
    %v4106 = vpop.f32.mrf.mxu0
    %v4107 = vpop.f32.mrf.mxu0
    %v4108 = vadd.f32 0.0, %v4107
    %v4109 = vpop.f32.mrf.mxu0
    %4110 = vmatprep.mubr.bf16.mxu0 %v3055
    %4111 = vmatmul.mubr.bf16.gmra.mxu0 %v2927
    %v4112 = vpop.f32.mrf.mxu0
    %v4113 = vadd.f32 0.0, %v4112
    %v4114 = vpop.f32.mrf.mxu0
    %v4115 = vpop.f32.mrf.mxu0
    %v4116 = vadd.f32 0.0, %v4115
    %v4117 = vpop.f32.mrf.mxu0
    %4118 = vmatprep.mubr.bf16.mxu0 %v3056
    %4119 = vmatmul.mubr.bf16.gmra.mxu0 %v2928
    %v4120 = vpop.f32.mrf.mxu0
    %v4121 = vadd.f32 0.0, %v4120
    %v4122 = vpop.f32.mrf.mxu0
    %v4123 = vpop.f32.mrf.mxu0
    %v4124 = vadd.f32 0.0, %v4123
    %v4125 = vpop.f32.mrf.mxu0
    %4126 = vmatprep.mubr.bf16.mxu0 %v3057
    %4127 = vmatmul.mubr.bf16.gmra.mxu0 %v2929
    %v4128 = vpop.f32.mrf.mxu0
    %v4129 = vadd.f32 0.0, %v4128
    %v4130 = vpop.f32.mrf.mxu0
    %v4131 = vpop.f32.mrf.mxu0
    %v4132 = vadd.f32 0.0, %v4131
    %v4133 = vpop.f32.mrf.mxu0
    %4134 = vdwg.mxu0
    %4135 = vmatprep.subr.bf16.mxu0 0
    %4136 = vmatpush1.bf16.msra.mxu0 %v3725
    %4137 = vmatprep.subr.bf16.mxu0 0
    %4138 = vmatpush1.bf16.msra.mxu0 %v3724
    %4139 = vmatprep.subr.bf16.mxu0 0
    %4140 = vmatpush1.bf16.msra.mxu0 %v3723
    %4141 = vmatprep.subr.bf16.mxu0 0
    %4142 = vmatpush1.bf16.msra.mxu0 %v3722
    %4143 = vmatprep.subr.bf16.mxu0 0
    %4144 = vmatpush1.bf16.msra.mxu0 %v3721
    %4145 = vmatprep.subr.bf16.mxu0 0
    %4146 = vmatpush1.bf16.msra.mxu0 %v3720
    %4147 = vmatprep.subr.bf16.mxu0 0
    %4148 = vmatpush1.bf16.msra.mxu0 %v3719
    %4149 = vmatprep.subr.bf16.mxu0 0
    %4150 = vmatpush1.bf16.msra.mxu0 %v3718
    %4151 = vmatprep.subr.bf16.mxu0 0
    %4152 = vmatpush2.bf16.msra.mxu0 %v3733
    %4153 = vmatprep.subr.bf16.mxu0 0
    %4154 = vmatpush2.bf16.msra.mxu0 %v3732
    %4155 = vmatprep.subr.bf16.mxu0 0
    %4156 = vmatpush2.bf16.msra.mxu0 %v3731
    %4157 = vmatprep.subr.bf16.mxu0 0
    %4158 = vmatpush2.bf16.msra.mxu0 %v3730
    %4159 = vmatprep.subr.bf16.mxu0 0
    %4160 = vmatpush2.bf16.msra.mxu0 %v3729
    %4161 = vmatprep.subr.bf16.mxu0 0
    %4162 = vmatpush2.bf16.msra.mxu0 %v3728
    %4163 = vmatprep.subr.bf16.mxu0 0
    %4164 = vmatpush2.bf16.msra.mxu0 %v3727
    %4165 = vmatprep.subr.bf16.mxu0 0
    %4166 = vmatpush2.bf16.msra.mxu0 %v3726
    %4167 = vmatprep.mubr.bf16.mxu0 %v2899
    %4168 = vmatmul.mubr.bf16.gmra.mxu0 %v3154
    %v4169 = vpop.f32.mrf.mxu0
    %v4170 = vadd.f32 %v3881, %v4169
    %v4171 = vpop.f32.mrf.mxu0
    %v4172 = vpop.f32.mrf.mxu0
    %v4173 = vadd.f32 %v3884, %v4172
    %v4174 = vpop.f32.mrf.mxu0
    %4175 = vmatprep.mubr.bf16.mxu0 %v2900
    %4176 = vmatmul.mubr.bf16.gmra.mxu0 %v3155
    %v4177 = vpop.f32.mrf.mxu0
    %v4178 = vadd.f32 %v3889, %v4177
    %v4179 = vpop.f32.mrf.mxu0
    %v4180 = vpop.f32.mrf.mxu0
    %v4181 = vadd.f32 %v3892, %v4180
    %v4182 = vpop.f32.mrf.mxu0
    %4183 = vmatprep.mubr.bf16.mxu0 %v2901
    %4184 = vmatmul.mubr.bf16.gmra.mxu0 %v3156
    %v4185 = vpop.f32.mrf.mxu0
    %v4186 = vadd.f32 %v3897, %v4185
    %v4187 = vpop.f32.mrf.mxu0
    %v4188 = vpop.f32.mrf.mxu0
    %v4189 = vadd.f32 %v3900, %v4188
    %v4190 = vpop.f32.mrf.mxu0
    %4191 = vmatprep.mubr.bf16.mxu0 %v2902
    %4192 = vmatmul.mubr.bf16.gmra.mxu0 %v3157
    %v4193 = vpop.f32.mrf.mxu0
    %v4194 = vadd.f32 %v3905, %v4193
    %v4195 = vpop.f32.mrf.mxu0
    %v4196 = vpop.f32.mrf.mxu0
    %v4197 = vadd.f32 %v3908, %v4196
    %v4198 = vpop.f32.mrf.mxu0
    %4199 = vmatprep.mubr.bf16.mxu0 %v2903
    %4200 = vmatmul.mubr.bf16.gmra.mxu0 %v3158
    %v4201 = vpop.f32.mrf.mxu0
    %v4202 = vadd.f32 %v3913, %v4201
    %v4203 = vpop.f32.mrf.mxu0
    %v4204 = vpop.f32.mrf.mxu0
    %v4205 = vadd.f32 %v3916, %v4204
    %v4206 = vpop.f32.mrf.mxu0
    %4207 = vmatprep.mubr.bf16.mxu0 %v2904
    %4208 = vmatmul.mubr.bf16.gmra.mxu0 %v3159
    %v4209 = vpop.f32.mrf.mxu0
    %v4210 = vadd.f32 %v3921, %v4209
    %v4211 = vpop.f32.mrf.mxu0
    %v4212 = vpop.f32.mrf.mxu0
    %v4213 = vadd.f32 %v3924, %v4212
    %v4214 = vpop.f32.mrf.mxu0
    %4215 = vmatprep.mubr.bf16.mxu0 %v2905
    %4216 = vmatmul.mubr.bf16.gmra.mxu0 %v3160
    %v4217 = vpop.f32.mrf.mxu0
    %v4218 = vadd.f32 %v3929, %v4217
    %v4219 = vpop.f32.mrf.mxu0
    %v4220 = vpop.f32.mrf.mxu0
    %v4221 = vadd.f32 %v3932, %v4220
    %v4222 = vpop.f32.mrf.mxu0
    %4223 = vmatprep.mubr.bf16.mxu0 %v2906
    %4224 = vmatmul.mubr.bf16.gmra.mxu0 %v3161
    %v4225 = vpop.f32.mrf.mxu0
    %v4226 = vadd.f32 %v3937, %v4225
    %v4227 = vpop.f32.mrf.mxu0
    %v4228 = vpop.f32.mrf.mxu0
    %v4229 = vadd.f32 %v3940, %v4228
    %v4230 = vpop.f32.mrf.mxu0
    %4231 = vmatprep.mubr.bf16.mxu0 %v2907
    %4232 = vmatmul.mubr.bf16.gmra.mxu0 %v3162
    %v4233 = vpop.f32.mrf.mxu0
    %v4234 = vadd.f32 %v3945, %v4233
    %v4235 = vpop.f32.mrf.mxu0
    %v4236 = vpop.f32.mrf.mxu0
    %v4237 = vadd.f32 %v3948, %v4236
    %v4238 = vpop.f32.mrf.mxu0
    %4239 = vmatprep.mubr.bf16.mxu0 %v2908
    %4240 = vmatmul.mubr.bf16.gmra.mxu0 %v3163
    %v4241 = vpop.f32.mrf.mxu0
    %v4242 = vadd.f32 %v3953, %v4241
    %v4243 = vpop.f32.mrf.mxu0
    %v4244 = vpop.f32.mrf.mxu0
    %v4245 = vadd.f32 %v3956, %v4244
    %v4246 = vpop.f32.mrf.mxu0
    %4247 = vmatprep.mubr.bf16.mxu0 %v2909
    %4248 = vmatmul.mubr.bf16.gmra.mxu0 %v3164
    %v4249 = vpop.f32.mrf.mxu0
    %v4250 = vadd.f32 %v3961, %v4249
    %v4251 = vpop.f32.mrf.mxu0
    %v4252 = vpop.f32.mrf.mxu0
    %v4253 = vadd.f32 %v3964, %v4252
    %v4254 = vpop.f32.mrf.mxu0
    %4255 = vmatprep.mubr.bf16.mxu0 %v2910
    %4256 = vmatmul.mubr.bf16.gmra.mxu0 %v3165
    %v4257 = vpop.f32.mrf.mxu0
    %v4258 = vadd.f32 %v3969, %v4257
    %v4259 = vpop.f32.mrf.mxu0
    %v4260 = vpop.f32.mrf.mxu0
    %v4261 = vadd.f32 %v3972, %v4260
    %v4262 = vpop.f32.mrf.mxu0
    %4263 = vmatprep.mubr.bf16.mxu0 %v2911
    %4264 = vmatmul.mubr.bf16.gmra.mxu0 %v3166
    %v4265 = vpop.f32.mrf.mxu0
    %v4266 = vadd.f32 %v3977, %v4265
    %v4267 = vpop.f32.mrf.mxu0
    %v4268 = vpop.f32.mrf.mxu0
    %v4269 = vadd.f32 %v3980, %v4268
    %v4270 = vpop.f32.mrf.mxu0
    %4271 = vmatprep.mubr.bf16.mxu0 %v2912
    %4272 = vmatmul.mubr.bf16.gmra.mxu0 %v3167
    %v4273 = vpop.f32.mrf.mxu0
    %v4274 = vadd.f32 %v3985, %v4273
    %v4275 = vpop.f32.mrf.mxu0
    %v4276 = vpop.f32.mrf.mxu0
    %v4277 = vadd.f32 %v3988, %v4276
    %v4278 = vpop.f32.mrf.mxu0
    %4279 = vmatprep.mubr.bf16.mxu0 %v2913
    %4280 = vmatmul.mubr.bf16.gmra.mxu0 %v3168
    %v4281 = vpop.f32.mrf.mxu0
    %v4282 = vadd.f32 %v3993, %v4281
    %v4283 = vpop.f32.mrf.mxu0
    %v4284 = vpop.f32.mrf.mxu0
    %v4285 = vadd.f32 %v3996, %v4284
    %v4286 = vpop.f32.mrf.mxu0
    %4287 = vmatprep.mubr.bf16.mxu0 %v3224
    %4288 = vmatmul.mubr.bf16.gmra.mxu0 %v3169
    %v4289 = vpop.f32.mrf.mxu0
    %v4290 = vadd.f32 %v4001, %v4289
    %v4291 = vpop.f32.mrf.mxu0
    %v4292 = vpop.f32.mrf.mxu0
    %v4293 = vadd.f32 %v4004, %v4292
    %v4294 = vpop.f32.mrf.mxu0
    %4295 = vmatprep.mubr.bf16.mxu0 %v2915
    %4296 = vmatmul.mubr.bf16.gmra.mxu0 %v3170
    %v4297 = vpop.f32.mrf.mxu0
    %v4298 = vadd.f32 %v4009, %v4297
    %v4299 = vpop.f32.mrf.mxu0
    %v4300 = vpop.f32.mrf.mxu0
    %v4301 = vadd.f32 %v4012, %v4300
    %v4302 = vpop.f32.mrf.mxu0
    %4303 = vmatprep.mubr.bf16.mxu0 %v2916
    %4304 = vmatmul.mubr.bf16.gmra.mxu0 %v3171
    %v4305 = vpop.f32.mrf.mxu0
    %v4306 = vadd.f32 %v4017, %v4305
    %v4307 = vpop.f32.mrf.mxu0
    %v4308 = vpop.f32.mrf.mxu0
    %v4309 = vadd.f32 %v4020, %v4308
    %v4310 = vpop.f32.mrf.mxu0
    %4311 = vmatprep.mubr.bf16.mxu0 %v2917
    %4312 = vmatmul.mubr.bf16.gmra.mxu0 %v3172
    %v4313 = vpop.f32.mrf.mxu0
    %v4314 = vadd.f32 %v4025, %v4313
    %v4315 = vpop.f32.mrf.mxu0
    %v4316 = vpop.f32.mrf.mxu0
    %v4317 = vadd.f32 %v4028, %v4316
    %v4318 = vpop.f32.mrf.mxu0
    %4319 = vmatprep.mubr.bf16.mxu0 %v2918
    %4320 = vmatmul.mubr.bf16.gmra.mxu0 %v3173
    %v4321 = vpop.f32.mrf.mxu0
    %v4322 = vadd.f32 %v4033, %v4321
    %v4323 = vpop.f32.mrf.mxu0
    %v4324 = vpop.f32.mrf.mxu0
    %v4325 = vadd.f32 %v4036, %v4324
    %v4326 = vpop.f32.mrf.mxu0
    %4327 = vmatprep.mubr.bf16.mxu0 %v2919
    %4328 = vmatmul.mubr.bf16.gmra.mxu0 %v3174
    %v4329 = vpop.f32.mrf.mxu0
    %v4330 = vadd.f32 %v4041, %v4329
    %v4331 = vpop.f32.mrf.mxu0
    %v4332 = vpop.f32.mrf.mxu0
    %v4333 = vadd.f32 %v4044, %v4332
    %v4334 = vpop.f32.mrf.mxu0
    %4335 = vmatprep.mubr.bf16.mxu0 %v2920
    %4336 = vmatmul.mubr.bf16.gmra.mxu0 %v3175
    %v4337 = vpop.f32.mrf.mxu0
    %v4338 = vadd.f32 %v4049, %v4337
    %v4339 = vpop.f32.mrf.mxu0
    %v4340 = vpop.f32.mrf.mxu0
    %v4341 = vadd.f32 %v4052, %v4340
    %v4342 = vpop.f32.mrf.mxu0
    %4343 = vmatprep.mubr.bf16.mxu0 %v2921
    %4344 = vmatmul.mubr.bf16.gmra.mxu0 %v3176
    %v4345 = vpop.f32.mrf.mxu0
    %v4346 = vadd.f32 %v4057, %v4345
    %v4347 = vpop.f32.mrf.mxu0
    %v4348 = vpop.f32.mrf.mxu0
    %v4349 = vadd.f32 %v4060, %v4348
    %v4350 = vpop.f32.mrf.mxu0
    %4351 = vmatprep.mubr.bf16.mxu0 %v2922
    %4352 = vmatmul.mubr.bf16.gmra.mxu0 %v3177
    %v4353 = vpop.f32.mrf.mxu0
    %v4354 = vadd.f32 %v4065, %v4353
    %v4355 = vpop.f32.mrf.mxu0
    %v4356 = vpop.f32.mrf.mxu0
    %v4357 = vadd.f32 %v4068, %v4356
    %v4358 = vpop.f32.mrf.mxu0
    %4359 = vmatprep.mubr.bf16.mxu0 %v2923
    %4360 = vmatmul.mubr.bf16.gmra.mxu0 %v3178
    %v4361 = vpop.f32.mrf.mxu0
    %v4362 = vadd.f32 %v4073, %v4361
    %v4363 = vpop.f32.mrf.mxu0
    %v4364 = vpop.f32.mrf.mxu0
    %v4365 = vadd.f32 %v4076, %v4364
    %v4366 = vpop.f32.mrf.mxu0
    %4367 = vmatprep.mubr.bf16.mxu0 %v2924
    %4368 = vmatmul.mubr.bf16.gmra.mxu0 %v3179
    %v4369 = vpop.f32.mrf.mxu0
    %v4370 = vadd.f32 %v4081, %v4369
    %v4371 = vpop.f32.mrf.mxu0
    %v4372 = vpop.f32.mrf.mxu0
    %v4373 = vadd.f32 %v4084, %v4372
    %v4374 = vpop.f32.mrf.mxu0
    %4375 = vmatprep.mubr.bf16.mxu0 %v2925
    %4376 = vmatmul.mubr.bf16.gmra.mxu0 %v3180
    %v4377 = vpop.f32.mrf.mxu0
    %v4378 = vadd.f32 %v4089, %v4377
    %v4379 = vpop.f32.mrf.mxu0
    %v4380 = vpop.f32.mrf.mxu0
    %v4381 = vadd.f32 %v4092, %v4380
    %v4382 = vpop.f32.mrf.mxu0
    %4383 = vmatprep.mubr.bf16.mxu0 %v2926
    %4384 = vmatmul.mubr.bf16.gmra.mxu0 %v3181
    %v4385 = vpop.f32.mrf.mxu0
    %v4386 = vadd.f32 %v4097, %v4385
    %v4387 = vpop.f32.mrf.mxu0
    %v4388 = vpop.f32.mrf.mxu0
    %v4389 = vadd.f32 %v4100, %v4388
    %v4390 = vpop.f32.mrf.mxu0
    %4391 = vmatprep.mubr.bf16.mxu0 %v2927
    %4392 = vmatmul.mubr.bf16.gmra.mxu0 %v3182
    %v4393 = vpop.f32.mrf.mxu0
    %v4394 = vadd.f32 %v4105, %v4393
    %v4395 = vpop.f32.mrf.mxu0
    %v4396 = vpop.f32.mrf.mxu0
    %v4397 = vadd.f32 %v4108, %v4396
    %v4398 = vpop.f32.mrf.mxu0
    %4399 = vmatprep.mubr.bf16.mxu0 %v2928
    %4400 = vmatmul.mubr.bf16.gmra.mxu0 %v3183
    %v4401 = vpop.f32.mrf.mxu0
    %v4402 = vadd.f32 %v4113, %v4401
    %v4403 = vpop.f32.mrf.mxu0
    %v4404 = vpop.f32.mrf.mxu0
    %v4405 = vadd.f32 %v4116, %v4404
    %v4406 = vpop.f32.mrf.mxu0
    %4407 = vmatprep.mubr.bf16.mxu0 %v2929
    %4408 = vmatmul.mubr.bf16.gmra.mxu0 %v3184
    %v4409 = vpop.f32.mrf.mxu0
    %v4410 = vadd.f32 %v4121, %v4409
    %v4411 = vpop.f32.mrf.mxu0
    %v4412 = vpop.f32.mrf.mxu0
    %v4413 = vadd.f32 %v4124, %v4412
    %v4414 = vpop.f32.mrf.mxu0
    %4415 = vmatprep.mubr.bf16.mxu0 %v3225
    %4416 = vmatmul.mubr.bf16.gmra.mxu0 %v3185
    %v4417 = vpop.f32.mrf.mxu0
    %v4418 = vadd.f32 %v4129, %v4417
    %v4419 = vpop.f32.mrf.mxu0
    %v4420 = vpop.f32.mrf.mxu0
    %v4421 = vadd.f32 %v4132, %v4420
    %v4422 = vpop.f32.mrf.mxu0
    %4423 = vdwg.mxu0
    %4424 = vmatprep.subr.bf16.mxu0 0
    %4425 = vmatpush1.bf16.msra.mxu0 %v3741
    %4426 = vmatprep.subr.bf16.mxu0 0
    %4427 = vmatpush1.bf16.msra.mxu0 %v3740
    %4428 = vmatprep.subr.bf16.mxu0 0
    %4429 = vmatpush1.bf16.msra.mxu0 %v3739
    %4430 = vmatprep.subr.bf16.mxu0 0
    %4431 = vmatpush1.bf16.msra.mxu0 %v3738
    %4432 = vmatprep.subr.bf16.mxu0 0
    %4433 = vmatpush1.bf16.msra.mxu0 %v3737
    %4434 = vmatprep.subr.bf16.mxu0 0
    %4435 = vmatpush1.bf16.msra.mxu0 %v3736
    %4436 = vmatprep.subr.bf16.mxu0 0
    %4437 = vmatpush1.bf16.msra.mxu0 %v3735
    %4438 = vmatprep.subr.bf16.mxu0 0
    %4439 = vmatpush1.bf16.msra.mxu0 %v3734
    %4440 = vmatprep.subr.bf16.mxu0 0
    %4441 = vmatpush2.bf16.msra.mxu0 %v3749
    %4442 = vmatprep.subr.bf16.mxu0 0
    %4443 = vmatpush2.bf16.msra.mxu0 %v3748
    %4444 = vmatprep.subr.bf16.mxu0 0
    %4445 = vmatpush2.bf16.msra.mxu0 %v3747
    %4446 = vmatprep.subr.bf16.mxu0 0
    %4447 = vmatpush2.bf16.msra.mxu0 %v3746
    %4448 = vmatprep.subr.bf16.mxu0 0
    %4449 = vmatpush2.bf16.msra.mxu0 %v3745
    %4450 = vmatprep.subr.bf16.mxu0 0
    %4451 = vmatpush2.bf16.msra.mxu0 %v3744
    %4452 = vmatprep.subr.bf16.mxu0 0
    %4453 = vmatpush2.bf16.msra.mxu0 %v3743
    %4454 = vmatprep.subr.bf16.mxu0 0
    %4455 = vmatpush2.bf16.msra.mxu0 %v3742
    %4456 = vmatprep.mubr.bf16.mxu0 %v3155
    %4457 = vmatmul.mubr.bf16.gmra.mxu0 %v3027
    %v4458 = vpop.f32.mrf.mxu0
    %v4459 = vadd.f32 %v4170, %v4458
    %v4460 = vpop.f32.mrf.mxu0
    %v4461 = vpop.f32.mrf.mxu0
    %v4462 = vadd.f32 %v4173, %v4461
    %v4463 = vpop.f32.mrf.mxu0
    %4464 = vmatprep.mubr.bf16.mxu0 %v3156
    %4465 = vmatmul.mubr.bf16.gmra.mxu0 %v3028
    %v4466 = vpop.f32.mrf.mxu0
    %v4467 = vadd.f32 %v4178, %v4466
    %v4468 = vpop.f32.mrf.mxu0
    %v4469 = vpop.f32.mrf.mxu0
    %v4470 = vadd.f32 %v4181, %v4469
    %v4471 = vpop.f32.mrf.mxu0
    %4472 = vmatprep.mubr.bf16.mxu0 %v3157
    %4473 = vmatmul.mubr.bf16.gmra.mxu0 %v3029
    %v4474 = vpop.f32.mrf.mxu0
    %v4475 = vadd.f32 %v4186, %v4474
    %v4476 = vpop.f32.mrf.mxu0
    %v4477 = vpop.f32.mrf.mxu0
    %v4478 = vadd.f32 %v4189, %v4477
    %v4479 = vpop.f32.mrf.mxu0
    %4480 = vmatprep.mubr.bf16.mxu0 %v3158
    %4481 = vmatmul.mubr.bf16.gmra.mxu0 %v3030
    %v4482 = vpop.f32.mrf.mxu0
    %v4483 = vadd.f32 %v4194, %v4482
    %v4484 = vpop.f32.mrf.mxu0
    %v4485 = vpop.f32.mrf.mxu0
    %v4486 = vadd.f32 %v4197, %v4485
    %v4487 = vpop.f32.mrf.mxu0
    %4488 = vmatprep.mubr.bf16.mxu0 %v3159
    %4489 = vmatmul.mubr.bf16.gmra.mxu0 %v3031
    %v4490 = vpop.f32.mrf.mxu0
    %v4491 = vadd.f32 %v4202, %v4490
    %v4492 = vpop.f32.mrf.mxu0
    %v4493 = vpop.f32.mrf.mxu0
    %v4494 = vadd.f32 %v4205, %v4493
    %v4495 = vpop.f32.mrf.mxu0
    %4496 = vmatprep.mubr.bf16.mxu0 %v3160
    %4497 = vmatmul.mubr.bf16.gmra.mxu0 %v3032
    %v4498 = vpop.f32.mrf.mxu0
    %v4499 = vadd.f32 %v4210, %v4498
    %v4500 = vpop.f32.mrf.mxu0
    %v4501 = vpop.f32.mrf.mxu0
    %v4502 = vadd.f32 %v4213, %v4501
    %v4503 = vpop.f32.mrf.mxu0
    %4504 = vmatprep.mubr.bf16.mxu0 %v3161
    %4505 = vmatmul.mubr.bf16.gmra.mxu0 %v3033
    %v4506 = vpop.f32.mrf.mxu0
    %v4507 = vadd.f32 %v4218, %v4506
    %v4508 = vpop.f32.mrf.mxu0
    %v4509 = vpop.f32.mrf.mxu0
    %v4510 = vadd.f32 %v4221, %v4509
    %v4511 = vpop.f32.mrf.mxu0
    %4512 = vmatprep.mubr.bf16.mxu0 %v3162
    %4513 = vmatmul.mubr.bf16.gmra.mxu0 %v3034
    %v4514 = vpop.f32.mrf.mxu0
    %v4515 = vadd.f32 %v4226, %v4514
    %v4516 = vpop.f32.mrf.mxu0
    %v4517 = vpop.f32.mrf.mxu0
    %v4518 = vadd.f32 %v4229, %v4517
    %v4519 = vpop.f32.mrf.mxu0
    %4520 = vmatprep.mubr.bf16.mxu0 %v3163
    %4521 = vmatmul.mubr.bf16.gmra.mxu0 %v3035
    %v4522 = vpop.f32.mrf.mxu0
    %v4523 = vadd.f32 %v4234, %v4522
    %v4524 = vpop.f32.mrf.mxu0
    %v4525 = vpop.f32.mrf.mxu0
    %v4526 = vadd.f32 %v4237, %v4525
    %v4527 = vpop.f32.mrf.mxu0
    %4528 = vmatprep.mubr.bf16.mxu0 %v3164
    %4529 = vmatmul.mubr.bf16.gmra.mxu0 %v3036
    %v4530 = vpop.f32.mrf.mxu0
    %v4531 = vadd.f32 %v4242, %v4530
    %v4532 = vpop.f32.mrf.mxu0
    %v4533 = vpop.f32.mrf.mxu0
    %v4534 = vadd.f32 %v4245, %v4533
    %v4535 = vpop.f32.mrf.mxu0
    %4536 = vmatprep.mubr.bf16.mxu0 %v3165
    %4537 = vmatmul.mubr.bf16.gmra.mxu0 %v3037
    %v4538 = vpop.f32.mrf.mxu0
    %v4539 = vadd.f32 %v4250, %v4538
    %v4540 = vpop.f32.mrf.mxu0
    %v4541 = vpop.f32.mrf.mxu0
    %v4542 = vadd.f32 %v4253, %v4541
    %v4543 = vpop.f32.mrf.mxu0
    %4544 = vmatprep.mubr.bf16.mxu0 %v3166
    %4545 = vmatmul.mubr.bf16.gmra.mxu0 %v3038
    %v4546 = vpop.f32.mrf.mxu0
    %v4547 = vadd.f32 %v4258, %v4546
    %v4548 = vpop.f32.mrf.mxu0
    %v4549 = vpop.f32.mrf.mxu0
    %v4550 = vadd.f32 %v4261, %v4549
    %v4551 = vpop.f32.mrf.mxu0
    %4552 = vmatprep.mubr.bf16.mxu0 %v3167
    %4553 = vmatmul.mubr.bf16.gmra.mxu0 %v3039
    %v4554 = vpop.f32.mrf.mxu0
    %v4555 = vadd.f32 %v4266, %v4554
    %v4556 = vpop.f32.mrf.mxu0
    %v4557 = vpop.f32.mrf.mxu0
    %v4558 = vadd.f32 %v4269, %v4557
    %v4559 = vpop.f32.mrf.mxu0
    %4560 = vmatprep.mubr.bf16.mxu0 %v3168
    %4561 = vmatmul.mubr.bf16.gmra.mxu0 %v3040
    %v4562 = vpop.f32.mrf.mxu0
    %v4563 = vadd.f32 %v4274, %v4562
    %v4564 = vpop.f32.mrf.mxu0
    %v4565 = vpop.f32.mrf.mxu0
    %v4566 = vadd.f32 %v4277, %v4565
    %v4567 = vpop.f32.mrf.mxu0
    %4568 = vmatprep.mubr.bf16.mxu0 %v3169
    %4569 = vmatmul.mubr.bf16.gmra.mxu0 %v3041
    %v4570 = vpop.f32.mrf.mxu0
    %v4571 = vadd.f32 %v4282, %v4570
    %v4572 = vpop.f32.mrf.mxu0
    %v4573 = vpop.f32.mrf.mxu0
    %v4574 = vadd.f32 %v4285, %v4573
    %v4575 = vpop.f32.mrf.mxu0
    %4576 = vmatprep.mubr.bf16.mxu0 %v3240
    %4577 = vmatmul.mubr.bf16.gmra.mxu0 %v3232
    %v4578 = vpop.f32.mrf.mxu0
    %v4579 = vadd.f32 %v4290, %v4578
    %v4580 = vpop.f32.mrf.mxu0
    %v4581 = vpop.f32.mrf.mxu0
    %v4582 = vadd.f32 %v4293, %v4581
    %v4583 = vpop.f32.mrf.mxu0
    %4584 = vmatprep.mubr.bf16.mxu0 %v3171
    %4585 = vmatmul.mubr.bf16.gmra.mxu0 %v3043
    %v4586 = vpop.f32.mrf.mxu0
    %v4587 = vadd.f32 %v4298, %v4586
    %v4588 = vpop.f32.mrf.mxu0
    %v4589 = vpop.f32.mrf.mxu0
    %v4590 = vadd.f32 %v4301, %v4589
    %v4591 = vpop.f32.mrf.mxu0
    %4592 = vmatprep.mubr.bf16.mxu0 %v3172
    %4593 = vmatmul.mubr.bf16.gmra.mxu0 %v3044
    %v4594 = vpop.f32.mrf.mxu0
    %v4595 = vadd.f32 %v4306, %v4594
    %v4596 = vpop.f32.mrf.mxu0
    %v4597 = vpop.f32.mrf.mxu0
    %v4598 = vadd.f32 %v4309, %v4597
    %v4599 = vpop.f32.mrf.mxu0
    %4600 = vmatprep.mubr.bf16.mxu0 %v3173
    %4601 = vmatmul.mubr.bf16.gmra.mxu0 %v3045
    %v4602 = vpop.f32.mrf.mxu0
    %v4603 = vadd.f32 %v4314, %v4602
    %v4604 = vpop.f32.mrf.mxu0
    %v4605 = vpop.f32.mrf.mxu0
    %v4606 = vadd.f32 %v4317, %v4605
    %v4607 = vpop.f32.mrf.mxu0
    %4608 = vmatprep.mubr.bf16.mxu0 %v3174
    %4609 = vmatmul.mubr.bf16.gmra.mxu0 %v3046
    %v4610 = vpop.f32.mrf.mxu0
    %v4611 = vadd.f32 %v4322, %v4610
    %v4612 = vpop.f32.mrf.mxu0
    %v4613 = vpop.f32.mrf.mxu0
    %v4614 = vadd.f32 %v4325, %v4613
    %v4615 = vpop.f32.mrf.mxu0
    %4616 = vmatprep.mubr.bf16.mxu0 %v3175
    %4617 = vmatmul.mubr.bf16.gmra.mxu0 %v3047
    %v4618 = vpop.f32.mrf.mxu0
    %v4619 = vadd.f32 %v4330, %v4618
    %v4620 = vpop.f32.mrf.mxu0
    %v4621 = vpop.f32.mrf.mxu0
    %v4622 = vadd.f32 %v4333, %v4621
    %v4623 = vpop.f32.mrf.mxu0
    %4624 = vmatprep.mubr.bf16.mxu0 %v3176
    %4625 = vmatmul.mubr.bf16.gmra.mxu0 %v3048
    %v4626 = vpop.f32.mrf.mxu0
    %v4627 = vadd.f32 %v4338, %v4626
    %v4628 = vpop.f32.mrf.mxu0
    %v4629 = vpop.f32.mrf.mxu0
    %v4630 = vadd.f32 %v4341, %v4629
    %v4631 = vpop.f32.mrf.mxu0
    %4632 = vmatprep.mubr.bf16.mxu0 %v3177
    %4633 = vmatmul.mubr.bf16.gmra.mxu0 %v3049
    %v4634 = vpop.f32.mrf.mxu0
    %v4635 = vadd.f32 %v4346, %v4634
    %v4636 = vpop.f32.mrf.mxu0
    %v4637 = vpop.f32.mrf.mxu0
    %v4638 = vadd.f32 %v4349, %v4637
    %v4639 = vpop.f32.mrf.mxu0
    %4640 = vmatprep.mubr.bf16.mxu0 %v3178
    %4641 = vmatmul.mubr.bf16.gmra.mxu0 %v3050
    %v4642 = vpop.f32.mrf.mxu0
    %v4643 = vadd.f32 %v4354, %v4642
    %v4644 = vpop.f32.mrf.mxu0
    %v4645 = vpop.f32.mrf.mxu0
    %v4646 = vadd.f32 %v4357, %v4645
    %v4647 = vpop.f32.mrf.mxu0
    %4648 = vmatprep.mubr.bf16.mxu0 %v3179
    %4649 = vmatmul.mubr.bf16.gmra.mxu0 %v3051
    %v4650 = vpop.f32.mrf.mxu0
    %v4651 = vadd.f32 %v4362, %v4650
    %v4652 = vpop.f32.mrf.mxu0
    %v4653 = vpop.f32.mrf.mxu0
    %v4654 = vadd.f32 %v4365, %v4653
    %v4655 = vpop.f32.mrf.mxu0
    %4656 = vmatprep.mubr.bf16.mxu0 %v3180
    %4657 = vmatmul.mubr.bf16.gmra.mxu0 %v3052
    %v4658 = vpop.f32.mrf.mxu0
    %v4659 = vadd.f32 %v4370, %v4658
    %v4660 = vpop.f32.mrf.mxu0
    %v4661 = vpop.f32.mrf.mxu0
    %v4662 = vadd.f32 %v4373, %v4661
    %v4663 = vpop.f32.mrf.mxu0
    %4664 = vmatprep.mubr.bf16.mxu0 %v3181
    %4665 = vmatmul.mubr.bf16.gmra.mxu0 %v3053
    %v4666 = vpop.f32.mrf.mxu0
    %v4667 = vadd.f32 %v4378, %v4666
    %v4668 = vpop.f32.mrf.mxu0
    %v4669 = vpop.f32.mrf.mxu0
    %v4670 = vadd.f32 %v4381, %v4669
    %v4671 = vpop.f32.mrf.mxu0
    %4672 = vmatprep.mubr.bf16.mxu0 %v3182
    %4673 = vmatmul.mubr.bf16.gmra.mxu0 %v3054
    %v4674 = vpop.f32.mrf.mxu0
    %v4675 = vadd.f32 %v4386, %v4674
    %v4676 = vpop.f32.mrf.mxu0
    %v4677 = vpop.f32.mrf.mxu0
    %v4678 = vadd.f32 %v4389, %v4677
    %v4679 = vpop.f32.mrf.mxu0
    %4680 = vmatprep.mubr.bf16.mxu0 %v3183
    %4681 = vmatmul.mubr.bf16.gmra.mxu0 %v3055
    %v4682 = vpop.f32.mrf.mxu0
    %v4683 = vadd.f32 %v4394, %v4682
    %v4684 = vpop.f32.mrf.mxu0
    %v4685 = vpop.f32.mrf.mxu0
    %v4686 = vadd.f32 %v4397, %v4685
    %v4687 = vpop.f32.mrf.mxu0
    %4688 = vmatprep.mubr.bf16.mxu0 %v3184
    %4689 = vmatmul.mubr.bf16.gmra.mxu0 %v3056
    %v4690 = vpop.f32.mrf.mxu0
    %v4691 = vadd.f32 %v4402, %v4690
    %v4692 = vpop.f32.mrf.mxu0
    %v4693 = vpop.f32.mrf.mxu0
    %v4694 = vadd.f32 %v4405, %v4693
    %v4695 = vpop.f32.mrf.mxu0
    %4696 = vmatprep.mubr.bf16.mxu0 %v3185
    %4697 = vmatmul.mubr.bf16.gmra.mxu0 %v3057
    %v4698 = vpop.f32.mrf.mxu0
    %v4699 = vadd.f32 %v4410, %v4698
    %v4700 = vpop.f32.mrf.mxu0
    %v4701 = vpop.f32.mrf.mxu0
    %v4702 = vadd.f32 %v4413, %v4701
    %v4703 = vpop.f32.mrf.mxu0
    %4704 = vmatprep.mubr.bf16.mxu0 %v3241
    %4705 = vmatmul.mubr.bf16.gmra.mxu0 %v3233
    %v4706 = vpop.f32.mrf.mxu0
    %v4707 = vadd.f32 %v4418, %v4706
    %v4708 = vpop.f32.mrf.mxu0
    %v4709 = vpop.f32.mrf.mxu0
    %v4710 = vadd.f32 %v4421, %v4709
    %v4711 = vpop.f32.mrf.mxu0
    %4712 = vdwg.mxu0
    %4713 = vmatprep.subr.bf16.mxu0 0
    %4714 = vmatpush1.bf16.msra.mxu0 %v3757
    %4715 = vmatprep.subr.bf16.mxu0 0
    %4716 = vmatpush1.bf16.msra.mxu0 %v3756
    %4717 = vmatprep.subr.bf16.mxu0 0
    %4718 = vmatpush1.bf16.msra.mxu0 %v3755
    %4719 = vmatprep.subr.bf16.mxu0 0
    %4720 = vmatpush1.bf16.msra.mxu0 %v3754
    %4721 = vmatprep.subr.bf16.mxu0 0
    %4722 = vmatpush1.bf16.msra.mxu0 %v3753
    %4723 = vmatprep.subr.bf16.mxu0 0
    %4724 = vmatpush1.bf16.msra.mxu0 %v3752
    %4725 = vmatprep.subr.bf16.mxu0 0
    %4726 = vmatpush1.bf16.msra.mxu0 %v3751
    %4727 = vmatprep.subr.bf16.mxu0 0
    %4728 = vmatpush1.bf16.msra.mxu0 %v3750
    %4729 = vmatprep.subr.bf16.mxu0 0
    %4730 = vmatpush2.bf16.msra.mxu0 %v3765
    %4731 = vmatprep.subr.bf16.mxu0 0
    %4732 = vmatpush2.bf16.msra.mxu0 %v3764
    %4733 = vmatprep.subr.bf16.mxu0 0
    %4734 = vmatpush2.bf16.msra.mxu0 %v3763
    %4735 = vmatprep.subr.bf16.mxu0 0
    %4736 = vmatpush2.bf16.msra.mxu0 %v3762
    %4737 = vmatprep.subr.bf16.mxu0 0
    %4738 = vmatpush2.bf16.msra.mxu0 %v3761
    %4739 = vmatprep.subr.bf16.mxu0 0
    %4740 = vmatpush2.bf16.msra.mxu0 %v3760
    %4741 = vmatprep.subr.bf16.mxu0 0
    %4742 = vmatpush2.bf16.msra.mxu0 %v3759
    %4743 = vmatprep.subr.bf16.mxu0 0
    %4744 = vmatpush2.bf16.msra.mxu0 %v3758
    %4745 = vmatprep.mubr.bf16.mxu0 %v3028
    %4746 = vmatmul.mubr.bf16.gmra.mxu0 %v2900
    %v4747 = vpop.f32.mrf.mxu0
    %v4748 = vadd.f32 %v4459, %v4747
    %v4749 = vpop.f32.mrf.mxu0
    %v4750 = vpop.f32.mrf.mxu0
    %v4751 = vadd.f32 %v4462, %v4750
    %v4752 = vpop.f32.mrf.mxu0
    %4753 = vmatprep.mubr.bf16.mxu0 %v3029
    %4754 = vmatmul.mubr.bf16.gmra.mxu0 %v2901
    %v4755 = vpop.f32.mrf.mxu0
    %v4756 = vadd.f32 %v4467, %v4755
    %v4757 = vpop.f32.mrf.mxu0
    %v4758 = vpop.f32.mrf.mxu0
    %v4759 = vadd.f32 %v4470, %v4758
    %v4760 = vpop.f32.mrf.mxu0
    %4761 = vmatprep.mubr.bf16.mxu0 %v3030
    %4762 = vmatmul.mubr.bf16.gmra.mxu0 %v2902
    %v4763 = vpop.f32.mrf.mxu0
    %v4764 = vadd.f32 %v4475, %v4763
    %v4765 = vpop.f32.mrf.mxu0
    %v4766 = vpop.f32.mrf.mxu0
    %v4767 = vadd.f32 %v4478, %v4766
    %v4768 = vpop.f32.mrf.mxu0
    %4769 = vmatprep.mubr.bf16.mxu0 %v3031
    %4770 = vmatmul.mubr.bf16.gmra.mxu0 %v2903
    %v4771 = vpop.f32.mrf.mxu0
    %v4772 = vadd.f32 %v4483, %v4771
    %v4773 = vpop.f32.mrf.mxu0
    %v4774 = vpop.f32.mrf.mxu0
    %v4775 = vadd.f32 %v4486, %v4774
    %v4776 = vpop.f32.mrf.mxu0
    %4777 = vmatprep.mubr.bf16.mxu0 %v3032
    %4778 = vmatmul.mubr.bf16.gmra.mxu0 %v2904
    %v4779 = vpop.f32.mrf.mxu0
    %v4780 = vadd.f32 %v4491, %v4779
    %v4781 = vpop.f32.mrf.mxu0
    %v4782 = vpop.f32.mrf.mxu0
    %v4783 = vadd.f32 %v4494, %v4782
    %v4784 = vpop.f32.mrf.mxu0
    %4785 = vmatprep.mubr.bf16.mxu0 %v3033
    %4786 = vmatmul.mubr.bf16.gmra.mxu0 %v2905
    %v4787 = vpop.f32.mrf.mxu0
    %v4788 = vadd.f32 %v4499, %v4787
    %v4789 = vpop.f32.mrf.mxu0
    %v4790 = vpop.f32.mrf.mxu0
    %v4791 = vadd.f32 %v4502, %v4790
    %v4792 = vpop.f32.mrf.mxu0
    %4793 = vmatprep.mubr.bf16.mxu0 %v3034
    %4794 = vmatmul.mubr.bf16.gmra.mxu0 %v2906
    %v4795 = vpop.f32.mrf.mxu0
    %v4796 = vadd.f32 %v4507, %v4795
    %v4797 = vpop.f32.mrf.mxu0
    %v4798 = vpop.f32.mrf.mxu0
    %v4799 = vadd.f32 %v4510, %v4798
    %v4800 = vpop.f32.mrf.mxu0
    %4801 = vmatprep.mubr.bf16.mxu0 %v3035
    %4802 = vmatmul.mubr.bf16.gmra.mxu0 %v2907
    %v4803 = vpop.f32.mrf.mxu0
    %v4804 = vadd.f32 %v4515, %v4803
    %v4805 = vpop.f32.mrf.mxu0
    %v4806 = vpop.f32.mrf.mxu0
    %v4807 = vadd.f32 %v4518, %v4806
    %v4808 = vpop.f32.mrf.mxu0
    %4809 = vmatprep.mubr.bf16.mxu0 %v3036
    %4810 = vmatmul.mubr.bf16.gmra.mxu0 %v2908
    %v4811 = vpop.f32.mrf.mxu0
    %v4812 = vadd.f32 %v4523, %v4811
    %v4813 = vpop.f32.mrf.mxu0
    %v4814 = vpop.f32.mrf.mxu0
    %v4815 = vadd.f32 %v4526, %v4814
    %v4816 = vpop.f32.mrf.mxu0
    %4817 = vmatprep.mubr.bf16.mxu0 %v3037
    %4818 = vmatmul.mubr.bf16.gmra.mxu0 %v2909
    %v4819 = vpop.f32.mrf.mxu0
    %v4820 = vadd.f32 %v4531, %v4819
    %v4821 = vpop.f32.mrf.mxu0
    %v4822 = vpop.f32.mrf.mxu0
    %v4823 = vadd.f32 %v4534, %v4822
    %v4824 = vpop.f32.mrf.mxu0
    %4825 = vmatprep.mubr.bf16.mxu0 %v3038
    %4826 = vmatmul.mubr.bf16.gmra.mxu0 %v2910
    %v4827 = vpop.f32.mrf.mxu0
    %v4828 = vadd.f32 %v4539, %v4827
    %v4829 = vpop.f32.mrf.mxu0
    %v4830 = vpop.f32.mrf.mxu0
    %v4831 = vadd.f32 %v4542, %v4830
    %v4832 = vpop.f32.mrf.mxu0
    %4833 = vmatprep.mubr.bf16.mxu0 %v3039
    %4834 = vmatmul.mubr.bf16.gmra.mxu0 %v2911
    %v4835 = vpop.f32.mrf.mxu0
    %v4836 = vadd.f32 %v4547, %v4835
    %v4837 = vpop.f32.mrf.mxu0
    %v4838 = vpop.f32.mrf.mxu0
    %v4839 = vadd.f32 %v4550, %v4838
    %v4840 = vpop.f32.mrf.mxu0
    %4841 = vmatprep.mubr.bf16.mxu0 %v3040
    %4842 = vmatmul.mubr.bf16.gmra.mxu0 %v2912
    %v4843 = vpop.f32.mrf.mxu0
    %v4844 = vadd.f32 %v4555, %v4843
    %v4845 = vpop.f32.mrf.mxu0
    %v4846 = vpop.f32.mrf.mxu0
    %v4847 = vadd.f32 %v4558, %v4846
    %v4848 = vpop.f32.mrf.mxu0
    %4849 = vmatprep.mubr.bf16.mxu0 %v3041
    %4850 = vmatmul.mubr.bf16.gmra.mxu0 %v2913
    %v4851 = vpop.f32.mrf.mxu0
    %v4852 = vadd.f32 %v4563, %v4851
    %v4853 = vpop.f32.mrf.mxu0
    %v4854 = vpop.f32.mrf.mxu0
    %v4855 = vadd.f32 %v4566, %v4854
    %v4856 = vpop.f32.mrf.mxu0
    %4857 = vmatprep.mubr.bf16.mxu0 %v3232
    %4858 = vmatmul.mubr.bf16.gmra.mxu0 %v3224
    %v4859 = vpop.f32.mrf.mxu0
    %v4860 = vadd.f32 %v4571, %v4859
    %v4861 = vpop.f32.mrf.mxu0
    %v4862 = vpop.f32.mrf.mxu0
    %v4863 = vadd.f32 %v4574, %v4862
    %v4864 = vpop.f32.mrf.mxu0
    %4865 = vmatprep.mubr.bf16.mxu0 %v3258
    %4866 = vmatmul.mubr.bf16.gmra.mxu0 %v3250
    %v4867 = vpop.f32.mrf.mxu0
    %v4868 = vadd.f32 %v4579, %v4867
    %v4869 = vpop.f32.mrf.mxu0
    %v4870 = vpop.f32.mrf.mxu0
    %v4871 = vadd.f32 %v4582, %v4870
    %v4872 = vpop.f32.mrf.mxu0
    %4873 = vmatprep.mubr.bf16.mxu0 %v3044
    %4874 = vmatmul.mubr.bf16.gmra.mxu0 %v2916
    %v4875 = vpop.f32.mrf.mxu0
    %v4876 = vadd.f32 %v4587, %v4875
    %v4877 = vpop.f32.mrf.mxu0
    %v4878 = vpop.f32.mrf.mxu0
    %v4879 = vadd.f32 %v4590, %v4878
    %v4880 = vpop.f32.mrf.mxu0
    %4881 = vmatprep.mubr.bf16.mxu0 %v3045
    %4882 = vmatmul.mubr.bf16.gmra.mxu0 %v2917
    %v4883 = vpop.f32.mrf.mxu0
    %v4884 = vadd.f32 %v4595, %v4883
    %v4885 = vpop.f32.mrf.mxu0
    %v4886 = vpop.f32.mrf.mxu0
    %v4887 = vadd.f32 %v4598, %v4886
    %v4888 = vpop.f32.mrf.mxu0
    %4889 = vmatprep.mubr.bf16.mxu0 %v3046
    %4890 = vmatmul.mubr.bf16.gmra.mxu0 %v2918
    %v4891 = vpop.f32.mrf.mxu0
    %v4892 = vadd.f32 %v4603, %v4891
    %v4893 = vpop.f32.mrf.mxu0
    %v4894 = vpop.f32.mrf.mxu0
    %v4895 = vadd.f32 %v4606, %v4894
    %v4896 = vpop.f32.mrf.mxu0
    %4897 = vmatprep.mubr.bf16.mxu0 %v3047
    %4898 = vmatmul.mubr.bf16.gmra.mxu0 %v2919
    %v4899 = vpop.f32.mrf.mxu0
    %v4900 = vadd.f32 %v4611, %v4899
    %v4901 = vpop.f32.mrf.mxu0
    %v4902 = vpop.f32.mrf.mxu0
    %v4903 = vadd.f32 %v4614, %v4902
    %v4904 = vpop.f32.mrf.mxu0
    %4905 = vmatprep.mubr.bf16.mxu0 %v3048
    %4906 = vmatmul.mubr.bf16.gmra.mxu0 %v2920
    %v4907 = vpop.f32.mrf.mxu0
    %v4908 = vadd.f32 %v4619, %v4907
    %v4909 = vpop.f32.mrf.mxu0
    %v4910 = vpop.f32.mrf.mxu0
    %v4911 = vadd.f32 %v4622, %v4910
    %v4912 = vpop.f32.mrf.mxu0
    %4913 = vmatprep.mubr.bf16.mxu0 %v3049
    %4914 = vmatmul.mubr.bf16.gmra.mxu0 %v2921
    %v4915 = vpop.f32.mrf.mxu0
    %v4916 = vadd.f32 %v4627, %v4915
    %v4917 = vpop.f32.mrf.mxu0
    %v4918 = vpop.f32.mrf.mxu0
    %v4919 = vadd.f32 %v4630, %v4918
    %v4920 = vpop.f32.mrf.mxu0
    %4921 = vmatprep.mubr.bf16.mxu0 %v3050
    %4922 = vmatmul.mubr.bf16.gmra.mxu0 %v2922
    %v4923 = vpop.f32.mrf.mxu0
    %v4924 = vadd.f32 %v4635, %v4923
    %v4925 = vpop.f32.mrf.mxu0
    %v4926 = vpop.f32.mrf.mxu0
    %v4927 = vadd.f32 %v4638, %v4926
    %v4928 = vpop.f32.mrf.mxu0
    %4929 = vmatprep.mubr.bf16.mxu0 %v3051
    %4930 = vmatmul.mubr.bf16.gmra.mxu0 %v2923
    %v4931 = vpop.f32.mrf.mxu0
    %v4932 = vadd.f32 %v4643, %v4931
    %v4933 = vpop.f32.mrf.mxu0
    %v4934 = vpop.f32.mrf.mxu0
    %v4935 = vadd.f32 %v4646, %v4934
    %v4936 = vpop.f32.mrf.mxu0
    %4937 = vmatprep.mubr.bf16.mxu0 %v3052
    %4938 = vmatmul.mubr.bf16.gmra.mxu0 %v2924
    %v4939 = vpop.f32.mrf.mxu0
    %v4940 = vadd.f32 %v4651, %v4939
    %v4941 = vpop.f32.mrf.mxu0
    %v4942 = vpop.f32.mrf.mxu0
    %v4943 = vadd.f32 %v4654, %v4942
    %v4944 = vpop.f32.mrf.mxu0
    %4945 = vmatprep.mubr.bf16.mxu0 %v3053
    %4946 = vmatmul.mubr.bf16.gmra.mxu0 %v2925
    %v4947 = vpop.f32.mrf.mxu0
    %v4948 = vadd.f32 %v4659, %v4947
    %v4949 = vpop.f32.mrf.mxu0
    %v4950 = vpop.f32.mrf.mxu0
    %v4951 = vadd.f32 %v4662, %v4950
    %v4952 = vpop.f32.mrf.mxu0
    %4953 = vmatprep.mubr.bf16.mxu0 %v3054
    %4954 = vmatmul.mubr.bf16.gmra.mxu0 %v2926
    %v4955 = vpop.f32.mrf.mxu0
    %v4956 = vadd.f32 %v4667, %v4955
    %v4957 = vpop.f32.mrf.mxu0
    %v4958 = vpop.f32.mrf.mxu0
    %v4959 = vadd.f32 %v4670, %v4958
    %v4960 = vpop.f32.mrf.mxu0
    %4961 = vmatprep.mubr.bf16.mxu0 %v3055
    %4962 = vmatmul.mubr.bf16.gmra.mxu0 %v2927
    %v4963 = vpop.f32.mrf.mxu0
    %v4964 = vadd.f32 %v4675, %v4963
    %v4965 = vpop.f32.mrf.mxu0
    %v4966 = vpop.f32.mrf.mxu0
    %v4967 = vadd.f32 %v4678, %v4966
    %v4968 = vpop.f32.mrf.mxu0
    %4969 = vmatprep.mubr.bf16.mxu0 %v3056
    %4970 = vmatmul.mubr.bf16.gmra.mxu0 %v2928
    %v4971 = vpop.f32.mrf.mxu0
    %v4972 = vadd.f32 %v4683, %v4971
    %v4973 = vpop.f32.mrf.mxu0
    %v4974 = vpop.f32.mrf.mxu0
    %v4975 = vadd.f32 %v4686, %v4974
    %v4976 = vpop.f32.mrf.mxu0
    %4977 = vmatprep.mubr.bf16.mxu0 %v3057
    %4978 = vmatmul.mubr.bf16.gmra.mxu0 %v2929
    %v4979 = vpop.f32.mrf.mxu0
    %v4980 = vadd.f32 %v4691, %v4979
    %v4981 = vpop.f32.mrf.mxu0
    %v4982 = vpop.f32.mrf.mxu0
    %v4983 = vadd.f32 %v4694, %v4982
    %v4984 = vpop.f32.mrf.mxu0
    %4985 = vmatprep.mubr.bf16.mxu0 %v3233
    %4986 = vmatmul.mubr.bf16.gmra.mxu0 %v3225
    %v4987 = vpop.f32.mrf.mxu0
    %v4988 = vadd.f32 %v4699, %v4987
    %v4989 = vpop.f32.mrf.mxu0
    %v4990 = vpop.f32.mrf.mxu0
    %v4991 = vadd.f32 %v4702, %v4990
    %v4992 = vpop.f32.mrf.mxu0
    %4993 = vmatprep.mubr.bf16.mxu0 %v3259
    %4994 = vmatmul.mubr.bf16.gmra.mxu0 %v3251
    %v4995 = vpop.f32.mrf.mxu0
    %v4996 = vadd.f32 %v4707, %v4995
    %v4997 = vpop.f32.mrf.mxu0
    %v4998 = vpop.f32.mrf.mxu0
    %v4999 = vadd.f32 %v4710, %v4998
    %v5000 = vpop.f32.mrf.mxu0
    %5001 = vdwg.mxu0
    %5002 = vmatprep.subr.bf16.mxu0 0
    %5003 = vmatpush1.bf16.msra.mxu0 %v3773
    %5004 = vmatprep.subr.bf16.mxu0 0
    %5005 = vmatpush1.bf16.msra.mxu0 %v3772
    %5006 = vmatprep.subr.bf16.mxu0 0
    %5007 = vmatpush1.bf16.msra.mxu0 %v3771
    %5008 = vmatprep.subr.bf16.mxu0 0
    %5009 = vmatpush1.bf16.msra.mxu0 %v3770
    %5010 = vmatprep.subr.bf16.mxu0 0
    %5011 = vmatpush1.bf16.msra.mxu0 %v3769
    %5012 = vmatprep.subr.bf16.mxu0 0
    %5013 = vmatpush1.bf16.msra.mxu0 %v3768
    %5014 = vmatprep.subr.bf16.mxu0 0
    %5015 = vmatpush1.bf16.msra.mxu0 %v3767
    %5016 = vmatprep.subr.bf16.mxu0 0
    %5017 = vmatpush1.bf16.msra.mxu0 %v3766
    %5018 = vmatprep.subr.bf16.mxu0 0
    %5019 = vmatpush2.bf16.msra.mxu0 0
    %5020 = vmatprep.subr.bf16.mxu0 0
    %5021 = vmatpush2.bf16.msra.mxu0 0
    %5022 = vmatprep.subr.bf16.mxu0 0
    %5023 = vmatpush2.bf16.msra.mxu0 0
    %5024 = vmatprep.subr.bf16.mxu0 0
    %5025 = vmatpush2.bf16.msra.mxu0 0
    %5026 = vmatprep.subr.bf16.mxu0 0
    %5027 = vmatpush2.bf16.msra.mxu0 0
    %5028 = vmatprep.subr.bf16.mxu0 0
    %5029 = vmatpush2.bf16.msra.mxu0 0
    %5030 = vmatprep.subr.bf16.mxu0 0
    %5031 = vmatpush2.bf16.msra.mxu0 0
    %5032 = vmatprep.subr.bf16.mxu0 0
    %5033 = vmatpush2.bf16.msra.mxu0 0
    %5034 = vmatprep.mubr.bf16.mxu0 0
    %5035 = vmatmul.mubr.bf16.gmra.mxu0 %v3156
    %v5036 = vpop.f32.mrf.mxu0
    %v5037 = vadd.f32 %v4748, %v5036
    %v5038 = vpop.f32.mrf.mxu0
    %v5039 = vpop.f32.mrf.mxu0
    %v5040 = vadd.f32 %v4751, %v5039
    %v5041 = vpop.f32.mrf.mxu0
    %5042 = vmatprep.mubr.bf16.mxu0 0
    %5043 = vmatmul.mubr.bf16.gmra.mxu0 %v3157
    %v5044 = vpop.f32.mrf.mxu0
    %v5045 = vadd.f32 %v4756, %v5044
    %v5046 = vpop.f32.mrf.mxu0
    %v5047 = vpop.f32.mrf.mxu0
    %v5048 = vadd.f32 %v4759, %v5047
    %v5049 = vpop.f32.mrf.mxu0
    %5050 = vmatprep.mubr.bf16.mxu0 0
    %5051 = vmatmul.mubr.bf16.gmra.mxu0 %v3158
    %v5052 = vpop.f32.mrf.mxu0
    %v5053 = vadd.f32 %v4764, %v5052
    %v5054 = vpop.f32.mrf.mxu0
    %v5055 = vpop.f32.mrf.mxu0
    %v5056 = vadd.f32 %v4767, %v5055
    %v5057 = vpop.f32.mrf.mxu0
    %5058 = vmatprep.mubr.bf16.mxu0 0
    %5059 = vmatmul.mubr.bf16.gmra.mxu0 %v3159
    %v5060 = vpop.f32.mrf.mxu0
    %v5061 = vadd.f32 %v4772, %v5060
    %v5062 = vpop.f32.mrf.mxu0
    %v5063 = vpop.f32.mrf.mxu0
    %v5064 = vadd.f32 %v4775, %v5063
    %v5065 = vpop.f32.mrf.mxu0
    %5066 = vmatprep.mubr.bf16.mxu0 0
    %5067 = vmatmul.mubr.bf16.gmra.mxu0 %v3160
    %v5068 = vpop.f32.mrf.mxu0
    %v5069 = vadd.f32 %v4780, %v5068
    %v5070 = vpop.f32.mrf.mxu0
    %v5071 = vpop.f32.mrf.mxu0
    %v5072 = vadd.f32 %v4783, %v5071
    %v5073 = vpop.f32.mrf.mxu0
    %5074 = vmatprep.mubr.bf16.mxu0 0
    %5075 = vmatmul.mubr.bf16.gmra.mxu0 %v3161
    %v5076 = vpop.f32.mrf.mxu0
    %v5077 = vadd.f32 %v4788, %v5076
    %v5078 = vpop.f32.mrf.mxu0
    %v5079 = vpop.f32.mrf.mxu0
    %v5080 = vadd.f32 %v4791, %v5079
    %v5081 = vpop.f32.mrf.mxu0
    %5082 = vmatprep.mubr.bf16.mxu0 0
    %5083 = vmatmul.mubr.bf16.gmra.mxu0 %v3162
    %v5084 = vpop.f32.mrf.mxu0
    %v5085 = vadd.f32 %v4796, %v5084
    %v5086 = vpop.f32.mrf.mxu0
    %v5087 = vpop.f32.mrf.mxu0
    %v5088 = vadd.f32 %v4799, %v5087
    %v5089 = vpop.f32.mrf.mxu0
    %5090 = vmatprep.mubr.bf16.mxu0 0
    %5091 = vmatmul.mubr.bf16.gmra.mxu0 %v3163
    %v5092 = vpop.f32.mrf.mxu0
    %v5093 = vadd.f32 %v4804, %v5092
    %v5094 = vpop.f32.mrf.mxu0
    %v5095 = vpop.f32.mrf.mxu0
    %v5096 = vadd.f32 %v4807, %v5095
    %v5097 = vpop.f32.mrf.mxu0
    %5098 = vmatprep.mubr.bf16.mxu0 0
    %5099 = vmatmul.mubr.bf16.gmra.mxu0 %v3164
    %v5100 = vpop.f32.mrf.mxu0
    %v5101 = vadd.f32 %v4812, %v5100
    %v5102 = vpop.f32.mrf.mxu0
    %v5103 = vpop.f32.mrf.mxu0
    %v5104 = vadd.f32 %v4815, %v5103
    %v5105 = vpop.f32.mrf.mxu0
    %5106 = vmatprep.mubr.bf16.mxu0 0
    %5107 = vmatmul.mubr.bf16.gmra.mxu0 %v3165
    %v5108 = vpop.f32.mrf.mxu0
    %v5109 = vadd.f32 %v4820, %v5108
    %v5110 = vpop.f32.mrf.mxu0
    %v5111 = vpop.f32.mrf.mxu0
    %v5112 = vadd.f32 %v4823, %v5111
    %v5113 = vpop.f32.mrf.mxu0
    %5114 = vmatprep.mubr.bf16.mxu0 0
    %5115 = vmatmul.mubr.bf16.gmra.mxu0 %v3166
    %v5116 = vpop.f32.mrf.mxu0
    %v5117 = vadd.f32 %v4828, %v5116
    %v5118 = vpop.f32.mrf.mxu0
    %v5119 = vpop.f32.mrf.mxu0
    %v5120 = vadd.f32 %v4831, %v5119
    %v5121 = vpop.f32.mrf.mxu0
    %5122 = vmatprep.mubr.bf16.mxu0 0
    %5123 = vmatmul.mubr.bf16.gmra.mxu0 %v3167
    %v5124 = vpop.f32.mrf.mxu0
    %v5125 = vadd.f32 %v4836, %v5124
    %v5126 = vpop.f32.mrf.mxu0
    %v5127 = vpop.f32.mrf.mxu0
    %v5128 = vadd.f32 %v4839, %v5127
    %v5129 = vpop.f32.mrf.mxu0
    %5130 = vmatprep.mubr.bf16.mxu0 0
    %5131 = vmatmul.mubr.bf16.gmra.mxu0 %v3168
    %v5132 = vpop.f32.mrf.mxu0
    %v5133 = vadd.f32 %v4844, %v5132
    %v5134 = vpop.f32.mrf.mxu0
    %v5135 = vpop.f32.mrf.mxu0
    %v5136 = vadd.f32 %v4847, %v5135
    %v5137 = vpop.f32.mrf.mxu0
    %5138 = vmatprep.mubr.bf16.mxu0 0
    %5139 = vmatmul.mubr.bf16.gmra.mxu0 %v3169
    %v5140 = vpop.f32.mrf.mxu0
    %v5141 = vadd.f32 %v4852, %v5140
    %v5142 = vpop.f32.mrf.mxu0
    %v5143 = vpop.f32.mrf.mxu0
    %v5144 = vadd.f32 %v4855, %v5143
    %v5145 = vpop.f32.mrf.mxu0
    %5146 = vmatprep.mubr.bf16.mxu0 0
    %5147 = vmatmul.mubr.bf16.gmra.mxu0 %v3240
    %v5148 = vpop.f32.mrf.mxu0
    %v5149 = vadd.f32 %v4860, %v5148
    %v5150 = vpop.f32.mrf.mxu0
    %v5151 = vpop.f32.mrf.mxu0
    %v5152 = vadd.f32 %v4863, %v5151
    %v5153 = vpop.f32.mrf.mxu0
    %5154 = vmatprep.mubr.bf16.mxu0 0
    %5155 = vmatmul.mubr.bf16.gmra.mxu0 %v3266
    %v5156 = vpop.f32.mrf.mxu0
    %v5157 = vadd.f32 %v4868, %v5156
    %v5158 = vpop.f32.mrf.mxu0
    %v5159 = vpop.f32.mrf.mxu0
    %v5160 = vadd.f32 %v4871, %v5159
    %v5161 = vpop.f32.mrf.mxu0
    %5162 = vmatprep.mubr.bf16.mxu0 0
    %5163 = vmatmul.mubr.bf16.gmra.mxu0 %v3172
    %v5164 = vpop.f32.mrf.mxu0
    %v5165 = vadd.f32 %v4876, %v5164
    %v5166 = vpop.f32.mrf.mxu0
    %v5167 = vpop.f32.mrf.mxu0
    %v5168 = vadd.f32 %v4879, %v5167
    %v5169 = vpop.f32.mrf.mxu0
    %5170 = vmatprep.mubr.bf16.mxu0 0
    %5171 = vmatmul.mubr.bf16.gmra.mxu0 %v3173
    %v5172 = vpop.f32.mrf.mxu0
    %v5173 = vadd.f32 %v4884, %v5172
    %v5174 = vpop.f32.mrf.mxu0
    %v5175 = vpop.f32.mrf.mxu0
    %v5176 = vadd.f32 %v4887, %v5175
    %v5177 = vpop.f32.mrf.mxu0
    %5178 = vmatprep.mubr.bf16.mxu0 0
    %5179 = vmatmul.mubr.bf16.gmra.mxu0 %v3174
    %v5180 = vpop.f32.mrf.mxu0
    %v5181 = vadd.f32 %v4892, %v5180
    %v5182 = vpop.f32.mrf.mxu0
    %v5183 = vpop.f32.mrf.mxu0
    %v5184 = vadd.f32 %v4895, %v5183
    %v5185 = vpop.f32.mrf.mxu0
    %5186 = vmatprep.mubr.bf16.mxu0 0
    %5187 = vmatmul.mubr.bf16.gmra.mxu0 %v3175
    %v5188 = vpop.f32.mrf.mxu0
    %v5189 = vadd.f32 %v4900, %v5188
    %v5190 = vpop.f32.mrf.mxu0
    %v5191 = vpop.f32.mrf.mxu0
    %v5192 = vadd.f32 %v4903, %v5191
    %v5193 = vpop.f32.mrf.mxu0
    %5194 = vmatprep.mubr.bf16.mxu0 0
    %5195 = vmatmul.mubr.bf16.gmra.mxu0 %v3176
    %v5196 = vpop.f32.mrf.mxu0
    %v5197 = vadd.f32 %v4908, %v5196
    %v5198 = vpop.f32.mrf.mxu0
    %v5199 = vpop.f32.mrf.mxu0
    %v5200 = vadd.f32 %v4911, %v5199
    %v5201 = vpop.f32.mrf.mxu0
    %5202 = vmatprep.mubr.bf16.mxu0 0
    %5203 = vmatmul.mubr.bf16.gmra.mxu0 %v3177
    %v5204 = vpop.f32.mrf.mxu0
    %v5205 = vadd.f32 %v4916, %v5204
    %v5206 = vpop.f32.mrf.mxu0
    %v5207 = vpop.f32.mrf.mxu0
    %v5208 = vadd.f32 %v4919, %v5207
    %v5209 = vpop.f32.mrf.mxu0
    %5210 = vmatprep.mubr.bf16.mxu0 0
    %5211 = vmatmul.mubr.bf16.gmra.mxu0 %v3178
    %v5212 = vpop.f32.mrf.mxu0
    %v5213 = vadd.f32 %v4924, %v5212
    %v5214 = vpop.f32.mrf.mxu0
    %v5215 = vpop.f32.mrf.mxu0
    %v5216 = vadd.f32 %v4927, %v5215
    %v5217 = vpop.f32.mrf.mxu0
    %5218 = vmatprep.mubr.bf16.mxu0 0
    %5219 = vmatmul.mubr.bf16.gmra.mxu0 %v3179
    %v5220 = vpop.f32.mrf.mxu0
    %v5221 = vadd.f32 %v4932, %v5220
    %v5222 = vpop.f32.mrf.mxu0
    %v5223 = vpop.f32.mrf.mxu0
    %v5224 = vadd.f32 %v4935, %v5223
    %v5225 = vpop.f32.mrf.mxu0
    %5226 = vmatprep.mubr.bf16.mxu0 0
    %5227 = vmatmul.mubr.bf16.gmra.mxu0 %v3180
    %v5228 = vpop.f32.mrf.mxu0
    %v5229 = vadd.f32 %v4940, %v5228
    %v5230 = vpop.f32.mrf.mxu0
    %v5231 = vpop.f32.mrf.mxu0
    %v5232 = vadd.f32 %v4943, %v5231
    %v5233 = vpop.f32.mrf.mxu0
    %5234 = vmatprep.mubr.bf16.mxu0 0
    %5235 = vmatmul.mubr.bf16.gmra.mxu0 %v3181
    %v5236 = vpop.f32.mrf.mxu0
    %v5237 = vadd.f32 %v4948, %v5236
    %v5238 = vpop.f32.mrf.mxu0
    %v5239 = vpop.f32.mrf.mxu0
    %v5240 = vadd.f32 %v4951, %v5239
    %v5241 = vpop.f32.mrf.mxu0
    %5242 = vmatprep.mubr.bf16.mxu0 0
    %5243 = vmatmul.mubr.bf16.gmra.mxu0 %v3182
    %v5244 = vpop.f32.mrf.mxu0
    %v5245 = vadd.f32 %v4956, %v5244
    %v5246 = vpop.f32.mrf.mxu0
    %v5247 = vpop.f32.mrf.mxu0
    %v5248 = vadd.f32 %v4959, %v5247
    %v5249 = vpop.f32.mrf.mxu0
    %5250 = vmatprep.mubr.bf16.mxu0 0
    %5251 = vmatmul.mubr.bf16.gmra.mxu0 %v3183
    %v5252 = vpop.f32.mrf.mxu0
    %v5253 = vadd.f32 %v4964, %v5252
    %v5254 = vpop.f32.mrf.mxu0
    %v5255 = vpop.f32.mrf.mxu0
    %v5256 = vadd.f32 %v4967, %v5255
    %v5257 = vpop.f32.mrf.mxu0
    %5258 = vmatprep.mubr.bf16.mxu0 0
    %5259 = vmatmul.mubr.bf16.gmra.mxu0 %v3184
    %v5260 = vpop.f32.mrf.mxu0
    %v5261 = vadd.f32 %v4972, %v5260
    %v5262 = vpop.f32.mrf.mxu0
    %v5263 = vpop.f32.mrf.mxu0
    %v5264 = vadd.f32 %v4975, %v5263
    %v5265 = vpop.f32.mrf.mxu0
    %5266 = vmatprep.mubr.bf16.mxu0 0
    %5267 = vmatmul.mubr.bf16.gmra.mxu0 %v3185
    %v5268 = vpop.f32.mrf.mxu0
    %v5269 = vadd.f32 %v4980, %v5268
    %v5270 = vpop.f32.mrf.mxu0
    %v5271 = vpop.f32.mrf.mxu0
    %v5272 = vadd.f32 %v4983, %v5271
    %v5273 = vpop.f32.mrf.mxu0
    %5274 = vmatprep.mubr.bf16.mxu0 0
    %5275 = vmatmul.mubr.bf16.gmra.mxu0 %v3241
    %v5276 = vpop.f32.mrf.mxu0
    %v5277 = vadd.f32 %v4988, %v5276
    %v5278 = vpop.f32.mrf.mxu0
    %v5279 = vpop.f32.mrf.mxu0
    %v5280 = vadd.f32 %v4991, %v5279
    %v5281 = vpop.f32.mrf.mxu0
    %5282 = vmatprep.mubr.bf16.mxu0 0
    %5283 = vmatmul.mubr.bf16.gmra.mxu0 %v3267
    %v5284 = vpop.f32.mrf.mxu0
    %v5285 = vadd.f32 %v4996, %v5284
    %v5286 = vpop.f32.mrf.mxu0
    %v5287 = vpop.f32.mrf.mxu0
    %v5288 = vadd.f32 %v4999, %v5287
    %v5289 = vpop.f32.mrf.mxu0
    %5290 = vdwg.mxu0
    %v5291 = vadd.f32 %v5037, %v5040
    %v5292 = vadd.f32 %v5291, %v5045
    %v5293 = vadd.f32 %v5292, %v5048
    %v5294 = vadd.f32 %v5293, %v5053
    %v5295 = vadd.f32 %v5294, %v5056
    %v5296 = vadd.f32 %v5295, %v5061
    %v5297 = vadd.f32 %v5296, %v5064
    %v5298 = vadd.f32 %v5297, %v5069
    %v5299 = vadd.f32 %v5298, %v5072
    %v5300 = vadd.f32 %v5299, %v5077
    %v5301 = vadd.f32 %v5300, %v5080
    %v5302 = vadd.f32 %v5301, %v5085
    %v5303 = vadd.f32 %v5302, %v5088
    %v5304 = vadd.f32 %v5303, %v5093
    %v5305 = vadd.f32 %v5304, %v5096
    %v5306 = vadd.f32 %v5305, %v5101
    %v5307 = vadd.f32 %v5306, %v5104
    %v5308 = vadd.f32 %v5307, %v5109
    %v5309 = vadd.f32 %v5308, %v5112
    %v5310 = vadd.f32 %v5309, %v5117
    %v5311 = vadd.f32 %v5310, %v5120
    %v5312 = vadd.f32 %v5311, %v5125
    %v5313 = vadd.f32 %v5312, %v5128
    %v5314 = vadd.f32 %v5313, %v5133
    %v5315 = vadd.f32 %v5314, %v5136
    %v5316 = vadd.f32 %v5315, %v5141
    %v5317 = vadd.f32 %v5316, %v5144
    %v5318 = vadd.f32 %v5317, %v5149
    %v5319 = vadd.f32 %v5318, %v5152
    %v5320 = vadd.f32 %v5319, %v5157
    %v5321 = vadd.f32 %v5320, %v5160
    %v5322 = vadd.f32 %v5321, %v5165
    %v5323 = vadd.f32 %v5322, %v5168
    %v5324 = vadd.f32 %v5323, %v5173
    %v5325 = vadd.f32 %v5324, %v5176
    %v5326 = vadd.f32 %v5325, %v5181
    %v5327 = vadd.f32 %v5326, %v5184
    %v5328 = vadd.f32 %v5327, %v5189
    %v5329 = vadd.f32 %v5328, %v5192
    %v5330 = vadd.f32 %v5329, %v5197
    %v5331 = vadd.f32 %v5330, %v5200
    %v5332 = vadd.f32 %v5331, %v5205
    %v5333 = vadd.f32 %v5332, %v5208
    %v5334 = vadd.f32 %v5333, %v5213
    %v5335 = vadd.f32 %v5334, %v5216
    %v5336 = vadd.f32 %v5335, %v5221
    %v5337 = vadd.f32 %v5336, %v5224
    %v5338 = vadd.f32 %v5337, %v5229
    %v5339 = vadd.f32 %v5338, %v5232
    %v5340 = vadd.f32 %v5339, %v5237
    %v5341 = vadd.f32 %v5340, %v5240
    %v5342 = vadd.f32 %v5341, %v5245
    %v5343 = vadd.f32 %v5342, %v5248
    %v5344 = vadd.f32 %v5343, %v5253
    %v5345 = vadd.f32 %v5344, %v5256
    %v5346 = vadd.f32 %v5345, %v5261
    %v5347 = vadd.f32 %v5346, %v5264
    %v5348 = vadd.f32 %v5347, %v5269
    %v5349 = vadd.f32 %v5348, %v5272
    %v5350 = vadd.f32 %v5349, %v5277
    %v5351 = vadd.f32 %v5350, %v5280
    %v5352 = vadd.f32 %v5351, %v5285
    %v5353 = vadd.f32 %v5352, %v5288
    %v5354 = vrot.slane %v5353, 4
    %v5355 = vadd.f32 %v5353, %v5354
    %v5356 = vrot.slane %v5355, 2
    %v5357 = vadd.f32 %v5355, %v5356
    %v5358 = vrot.slane %v5357, 1
    %v5359 = vadd.f32 %v5357, %v5358
    %v5360 = vmul.f32 %v5359, 0.001953125
    %v5361 = vsub.f32 %v5037, %v5360
    %v5362 = vsub.f32 %v5040, %v5360
    %v5363 = vsub.f32 %v5045, %v5360
    %v5364 = vsub.f32 %v5048, %v5360
    %v5365 = vsub.f32 %v5053, %v5360
    %v5366 = vsub.f32 %v5056, %v5360
    %v5367 = vsub.f32 %v5061, %v5360
    %v5368 = vsub.f32 %v5064, %v5360
    %v5369 = vsub.f32 %v5069, %v5360
    %v5370 = vsub.f32 %v5072, %v5360
    %v5371 = vsub.f32 %v5077, %v5360
    %v5372 = vsub.f32 %v5080, %v5360
    %v5373 = vsub.f32 %v5085, %v5360
    %v5374 = vsub.f32 %v5088, %v5360
    %v5375 = vsub.f32 %v5093, %v5360
    %v5376 = vsub.f32 %v5096, %v5360
    %v5377 = vsub.f32 %v5101, %v5360
    %v5378 = vsub.f32 %v5104, %v5360
    %v5379 = vsub.f32 %v5109, %v5360
    %v5380 = vsub.f32 %v5112, %v5360
    %v5381 = vsub.f32 %v5117, %v5360
    %v5382 = vsub.f32 %v5120, %v5360
    %v5383 = vsub.f32 %v5125, %v5360
    %v5384 = vsub.f32 %v5128, %v5360
    %v5385 = vsub.f32 %v5133, %v5360
    %v5386 = vsub.f32 %v5136, %v5360
    %v5387 = vsub.f32 %v5141, %v5360
    %v5388 = vsub.f32 %v5144, %v5360
    %v5389 = vsub.f32 %v5149, %v5360
    %v5390 = vsub.f32 %v5152, %v5360
    %v5391 = vsub.f32 %v5157, %v5360
    %v5392 = vsub.f32 %v5160, %v5360
    %v5393 = vsub.f32 %v5165, %v5360
    %v5394 = vsub.f32 %v5168, %v5360
    %v5395 = vsub.f32 %v5173, %v5360
    %v5396 = vsub.f32 %v5176, %v5360
    %v5397 = vsub.f32 %v5181, %v5360
    %v5398 = vsub.f32 %v5184, %v5360
    %v5399 = vsub.f32 %v5189, %v5360
    %v5400 = vsub.f32 %v5192, %v5360
    %v5401 = vsub.f32 %v5197, %v5360
    %v5402 = vsub.f32 %v5200, %v5360
    %v5403 = vsub.f32 %v5205, %v5360
    %v5404 = vsub.f32 %v5208, %v5360
    %v5405 = vsub.f32 %v5213, %v5360
    %v5406 = vsub.f32 %v5216, %v5360
    %v5407 = vsub.f32 %v5221, %v5360
    %v5408 = vsub.f32 %v5224, %v5360
    %v5409 = vsub.f32 %v5229, %v5360
    %v5410 = vsub.f32 %v5232, %v5360
    %v5411 = vsub.f32 %v5237, %v5360
    %v5412 = vsub.f32 %v5240, %v5360
    %v5413 = vsub.f32 %v5245, %v5360
    %v5414 = vsub.f32 %v5248, %v5360
    %v5415 = vsub.f32 %v5253, %v5360
    %v5416 = vsub.f32 %v5256, %v5360
    %v5417 = vsub.f32 %v5261, %v5360
    %v5418 = vsub.f32 %v5264, %v5360
    %v5419 = vsub.f32 %v5269, %v5360
    %v5420 = vsub.f32 %v5272, %v5360
    %v5421 = vsub.f32 %v5277, %v5360
    %v5422 = vsub.f32 %v5280, %v5360
    %v5423 = vsub.f32 %v5285, %v5360
    %v5424 = vsub.f32 %v5288, %v5360
    %v5425 = vmul.f32 %v5361, %v5361
    %v5426 = vmul.f32 %v5362, %v5362
    %v5427 = vmul.f32 %v5363, %v5363
    %v5428 = vmul.f32 %v5364, %v5364
    %v5429 = vmul.f32 %v5365, %v5365
    %v5430 = vmul.f32 %v5366, %v5366
    %v5431 = vmul.f32 %v5367, %v5367
    %v5432 = vmul.f32 %v5368, %v5368
    %v5433 = vmul.f32 %v5369, %v5369
    %v5434 = vmul.f32 %v5370, %v5370
    %v5435 = vmul.f32 %v5371, %v5371
    %v5436 = vmul.f32 %v5372, %v5372
    %v5437 = vmul.f32 %v5373, %v5373
    %v5438 = vmul.f32 %v5374, %v5374
    %v5439 = vmul.f32 %v5375, %v5375
    %v5440 = vmul.f32 %v5376, %v5376
    %v5441 = vmul.f32 %v5377, %v5377
    %v5442 = vmul.f32 %v5378, %v5378
    %v5443 = vmul.f32 %v5379, %v5379
    %v5444 = vmul.f32 %v5380, %v5380
    %v5445 = vmul.f32 %v5381, %v5381
    %v5446 = vmul.f32 %v5382, %v5382
    %v5447 = vmul.f32 %v5383, %v5383
    %v5448 = vmul.f32 %v5384, %v5384
    %v5449 = vmul.f32 %v5385, %v5385
    %v5450 = vmul.f32 %v5386, %v5386
    %v5451 = vmul.f32 %v5387, %v5387
    %v5452 = vmul.f32 %v5388, %v5388
    %v5453 = vmul.f32 %v5389, %v5389
    %v5454 = vmul.f32 %v5390, %v5390
    %v5455 = vmul.f32 %v5391, %v5391
    %v5456 = vmul.f32 %v5392, %v5392
    %v5457 = vmul.f32 %v5393, %v5393
    %v5458 = vmul.f32 %v5394, %v5394
    %v5459 = vmul.f32 %v5395, %v5395
    %v5460 = vmul.f32 %v5396, %v5396
    %v5461 = vmul.f32 %v5397, %v5397
    %v5462 = vmul.f32 %v5398, %v5398
    %v5463 = vmul.f32 %v5399, %v5399
    %v5464 = vmul.f32 %v5400, %v5400
    %v5465 = vmul.f32 %v5401, %v5401
    %v5466 = vmul.f32 %v5402, %v5402
    %v5467 = vmul.f32 %v5403, %v5403
    %v5468 = vmul.f32 %v5404, %v5404
    %v5469 = vmul.f32 %v5405, %v5405
    %v5470 = vmul.f32 %v5406, %v5406
    %v5471 = vmul.f32 %v5407, %v5407
    %v5472 = vmul.f32 %v5408, %v5408
    %v5473 = vmul.f32 %v5409, %v5409
    %v5474 = vmul.f32 %v5410, %v5410
    %v5475 = vmul.f32 %v5411, %v5411
    %v5476 = vmul.f32 %v5412, %v5412
    %v5477 = vmul.f32 %v5413, %v5413
    %v5478 = vmul.f32 %v5414, %v5414
    %v5479 = vmul.f32 %v5415, %v5415
    %v5480 = vmul.f32 %v5416, %v5416
    %v5481 = vmul.f32 %v5417, %v5417
    %v5482 = vmul.f32 %v5418, %v5418
    %v5483 = vmul.f32 %v5419, %v5419
    %v5484 = vmul.f32 %v5420, %v5420
    %v5485 = vmul.f32 %v5421, %v5421
    %v5486 = vmul.f32 %v5422, %v5422
    %v5487 = vmul.f32 %v5423, %v5423
    %v5488 = vmul.f32 %v5424, %v5424
    %v5489 = vadd.f32 %v5425, %v5426
    %v5490 = vadd.f32 %v5489, %v5427
    %v5491 = vadd.f32 %v5490, %v5428
    %v5492 = vadd.f32 %v5491, %v5429
    %v5493 = vadd.f32 %v5492, %v5430
    %v5494 = vadd.f32 %v5493, %v5431
    %v5495 = vadd.f32 %v5494, %v5432
    %v5496 = vadd.f32 %v5495, %v5433
    %v5497 = vadd.f32 %v5496, %v5434
    %v5498 = vadd.f32 %v5497, %v5435
    %v5499 = vadd.f32 %v5498, %v5436
    %v5500 = vadd.f32 %v5499, %v5437
    %v5501 = vadd.f32 %v5500, %v5438
    %v5502 = vadd.f32 %v5501, %v5439
    %v5503 = vadd.f32 %v5502, %v5440
    %v5504 = vadd.f32 %v5503, %v5441
    %v5505 = vadd.f32 %v5504, %v5442
    %v5506 = vadd.f32 %v5505, %v5443
    %v5507 = vadd.f32 %v5506, %v5444
    %v5508 = vadd.f32 %v5507, %v5445
    %v5509 = vadd.f32 %v5508, %v5446
    %v5510 = vadd.f32 %v5509, %v5447
    %v5511 = vadd.f32 %v5510, %v5448
    %v5512 = vadd.f32 %v5511, %v5449
    %v5513 = vadd.f32 %v5512, %v5450
    %v5514 = vadd.f32 %v5513, %v5451
    %v5515 = vadd.f32 %v5514, %v5452
    %v5516 = vadd.f32 %v5515, %v5453
    %v5517 = vadd.f32 %v5516, %v5454
    %v5518 = vadd.f32 %v5517, %v5455
    %v5519 = vadd.f32 %v5518, %v5456
    %v5520 = vadd.f32 %v5519, %v5457
    %v5521 = vadd.f32 %v5520, %v5458
    %v5522 = vadd.f32 %v5521, %v5459
    %v5523 = vadd.f32 %v5522, %v5460
    %v5524 = vadd.f32 %v5523, %v5461
    %v5525 = vadd.f32 %v5524, %v5462
    %v5526 = vadd.f32 %v5525, %v5463
    %v5527 = vadd.f32 %v5526, %v5464
    %v5528 = vadd.f32 %v5527, %v5465
    %v5529 = vadd.f32 %v5528, %v5466
    %v5530 = vadd.f32 %v5529, %v5467
    %v5531 = vadd.f32 %v5530, %v5468
    %v5532 = vadd.f32 %v5531, %v5469
    %v5533 = vadd.f32 %v5532, %v5470
    %v5534 = vadd.f32 %v5533, %v5471
    %v5535 = vadd.f32 %v5534, %v5472
    %v5536 = vadd.f32 %v5535, %v5473
    %v5537 = vadd.f32 %v5536, %v5474
    %v5538 = vadd.f32 %v5537, %v5475
    %v5539 = vadd.f32 %v5538, %v5476
    %v5540 = vadd.f32 %v5539, %v5477
    %v5541 = vadd.f32 %v5540, %v5478
    %v5542 = vadd.f32 %v5541, %v5479
    %v5543 = vadd.f32 %v5542, %v5480
    %v5544 = vadd.f32 %v5543, %v5481
    %v5545 = vadd.f32 %v5544, %v5482
    %v5546 = vadd.f32 %v5545, %v5483
    %v5547 = vadd.f32 %v5546, %v5484
    %v5548 = vadd.f32 %v5547, %v5485
    %v5549 = vadd.f32 %v5548, %v5486
    %v5550 = vadd.f32 %v5549, %v5487
    %v5551 = vadd.f32 %v5550, %v5488
    %v5552 = vrot.slane %v5551, 4
    %v5553 = vadd.f32 %v5551, %v5552
    %v5554 = vrot.slane %v5553, 2
    %v5555 = vadd.f32 %v5553, %v5554
    %v5556 = vrot.slane %v5555, 1
    %v5557 = vadd.f32 %v5555, %v5556
    %v5558 = vmul.f32 %v5557, 0.001953125
    %v5559 = vld [vmem:[%s3] sm:$0x1]
    %v5560 = vadd.f32 %v5558, 1e-05
    %v5561 = vrsqrt.pop %v5560
    %v5562 = vmul.f32 %v5559, %v5561
    %v5564 = vlaneseq
    %v5565 = vshrl.u32 %v5564, 7
    %v5566 = vsub.s32 0, %v5565
    %v5567 = vrot.slane %v5562, %v5566
    %v5569 = vmul.f32 %v5361, %v5567
    %v5570 = vmul.f32 %v5362, %v5567
    %v5571 = vmul.f32 %v5363, %v5567
    %v5572 = vmul.f32 %v5364, %v5567
    %v5573 = vmul.f32 %v5365, %v5567
    %v5574 = vmul.f32 %v5366, %v5567
    %v5575 = vmul.f32 %v5367, %v5567
    %v5576 = vmul.f32 %v5368, %v5567
    %v5577 = vmul.f32 %v5369, %v5567
    %v5578 = vmul.f32 %v5370, %v5567
    %v5579 = vmul.f32 %v5371, %v5567
    %v5580 = vmul.f32 %v5372, %v5567
    %v5581 = vmul.f32 %v5373, %v5567
    %v5582 = vmul.f32 %v5374, %v5567
    %v5583 = vmul.f32 %v5375, %v5567
    %v5584 = vmul.f32 %v5376, %v5567
    %v5585 = vmul.f32 %v5377, %v5567
    %v5586 = vmul.f32 %v5378, %v5567
    %v5587 = vmul.f32 %v5379, %v5567
    %v5588 = vmul.f32 %v5380, %v5567
    %v5589 = vmul.f32 %v5381, %v5567
    %v5590 = vmul.f32 %v5382, %v5567
    %v5591 = vmul.f32 %v5383, %v5567
    %v5592 = vmul.f32 %v5384, %v5567
    %v5593 = vmul.f32 %v5385, %v5567
    %v5594 = vmul.f32 %v5386, %v5567
    %v5595 = vmul.f32 %v5387, %v5567
    %v5596 = vmul.f32 %v5388, %v5567
    %v5597 = vmul.f32 %v5389, %v5567
    %v5598 = vmul.f32 %v5390, %v5567
    %v5599 = vmul.f32 %v5391, %v5567
    %v5600 = vmul.f32 %v5392, %v5567
    %v5601 = vmul.f32 %v5393, %v5567
    %v5602 = vmul.f32 %v5394, %v5567
    %v5603 = vmul.f32 %v5395, %v5567
    %v5604 = vmul.f32 %v5396, %v5567
    %v5605 = vmul.f32 %v5397, %v5567
    %v5606 = vmul.f32 %v5398, %v5567
    %v5607 = vmul.f32 %v5399, %v5567
    %v5608 = vmul.f32 %v5400, %v5567
    %v5609 = vmul.f32 %v5401, %v5567
    %v5610 = vmul.f32 %v5402, %v5567
    %v5611 = vmul.f32 %v5403, %v5567
    %v5612 = vmul.f32 %v5404, %v5567
    %v5613 = vmul.f32 %v5405, %v5567
    %v5614 = vmul.f32 %v5406, %v5567
    %v5615 = vmul.f32 %v5407, %v5567
    %v5616 = vmul.f32 %v5408, %v5567
    %v5617 = vmul.f32 %v5409, %v5567
    %v5618 = vmul.f32 %v5410, %v5567
    %v5619 = vmul.f32 %v5411, %v5567
    %v5620 = vmul.f32 %v5412, %v5567
    %v5621 = vmul.f32 %v5413, %v5567
    %v5622 = vmul.f32 %v5414, %v5567
    %v5623 = vmul.f32 %v5415, %v5567
    %v5624 = vmul.f32 %v5416, %v5567
    %v5625 = vmul.f32 %v5417, %v5567
    %v5626 = vmul.f32 %v5418, %v5567
    %v5627 = vmul.f32 %v5419, %v5567
    %v5628 = vmul.f32 %v5420, %v5567
    %v5629 = vmul.f32 %v5421, %v5567
    %v5630 = vmul.f32 %v5422, %v5567
    %v5631 = vmul.f32 %v5423, %v5567
    %v5632 = vmul.f32 %v5424, %v5567
    %v5633 = vld [vmem:[%s4] sm:$0x1]
    %v5635 = vlaneseq
    %v5636 = vshrl.u32 %v5635, 7
    %v5637 = vsub.s32 0, %v5636
    %v5638 = vrot.slane %v5633, %v5637
    %v5640 = vadd.f32 %v5569, %v5638
    %v5641 = vadd.f32 %v5570, %v5638
    %v5642 = vadd.f32 %v5571, %v5638
    %v5643 = vadd.f32 %v5572, %v5638
    %v5644 = vadd.f32 %v5573, %v5638
    %v5645 = vadd.f32 %v5574, %v5638
    %v5646 = vadd.f32 %v5575, %v5638
    %v5647 = vadd.f32 %v5576, %v5638
    %v5648 = vadd.f32 %v5577, %v5638
    %v5649 = vadd.f32 %v5578, %v5638
    %v5650 = vadd.f32 %v5579, %v5638
    %v5651 = vadd.f32 %v5580, %v5638
    %v5652 = vadd.f32 %v5581, %v5638
    %v5653 = vadd.f32 %v5582, %v5638
    %v5654 = vadd.f32 %v5583, %v5638
    %v5655 = vadd.f32 %v5584, %v5638
    %v5656 = vadd.f32 %v5585, %v5638
    %v5657 = vadd.f32 %v5586, %v5638
    %v5658 = vadd.f32 %v5587, %v5638
    %v5659 = vadd.f32 %v5588, %v5638
    %v5660 = vadd.f32 %v5589, %v5638
    %v5661 = vadd.f32 %v5590, %v5638
    %v5662 = vadd.f32 %v5591, %v5638
    %v5663 = vadd.f32 %v5592, %v5638
    %v5664 = vadd.f32 %v5593, %v5638
    %v5665 = vadd.f32 %v5594, %v5638
    %v5666 = vadd.f32 %v5595, %v5638
    %v5667 = vadd.f32 %v5596, %v5638
    %v5668 = vadd.f32 %v5597, %v5638
    %v5669 = vadd.f32 %v5598, %v5638
    %v5670 = vadd.f32 %v5599, %v5638
    %v5671 = vadd.f32 %v5600, %v5638
    %v5672 = vadd.f32 %v5601, %v5638
    %v5673 = vadd.f32 %v5602, %v5638
    %v5674 = vadd.f32 %v5603, %v5638
    %v5675 = vadd.f32 %v5604, %v5638
    %v5676 = vadd.f32 %v5605, %v5638
    %v5677 = vadd.f32 %v5606, %v5638
    %v5678 = vadd.f32 %v5607, %v5638
    %v5679 = vadd.f32 %v5608, %v5638
    %v5680 = vadd.f32 %v5609, %v5638
    %v5681 = vadd.f32 %v5610, %v5638
    %v5682 = vadd.f32 %v5611, %v5638
    %v5683 = vadd.f32 %v5612, %v5638
    %v5684 = vadd.f32 %v5613, %v5638
    %v5685 = vadd.f32 %v5614, %v5638
    %v5686 = vadd.f32 %v5615, %v5638
    %v5687 = vadd.f32 %v5616, %v5638
    %v5688 = vadd.f32 %v5617, %v5638
    %v5689 = vadd.f32 %v5618, %v5638
    %v5690 = vadd.f32 %v5619, %v5638
    %v5691 = vadd.f32 %v5620, %v5638
    %v5692 = vadd.f32 %v5621, %v5638
    %v5693 = vadd.f32 %v5622, %v5638
    %v5694 = vadd.f32 %v5623, %v5638
    %v5695 = vadd.f32 %v5624, %v5638
    %v5696 = vadd.f32 %v5625, %v5638
    %v5697 = vadd.f32 %v5626, %v5638
    %v5698 = vadd.f32 %v5627, %v5638
    %v5699 = vadd.f32 %v5628, %v5638
    %v5700 = vadd.f32 %v5629, %v5638
    %v5701 = vadd.f32 %v5630, %v5638
    %v5702 = vadd.f32 %v5631, %v5638
    %v5703 = vadd.f32 %v5632, %v5638
    %v5704 = vmax.f32 %v5640, 0.0
    %v5705 = vmax.f32 %v5641, 0.0
    %v5706 = vmax.f32 %v5642, 0.0
    %v5707 = vmax.f32 %v5643, 0.0
    %v5708 = vmax.f32 %v5644, 0.0
    %v5709 = vmax.f32 %v5645, 0.0
    %v5710 = vmax.f32 %v5646, 0.0
    %v5711 = vmax.f32 %v5647, 0.0
    %v5712 = vmax.f32 %v5648, 0.0
    %v5713 = vmax.f32 %v5649, 0.0
    %v5714 = vmax.f32 %v5650, 0.0
    %v5715 = vmax.f32 %v5651, 0.0
    %v5716 = vmax.f32 %v5652, 0.0
    %v5717 = vmax.f32 %v5653, 0.0
    %v5718 = vmax.f32 %v5654, 0.0
    %v5719 = vmax.f32 %v5655, 0.0
    %v5720 = vmax.f32 %v5656, 0.0
    %v5721 = vmax.f32 %v5657, 0.0
    %v5722 = vmax.f32 %v5658, 0.0
    %v5723 = vmax.f32 %v5659, 0.0
    %v5724 = vmax.f32 %v5660, 0.0
    %v5725 = vmax.f32 %v5661, 0.0
    %v5726 = vmax.f32 %v5662, 0.0
    %v5727 = vmax.f32 %v5663, 0.0
    %v5728 = vmax.f32 %v5664, 0.0
    %v5729 = vmax.f32 %v5665, 0.0
    %v5730 = vmax.f32 %v5666, 0.0
    %v5731 = vmax.f32 %v5667, 0.0
    %v5732 = vmax.f32 %v5668, 0.0
    %v5733 = vmax.f32 %v5669, 0.0
    %v5734 = vmax.f32 %v5670, 0.0
    %v5735 = vmax.f32 %v5671, 0.0
    %v5736 = vmax.f32 %v5672, 0.0
    %v5737 = vmax.f32 %v5673, 0.0
    %v5738 = vmax.f32 %v5674, 0.0
    %v5739 = vmax.f32 %v5675, 0.0
    %v5740 = vmax.f32 %v5676, 0.0
    %v5741 = vmax.f32 %v5677, 0.0
    %v5742 = vmax.f32 %v5678, 0.0
    %v5743 = vmax.f32 %v5679, 0.0
    %v5744 = vmax.f32 %v5680, 0.0
    %v5745 = vmax.f32 %v5681, 0.0
    %v5746 = vmax.f32 %v5682, 0.0
    %v5747 = vmax.f32 %v5683, 0.0
    %v5748 = vmax.f32 %v5684, 0.0
    %v5749 = vmax.f32 %v5685, 0.0
    %v5750 = vmax.f32 %v5686, 0.0
    %v5751 = vmax.f32 %v5687, 0.0
    %v5752 = vmax.f32 %v5688, 0.0
    %v5753 = vmax.f32 %v5689, 0.0
    %v5754 = vmax.f32 %v5690, 0.0
    %v5755 = vmax.f32 %v5691, 0.0
    %v5756 = vmax.f32 %v5692, 0.0
    %v5757 = vmax.f32 %v5693, 0.0
    %v5758 = vmax.f32 %v5694, 0.0
    %v5759 = vmax.f32 %v5695, 0.0
    %v5760 = vmax.f32 %v5696, 0.0
    %v5761 = vmax.f32 %v5697, 0.0
    %v5762 = vmax.f32 %v5698, 0.0
    %v5763 = vmax.f32 %v5699, 0.0
    %v5764 = vmax.f32 %v5700, 0.0
    %v5765 = vmax.f32 %v5701, 0.0
    %v5766 = vmax.f32 %v5702, 0.0
    %v5767 = vmax.f32 %v5703, 0.0
    %5768 = vst [vmem:[#allocation3] sm:$0xf] 0
    %5769 = vst [vmem:[#allocation3 + $0x4] sm:$0xf] 0
    %5770 = vst [vmem:[#allocation3 + $0x8] sm:$0x1] 0
    %5771 = vst [vmem:[#allocation3 + $0xd8] sm:$0xf] 0
    %5772 = vst [vmem:[#allocation3 + $0xdc] sm:$0xf] 0
    %5773 = vst [vmem:[#allocation3 + $0xe0] sm:$0x1] 0
    %s5774 = scalar_lea.vmem [#allocation3], 204
    %5775 = vst [vmem:[%s5774] sm:$0xf] 0
    %5776 = vst [vmem:[%s5774 + $0x4] sm:$0xf] 0
    %5777 = vst [vmem:[%s5774 + $0x8] sm:$0x1] 0
    %5778 = vst [vmem:[%s5774 + $0xd8] sm:$0xf] 0
    %5779 = vst [vmem:[%s5774 + $0xdc] sm:$0xf] 0
    %5780 = vst [vmem:[%s5774 + $0xe0] sm:$0x1] 0
    %v5781 = vld [vmem:[#allocation3] sm:$0x1]
    %v5782 = vsel %vm84, 0, %v5781
    %5783 = vst [vmem:[#allocation3] sm:$0x1] %v5782
    %v5784 = vld [vmem:[#allocation3 + $0xc] sm:$0x1]
    %v5785 = vsel %vm84, 0, %v5784
    %5786 = vst [vmem:[#allocation3 + $0xc] sm:$0x1] %v5785
    %v5787 = vld [vmem:[#allocation3 + $0x18] sm:$0x1]
    %v5788 = vsel %vm84, 0, %v5787
    %5789 = vst [vmem:[#allocation3 + $0x18] sm:$0x1] %v5788
    %v5790 = vld [vmem:[#allocation3 + $0x24] sm:$0x1]
    %v5791 = vsel %vm84, 0, %v5790
    %5792 = vst [vmem:[#allocation3 + $0x24] sm:$0x1] %v5791
    %v5793 = vld [vmem:[#allocation3 + $0x30] sm:$0x1]
    %v5794 = vsel %vm84, 0, %v5793
    %5795 = vst [vmem:[#allocation3 + $0x30] sm:$0x1] %v5794
    %v5796 = vld [vmem:[#allocation3 + $0x3c] sm:$0x1]
    %v5797 = vsel %vm84, 0, %v5796
    %5798 = vst [vmem:[#allocation3 + $0x3c] sm:$0x1] %v5797
    %v5799 = vld [vmem:[#allocation3 + $0x48] sm:$0x1]
    %v5800 = vsel %vm84, 0, %v5799
    %5801 = vst [vmem:[#allocation3 + $0x48] sm:$0x1] %v5800
    %v5802 = vld [vmem:[#allocation3 + $0x54] sm:$0x1]
    %v5803 = vsel %vm84, 0, %v5802
    %5804 = vst [vmem:[#allocation3 + $0x54] sm:$0x1] %v5803
    %v5805 = vld [vmem:[#allocation3 + $0x60] sm:$0x1]
    %v5806 = vsel %vm84, 0, %v5805
    %5807 = vst [vmem:[#allocation3 + $0x60] sm:$0x1] %v5806
    %v5808 = vld [vmem:[#allocation3 + $0x6c] sm:$0x1]
    %v5809 = vsel %vm84, 0, %v5808
    %5810 = vst [vmem:[#allocation3 + $0x6c] sm:$0x1] %v5809
    %v5811 = vld [vmem:[#allocation3 + $0x78] sm:$0x1]
    %v5812 = vsel %vm84, 0, %v5811
    %5813 = vst [vmem:[#allocation3 + $0x78] sm:$0x1] %v5812
    %v5814 = vld [vmem:[#allocation3 + $0x84] sm:$0x1]
    %v5815 = vsel %vm84, 0, %v5814
    %5816 = vst [vmem:[#allocation3 + $0x84] sm:$0x1] %v5815
    %v5817 = vld [vmem:[#allocation3 + $0x90] sm:$0x1]
    %v5818 = vsel %vm84, 0, %v5817
    %5819 = vst [vmem:[#allocation3 + $0x90] sm:$0x1] %v5818
    %v5820 = vld [vmem:[#allocation3 + $0x9c] sm:$0x1]
    %v5821 = vsel %vm84, 0, %v5820
    %5822 = vst [vmem:[#allocation3 + $0x9c] sm:$0x1] %v5821
    %v5823 = vld [vmem:[#allocation3 + $0xa8] sm:$0x1]
    %v5824 = vsel %vm84, 0, %v5823
    %5825 = vst [vmem:[#allocation3 + $0xa8] sm:$0x1] %v5824
    %v5826 = vld [vmem:[#allocation3 + $0xb4] sm:$0x1]
    %v5827 = vsel %vm84, 0, %v5826
    %5828 = vst [vmem:[#allocation3 + $0xb4] sm:$0x1] %v5827
    %v5829 = vld [vmem:[#allocation3 + $0xc0] sm:$0x1]
    %v5830 = vsel %vm84, 0, %v5829
    %5831 = vst [vmem:[#allocation3 + $0xc0] sm:$0x1] %v5830
    %v5832 = vld [vmem:[#allocation3 + $0xcc] sm:$0x1]
    %v5833 = vsel %vm84, 0, %v5832
    %5834 = vst [vmem:[#allocation3 + $0xcc] sm:$0x1] %v5833
    %v5835 = vld [vmem:[#allocation3 + $0xd8] sm:$0x1]
    %v5836 = vsel %vm84, 0, %v5835
    %5837 = vst [vmem:[#allocation3 + $0xd8] sm:$0x1] %v5836
    %v5838 = vld [vmem:[#allocation3 + $0xe4] sm:$0x1]
    %v5839 = vsel %vm84, 0, %v5838
    %5840 = vst [vmem:[#allocation3 + $0xe4] sm:$0x1] %v5839
    %v5841 = vld [vmem:[#allocation3 + $0xf0] sm:$0x1]
    %v5842 = vsel %vm84, 0, %v5841
    %5843 = vst [vmem:[#allocation3 + $0xf0] sm:$0x1] %v5842
    %v5844 = vld [vmem:[#allocation3 + $0xfc] sm:$0x1]
    %v5845 = vsel %vm84, 0, %v5844
    %5846 = vst [vmem:[#allocation3 + $0xfc] sm:$0x1] %v5845
    %v5847 = vld [vmem:[#allocation3 + $0x108] sm:$0x1]
    %v5848 = vsel %vm84, 0, %v5847
    %5849 = vst [vmem:[#allocation3 + $0x108] sm:$0x1] %v5848
    %v5850 = vld [vmem:[#allocation3 + $0x114] sm:$0x1]
    %v5851 = vsel %vm84, 0, %v5850
    %5852 = vst [vmem:[#allocation3 + $0x114] sm:$0x1] %v5851
    %v5853 = vld [vmem:[#allocation3 + $0x120] sm:$0x1]
    %v5854 = vsel %vm84, 0, %v5853
    %5855 = vst [vmem:[#allocation3 + $0x120] sm:$0x1] %v5854
    %v5856 = vld [vmem:[#allocation3 + $0x12c] sm:$0x1]
    %v5857 = vsel %vm84, 0, %v5856
    %5858 = vst [vmem:[#allocation3 + $0x12c] sm:$0x1] %v5857
    %v5859 = vld [vmem:[#allocation3 + $0x138] sm:$0x1]
    %v5860 = vsel %vm84, 0, %v5859
    %5861 = vst [vmem:[#allocation3 + $0x138] sm:$0x1] %v5860
    %v5862 = vld [vmem:[#allocation3 + $0x144] sm:$0x1]
    %v5863 = vsel %vm84, 0, %v5862
    %5864 = vst [vmem:[#allocation3 + $0x144] sm:$0x1] %v5863
    %v5865 = vld [vmem:[#allocation3 + $0x150] sm:$0x1]
    %v5866 = vsel %vm84, 0, %v5865
    %5867 = vst [vmem:[#allocation3 + $0x150] sm:$0x1] %v5866
    %v5868 = vld [vmem:[#allocation3 + $0x15c] sm:$0x1]
    %v5869 = vsel %vm84, 0, %v5868
    %5870 = vst [vmem:[#allocation3 + $0x15c] sm:$0x1] %v5869
    %v5871 = vld [vmem:[#allocation3 + $0x168] sm:$0x1]
    %v5872 = vsel %vm84, 0, %v5871
    %5873 = vst [vmem:[#allocation3 + $0x168] sm:$0x1] %v5872
    %v5874 = vld [vmem:[#allocation3 + $0x174] sm:$0x1]
    %v5875 = vsel %vm84, 0, %v5874
    %5876 = vst [vmem:[#allocation3 + $0x174] sm:$0x1] %v5875
    %v5877 = vld [vmem:[#allocation3 + $0x180] sm:$0x1]
    %v5878 = vsel %vm84, 0, %v5877
    %5879 = vst [vmem:[#allocation3 + $0x180] sm:$0x1] %v5878
    %v5880 = vld [vmem:[#allocation3 + $0x18c] sm:$0x1]
    %v5881 = vsel %vm84, 0, %v5880
    %5882 = vst [vmem:[#allocation3 + $0x18c] sm:$0x1] %v5881
    %v5883 = vld [vmem:[#allocation3 + $0x198] sm:$0x1]
    %v5884 = vsel %vm84, 0, %v5883
    %5885 = vst [vmem:[#allocation3 + $0x198] sm:$0x1] %v5884
    %v5886 = vld [vmem:[#allocation3 + $0x1a4] sm:$0x1]
    %v5887 = vsel %vm84, 0, %v5886
    %5888 = vst [vmem:[#allocation3 + $0x1a4] sm:$0x1] %v5887
    %v5889 = vld [vmem:[#allocation3 + $0x8] sm:$0x1]
    %v5890 = vsel %vm194, 0, %v5889
    %5891 = vst [vmem:[#allocation3 + $0x8] sm:$0x1] %v5890
    %v5892 = vld [vmem:[#allocation3 + $0x14] sm:$0x1]
    %v5893 = vsel %vm194, 0, %v5892
    %5894 = vst [vmem:[#allocation3 + $0x14] sm:$0x1] %v5893
    %v5895 = vld [vmem:[#allocation3 + $0x20] sm:$0x1]
    %v5896 = vsel %vm194, 0, %v5895
    %5897 = vst [vmem:[#allocation3 + $0x20] sm:$0x1] %v5896
    %v5898 = vld [vmem:[#allocation3 + $0x2c] sm:$0x1]
    %v5899 = vsel %vm194, 0, %v5898
    %5900 = vst [vmem:[#allocation3 + $0x2c] sm:$0x1] %v5899
    %v5901 = vld [vmem:[#allocation3 + $0x38] sm:$0x1]
    %v5902 = vsel %vm194, 0, %v5901
    %5903 = vst [vmem:[#allocation3 + $0x38] sm:$0x1] %v5902
    %v5904 = vld [vmem:[#allocation3 + $0x44] sm:$0x1]
    %v5905 = vsel %vm194, 0, %v5904
    %5906 = vst [vmem:[#allocation3 + $0x44] sm:$0x1] %v5905
    %v5907 = vld [vmem:[#allocation3 + $0x50] sm:$0x1]
    %v5908 = vsel %vm194, 0, %v5907
    %5909 = vst [vmem:[#allocation3 + $0x50] sm:$0x1] %v5908
    %v5910 = vld [vmem:[#allocation3 + $0x5c] sm:$0x1]
    %v5911 = vsel %vm194, 0, %v5910
    %5912 = vst [vmem:[#allocation3 + $0x5c] sm:$0x1] %v5911
    %v5913 = vld [vmem:[#allocation3 + $0x68] sm:$0x1]
    %v5914 = vsel %vm194, 0, %v5913
    %5915 = vst [vmem:[#allocation3 + $0x68] sm:$0x1] %v5914
    %v5916 = vld [vmem:[#allocation3 + $0x74] sm:$0x1]
    %v5917 = vsel %vm194, 0, %v5916
    %5918 = vst [vmem:[#allocation3 + $0x74] sm:$0x1] %v5917
    %v5919 = vld [vmem:[#allocation3 + $0x80] sm:$0x1]
    %v5920 = vsel %vm194, 0, %v5919
    %5921 = vst [vmem:[#allocation3 + $0x80] sm:$0x1] %v5920
    %v5922 = vld [vmem:[#allocation3 + $0x8c] sm:$0x1]
    %v5923 = vsel %vm194, 0, %v5922
    %5924 = vst [vmem:[#allocation3 + $0x8c] sm:$0x1] %v5923
    %v5925 = vld [vmem:[#allocation3 + $0x98] sm:$0x1]
    %v5926 = vsel %vm194, 0, %v5925
    %5927 = vst [vmem:[#allocation3 + $0x98] sm:$0x1] %v5926
    %v5928 = vld [vmem:[#allocation3 + $0xa4] sm:$0x1]
    %v5929 = vsel %vm194, 0, %v5928
    %5930 = vst [vmem:[#allocation3 + $0xa4] sm:$0x1] %v5929
    %v5931 = vld [vmem:[#allocation3 + $0xb0] sm:$0x1]
    %v5932 = vsel %vm194, 0, %v5931
    %5933 = vst [vmem:[#allocation3 + $0xb0] sm:$0x1] %v5932
    %v5934 = vld [vmem:[#allocation3 + $0xbc] sm:$0x1]
    %v5935 = vsel %vm194, 0, %v5934
    %5936 = vst [vmem:[#allocation3 + $0xbc] sm:$0x1] %v5935
    %v5937 = vld [vmem:[#allocation3 + $0xc8] sm:$0x1]
    %v5938 = vsel %vm194, 0, %v5937
    %5939 = vst [vmem:[#allocation3 + $0xc8] sm:$0x1] %v5938
    %v5940 = vld [vmem:[#allocation3 + $0xd4] sm:$0x1]
    %v5941 = vsel %vm194, 0, %v5940
    %5942 = vst [vmem:[#allocation3 + $0xd4] sm:$0x1] %v5941
    %v5943 = vld [vmem:[#allocation3 + $0xe0] sm:$0x1]
    %v5944 = vsel %vm194, 0, %v5943
    %5945 = vst [vmem:[#allocation3 + $0xe0] sm:$0x1] %v5944
    %v5946 = vld [vmem:[#allocation3 + $0xec] sm:$0x1]
    %v5947 = vsel %vm194, 0, %v5946
    %5948 = vst [vmem:[#allocation3 + $0xec] sm:$0x1] %v5947
    %v5949 = vld [vmem:[#allocation3 + $0xf8] sm:$0x1]
    %v5950 = vsel %vm194, 0, %v5949
    %5951 = vst [vmem:[#allocation3 + $0xf8] sm:$0x1] %v5950
    %v5952 = vld [vmem:[#allocation3 + $0x104] sm:$0x1]
    %v5953 = vsel %vm194, 0, %v5952
    %5954 = vst [vmem:[#allocation3 + $0x104] sm:$0x1] %v5953
    %v5955 = vld [vmem:[#allocation3 + $0x110] sm:$0x1]
    %v5956 = vsel %vm194, 0, %v5955
    %5957 = vst [vmem:[#allocation3 + $0x110] sm:$0x1] %v5956
    %v5958 = vld [vmem:[#allocation3 + $0x11c] sm:$0x1]
    %v5959 = vsel %vm194, 0, %v5958
    %5960 = vst [vmem:[#allocation3 + $0x11c] sm:$0x1] %v5959
    %v5961 = vld [vmem:[#allocation3 + $0x128] sm:$0x1]
    %v5962 = vsel %vm194, 0, %v5961
    %5963 = vst [vmem:[#allocation3 + $0x128] sm:$0x1] %v5962
    %v5964 = vld [vmem:[#allocation3 + $0x134] sm:$0x1]
    %v5965 = vsel %vm194, 0, %v5964
    %5966 = vst [vmem:[#allocation3 + $0x134] sm:$0x1] %v5965
    %v5967 = vld [vmem:[#allocation3 + $0x140] sm:$0x1]
    %v5968 = vsel %vm194, 0, %v5967
    %5969 = vst [vmem:[#allocation3 + $0x140] sm:$0x1] %v5968
    %v5970 = vld [vmem:[#allocation3 + $0x14c] sm:$0x1]
    %v5971 = vsel %vm194, 0, %v5970
    %5972 = vst [vmem:[#allocation3 + $0x14c] sm:$0x1] %v5971
    %v5973 = vld [vmem:[#allocation3 + $0x158] sm:$0x1]
    %v5974 = vsel %vm194, 0, %v5973
    %5975 = vst [vmem:[#allocation3 + $0x158] sm:$0x1] %v5974
    %v5976 = vld [vmem:[#allocation3 + $0x164] sm:$0x1]
    %v5977 = vsel %vm194, 0, %v5976
    %5978 = vst [vmem:[#allocation3 + $0x164] sm:$0x1] %v5977
    %v5979 = vld [vmem:[#allocation3 + $0x170] sm:$0x1]
    %v5980 = vsel %vm194, 0, %v5979
    %5981 = vst [vmem:[#allocation3 + $0x170] sm:$0x1] %v5980
    %v5982 = vld [vmem:[#allocation3 + $0x17c] sm:$0x1]
    %v5983 = vsel %vm194, 0, %v5982
    %5984 = vst [vmem:[#allocation3 + $0x17c] sm:$0x1] %v5983
    %v5985 = vld [vmem:[#allocation3 + $0x188] sm:$0x1]
    %v5986 = vsel %vm194, 0, %v5985
    %5987 = vst [vmem:[#allocation3 + $0x188] sm:$0x1] %v5986
    %v5988 = vld [vmem:[#allocation3 + $0x194] sm:$0x1]
    %v5989 = vsel %vm194, 0, %v5988
    %5990 = vst [vmem:[#allocation3 + $0x194] sm:$0x1] %v5989
    %v5991 = vld [vmem:[#allocation3 + $0x1a0] sm:$0x1]
    %v5992 = vsel %vm194, 0, %v5991
    %5993 = vst [vmem:[#allocation3 + $0x1a0] sm:$0x1] %v5992
    %v5994 = vld [vmem:[#allocation3 + $0x1ac] sm:$0x1]
    %v5995 = vsel %vm194, 0, %v5994
    %5996 = vst [vmem:[#allocation3 + $0x1ac] sm:$0x1] %v5995
    %v5997 = vpack.c.bf16 %v5705, %v5704
    %v5998 = vpack.c.bf16 %v5707, %v5706
    %v5999 = vpack.c.bf16 %v5709, %v5708
    %v6000 = vpack.c.bf16 %v5711, %v5710
    %v6001 = vpack.c.bf16 %v5713, %v5712
    %v6002 = vpack.c.bf16 %v5715, %v5714
    %v6003 = vpack.c.bf16 %v5717, %v5716
    %v6004 = vpack.c.bf16 %v5719, %v5718
    %v6005 = vpack.c.bf16 %v5721, %v5720
    %v6006 = vpack.c.bf16 %v5723, %v5722
    %v6007 = vpack.c.bf16 %v5725, %v5724
    %v6008 = vpack.c.bf16 %v5727, %v5726
    %v6009 = vpack.c.bf16 %v5729, %v5728
    %v6010 = vpack.c.bf16 %v5731, %v5730
    %v6011 = vpack.c.bf16 %v5733, %v5732
    %v6012 = vpack.c.bf16 %v5735, %v5734
    %v6013 = vpack.c.bf16 %v5737, %v5736
    %v6014 = vpack.c.bf16 %v5739, %v5738
    %v6015 = vpack.c.bf16 %v5741, %v5740
    %v6016 = vpack.c.bf16 %v5743, %v5742
    %v6017 = vpack.c.bf16 %v5745, %v5744
    %v6018 = vpack.c.bf16 %v5747, %v5746
    %v6019 = vpack.c.bf16 %v5749, %v5748
    %v6020 = vpack.c.bf16 %v5751, %v5750
    %v6021 = vpack.c.bf16 %v5753, %v5752
    %v6022 = vpack.c.bf16 %v5755, %v5754
    %v6023 = vpack.c.bf16 %v5757, %v5756
    %v6024 = vpack.c.bf16 %v5759, %v5758
    %v6025 = vpack.c.bf16 %v5761, %v5760
    %v6026 = vpack.c.bf16 %v5763, %v5762
    %v6027 = vpack.c.bf16 %v5765, %v5764
    %v6028 = vpack.c.bf16 %v5767, %v5766
    %v6061 = vunpack.c.l.b16 %v5997
    %v6062 = vunpack.c.h.b16 %v5997
    %v6063 = vunpack.c.l.b16 %v5998
    %v6064 = vunpack.c.h.b16 %v5998
    %v6065 = vunpack.c.l.b16 %v5999
    %v6066 = vunpack.c.h.b16 %v5999
    %v6067 = vunpack.c.l.b16 %v6000
    %v6068 = vunpack.c.h.b16 %v6000
    %v6069 = vunpack.c.l.b16 %v6001
    %v6070 = vunpack.c.h.b16 %v6001
    %v6071 = vunpack.c.l.b16 %v6002
    %v6072 = vunpack.c.h.b16 %v6002
    %v6073 = vunpack.c.l.b16 %v6003
    %v6074 = vunpack.c.h.b16 %v6003
    %v6075 = vunpack.c.l.b16 %v6004
    %v6076 = vunpack.c.h.b16 %v6004
    %v6077 = vunpack.c.l.b16 %v6005
    %v6078 = vunpack.c.h.b16 %v6005
    %v6079 = vunpack.c.l.b16 %v6006
    %v6080 = vunpack.c.h.b16 %v6006
    %v6081 = vunpack.c.l.b16 %v6007
    %v6082 = vunpack.c.h.b16 %v6007
    %v6083 = vunpack.c.l.b16 %v6008
    %v6084 = vunpack.c.h.b16 %v6008
    %v6085 = vunpack.c.l.b16 %v6009
    %v6086 = vunpack.c.h.b16 %v6009
    %v6087 = vunpack.c.l.b16 %v6010
    %v6088 = vunpack.c.h.b16 %v6010
    %v6089 = vunpack.c.l.b16 %v6011
    %v6090 = vunpack.c.h.b16 %v6011
    %v6091 = vunpack.c.l.b16 %v6012
    %v6092 = vunpack.c.h.b16 %v6012
    %v6093 = vunpack.c.l.b16 %v6013
    %v6094 = vunpack.c.h.b16 %v6013
    %v6095 = vunpack.c.l.b16 %v6014
    %v6096 = vunpack.c.h.b16 %v6014
    %v6097 = vunpack.c.l.b16 %v6015
    %v6098 = vunpack.c.h.b16 %v6015
    %v6099 = vunpack.c.l.b16 %v6016
    %v6100 = vunpack.c.h.b16 %v6016
    %v6101 = vunpack.c.l.b16 %v6017
    %v6102 = vunpack.c.h.b16 %v6017
    %v6103 = vunpack.c.l.b16 %v6018
    %v6104 = vunpack.c.h.b16 %v6018
    %v6105 = vunpack.c.l.b16 %v6019
    %v6106 = vunpack.c.h.b16 %v6019
    %v6107 = vunpack.c.l.b16 %v6020
    %v6108 = vunpack.c.h.b16 %v6020
    %v6109 = vunpack.c.l.b16 %v6021
    %v6110 = vunpack.c.h.b16 %v6021
    %v6111 = vunpack.c.l.b16 %v6022
    %v6112 = vunpack.c.h.b16 %v6022
    %v6113 = vunpack.c.l.b16 %v6023
    %v6114 = vunpack.c.h.b16 %v6023
    %v6115 = vunpack.c.l.b16 %v6024
    %v6116 = vunpack.c.h.b16 %v6024
    %v6117 = vunpack.c.l.b16 %v6025
    %v6118 = vunpack.c.h.b16 %v6025
    %v6119 = vunpack.c.l.b16 %v6026
    %v6120 = vunpack.c.h.b16 %v6026
    %v6121 = vunpack.c.l.b16 %v6027
    %v6122 = vunpack.c.h.b16 %v6027
    %v6123 = vunpack.c.l.b16 %v6028
    %v6124 = vunpack.c.h.b16 %v6028
    %v6125 = vpack.c.b16 %v6061, %v6061
    %v6126 = vpack.c.b16 %v6062, %v6062
    %v6127 = vpack.c.b16 %v6063, %v6063
    %v6128 = vpack.c.b16 %v6064, %v6064
    %v6129 = vpack.c.b16 %v6065, %v6065
    %v6130 = vpack.c.b16 %v6066, %v6066
    %v6131 = vpack.c.b16 %v6067, %v6067
    %v6132 = vpack.c.b16 %v6068, %v6068
    %v6133 = vpack.c.b16 %v6069, %v6069
    %v6134 = vpack.c.b16 %v6070, %v6070
    %v6135 = vpack.c.b16 %v6071, %v6071
    %v6136 = vpack.c.b16 %v6072, %v6072
    %v6137 = vpack.c.b16 %v6073, %v6073
    %v6138 = vpack.c.b16 %v6074, %v6074
    %v6139 = vpack.c.b16 %v6075, %v6075
    %v6140 = vpack.c.b16 %v6076, %v6076
    %v6141 = vpack.c.b16 %v6077, %v6077
    %v6142 = vpack.c.b16 %v6078, %v6078
    %v6143 = vpack.c.b16 %v6079, %v6079
    %v6144 = vpack.c.b16 %v6080, %v6080
    %v6145 = vpack.c.b16 %v6081, %v6081
    %v6146 = vpack.c.b16 %v6082, %v6082
    %v6147 = vpack.c.b16 %v6083, %v6083
    %v6148 = vpack.c.b16 %v6084, %v6084
    %v6149 = vpack.c.b16 %v6085, %v6085
    %v6150 = vpack.c.b16 %v6086, %v6086
    %v6151 = vpack.c.b16 %v6087, %v6087
    %v6152 = vpack.c.b16 %v6088, %v6088
    %v6153 = vpack.c.b16 %v6089, %v6089
    %v6154 = vpack.c.b16 %v6090, %v6090
    %v6155 = vpack.c.b16 %v6091, %v6091
    %v6156 = vpack.c.b16 %v6092, %v6092
    %v6157 = vpack.c.b16 %v6093, %v6093
    %v6158 = vpack.c.b16 %v6094, %v6094
    %v6159 = vpack.c.b16 %v6095, %v6095
    %v6160 = vpack.c.b16 %v6096, %v6096
    %v6161 = vpack.c.b16 %v6097, %v6097
    %v6162 = vpack.c.b16 %v6098, %v6098
    %v6163 = vpack.c.b16 %v6099, %v6099
    %v6164 = vpack.c.b16 %v6100, %v6100
    %v6165 = vpack.c.b16 %v6101, %v6101
    %v6166 = vpack.c.b16 %v6102, %v6102
    %v6167 = vpack.c.b16 %v6103, %v6103
    %v6168 = vpack.c.b16 %v6104, %v6104
    %v6169 = vpack.c.b16 %v6105, %v6105
    %v6170 = vpack.c.b16 %v6106, %v6106
    %v6171 = vpack.c.b16 %v6107, %v6107
    %v6172 = vpack.c.b16 %v6108, %v6108
    %v6173 = vpack.c.b16 %v6109, %v6109
    %v6174 = vpack.c.b16 %v6110, %v6110
    %v6175 = vpack.c.b16 %v6111, %v6111
    %v6176 = vpack.c.b16 %v6112, %v6112
    %v6177 = vpack.c.b16 %v6113, %v6113
    %v6178 = vpack.c.b16 %v6114, %v6114
    %v6179 = vpack.c.b16 %v6115, %v6115
    %v6180 = vpack.c.b16 %v6116, %v6116
    %v6181 = vpack.c.b16 %v6117, %v6117
    %v6182 = vpack.c.b16 %v6118, %v6118
    %v6183 = vpack.c.b16 %v6119, %v6119
    %v6184 = vpack.c.b16 %v6120, %v6120
    %v6185 = vpack.c.b16 %v6121, %v6121
    %v6186 = vpack.c.b16 %v6122, %v6122
    %v6187 = vpack.c.b16 %v6123, %v6123
    %v6188 = vpack.c.b16 %v6124, %v6124
    %v6190 = vshrl.u32 %v6125, 16
    %v6192 = vrot.slane %v6190, 7
    %v6193 = vshll.u32 %v6125, 16
    %v6195 = vor.u32 %v6192, %v6193
    %v6196 = vrot.slane %v6192, 4
    %v6198 = vshrl.u32 %v6126, 16
    %v6200 = vrot.slane %v6198, 7
    %v6201 = vshll.u32 %v6126, 16
    %v6203 = vor.u32 %v6200, %v6201
    %v6204 = vsel %vm560, %v6196, %v6203
    %v6205 = vrot.slane %v6200, 4
    %v6207 = vshrl.u32 %v6127, 16
    %v6209 = vrot.slane %v6207, 7
    %v6210 = vshll.u32 %v6127, 16
    %v6212 = vor.u32 %v6209, %v6210
    %v6213 = vrot.slane %v6209, 4
    %v6215 = vshrl.u32 %v6128, 16
    %v6217 = vrot.slane %v6215, 7
    %v6218 = vshll.u32 %v6128, 16
    %v6220 = vor.u32 %v6217, %v6218
    %v6221 = vsel %vm560, %v6213, %v6220
    %v6222 = vrot.slane %v6217, 4
    %v6224 = vshrl.u32 %v6129, 16
    %v6226 = vrot.slane %v6224, 7
    %v6227 = vshll.u32 %v6129, 16
    %v6229 = vor.u32 %v6226, %v6227
    %v6230 = vrot.slane %v6226, 4
    %v6232 = vshrl.u32 %v6130, 16
    %v6234 = vrot.slane %v6232, 7
    %v6235 = vshll.u32 %v6130, 16
    %v6237 = vor.u32 %v6234, %v6235
    %v6238 = vsel %vm560, %v6230, %v6237
    %v6239 = vrot.slane %v6234, 4
    %v6241 = vshrl.u32 %v6131, 16
    %v6243 = vrot.slane %v6241, 7
    %v6244 = vshll.u32 %v6131, 16
    %v6246 = vor.u32 %v6243, %v6244
    %v6247 = vrot.slane %v6243, 4
    %v6249 = vshrl.u32 %v6132, 16
    %v6251 = vrot.slane %v6249, 7
    %v6252 = vshll.u32 %v6132, 16
    %v6254 = vor.u32 %v6251, %v6252
    %v6255 = vsel %vm560, %v6247, %v6254
    %v6256 = vrot.slane %v6251, 4
    %v6258 = vshrl.u32 %v6133, 16
    %v6260 = vrot.slane %v6258, 7
    %v6261 = vshll.u32 %v6133, 16
    %v6263 = vor.u32 %v6260, %v6261
    %v6264 = vrot.slane %v6260, 4
    %v6266 = vshrl.u32 %v6134, 16
    %v6268 = vrot.slane %v6266, 7
    %v6269 = vshll.u32 %v6134, 16
    %v6271 = vor.u32 %v6268, %v6269
    %v6272 = vsel %vm560, %v6264, %v6271
    %v6273 = vrot.slane %v6268, 4
    %v6275 = vshrl.u32 %v6135, 16
    %v6277 = vrot.slane %v6275, 7
    %v6278 = vshll.u32 %v6135, 16
    %v6280 = vor.u32 %v6277, %v6278
    %v6281 = vrot.slane %v6277, 4
    %v6283 = vshrl.u32 %v6136, 16
    %v6285 = vrot.slane %v6283, 7
    %v6286 = vshll.u32 %v6136, 16
    %v6288 = vor.u32 %v6285, %v6286
    %v6289 = vsel %vm560, %v6281, %v6288
    %v6290 = vrot.slane %v6285, 4
    %v6292 = vshrl.u32 %v6137, 16
    %v6294 = vrot.slane %v6292, 7
    %v6295 = vshll.u32 %v6137, 16
    %v6297 = vor.u32 %v6294, %v6295
    %v6298 = vrot.slane %v6294, 4
    %v6300 = vshrl.u32 %v6138, 16
    %v6302 = vrot.slane %v6300, 7
    %v6303 = vshll.u32 %v6138, 16
    %v6305 = vor.u32 %v6302, %v6303
    %v6306 = vsel %vm560, %v6298, %v6305
    %v6307 = vrot.slane %v6302, 4
    %v6309 = vshrl.u32 %v6139, 16
    %v6311 = vrot.slane %v6309, 7
    %v6312 = vshll.u32 %v6139, 16
    %v6314 = vor.u32 %v6311, %v6312
    %v6315 = vrot.slane %v6311, 4
    %v6317 = vshrl.u32 %v6140, 16
    %v6319 = vrot.slane %v6317, 7
    %v6320 = vshll.u32 %v6140, 16
    %v6322 = vor.u32 %v6319, %v6320
    %v6323 = vsel %vm560, %v6315, %v6322
    %v6324 = vrot.slane %v6319, 4
    %v6326 = vshrl.u32 %v6141, 16
    %v6328 = vrot.slane %v6326, 7
    %v6329 = vshll.u32 %v6141, 16
    %v6331 = vor.u32 %v6328, %v6329
    %v6332 = vrot.slane %v6328, 4
    %v6334 = vshrl.u32 %v6142, 16
    %v6336 = vrot.slane %v6334, 7
    %v6337 = vshll.u32 %v6142, 16
    %v6339 = vor.u32 %v6336, %v6337
    %v6340 = vsel %vm560, %v6332, %v6339
    %v6341 = vrot.slane %v6336, 4
    %v6343 = vshrl.u32 %v6143, 16
    %v6345 = vrot.slane %v6343, 7
    %v6346 = vshll.u32 %v6143, 16
    %v6348 = vor.u32 %v6345, %v6346
    %v6349 = vrot.slane %v6345, 4
    %v6351 = vshrl.u32 %v6144, 16
    %v6353 = vrot.slane %v6351, 7
    %v6354 = vshll.u32 %v6144, 16
    %v6356 = vor.u32 %v6353, %v6354
    %v6357 = vsel %vm560, %v6349, %v6356
    %v6358 = vrot.slane %v6353, 4
    %v6360 = vshrl.u32 %v6145, 16
    %v6362 = vrot.slane %v6360, 7
    %v6363 = vshll.u32 %v6145, 16
    %v6365 = vor.u32 %v6362, %v6363
    %v6366 = vrot.slane %v6362, 4
    %v6368 = vshrl.u32 %v6146, 16
    %v6370 = vrot.slane %v6368, 7
    %v6371 = vshll.u32 %v6146, 16
    %v6373 = vor.u32 %v6370, %v6371
    %v6374 = vsel %vm560, %v6366, %v6373
    %v6375 = vrot.slane %v6370, 4
    %v6377 = vshrl.u32 %v6147, 16
    %v6379 = vrot.slane %v6377, 7
    %v6380 = vshll.u32 %v6147, 16
    %v6382 = vor.u32 %v6379, %v6380
    %v6383 = vrot.slane %v6379, 4
    %v6385 = vshrl.u32 %v6148, 16
    %v6387 = vrot.slane %v6385, 7
    %v6388 = vshll.u32 %v6148, 16
    %v6390 = vor.u32 %v6387, %v6388
    %v6391 = vsel %vm560, %v6383, %v6390
    %v6392 = vrot.slane %v6387, 4
    %v6394 = vshrl.u32 %v6149, 16
    %v6396 = vrot.slane %v6394, 7
    %v6397 = vshll.u32 %v6149, 16
    %v6399 = vor.u32 %v6396, %v6397
    %v6400 = vrot.slane %v6396, 4
    %v6402 = vshrl.u32 %v6150, 16
    %v6404 = vrot.slane %v6402, 7
    %v6405 = vshll.u32 %v6150, 16
    %v6407 = vor.u32 %v6404, %v6405
    %v6408 = vsel %vm560, %v6400, %v6407
    %v6409 = vrot.slane %v6404, 4
    %v6411 = vshrl.u32 %v6151, 16
    %v6413 = vrot.slane %v6411, 7
    %v6414 = vshll.u32 %v6151, 16
    %v6416 = vor.u32 %v6413, %v6414
    %v6417 = vrot.slane %v6413, 4
    %v6419 = vshrl.u32 %v6152, 16
    %v6421 = vrot.slane %v6419, 7
    %v6422 = vshll.u32 %v6152, 16
    %v6424 = vor.u32 %v6421, %v6422
    %v6425 = vsel %vm560, %v6417, %v6424
    %v6426 = vrot.slane %v6421, 4
    %v6428 = vshrl.u32 %v6153, 16
    %v6430 = vrot.slane %v6428, 7
    %v6431 = vshll.u32 %v6153, 16
    %v6433 = vor.u32 %v6430, %v6431
    %v6434 = vrot.slane %v6430, 4
    %v6436 = vshrl.u32 %v6154, 16
    %v6438 = vrot.slane %v6436, 7
    %v6439 = vshll.u32 %v6154, 16
    %v6441 = vor.u32 %v6438, %v6439
    %v6442 = vsel %vm560, %v6434, %v6441
    %v6443 = vrot.slane %v6438, 4
    %v6445 = vshrl.u32 %v6155, 16
    %v6447 = vrot.slane %v6445, 7
    %v6448 = vshll.u32 %v6155, 16
    %v6450 = vor.u32 %v6447, %v6448
    %v6451 = vrot.slane %v6447, 4
    %v6453 = vshrl.u32 %v6156, 16
    %v6455 = vrot.slane %v6453, 7
    %v6456 = vshll.u32 %v6156, 16
    %v6458 = vor.u32 %v6455, %v6456
    %v6459 = vsel %vm560, %v6451, %v6458
    %v6460 = vrot.slane %v6455, 4
    %v6462 = vshrl.u32 %v6157, 16
    %v6464 = vrot.slane %v6462, 7
    %v6465 = vshll.u32 %v6157, 16
    %v6467 = vor.u32 %v6464, %v6465
    %v6468 = vrot.slane %v6464, 4
    %v6470 = vshrl.u32 %v6158, 16
    %v6472 = vrot.slane %v6470, 7
    %v6473 = vshll.u32 %v6158, 16
    %v6475 = vor.u32 %v6472, %v6473
    %v6476 = vsel %vm560, %v6468, %v6475
    %v6477 = vrot.slane %v6472, 4
    %v6479 = vshrl.u32 %v6159, 16
    %v6481 = vrot.slane %v6479, 7
    %v6482 = vshll.u32 %v6159, 16
    %v6484 = vor.u32 %v6481, %v6482
    %v6485 = vrot.slane %v6481, 4
    %v6487 = vshrl.u32 %v6160, 16
    %v6489 = vrot.slane %v6487, 7
    %v6490 = vshll.u32 %v6160, 16
    %v6492 = vor.u32 %v6489, %v6490
    %v6493 = vsel %vm560, %v6485, %v6492
    %v6494 = vrot.slane %v6489, 4
    %v6496 = vshrl.u32 %v6161, 16
    %v6498 = vrot.slane %v6496, 7
    %v6499 = vshll.u32 %v6161, 16
    %v6501 = vor.u32 %v6498, %v6499
    %v6502 = vrot.slane %v6498, 4
    %v6504 = vshrl.u32 %v6162, 16
    %v6506 = vrot.slane %v6504, 7
    %v6507 = vshll.u32 %v6162, 16
    %v6509 = vor.u32 %v6506, %v6507
    %v6510 = vsel %vm560, %v6502, %v6509
    %v6511 = vrot.slane %v6506, 4
    %v6513 = vshrl.u32 %v6163, 16
    %v6515 = vrot.slane %v6513, 7
    %v6516 = vshll.u32 %v6163, 16
    %v6518 = vor.u32 %v6515, %v6516
    %v6519 = vrot.slane %v6515, 4
    %v6521 = vshrl.u32 %v6164, 16
    %v6523 = vrot.slane %v6521, 7
    %v6524 = vshll.u32 %v6164, 16
    %v6526 = vor.u32 %v6523, %v6524
    %v6527 = vsel %vm560, %v6519, %v6526
    %v6528 = vrot.slane %v6523, 4
    %v6530 = vshrl.u32 %v6165, 16
    %v6532 = vrot.slane %v6530, 7
    %v6533 = vshll.u32 %v6165, 16
    %v6535 = vor.u32 %v6532, %v6533
    %v6536 = vrot.slane %v6532, 4
    %v6538 = vshrl.u32 %v6166, 16
    %v6540 = vrot.slane %v6538, 7
    %v6541 = vshll.u32 %v6166, 16
    %v6543 = vor.u32 %v6540, %v6541
    %v6544 = vsel %vm560, %v6536, %v6543
    %v6545 = vrot.slane %v6540, 4
    %v6547 = vshrl.u32 %v6167, 16
    %v6549 = vrot.slane %v6547, 7
    %v6550 = vshll.u32 %v6167, 16
    %v6552 = vor.u32 %v6549, %v6550
    %v6553 = vrot.slane %v6549, 4
    %v6555 = vshrl.u32 %v6168, 16
    %v6557 = vrot.slane %v6555, 7
    %v6558 = vshll.u32 %v6168, 16
    %v6560 = vor.u32 %v6557, %v6558
    %v6561 = vsel %vm560, %v6553, %v6560
    %v6562 = vrot.slane %v6557, 4
    %v6564 = vshrl.u32 %v6169, 16
    %v6566 = vrot.slane %v6564, 7
    %v6567 = vshll.u32 %v6169, 16
    %v6569 = vor.u32 %v6566, %v6567
    %v6570 = vrot.slane %v6566, 4
    %v6572 = vshrl.u32 %v6170, 16
    %v6574 = vrot.slane %v6572, 7
    %v6575 = vshll.u32 %v6170, 16
    %v6577 = vor.u32 %v6574, %v6575
    %v6578 = vsel %vm560, %v6570, %v6577
    %v6579 = vrot.slane %v6574, 4
    %v6581 = vshrl.u32 %v6171, 16
    %v6583 = vrot.slane %v6581, 7
    %v6584 = vshll.u32 %v6171, 16
    %v6586 = vor.u32 %v6583, %v6584
    %v6587 = vrot.slane %v6583, 4
    %v6589 = vshrl.u32 %v6172, 16
    %v6591 = vrot.slane %v6589, 7
    %v6592 = vshll.u32 %v6172, 16
    %v6594 = vor.u32 %v6591, %v6592
    %v6595 = vsel %vm560, %v6587, %v6594
    %v6596 = vrot.slane %v6591, 4
    %v6598 = vshrl.u32 %v6173, 16
    %v6600 = vrot.slane %v6598, 7
    %v6601 = vshll.u32 %v6173, 16
    %v6603 = vor.u32 %v6600, %v6601
    %v6604 = vrot.slane %v6600, 4
    %v6606 = vshrl.u32 %v6174, 16
    %v6608 = vrot.slane %v6606, 7
    %v6609 = vshll.u32 %v6174, 16
    %v6611 = vor.u32 %v6608, %v6609
    %v6612 = vsel %vm560, %v6604, %v6611
    %v6613 = vrot.slane %v6608, 4
    %v6615 = vshrl.u32 %v6175, 16
    %v6617 = vrot.slane %v6615, 7
    %v6618 = vshll.u32 %v6175, 16
    %v6620 = vor.u32 %v6617, %v6618
    %v6621 = vrot.slane %v6617, 4
    %v6623 = vshrl.u32 %v6176, 16
    %v6625 = vrot.slane %v6623, 7
    %v6626 = vshll.u32 %v6176, 16
    %v6628 = vor.u32 %v6625, %v6626
    %v6629 = vsel %vm560, %v6621, %v6628
    %v6630 = vrot.slane %v6625, 4
    %v6632 = vshrl.u32 %v6177, 16
    %v6634 = vrot.slane %v6632, 7
    %v6635 = vshll.u32 %v6177, 16
    %v6637 = vor.u32 %v6634, %v6635
    %v6638 = vrot.slane %v6634, 4
    %v6640 = vshrl.u32 %v6178, 16
    %v6642 = vrot.slane %v6640, 7
    %v6643 = vshll.u32 %v6178, 16
    %v6645 = vor.u32 %v6642, %v6643
    %v6646 = vsel %vm560, %v6638, %v6645
    %v6647 = vrot.slane %v6642, 4
    %v6649 = vshrl.u32 %v6179, 16
    %v6651 = vrot.slane %v6649, 7
    %v6652 = vshll.u32 %v6179, 16
    %v6654 = vor.u32 %v6651, %v6652
    %v6655 = vrot.slane %v6651, 4
    %v6657 = vshrl.u32 %v6180, 16
    %v6659 = vrot.slane %v6657, 7
    %v6660 = vshll.u32 %v6180, 16
    %v6662 = vor.u32 %v6659, %v6660
    %v6663 = vsel %vm560, %v6655, %v6662
    %v6664 = vrot.slane %v6659, 4
    %v6666 = vshrl.u32 %v6181, 16
    %v6668 = vrot.slane %v6666, 7
    %v6669 = vshll.u32 %v6181, 16
    %v6671 = vor.u32 %v6668, %v6669
    %v6672 = vrot.slane %v6668, 4
    %v6674 = vshrl.u32 %v6182, 16
    %v6676 = vrot.slane %v6674, 7
    %v6677 = vshll.u32 %v6182, 16
    %v6679 = vor.u32 %v6676, %v6677
    %v6680 = vsel %vm560, %v6672, %v6679
    %v6681 = vrot.slane %v6676, 4
    %v6683 = vshrl.u32 %v6183, 16
    %v6685 = vrot.slane %v6683, 7
    %v6686 = vshll.u32 %v6183, 16
    %v6688 = vor.u32 %v6685, %v6686
    %v6689 = vrot.slane %v6685, 4
    %v6691 = vshrl.u32 %v6184, 16
    %v6693 = vrot.slane %v6691, 7
    %v6694 = vshll.u32 %v6184, 16
    %v6696 = vor.u32 %v6693, %v6694
    %v6697 = vsel %vm560, %v6689, %v6696
    %v6698 = vrot.slane %v6693, 4
    %v6700 = vshrl.u32 %v6185, 16
    %v6702 = vrot.slane %v6700, 7
    %v6703 = vshll.u32 %v6185, 16
    %v6705 = vor.u32 %v6702, %v6703
    %v6706 = vrot.slane %v6702, 4
    %v6708 = vshrl.u32 %v6186, 16
    %v6710 = vrot.slane %v6708, 7
    %v6711 = vshll.u32 %v6186, 16
    %v6713 = vor.u32 %v6710, %v6711
    %v6714 = vsel %vm560, %v6706, %v6713
    %v6715 = vrot.slane %v6710, 4
    %v6717 = vshrl.u32 %v6187, 16
    %v6719 = vrot.slane %v6717, 7
    %v6720 = vshll.u32 %v6187, 16
    %v6722 = vor.u32 %v6719, %v6720
    %v6723 = vrot.slane %v6719, 4
    %v6725 = vshrl.u32 %v6188, 16
    %v6727 = vrot.slane %v6725, 7
    %v6728 = vshll.u32 %v6188, 16
    %v6730 = vor.u32 %v6727, %v6728
    %v6731 = vsel %vm560, %v6723, %v6730
    %v6732 = vrot.slane %v6727, 4
    %s6829 = scalar_lea.vmem [#allocation3], 12
    %v6830 = vld [vmem:[%s6829] sm:$0xf]
    %v6831 = vsel %vm1203, %v6195, %v6830
    %6832 = vst [vmem:[%s6829] sm:$0xf] %v6831
    %6833 = vst [vmem:[%s6829 + $0x4] sm:$0xf] %v6204
    %v6834 = vld [vmem:[%s6829 + $0x8] sm:$0x1]
    %v6835 = vsel %vm84, %v6205, %v6834
    %6836 = vst [vmem:[%s6829 + $0x8] sm:$0x1] %v6835
    %v6837 = vld [vmem:[%s6829 + $0xc] sm:$0xf]
    %v6838 = vsel %vm1203, %v6212, %v6837
    %6839 = vst [vmem:[%s6829 + $0xc] sm:$0xf] %v6838
    %6840 = vst [vmem:[%s6829 + $0x10] sm:$0xf] %v6221
    %v6841 = vld [vmem:[%s6829 + $0x14] sm:$0x1]
    %v6842 = vsel %vm84, %v6222, %v6841
    %6843 = vst [vmem:[%s6829 + $0x14] sm:$0x1] %v6842
    %v6844 = vld [vmem:[%s6829 + $0x18] sm:$0xf]
    %v6845 = vsel %vm1203, %v6229, %v6844
    %6846 = vst [vmem:[%s6829 + $0x18] sm:$0xf] %v6845
    %6847 = vst [vmem:[%s6829 + $0x1c] sm:$0xf] %v6238
    %v6848 = vld [vmem:[%s6829 + $0x20] sm:$0x1]
    %v6849 = vsel %vm84, %v6239, %v6848
    %6850 = vst [vmem:[%s6829 + $0x20] sm:$0x1] %v6849
    %v6851 = vld [vmem:[%s6829 + $0x24] sm:$0xf]
    %v6852 = vsel %vm1203, %v6246, %v6851
    %6853 = vst [vmem:[%s6829 + $0x24] sm:$0xf] %v6852
    %6854 = vst [vmem:[%s6829 + $0x28] sm:$0xf] %v6255
    %v6855 = vld [vmem:[%s6829 + $0x2c] sm:$0x1]
    %v6856 = vsel %vm84, %v6256, %v6855
    %6857 = vst [vmem:[%s6829 + $0x2c] sm:$0x1] %v6856
    %v6858 = vld [vmem:[%s6829 + $0x30] sm:$0xf]
    %v6859 = vsel %vm1203, %v6263, %v6858
    %6860 = vst [vmem:[%s6829 + $0x30] sm:$0xf] %v6859
    %6861 = vst [vmem:[%s6829 + $0x34] sm:$0xf] %v6272
    %v6862 = vld [vmem:[%s6829 + $0x38] sm:$0x1]
    %v6863 = vsel %vm84, %v6273, %v6862
    %6864 = vst [vmem:[%s6829 + $0x38] sm:$0x1] %v6863
    %v6865 = vld [vmem:[%s6829 + $0x3c] sm:$0xf]
    %v6866 = vsel %vm1203, %v6280, %v6865
    %6867 = vst [vmem:[%s6829 + $0x3c] sm:$0xf] %v6866
    %6868 = vst [vmem:[%s6829 + $0x40] sm:$0xf] %v6289
    %v6869 = vld [vmem:[%s6829 + $0x44] sm:$0x1]
    %v6870 = vsel %vm84, %v6290, %v6869
    %6871 = vst [vmem:[%s6829 + $0x44] sm:$0x1] %v6870
    %v6872 = vld [vmem:[%s6829 + $0x48] sm:$0xf]
    %v6873 = vsel %vm1203, %v6297, %v6872
    %6874 = vst [vmem:[%s6829 + $0x48] sm:$0xf] %v6873
    %6875 = vst [vmem:[%s6829 + $0x4c] sm:$0xf] %v6306
    %v6876 = vld [vmem:[%s6829 + $0x50] sm:$0x1]
    %v6877 = vsel %vm84, %v6307, %v6876
    %6878 = vst [vmem:[%s6829 + $0x50] sm:$0x1] %v6877
    %v6879 = vld [vmem:[%s6829 + $0x54] sm:$0xf]
    %v6880 = vsel %vm1203, %v6314, %v6879
    %6881 = vst [vmem:[%s6829 + $0x54] sm:$0xf] %v6880
    %6882 = vst [vmem:[%s6829 + $0x58] sm:$0xf] %v6323
    %v6883 = vld [vmem:[%s6829 + $0x5c] sm:$0x1]
    %v6884 = vsel %vm84, %v6324, %v6883
    %6885 = vst [vmem:[%s6829 + $0x5c] sm:$0x1] %v6884
    %v6886 = vld [vmem:[%s6829 + $0x60] sm:$0xf]
    %v6887 = vsel %vm1203, %v6331, %v6886
    %6888 = vst [vmem:[%s6829 + $0x60] sm:$0xf] %v6887
    %6889 = vst [vmem:[%s6829 + $0x64] sm:$0xf] %v6340
    %v6890 = vld [vmem:[%s6829 + $0x68] sm:$0x1]
    %v6891 = vsel %vm84, %v6341, %v6890
    %6892 = vst [vmem:[%s6829 + $0x68] sm:$0x1] %v6891
    %v6893 = vld [vmem:[%s6829 + $0x6c] sm:$0xf]
    %v6894 = vsel %vm1203, %v6348, %v6893
    %6895 = vst [vmem:[%s6829 + $0x6c] sm:$0xf] %v6894
    %6896 = vst [vmem:[%s6829 + $0x70] sm:$0xf] %v6357
    %v6897 = vld [vmem:[%s6829 + $0x74] sm:$0x1]
    %v6898 = vsel %vm84, %v6358, %v6897
    %6899 = vst [vmem:[%s6829 + $0x74] sm:$0x1] %v6898
    %v6900 = vld [vmem:[%s6829 + $0x78] sm:$0xf]
    %v6901 = vsel %vm1203, %v6365, %v6900
    %6902 = vst [vmem:[%s6829 + $0x78] sm:$0xf] %v6901
    %6903 = vst [vmem:[%s6829 + $0x7c] sm:$0xf] %v6374
    %v6904 = vld [vmem:[%s6829 + $0x80] sm:$0x1]
    %v6905 = vsel %vm84, %v6375, %v6904
    %6906 = vst [vmem:[%s6829 + $0x80] sm:$0x1] %v6905
    %v6907 = vld [vmem:[%s6829 + $0x84] sm:$0xf]
    %v6908 = vsel %vm1203, %v6382, %v6907
    %6909 = vst [vmem:[%s6829 + $0x84] sm:$0xf] %v6908
    %6910 = vst [vmem:[%s6829 + $0x88] sm:$0xf] %v6391
    %v6911 = vld [vmem:[%s6829 + $0x8c] sm:$0x1]
    %v6912 = vsel %vm84, %v6392, %v6911
    %6913 = vst [vmem:[%s6829 + $0x8c] sm:$0x1] %v6912
    %v6914 = vld [vmem:[%s6829 + $0x90] sm:$0xf]
    %v6915 = vsel %vm1203, %v6399, %v6914
    %6916 = vst [vmem:[%s6829 + $0x90] sm:$0xf] %v6915
    %6917 = vst [vmem:[%s6829 + $0x94] sm:$0xf] %v6408
    %v6918 = vld [vmem:[%s6829 + $0x98] sm:$0x1]
    %v6919 = vsel %vm84, %v6409, %v6918
    %6920 = vst [vmem:[%s6829 + $0x98] sm:$0x1] %v6919
    %v6921 = vld [vmem:[%s6829 + $0x9c] sm:$0xf]
    %v6922 = vsel %vm1203, %v6416, %v6921
    %6923 = vst [vmem:[%s6829 + $0x9c] sm:$0xf] %v6922
    %6924 = vst [vmem:[%s6829 + $0xa0] sm:$0xf] %v6425
    %v6925 = vld [vmem:[%s6829 + $0xa4] sm:$0x1]
    %v6926 = vsel %vm84, %v6426, %v6925
    %6927 = vst [vmem:[%s6829 + $0xa4] sm:$0x1] %v6926
    %v6928 = vld [vmem:[%s6829 + $0xa8] sm:$0xf]
    %v6929 = vsel %vm1203, %v6433, %v6928
    %6930 = vst [vmem:[%s6829 + $0xa8] sm:$0xf] %v6929
    %6931 = vst [vmem:[%s6829 + $0xac] sm:$0xf] %v6442
    %v6932 = vld [vmem:[%s6829 + $0xb0] sm:$0x1]
    %v6933 = vsel %vm84, %v6443, %v6932
    %6934 = vst [vmem:[%s6829 + $0xb0] sm:$0x1] %v6933
    %v6935 = vld [vmem:[%s6829 + $0xb4] sm:$0xf]
    %v6936 = vsel %vm1203, %v6450, %v6935
    %6937 = vst [vmem:[%s6829 + $0xb4] sm:$0xf] %v6936
    %6938 = vst [vmem:[%s6829 + $0xb8] sm:$0xf] %v6459
    %v6939 = vld [vmem:[%s6829 + $0xbc] sm:$0x1]
    %v6940 = vsel %vm84, %v6460, %v6939
    %6941 = vst [vmem:[%s6829 + $0xbc] sm:$0x1] %v6940
    %v6942 = vld [vmem:[%s6829 + $0xd8] sm:$0xf]
    %v6943 = vsel %vm1203, %v6467, %v6942
    %6944 = vst [vmem:[%s6829 + $0xd8] sm:$0xf] %v6943
    %6945 = vst [vmem:[%s6829 + $0xdc] sm:$0xf] %v6476
    %v6946 = vld [vmem:[%s6829 + $0xe0] sm:$0x1]
    %v6947 = vsel %vm84, %v6477, %v6946
    %6948 = vst [vmem:[%s6829 + $0xe0] sm:$0x1] %v6947
    %v6949 = vld [vmem:[%s6829 + $0xe4] sm:$0xf]
    %v6950 = vsel %vm1203, %v6484, %v6949
    %6951 = vst [vmem:[%s6829 + $0xe4] sm:$0xf] %v6950
    %6952 = vst [vmem:[%s6829 + $0xe8] sm:$0xf] %v6493
    %v6953 = vld [vmem:[%s6829 + $0xec] sm:$0x1]
    %v6954 = vsel %vm84, %v6494, %v6953
    %6955 = vst [vmem:[%s6829 + $0xec] sm:$0x1] %v6954
    %v6956 = vld [vmem:[%s6829 + $0xf0] sm:$0xf]
    %v6957 = vsel %vm1203, %v6501, %v6956
    %6958 = vst [vmem:[%s6829 + $0xf0] sm:$0xf] %v6957
    %6959 = vst [vmem:[%s6829 + $0xf4] sm:$0xf] %v6510
    %v6960 = vld [vmem:[%s6829 + $0xf8] sm:$0x1]
    %v6961 = vsel %vm84, %v6511, %v6960
    %6962 = vst [vmem:[%s6829 + $0xf8] sm:$0x1] %v6961
    %v6963 = vld [vmem:[%s6829 + $0xfc] sm:$0xf]
    %v6964 = vsel %vm1203, %v6518, %v6963
    %6965 = vst [vmem:[%s6829 + $0xfc] sm:$0xf] %v6964
    %6966 = vst [vmem:[%s6829 + $0x100] sm:$0xf] %v6527
    %v6967 = vld [vmem:[%s6829 + $0x104] sm:$0x1]
    %v6968 = vsel %vm84, %v6528, %v6967
    %6969 = vst [vmem:[%s6829 + $0x104] sm:$0x1] %v6968
    %v6970 = vld [vmem:[%s6829 + $0x108] sm:$0xf]
    %v6971 = vsel %vm1203, %v6535, %v6970
    %6972 = vst [vmem:[%s6829 + $0x108] sm:$0xf] %v6971
    %6973 = vst [vmem:[%s6829 + $0x10c] sm:$0xf] %v6544
    %v6974 = vld [vmem:[%s6829 + $0x110] sm:$0x1]
    %v6975 = vsel %vm84, %v6545, %v6974
    %6976 = vst [vmem:[%s6829 + $0x110] sm:$0x1] %v6975
    %v6977 = vld [vmem:[%s6829 + $0x114] sm:$0xf]
    %v6978 = vsel %vm1203, %v6552, %v6977
    %6979 = vst [vmem:[%s6829 + $0x114] sm:$0xf] %v6978
    %6980 = vst [vmem:[%s6829 + $0x118] sm:$0xf] %v6561
    %v6981 = vld [vmem:[%s6829 + $0x11c] sm:$0x1]
    %v6982 = vsel %vm84, %v6562, %v6981
    %6983 = vst [vmem:[%s6829 + $0x11c] sm:$0x1] %v6982
    %v6984 = vld [vmem:[%s6829 + $0x120] sm:$0xf]
    %v6985 = vsel %vm1203, %v6569, %v6984
    %6986 = vst [vmem:[%s6829 + $0x120] sm:$0xf] %v6985
    %6987 = vst [vmem:[%s6829 + $0x124] sm:$0xf] %v6578
    %v6988 = vld [vmem:[%s6829 + $0x128] sm:$0x1]
    %v6989 = vsel %vm84, %v6579, %v6988
    %6990 = vst [vmem:[%s6829 + $0x128] sm:$0x1] %v6989
    %v6991 = vld [vmem:[%s6829 + $0x12c] sm:$0xf]
    %v6992 = vsel %vm1203, %v6586, %v6991
    %6993 = vst [vmem:[%s6829 + $0x12c] sm:$0xf] %v6992
    %6994 = vst [vmem:[%s6829 + $0x130] sm:$0xf] %v6595
    %v6995 = vld [vmem:[%s6829 + $0x134] sm:$0x1]
    %v6996 = vsel %vm84, %v6596, %v6995
    %6997 = vst [vmem:[%s6829 + $0x134] sm:$0x1] %v6996
    %v6998 = vld [vmem:[%s6829 + $0x138] sm:$0xf]
    %v6999 = vsel %vm1203, %v6603, %v6998
    %7000 = vst [vmem:[%s6829 + $0x138] sm:$0xf] %v6999
    %7001 = vst [vmem:[%s6829 + $0x13c] sm:$0xf] %v6612
    %v7002 = vld [vmem:[%s6829 + $0x140] sm:$0x1]
    %v7003 = vsel %vm84, %v6613, %v7002
    %7004 = vst [vmem:[%s6829 + $0x140] sm:$0x1] %v7003
    %v7005 = vld [vmem:[%s6829 + $0x144] sm:$0xf]
    %v7006 = vsel %vm1203, %v6620, %v7005
    %7007 = vst [vmem:[%s6829 + $0x144] sm:$0xf] %v7006
    %7008 = vst [vmem:[%s6829 + $0x148] sm:$0xf] %v6629
    %v7009 = vld [vmem:[%s6829 + $0x14c] sm:$0x1]
    %v7010 = vsel %vm84, %v6630, %v7009
    %7011 = vst [vmem:[%s6829 + $0x14c] sm:$0x1] %v7010
    %v7012 = vld [vmem:[%s6829 + $0x150] sm:$0xf]
    %v7013 = vsel %vm1203, %v6637, %v7012
    %7014 = vst [vmem:[%s6829 + $0x150] sm:$0xf] %v7013
    %7015 = vst [vmem:[%s6829 + $0x154] sm:$0xf] %v6646
    %v7016 = vld [vmem:[%s6829 + $0x158] sm:$0x1]
    %v7017 = vsel %vm84, %v6647, %v7016
    %7018 = vst [vmem:[%s6829 + $0x158] sm:$0x1] %v7017
    %v7019 = vld [vmem:[%s6829 + $0x15c] sm:$0xf]
    %v7020 = vsel %vm1203, %v6654, %v7019
    %7021 = vst [vmem:[%s6829 + $0x15c] sm:$0xf] %v7020
    %7022 = vst [vmem:[%s6829 + $0x160] sm:$0xf] %v6663
    %v7023 = vld [vmem:[%s6829 + $0x164] sm:$0x1]
    %v7024 = vsel %vm84, %v6664, %v7023
    %7025 = vst [vmem:[%s6829 + $0x164] sm:$0x1] %v7024
    %v7026 = vld [vmem:[%s6829 + $0x168] sm:$0xf]
    %v7027 = vsel %vm1203, %v6671, %v7026
    %7028 = vst [vmem:[%s6829 + $0x168] sm:$0xf] %v7027
    %7029 = vst [vmem:[%s6829 + $0x16c] sm:$0xf] %v6680
    %v7030 = vld [vmem:[%s6829 + $0x170] sm:$0x1]
    %v7031 = vsel %vm84, %v6681, %v7030
    %7032 = vst [vmem:[%s6829 + $0x170] sm:$0x1] %v7031
    %v7033 = vld [vmem:[%s6829 + $0x174] sm:$0xf]
    %v7034 = vsel %vm1203, %v6688, %v7033
    %7035 = vst [vmem:[%s6829 + $0x174] sm:$0xf] %v7034
    %7036 = vst [vmem:[%s6829 + $0x178] sm:$0xf] %v6697
    %v7037 = vld [vmem:[%s6829 + $0x17c] sm:$0x1]
    %v7038 = vsel %vm84, %v6698, %v7037
    %7039 = vst [vmem:[%s6829 + $0x17c] sm:$0x1] %v7038
    %v7040 = vld [vmem:[%s6829 + $0x180] sm:$0xf]
    %v7041 = vsel %vm1203, %v6705, %v7040
    %7042 = vst [vmem:[%s6829 + $0x180] sm:$0xf] %v7041
    %7043 = vst [vmem:[%s6829 + $0x184] sm:$0xf] %v6714
    %v7044 = vld [vmem:[%s6829 + $0x188] sm:$0x1]
    %v7045 = vsel %vm84, %v6715, %v7044
    %7046 = vst [vmem:[%s6829 + $0x188] sm:$0x1] %v7045
    %v7047 = vld [vmem:[%s6829 + $0x18c] sm:$0xf]
    %v7048 = vsel %vm1203, %v6722, %v7047
    %7049 = vst [vmem:[%s6829 + $0x18c] sm:$0xf] %v7048
    %7050 = vst [vmem:[%s6829 + $0x190] sm:$0xf] %v6731
    %v7051 = vld [vmem:[%s6829 + $0x194] sm:$0x1]
    %v7052 = vsel %vm84, %v6732, %v7051
    %7053 = vst [vmem:[%s6829 + $0x194] sm:$0x1] %v7052
    %v7054 = vld [vmem:[#allocation3] sm:$0xf]
    %v7055 = vld [vmem:[#allocation3 + $0x4] sm:$0xf]
    %v7056 = vld [vmem:[#allocation3 + $0xc] sm:$0xf]
    %v7057 = vld [vmem:[#allocation3 + $0x10] sm:$0xf]
    %v7058 = vld [vmem:[#allocation3 + $0x18] sm:$0xf]
    %v7059 = vld [vmem:[#allocation3 + $0x1c] sm:$0xf]
    %v7060 = vld [vmem:[#allocation3 + $0x24] sm:$0xf]
    %v7061 = vld [vmem:[#allocation3 + $0x28] sm:$0xf]
    %v7062 = vld [vmem:[#allocation3 + $0x30] sm:$0xf]
    %v7063 = vld [vmem:[#allocation3 + $0x34] sm:$0xf]
    %v7064 = vld [vmem:[#allocation3 + $0x3c] sm:$0xf]
    %v7065 = vld [vmem:[#allocation3 + $0x40] sm:$0xf]
    %v7066 = vld [vmem:[#allocation3 + $0x48] sm:$0xf]
    %v7067 = vld [vmem:[#allocation3 + $0x4c] sm:$0xf]
    %v7068 = vld [vmem:[#allocation3 + $0x54] sm:$0xf]
    %v7069 = vld [vmem:[#allocation3 + $0x58] sm:$0xf]
    %v7070 = vld [vmem:[#allocation3 + $0x60] sm:$0xf]
    %v7071 = vld [vmem:[#allocation3 + $0x64] sm:$0xf]
    %v7072 = vld [vmem:[#allocation3 + $0x6c] sm:$0xf]
    %v7073 = vld [vmem:[#allocation3 + $0x70] sm:$0xf]
    %v7074 = vld [vmem:[#allocation3 + $0x78] sm:$0xf]
    %v7075 = vld [vmem:[#allocation3 + $0x7c] sm:$0xf]
    %v7076 = vld [vmem:[#allocation3 + $0x84] sm:$0xf]
    %v7077 = vld [vmem:[#allocation3 + $0x88] sm:$0xf]
    %v7078 = vld [vmem:[#allocation3 + $0x90] sm:$0xf]
    %v7079 = vld [vmem:[#allocation3 + $0x94] sm:$0xf]
    %v7080 = vld [vmem:[#allocation3 + $0x9c] sm:$0xf]
    %v7081 = vld [vmem:[#allocation3 + $0xa0] sm:$0xf]
    %v7082 = vld [vmem:[#allocation3 + $0xa8] sm:$0xf]
    %v7083 = vld [vmem:[#allocation3 + $0xac] sm:$0xf]
    %v7084 = vld [vmem:[#allocation3 + $0xb4] sm:$0xf]
    %v7085 = vld [vmem:[#allocation3 + $0xb8] sm:$0xf]
    %v7086 = vld [vmem:[#allocation3 + $0xc0] sm:$0xf]
    %v7087 = vld [vmem:[#allocation3 + $0xc4] sm:$0xf]
    %v7088 = vld [vmem:[#allocation3 + $0xcc] sm:$0xf]
    %v7089 = vld [vmem:[#allocation3 + $0xd0] sm:$0xf]
    %v7090 = vld [vmem:[#allocation3 + $0xd8] sm:$0xf]
    %v7091 = vld [vmem:[#allocation3 + $0xdc] sm:$0xf]
    %v7092 = vld [vmem:[#allocation3 + $0xe4] sm:$0xf]
    %v7093 = vld [vmem:[#allocation3 + $0xe8] sm:$0xf]
    %v7094 = vld [vmem:[#allocation3 + $0xf0] sm:$0xf]
    %v7095 = vld [vmem:[#allocation3 + $0xf4] sm:$0xf]
    %v7096 = vld [vmem:[#allocation3 + $0xfc] sm:$0xf]
    %v7097 = vld [vmem:[#allocation3 + $0x100] sm:$0xf]
    %v7098 = vld [vmem:[#allocation3 + $0x108] sm:$0xf]
    %v7099 = vld [vmem:[#allocation3 + $0x10c] sm:$0xf]
    %v7100 = vld [vmem:[#allocation3 + $0x114] sm:$0xf]
    %v7101 = vld [vmem:[#allocation3 + $0x118] sm:$0xf]
    %v7102 = vld [vmem:[#allocation3 + $0x120] sm:$0xf]
    %v7103 = vld [vmem:[#allocation3 + $0x124] sm:$0xf]
    %v7104 = vld [vmem:[#allocation3 + $0x12c] sm:$0xf]
    %v7105 = vld [vmem:[#allocation3 + $0x130] sm:$0xf]
    %v7106 = vld [vmem:[#allocation3 + $0x138] sm:$0xf]
    %v7107 = vld [vmem:[#allocation3 + $0x13c] sm:$0xf]
    %v7108 = vld [vmem:[#allocation3 + $0x144] sm:$0xf]
    %v7109 = vld [vmem:[#allocation3 + $0x148] sm:$0xf]
    %v7110 = vld [vmem:[#allocation3 + $0x150] sm:$0xf]
    %v7111 = vld [vmem:[#allocation3 + $0x154] sm:$0xf]
    %v7112 = vld [vmem:[#allocation3 + $0x15c] sm:$0xf]
    %v7113 = vld [vmem:[#allocation3 + $0x160] sm:$0xf]
    %v7114 = vld [vmem:[#allocation3 + $0x168] sm:$0xf]
    %v7115 = vld [vmem:[#allocation3 + $0x16c] sm:$0xf]
    %v7116 = vld [vmem:[#allocation3 + $0x174] sm:$0xf]
    %v7117 = vld [vmem:[#allocation3 + $0x178] sm:$0xf]
    %v7118 = vld [vmem:[#allocation3 + $0x180] sm:$0xf]
    %v7119 = vld [vmem:[#allocation3 + $0x184] sm:$0xf]
    %v7120 = vld [vmem:[#allocation3 + $0x18c] sm:$0xf]
    %v7121 = vld [vmem:[#allocation3 + $0x190] sm:$0xf]
    %v7122 = vld [vmem:[#allocation3 + $0x198] sm:$0xf]
    %v7123 = vld [vmem:[#allocation3 + $0x19c] sm:$0xf]
    %v7124 = vld [vmem:[#allocation3 + $0x1a4] sm:$0xf]
    %v7125 = vld [vmem:[#allocation3 + $0x1a8] sm:$0xf]
    %v7126 = vld [vmem:[#allocation3 + $0x8] sm:$0x1]
    %v7127 = vld [vmem:[#allocation3 + $0x14] sm:$0x1]
    %v7128 = vld [vmem:[#allocation3 + $0x20] sm:$0x1]
    %v7129 = vld [vmem:[#allocation3 + $0x2c] sm:$0x1]
    %v7130 = vld [vmem:[#allocation3 + $0x38] sm:$0x1]
    %v7131 = vld [vmem:[#allocation3 + $0x44] sm:$0x1]
    %v7132 = vld [vmem:[#allocation3 + $0x50] sm:$0x1]
    %v7133 = vld [vmem:[#allocation3 + $0x5c] sm:$0x1]
    %v7134 = vld [vmem:[#allocation3 + $0x68] sm:$0x1]
    %v7135 = vld [vmem:[#allocation3 + $0x74] sm:$0x1]
    %v7136 = vld [vmem:[#allocation3 + $0x80] sm:$0x1]
    %v7137 = vld [vmem:[#allocation3 + $0x8c] sm:$0x1]
    %v7138 = vld [vmem:[#allocation3 + $0x98] sm:$0x1]
    %v7139 = vld [vmem:[#allocation3 + $0xa4] sm:$0x1]
    %v7140 = vld [vmem:[#allocation3 + $0xb0] sm:$0x1]
    %v7141 = vld [vmem:[#allocation3 + $0xbc] sm:$0x1]
    %v7142 = vld [vmem:[#allocation3 + $0xc8] sm:$0x1]
    %v7143 = vld [vmem:[#allocation3 + $0xd4] sm:$0x1]
    %v7144 = vld [vmem:[#allocation3 + $0xe0] sm:$0x1]
    %v7145 = vld [vmem:[#allocation3 + $0xec] sm:$0x1]
    %v7146 = vld [vmem:[#allocation3 + $0xf8] sm:$0x1]
    %v7147 = vld [vmem:[#allocation3 + $0x104] sm:$0x1]
    %v7148 = vld [vmem:[#allocation3 + $0x110] sm:$0x1]
    %v7149 = vld [vmem:[#allocation3 + $0x11c] sm:$0x1]
    %v7150 = vld [vmem:[#allocation3 + $0x128] sm:$0x1]
    %v7151 = vld [vmem:[#allocation3 + $0x134] sm:$0x1]
    %v7152 = vld [vmem:[#allocation3 + $0x140] sm:$0x1]
    %v7153 = vld [vmem:[#allocation3 + $0x14c] sm:$0x1]
    %v7154 = vld [vmem:[#allocation3 + $0x158] sm:$0x1]
    %v7155 = vld [vmem:[#allocation3 + $0x164] sm:$0x1]
    %v7156 = vld [vmem:[#allocation3 + $0x170] sm:$0x1]
    %v7157 = vld [vmem:[#allocation3 + $0x17c] sm:$0x1]
    %v7158 = vld [vmem:[#allocation3 + $0x188] sm:$0x1]
    %v7159 = vld [vmem:[#allocation3 + $0x194] sm:$0x1]
    %v7160 = vld [vmem:[#allocation3 + $0x1a0] sm:$0x1]
    %v7161 = vld [vmem:[#allocation3 + $0x1ac] sm:$0x1]
    %v7163 = vshrl.u32 %v7054, 16
    %v7165 = vrot.slane %v7163, 4
    %v7166 = vshll.u32 %v7054, 16
    %v7168 = vrot.slane %v7166, 5
    %v7169 = vor.u32 %v7165, %v7168
    %v7170 = vrot.slane %v7169, 4
    %v7172 = vshll.u32 %v7055, 16
    %v7174 = vrot.slane %v7172, 5
    %v7175 = vsel %vm1538, %v7170, %v7174
    %v7176 = vshrl.u32 %v7055, 16
    %v7178 = vrot.slane %v7176, 4
    %v7179 = vor.u32 %v7178, %v7174
    %v7180 = vrot.slane %v7179, 4
    %v7182 = vshll.u32 %v7126, 16
    %v7184 = vrot.slane %v7182, 5
    %v7185 = vsel %vm1538, %v7180, %v7184
    %v7187 = vshrl.u32 %v7056, 16
    %v7189 = vrot.slane %v7187, 4
    %v7190 = vshll.u32 %v7056, 16
    %v7192 = vrot.slane %v7190, 5
    %v7193 = vor.u32 %v7189, %v7192
    %v7194 = vrot.slane %v7193, 4
    %v7196 = vshll.u32 %v7057, 16
    %v7198 = vrot.slane %v7196, 5
    %v7199 = vsel %vm1538, %v7194, %v7198
    %v7200 = vshrl.u32 %v7057, 16
    %v7202 = vrot.slane %v7200, 4
    %v7203 = vor.u32 %v7202, %v7198
    %v7204 = vrot.slane %v7203, 4
    %v7206 = vshll.u32 %v7127, 16
    %v7208 = vrot.slane %v7206, 5
    %v7209 = vsel %vm1538, %v7204, %v7208
    %v7211 = vshrl.u32 %v7058, 16
    %v7213 = vrot.slane %v7211, 4
    %v7214 = vshll.u32 %v7058, 16
    %v7216 = vrot.slane %v7214, 5
    %v7217 = vor.u32 %v7213, %v7216
    %v7218 = vrot.slane %v7217, 4
    %v7220 = vshll.u32 %v7059, 16
    %v7222 = vrot.slane %v7220, 5
    %v7223 = vsel %vm1538, %v7218, %v7222
    %v7224 = vshrl.u32 %v7059, 16
    %v7226 = vrot.slane %v7224, 4
    %v7227 = vor.u32 %v7226, %v7222
    %v7228 = vrot.slane %v7227, 4
    %v7230 = vshll.u32 %v7128, 16
    %v7232 = vrot.slane %v7230, 5
    %v7233 = vsel %vm1538, %v7228, %v7232
    %v7235 = vshrl.u32 %v7060, 16
    %v7237 = vrot.slane %v7235, 4
    %v7238 = vshll.u32 %v7060, 16
    %v7240 = vrot.slane %v7238, 5
    %v7241 = vor.u32 %v7237, %v7240
    %v7242 = vrot.slane %v7241, 4
    %v7244 = vshll.u32 %v7061, 16
    %v7246 = vrot.slane %v7244, 5
    %v7247 = vsel %vm1538, %v7242, %v7246
    %v7248 = vshrl.u32 %v7061, 16
    %v7250 = vrot.slane %v7248, 4
    %v7251 = vor.u32 %v7250, %v7246
    %v7252 = vrot.slane %v7251, 4
    %v7254 = vshll.u32 %v7129, 16
    %v7256 = vrot.slane %v7254, 5
    %v7257 = vsel %vm1538, %v7252, %v7256
    %v7259 = vshrl.u32 %v7062, 16
    %v7261 = vrot.slane %v7259, 4
    %v7262 = vshll.u32 %v7062, 16
    %v7264 = vrot.slane %v7262, 5
    %v7265 = vor.u32 %v7261, %v7264
    %v7266 = vrot.slane %v7265, 4
    %v7268 = vshll.u32 %v7063, 16
    %v7270 = vrot.slane %v7268, 5
    %v7271 = vsel %vm1538, %v7266, %v7270
    %v7272 = vshrl.u32 %v7063, 16
    %v7274 = vrot.slane %v7272, 4
    %v7275 = vor.u32 %v7274, %v7270
    %v7276 = vrot.slane %v7275, 4
    %v7278 = vshll.u32 %v7130, 16
    %v7280 = vrot.slane %v7278, 5
    %v7281 = vsel %vm1538, %v7276, %v7280
    %v7283 = vshrl.u32 %v7064, 16
    %v7285 = vrot.slane %v7283, 4
    %v7286 = vshll.u32 %v7064, 16
    %v7288 = vrot.slane %v7286, 5
    %v7289 = vor.u32 %v7285, %v7288
    %v7290 = vrot.slane %v7289, 4
    %v7292 = vshll.u32 %v7065, 16
    %v7294 = vrot.slane %v7292, 5
    %v7295 = vsel %vm1538, %v7290, %v7294
    %v7296 = vshrl.u32 %v7065, 16
    %v7298 = vrot.slane %v7296, 4
    %v7299 = vor.u32 %v7298, %v7294
    %v7300 = vrot.slane %v7299, 4
    %v7302 = vshll.u32 %v7131, 16
    %v7304 = vrot.slane %v7302, 5
    %v7305 = vsel %vm1538, %v7300, %v7304
    %v7307 = vshrl.u32 %v7066, 16
    %v7309 = vrot.slane %v7307, 4
    %v7310 = vshll.u32 %v7066, 16
    %v7312 = vrot.slane %v7310, 5
    %v7313 = vor.u32 %v7309, %v7312
    %v7314 = vrot.slane %v7313, 4
    %v7316 = vshll.u32 %v7067, 16
    %v7318 = vrot.slane %v7316, 5
    %v7319 = vsel %vm1538, %v7314, %v7318
    %v7320 = vshrl.u32 %v7067, 16
    %v7322 = vrot.slane %v7320, 4
    %v7323 = vor.u32 %v7322, %v7318
    %v7324 = vrot.slane %v7323, 4
    %v7326 = vshll.u32 %v7132, 16
    %v7328 = vrot.slane %v7326, 5
    %v7329 = vsel %vm1538, %v7324, %v7328
    %v7331 = vshrl.u32 %v7068, 16
    %v7333 = vrot.slane %v7331, 4
    %v7334 = vshll.u32 %v7068, 16
    %v7336 = vrot.slane %v7334, 5
    %v7337 = vor.u32 %v7333, %v7336
    %v7338 = vrot.slane %v7337, 4
    %v7340 = vshll.u32 %v7069, 16
    %v7342 = vrot.slane %v7340, 5
    %v7343 = vsel %vm1538, %v7338, %v7342
    %v7344 = vshrl.u32 %v7069, 16
    %v7346 = vrot.slane %v7344, 4
    %v7347 = vor.u32 %v7346, %v7342
    %v7348 = vrot.slane %v7347, 4
    %v7350 = vshll.u32 %v7133, 16
    %v7352 = vrot.slane %v7350, 5
    %v7353 = vsel %vm1538, %v7348, %v7352
    %v7355 = vshrl.u32 %v7070, 16
    %v7357 = vrot.slane %v7355, 4
    %v7358 = vshll.u32 %v7070, 16
    %v7360 = vrot.slane %v7358, 5
    %v7361 = vor.u32 %v7357, %v7360
    %v7362 = vrot.slane %v7361, 4
    %v7364 = vshll.u32 %v7071, 16
    %v7366 = vrot.slane %v7364, 5
    %v7367 = vsel %vm1538, %v7362, %v7366
    %v7368 = vshrl.u32 %v7071, 16
    %v7370 = vrot.slane %v7368, 4
    %v7371 = vor.u32 %v7370, %v7366
    %v7372 = vrot.slane %v7371, 4
    %v7374 = vshll.u32 %v7134, 16
    %v7376 = vrot.slane %v7374, 5
    %v7377 = vsel %vm1538, %v7372, %v7376
    %v7379 = vshrl.u32 %v7072, 16
    %v7381 = vrot.slane %v7379, 4
    %v7382 = vshll.u32 %v7072, 16
    %v7384 = vrot.slane %v7382, 5
    %v7385 = vor.u32 %v7381, %v7384
    %v7386 = vrot.slane %v7385, 4
    %v7388 = vshll.u32 %v7073, 16
    %v7390 = vrot.slane %v7388, 5
    %v7391 = vsel %vm1538, %v7386, %v7390
    %v7392 = vshrl.u32 %v7073, 16
    %v7394 = vrot.slane %v7392, 4
    %v7395 = vor.u32 %v7394, %v7390
    %v7396 = vrot.slane %v7395, 4
    %v7398 = vshll.u32 %v7135, 16
    %v7400 = vrot.slane %v7398, 5
    %v7401 = vsel %vm1538, %v7396, %v7400
    %v7403 = vshrl.u32 %v7074, 16
    %v7405 = vrot.slane %v7403, 4
    %v7406 = vshll.u32 %v7074, 16
    %v7408 = vrot.slane %v7406, 5
    %v7409 = vor.u32 %v7405, %v7408
    %v7410 = vrot.slane %v7409, 4
    %v7412 = vshll.u32 %v7075, 16
    %v7414 = vrot.slane %v7412, 5
    %v7415 = vsel %vm1538, %v7410, %v7414
    %v7416 = vshrl.u32 %v7075, 16
    %v7418 = vrot.slane %v7416, 4
    %v7419 = vor.u32 %v7418, %v7414
    %v7420 = vrot.slane %v7419, 4
    %v7422 = vshll.u32 %v7136, 16
    %v7424 = vrot.slane %v7422, 5
    %v7425 = vsel %vm1538, %v7420, %v7424
    %v7427 = vshrl.u32 %v7076, 16
    %v7429 = vrot.slane %v7427, 4
    %v7430 = vshll.u32 %v7076, 16
    %v7432 = vrot.slane %v7430, 5
    %v7433 = vor.u32 %v7429, %v7432
    %v7434 = vrot.slane %v7433, 4
    %v7436 = vshll.u32 %v7077, 16
    %v7438 = vrot.slane %v7436, 5
    %v7439 = vsel %vm1538, %v7434, %v7438
    %v7440 = vshrl.u32 %v7077, 16
    %v7442 = vrot.slane %v7440, 4
    %v7443 = vor.u32 %v7442, %v7438
    %v7444 = vrot.slane %v7443, 4
    %v7446 = vshll.u32 %v7137, 16
    %v7448 = vrot.slane %v7446, 5
    %v7449 = vsel %vm1538, %v7444, %v7448
    %v7451 = vshrl.u32 %v7078, 16
    %v7453 = vrot.slane %v7451, 4
    %v7454 = vshll.u32 %v7078, 16
    %v7456 = vrot.slane %v7454, 5
    %v7457 = vor.u32 %v7453, %v7456
    %v7458 = vrot.slane %v7457, 4
    %v7460 = vshll.u32 %v7079, 16
    %v7462 = vrot.slane %v7460, 5
    %v7463 = vsel %vm1538, %v7458, %v7462
    %v7464 = vshrl.u32 %v7079, 16
    %v7466 = vrot.slane %v7464, 4
    %v7467 = vor.u32 %v7466, %v7462
    %v7468 = vrot.slane %v7467, 4
    %v7470 = vshll.u32 %v7138, 16
    %v7472 = vrot.slane %v7470, 5
    %v7473 = vsel %vm1538, %v7468, %v7472
    %v7475 = vshrl.u32 %v7080, 16
    %v7477 = vrot.slane %v7475, 4
    %v7478 = vshll.u32 %v7080, 16
    %v7480 = vrot.slane %v7478, 5
    %v7481 = vor.u32 %v7477, %v7480
    %v7482 = vrot.slane %v7481, 4
    %v7484 = vshll.u32 %v7081, 16
    %v7486 = vrot.slane %v7484, 5
    %v7487 = vsel %vm1538, %v7482, %v7486
    %v7488 = vshrl.u32 %v7081, 16
    %v7490 = vrot.slane %v7488, 4
    %v7491 = vor.u32 %v7490, %v7486
    %v7492 = vrot.slane %v7491, 4
    %v7494 = vshll.u32 %v7139, 16
    %v7496 = vrot.slane %v7494, 5
    %v7497 = vsel %vm1538, %v7492, %v7496
    %v7499 = vshrl.u32 %v7082, 16
    %v7501 = vrot.slane %v7499, 4
    %v7502 = vshll.u32 %v7082, 16
    %v7504 = vrot.slane %v7502, 5
    %v7505 = vor.u32 %v7501, %v7504
    %v7506 = vrot.slane %v7505, 4
    %v7508 = vshll.u32 %v7083, 16
    %v7510 = vrot.slane %v7508, 5
    %v7511 = vsel %vm1538, %v7506, %v7510
    %v7512 = vshrl.u32 %v7083, 16
    %v7514 = vrot.slane %v7512, 4
    %v7515 = vor.u32 %v7514, %v7510
    %v7516 = vrot.slane %v7515, 4
    %v7518 = vshll.u32 %v7140, 16
    %v7520 = vrot.slane %v7518, 5
    %v7521 = vsel %vm1538, %v7516, %v7520
    %v7523 = vshrl.u32 %v7084, 16
    %v7525 = vrot.slane %v7523, 4
    %v7526 = vshll.u32 %v7084, 16
    %v7528 = vrot.slane %v7526, 5
    %v7529 = vor.u32 %v7525, %v7528
    %v7530 = vrot.slane %v7529, 4
    %v7532 = vshll.u32 %v7085, 16
    %v7534 = vrot.slane %v7532, 5
    %v7535 = vsel %vm1538, %v7530, %v7534
    %v7536 = vshrl.u32 %v7085, 16
    %v7538 = vrot.slane %v7536, 4
    %v7539 = vor.u32 %v7538, %v7534
    %v7540 = vrot.slane %v7539, 4
    %v7542 = vshll.u32 %v7141, 16
    %v7544 = vrot.slane %v7542, 5
    %v7545 = vsel %vm1538, %v7540, %v7544
    %v7547 = vshrl.u32 %v7090, 16
    %v7549 = vrot.slane %v7547, 4
    %v7550 = vshll.u32 %v7090, 16
    %v7552 = vrot.slane %v7550, 5
    %v7553 = vor.u32 %v7549, %v7552
    %v7554 = vrot.slane %v7553, 4
    %v7556 = vshll.u32 %v7091, 16
    %v7558 = vrot.slane %v7556, 5
    %v7559 = vsel %vm1538, %v7554, %v7558
    %v7560 = vshrl.u32 %v7091, 16
    %v7562 = vrot.slane %v7560, 4
    %v7563 = vor.u32 %v7562, %v7558
    %v7564 = vrot.slane %v7563, 4
    %v7566 = vshll.u32 %v7144, 16
    %v7568 = vrot.slane %v7566, 5
    %v7569 = vsel %vm1538, %v7564, %v7568
    %v7571 = vshrl.u32 %v7092, 16
    %v7573 = vrot.slane %v7571, 4
    %v7574 = vshll.u32 %v7092, 16
    %v7576 = vrot.slane %v7574, 5
    %v7577 = vor.u32 %v7573, %v7576
    %v7578 = vrot.slane %v7577, 4
    %v7580 = vshll.u32 %v7093, 16
    %v7582 = vrot.slane %v7580, 5
    %v7583 = vsel %vm1538, %v7578, %v7582
    %v7584 = vshrl.u32 %v7093, 16
    %v7586 = vrot.slane %v7584, 4
    %v7587 = vor.u32 %v7586, %v7582
    %v7588 = vrot.slane %v7587, 4
    %v7590 = vshll.u32 %v7145, 16
    %v7592 = vrot.slane %v7590, 5
    %v7593 = vsel %vm1538, %v7588, %v7592
    %v7595 = vshrl.u32 %v7094, 16
    %v7597 = vrot.slane %v7595, 4
    %v7598 = vshll.u32 %v7094, 16
    %v7600 = vrot.slane %v7598, 5
    %v7601 = vor.u32 %v7597, %v7600
    %v7602 = vrot.slane %v7601, 4
    %v7604 = vshll.u32 %v7095, 16
    %v7606 = vrot.slane %v7604, 5
    %v7607 = vsel %vm1538, %v7602, %v7606
    %v7608 = vshrl.u32 %v7095, 16
    %v7610 = vrot.slane %v7608, 4
    %v7611 = vor.u32 %v7610, %v7606
    %v7612 = vrot.slane %v7611, 4
    %v7614 = vshll.u32 %v7146, 16
    %v7616 = vrot.slane %v7614, 5
    %v7617 = vsel %vm1538, %v7612, %v7616
    %v7619 = vshrl.u32 %v7096, 16
    %v7621 = vrot.slane %v7619, 4
    %v7622 = vshll.u32 %v7096, 16
    %v7624 = vrot.slane %v7622, 5
    %v7625 = vor.u32 %v7621, %v7624
    %v7626 = vrot.slane %v7625, 4
    %v7628 = vshll.u32 %v7097, 16
    %v7630 = vrot.slane %v7628, 5
    %v7631 = vsel %vm1538, %v7626, %v7630
    %v7632 = vshrl.u32 %v7097, 16
    %v7634 = vrot.slane %v7632, 4
    %v7635 = vor.u32 %v7634, %v7630
    %v7636 = vrot.slane %v7635, 4
    %v7638 = vshll.u32 %v7147, 16
    %v7640 = vrot.slane %v7638, 5
    %v7641 = vsel %vm1538, %v7636, %v7640
    %v7643 = vshrl.u32 %v7098, 16
    %v7645 = vrot.slane %v7643, 4
    %v7646 = vshll.u32 %v7098, 16
    %v7648 = vrot.slane %v7646, 5
    %v7649 = vor.u32 %v7645, %v7648
    %v7650 = vrot.slane %v7649, 4
    %v7652 = vshll.u32 %v7099, 16
    %v7654 = vrot.slane %v7652, 5
    %v7655 = vsel %vm1538, %v7650, %v7654
    %v7656 = vshrl.u32 %v7099, 16
    %v7658 = vrot.slane %v7656, 4
    %v7659 = vor.u32 %v7658, %v7654
    %v7660 = vrot.slane %v7659, 4
    %v7662 = vshll.u32 %v7148, 16
    %v7664 = vrot.slane %v7662, 5
    %v7665 = vsel %vm1538, %v7660, %v7664
    %v7667 = vshrl.u32 %v7100, 16
    %v7669 = vrot.slane %v7667, 4
    %v7670 = vshll.u32 %v7100, 16
    %v7672 = vrot.slane %v7670, 5
    %v7673 = vor.u32 %v7669, %v7672
    %v7674 = vrot.slane %v7673, 4
    %v7676 = vshll.u32 %v7101, 16
    %v7678 = vrot.slane %v7676, 5
    %v7679 = vsel %vm1538, %v7674, %v7678
    %v7680 = vshrl.u32 %v7101, 16
    %v7682 = vrot.slane %v7680, 4
    %v7683 = vor.u32 %v7682, %v7678
    %v7684 = vrot.slane %v7683, 4
    %v7686 = vshll.u32 %v7149, 16
    %v7688 = vrot.slane %v7686, 5
    %v7689 = vsel %vm1538, %v7684, %v7688
    %v7691 = vshrl.u32 %v7102, 16
    %v7693 = vrot.slane %v7691, 4
    %v7694 = vshll.u32 %v7102, 16
    %v7696 = vrot.slane %v7694, 5
    %v7697 = vor.u32 %v7693, %v7696
    %v7698 = vrot.slane %v7697, 4
    %v7700 = vshll.u32 %v7103, 16
    %v7702 = vrot.slane %v7700, 5
    %v7703 = vsel %vm1538, %v7698, %v7702
    %v7704 = vshrl.u32 %v7103, 16
    %v7706 = vrot.slane %v7704, 4
    %v7707 = vor.u32 %v7706, %v7702
    %v7708 = vrot.slane %v7707, 4
    %v7710 = vshll.u32 %v7150, 16
    %v7712 = vrot.slane %v7710, 5
    %v7713 = vsel %vm1538, %v7708, %v7712
    %v7715 = vshrl.u32 %v7104, 16
    %v7717 = vrot.slane %v7715, 4
    %v7718 = vshll.u32 %v7104, 16
    %v7720 = vrot.slane %v7718, 5
    %v7721 = vor.u32 %v7717, %v7720
    %v7722 = vrot.slane %v7721, 4
    %v7724 = vshll.u32 %v7105, 16
    %v7726 = vrot.slane %v7724, 5
    %v7727 = vsel %vm1538, %v7722, %v7726
    %v7728 = vshrl.u32 %v7105, 16
    %v7730 = vrot.slane %v7728, 4
    %v7731 = vor.u32 %v7730, %v7726
    %v7732 = vrot.slane %v7731, 4
    %v7734 = vshll.u32 %v7151, 16
    %v7736 = vrot.slane %v7734, 5
    %v7737 = vsel %vm1538, %v7732, %v7736
    %v7739 = vshrl.u32 %v7106, 16
    %v7741 = vrot.slane %v7739, 4
    %v7742 = vshll.u32 %v7106, 16
    %v7744 = vrot.slane %v7742, 5
    %v7745 = vor.u32 %v7741, %v7744
    %v7746 = vrot.slane %v7745, 4
    %v7748 = vshll.u32 %v7107, 16
    %v7750 = vrot.slane %v7748, 5
    %v7751 = vsel %vm1538, %v7746, %v7750
    %v7752 = vshrl.u32 %v7107, 16
    %v7754 = vrot.slane %v7752, 4
    %v7755 = vor.u32 %v7754, %v7750
    %v7756 = vrot.slane %v7755, 4
    %v7758 = vshll.u32 %v7152, 16
    %v7760 = vrot.slane %v7758, 5
    %v7761 = vsel %vm1538, %v7756, %v7760
    %v7763 = vshrl.u32 %v7108, 16
    %v7765 = vrot.slane %v7763, 4
    %v7766 = vshll.u32 %v7108, 16
    %v7768 = vrot.slane %v7766, 5
    %v7769 = vor.u32 %v7765, %v7768
    %v7770 = vrot.slane %v7769, 4
    %v7772 = vshll.u32 %v7109, 16
    %v7774 = vrot.slane %v7772, 5
    %v7775 = vsel %vm1538, %v7770, %v7774
    %v7776 = vshrl.u32 %v7109, 16
    %v7778 = vrot.slane %v7776, 4
    %v7779 = vor.u32 %v7778, %v7774
    %v7780 = vrot.slane %v7779, 4
    %v7782 = vshll.u32 %v7153, 16
    %v7784 = vrot.slane %v7782, 5
    %v7785 = vsel %vm1538, %v7780, %v7784
    %v7787 = vshrl.u32 %v7110, 16
    %v7789 = vrot.slane %v7787, 4
    %v7790 = vshll.u32 %v7110, 16
    %v7792 = vrot.slane %v7790, 5
    %v7793 = vor.u32 %v7789, %v7792
    %v7794 = vrot.slane %v7793, 4
    %v7796 = vshll.u32 %v7111, 16
    %v7798 = vrot.slane %v7796, 5
    %v7799 = vsel %vm1538, %v7794, %v7798
    %v7800 = vshrl.u32 %v7111, 16
    %v7802 = vrot.slane %v7800, 4
    %v7803 = vor.u32 %v7802, %v7798
    %v7804 = vrot.slane %v7803, 4
    %v7806 = vshll.u32 %v7154, 16
    %v7808 = vrot.slane %v7806, 5
    %v7809 = vsel %vm1538, %v7804, %v7808
    %v7811 = vshrl.u32 %v7112, 16
    %v7813 = vrot.slane %v7811, 4
    %v7814 = vshll.u32 %v7112, 16
    %v7816 = vrot.slane %v7814, 5
    %v7817 = vor.u32 %v7813, %v7816
    %v7818 = vrot.slane %v7817, 4
    %v7820 = vshll.u32 %v7113, 16
    %v7822 = vrot.slane %v7820, 5
    %v7823 = vsel %vm1538, %v7818, %v7822
    %v7824 = vshrl.u32 %v7113, 16
    %v7826 = vrot.slane %v7824, 4
    %v7827 = vor.u32 %v7826, %v7822
    %v7828 = vrot.slane %v7827, 4
    %v7830 = vshll.u32 %v7155, 16
    %v7832 = vrot.slane %v7830, 5
    %v7833 = vsel %vm1538, %v7828, %v7832
    %v7835 = vshrl.u32 %v7114, 16
    %v7837 = vrot.slane %v7835, 4
    %v7838 = vshll.u32 %v7114, 16
    %v7840 = vrot.slane %v7838, 5
    %v7841 = vor.u32 %v7837, %v7840
    %v7842 = vrot.slane %v7841, 4
    %v7844 = vshll.u32 %v7115, 16
    %v7846 = vrot.slane %v7844, 5
    %v7847 = vsel %vm1538, %v7842, %v7846
    %v7848 = vshrl.u32 %v7115, 16
    %v7850 = vrot.slane %v7848, 4
    %v7851 = vor.u32 %v7850, %v7846
    %v7852 = vrot.slane %v7851, 4
    %v7854 = vshll.u32 %v7156, 16
    %v7856 = vrot.slane %v7854, 5
    %v7857 = vsel %vm1538, %v7852, %v7856
    %v7859 = vshrl.u32 %v7116, 16
    %v7861 = vrot.slane %v7859, 4
    %v7862 = vshll.u32 %v7116, 16
    %v7864 = vrot.slane %v7862, 5
    %v7865 = vor.u32 %v7861, %v7864
    %v7866 = vrot.slane %v7865, 4
    %v7868 = vshll.u32 %v7117, 16
    %v7870 = vrot.slane %v7868, 5
    %v7871 = vsel %vm1538, %v7866, %v7870
    %v7872 = vshrl.u32 %v7117, 16
    %v7874 = vrot.slane %v7872, 4
    %v7875 = vor.u32 %v7874, %v7870
    %v7876 = vrot.slane %v7875, 4
    %v7878 = vshll.u32 %v7157, 16
    %v7880 = vrot.slane %v7878, 5
    %v7881 = vsel %vm1538, %v7876, %v7880
    %v7883 = vshrl.u32 %v7118, 16
    %v7885 = vrot.slane %v7883, 4
    %v7886 = vshll.u32 %v7118, 16
    %v7888 = vrot.slane %v7886, 5
    %v7889 = vor.u32 %v7885, %v7888
    %v7890 = vrot.slane %v7889, 4
    %v7892 = vshll.u32 %v7119, 16
    %v7894 = vrot.slane %v7892, 5
    %v7895 = vsel %vm1538, %v7890, %v7894
    %v7896 = vshrl.u32 %v7119, 16
    %v7898 = vrot.slane %v7896, 4
    %v7899 = vor.u32 %v7898, %v7894
    %v7900 = vrot.slane %v7899, 4
    %v7902 = vshll.u32 %v7158, 16
    %v7904 = vrot.slane %v7902, 5
    %v7905 = vsel %vm1538, %v7900, %v7904
    %v7907 = vshrl.u32 %v7120, 16
    %v7909 = vrot.slane %v7907, 4
    %v7910 = vshll.u32 %v7120, 16
    %v7912 = vrot.slane %v7910, 5
    %v7913 = vor.u32 %v7909, %v7912
    %v7914 = vrot.slane %v7913, 4
    %v7916 = vshll.u32 %v7121, 16
    %v7918 = vrot.slane %v7916, 5
    %v7919 = vsel %vm1538, %v7914, %v7918
    %v7920 = vshrl.u32 %v7121, 16
    %v7922 = vrot.slane %v7920, 4
    %v7923 = vor.u32 %v7922, %v7918
    %v7924 = vrot.slane %v7923, 4
    %v7926 = vshll.u32 %v7159, 16
    %v7928 = vrot.slane %v7926, 5
    %v7929 = vsel %vm1538, %v7924, %v7928
    %v7931 = vshrl.u32 %v7086, 16
    %v7933 = vrot.slane %v7931, 4
    %v7934 = vshll.u32 %v7086, 16
    %v7936 = vrot.slane %v7934, 5
    %v7937 = vor.u32 %v7933, %v7936
    %v7938 = vrot.slane %v7937, 4
    %v7940 = vshll.u32 %v7087, 16
    %v7942 = vrot.slane %v7940, 5
    %v7943 = vsel %vm1538, %v7938, %v7942
    %v7944 = vshrl.u32 %v7087, 16
    %v7946 = vrot.slane %v7944, 4
    %v7947 = vor.u32 %v7946, %v7942
    %v7948 = vrot.slane %v7947, 4
    %v7950 = vshll.u32 %v7142, 16
    %v7952 = vrot.slane %v7950, 5
    %v7953 = vsel %vm1538, %v7948, %v7952
    %v7955 = vshrl.u32 %v7122, 16
    %v7957 = vrot.slane %v7955, 4
    %v7958 = vshll.u32 %v7122, 16
    %v7960 = vrot.slane %v7958, 5
    %v7961 = vor.u32 %v7957, %v7960
    %v7962 = vrot.slane %v7961, 4
    %v7964 = vshll.u32 %v7123, 16
    %v7966 = vrot.slane %v7964, 5
    %v7967 = vsel %vm1538, %v7962, %v7966
    %v7968 = vshrl.u32 %v7123, 16
    %v7970 = vrot.slane %v7968, 4
    %v7971 = vor.u32 %v7970, %v7966
    %v7972 = vrot.slane %v7971, 4
    %v7974 = vshll.u32 %v7160, 16
    %v7976 = vrot.slane %v7974, 5
    %v7977 = vsel %vm1538, %v7972, %v7976
    %v7979 = vshrl.u32 %v7088, 16
    %v7981 = vrot.slane %v7979, 4
    %v7982 = vshll.u32 %v7088, 16
    %v7984 = vrot.slane %v7982, 5
    %v7985 = vor.u32 %v7981, %v7984
    %v7986 = vrot.slane %v7985, 4
    %v7988 = vshll.u32 %v7089, 16
    %v7990 = vrot.slane %v7988, 5
    %v7991 = vsel %vm1538, %v7986, %v7990
    %v7992 = vshrl.u32 %v7089, 16
    %v7994 = vrot.slane %v7992, 4
    %v7995 = vor.u32 %v7994, %v7990
    %v7996 = vrot.slane %v7995, 4
    %v7998 = vshll.u32 %v7143, 16
    %v8000 = vrot.slane %v7998, 5
    %v8001 = vsel %vm1538, %v7996, %v8000
    %v8003 = vshrl.u32 %v7124, 16
    %v8005 = vrot.slane %v8003, 4
    %v8006 = vshll.u32 %v7124, 16
    %v8008 = vrot.slane %v8006, 5
    %v8009 = vor.u32 %v8005, %v8008
    %v8010 = vrot.slane %v8009, 4
    %v8012 = vshll.u32 %v7125, 16
    %v8014 = vrot.slane %v8012, 5
    %v8015 = vsel %vm1538, %v8010, %v8014
    %v8016 = vshrl.u32 %v7125, 16
    %v8018 = vrot.slane %v8016, 4
    %v8019 = vor.u32 %v8018, %v8014
    %v8020 = vrot.slane %v8019, 4
    %v8022 = vshll.u32 %v7161, 16
    %v8024 = vrot.slane %v8022, 5
    %v8025 = vsel %vm1538, %v8020, %v8024
    %v8026 = vld [vmem:[#allocation3] sm:$0xe]
    %v8027 = vld [vmem:[#allocation3 + $0xc] sm:$0xe]
    %v8028 = vld [vmem:[#allocation3 + $0x18] sm:$0xe]
    %v8029 = vld [vmem:[#allocation3 + $0x24] sm:$0xe]
    %v8030 = vld [vmem:[#allocation3 + $0x30] sm:$0xe]
    %v8031 = vld [vmem:[#allocation3 + $0x3c] sm:$0xe]
    %v8032 = vld [vmem:[#allocation3 + $0x48] sm:$0xe]
    %v8033 = vld [vmem:[#allocation3 + $0x54] sm:$0xe]
    %v8034 = vld [vmem:[#allocation3 + $0x60] sm:$0xe]
    %v8035 = vld [vmem:[#allocation3 + $0x6c] sm:$0xe]
    %v8036 = vld [vmem:[#allocation3 + $0x78] sm:$0xe]
    %v8037 = vld [vmem:[#allocation3 + $0x84] sm:$0xe]
    %v8038 = vld [vmem:[#allocation3 + $0x90] sm:$0xe]
    %v8039 = vld [vmem:[#allocation3 + $0x9c] sm:$0xe]
    %v8040 = vld [vmem:[#allocation3 + $0xa8] sm:$0xe]
    %v8041 = vld [vmem:[#allocation3 + $0xb4] sm:$0xe]
    %v8042 = vld [vmem:[#allocation3 + $0xc0] sm:$0xe]
    %v8043 = vld [vmem:[#allocation3 + $0xcc] sm:$0xe]
    %v8044 = vld [vmem:[#allocation3 + $0xd8] sm:$0xe]
    %v8045 = vld [vmem:[#allocation3 + $0xe4] sm:$0xe]
    %v8046 = vld [vmem:[#allocation3 + $0xf0] sm:$0xe]
    %v8047 = vld [vmem:[#allocation3 + $0xfc] sm:$0xe]
    %v8048 = vld [vmem:[#allocation3 + $0x108] sm:$0xe]
    %v8049 = vld [vmem:[#allocation3 + $0x114] sm:$0xe]
    %v8050 = vld [vmem:[#allocation3 + $0x120] sm:$0xe]
    %v8051 = vld [vmem:[#allocation3 + $0x12c] sm:$0xe]
    %v8052 = vld [vmem:[#allocation3 + $0x138] sm:$0xe]
    %v8053 = vld [vmem:[#allocation3 + $0x144] sm:$0xe]
    %v8054 = vld [vmem:[#allocation3 + $0x150] sm:$0xe]
    %v8055 = vld [vmem:[#allocation3 + $0x15c] sm:$0xe]
    %v8056 = vld [vmem:[#allocation3 + $0x168] sm:$0xe]
    %v8057 = vld [vmem:[#allocation3 + $0x174] sm:$0xe]
    %v8058 = vld [vmem:[#allocation3 + $0x180] sm:$0xe]
    %v8059 = vld [vmem:[#allocation3 + $0x18c] sm:$0xe]
    %v8060 = vld [vmem:[#allocation3 + $0x198] sm:$0xe]
    %v8061 = vld [vmem:[#allocation3 + $0x1a4] sm:$0xe]
    %v8158 = vrot.slane %v8026, 5
    %v8159 = vrot.slane %v8158, 4
    %v8160 = vrot.slane %v7055, 5
    %v8161 = vsel %vm2537, %v8159, %v8160
    %v8162 = vrot.slane %v8160, 4
    %v8163 = vrot.slane %v7126, 5
    %v8164 = vsel %vm2537, %v8162, %v8163
    %v8165 = vrot.slane %v8027, 5
    %v8166 = vrot.slane %v8165, 4
    %v8167 = vrot.slane %v7057, 5
    %v8168 = vsel %vm2537, %v8166, %v8167
    %v8169 = vrot.slane %v8167, 4
    %v8170 = vrot.slane %v7127, 5
    %v8171 = vsel %vm2537, %v8169, %v8170
    %v8172 = vrot.slane %v8028, 5
    %v8173 = vrot.slane %v8172, 4
    %v8174 = vrot.slane %v7059, 5
    %v8175 = vsel %vm2537, %v8173, %v8174
    %v8176 = vrot.slane %v8174, 4
    %v8177 = vrot.slane %v7128, 5
    %v8178 = vsel %vm2537, %v8176, %v8177
    %v8179 = vrot.slane %v8029, 5
    %v8180 = vrot.slane %v8179, 4
    %v8181 = vrot.slane %v7061, 5
    %v8182 = vsel %vm2537, %v8180, %v8181
    %v8183 = vrot.slane %v8181, 4
    %v8184 = vrot.slane %v7129, 5
    %v8185 = vsel %vm2537, %v8183, %v8184
    %v8186 = vrot.slane %v8030, 5
    %v8187 = vrot.slane %v8186, 4
    %v8188 = vrot.slane %v7063, 5
    %v8189 = vsel %vm2537, %v8187, %v8188
    %v8190 = vrot.slane %v8188, 4
    %v8191 = vrot.slane %v7130, 5
    %v8192 = vsel %vm2537, %v8190, %v8191
    %v8193 = vrot.slane %v8031, 5
    %v8194 = vrot.slane %v8193, 4
    %v8195 = vrot.slane %v7065, 5
    %v8196 = vsel %vm2537, %v8194, %v8195
    %v8197 = vrot.slane %v8195, 4
    %v8198 = vrot.slane %v7131, 5
    %v8199 = vsel %vm2537, %v8197, %v8198
    %v8200 = vrot.slane %v8032, 5
    %v8201 = vrot.slane %v8200, 4
    %v8202 = vrot.slane %v7067, 5
    %v8203 = vsel %vm2537, %v8201, %v8202
    %v8204 = vrot.slane %v8202, 4
    %v8205 = vrot.slane %v7132, 5
    %v8206 = vsel %vm2537, %v8204, %v8205
    %v8207 = vrot.slane %v8033, 5
    %v8208 = vrot.slane %v8207, 4
    %v8209 = vrot.slane %v7069, 5
    %v8210 = vsel %vm2537, %v8208, %v8209
    %v8211 = vrot.slane %v8209, 4
    %v8212 = vrot.slane %v7133, 5
    %v8213 = vsel %vm2537, %v8211, %v8212
    %v8214 = vrot.slane %v8034, 5
    %v8215 = vrot.slane %v8214, 4
    %v8216 = vrot.slane %v7071, 5
    %v8217 = vsel %vm2537, %v8215, %v8216
    %v8218 = vrot.slane %v8216, 4
    %v8219 = vrot.slane %v7134, 5
    %v8220 = vsel %vm2537, %v8218, %v8219
    %v8221 = vrot.slane %v8035, 5
    %v8222 = vrot.slane %v8221, 4
    %v8223 = vrot.slane %v7073, 5
    %v8224 = vsel %vm2537, %v8222, %v8223
    %v8225 = vrot.slane %v8223, 4
    %v8226 = vrot.slane %v7135, 5
    %v8227 = vsel %vm2537, %v8225, %v8226
    %v8228 = vrot.slane %v8036, 5
    %v8229 = vrot.slane %v8228, 4
    %v8230 = vrot.slane %v7075, 5
    %v8231 = vsel %vm2537, %v8229, %v8230
    %v8232 = vrot.slane %v8230, 4
    %v8233 = vrot.slane %v7136, 5
    %v8234 = vsel %vm2537, %v8232, %v8233
    %v8235 = vrot.slane %v8037, 5
    %v8236 = vrot.slane %v8235, 4
    %v8237 = vrot.slane %v7077, 5
    %v8238 = vsel %vm2537, %v8236, %v8237
    %v8239 = vrot.slane %v8237, 4
    %v8240 = vrot.slane %v7137, 5
    %v8241 = vsel %vm2537, %v8239, %v8240
    %v8242 = vrot.slane %v8038, 5
    %v8243 = vrot.slane %v8242, 4
    %v8244 = vrot.slane %v7079, 5
    %v8245 = vsel %vm2537, %v8243, %v8244
    %v8246 = vrot.slane %v8244, 4
    %v8247 = vrot.slane %v7138, 5
    %v8248 = vsel %vm2537, %v8246, %v8247
    %v8249 = vrot.slane %v8039, 5
    %v8250 = vrot.slane %v8249, 4
    %v8251 = vrot.slane %v7081, 5
    %v8252 = vsel %vm2537, %v8250, %v8251
    %v8253 = vrot.slane %v8251, 4
    %v8254 = vrot.slane %v7139, 5
    %v8255 = vsel %vm2537, %v8253, %v8254
    %v8256 = vrot.slane %v8040, 5
    %v8257 = vrot.slane %v8256, 4
    %v8258 = vrot.slane %v7083, 5
    %v8259 = vsel %vm2537, %v8257, %v8258
    %v8260 = vrot.slane %v8258, 4
    %v8261 = vrot.slane %v7140, 5
    %v8262 = vsel %vm2537, %v8260, %v8261
    %v8263 = vrot.slane %v8041, 5
    %v8264 = vrot.slane %v8263, 4
    %v8265 = vrot.slane %v7085, 5
    %v8266 = vsel %vm2537, %v8264, %v8265
    %v8267 = vrot.slane %v8265, 4
    %v8268 = vrot.slane %v7141, 5
    %v8269 = vsel %vm2537, %v8267, %v8268
    %v8270 = vrot.slane %v8044, 5
    %v8271 = vrot.slane %v8270, 4
    %v8272 = vrot.slane %v7091, 5
    %v8273 = vsel %vm2537, %v8271, %v8272
    %v8274 = vrot.slane %v8272, 4
    %v8275 = vrot.slane %v7144, 5
    %v8276 = vsel %vm2537, %v8274, %v8275
    %v8277 = vrot.slane %v8045, 5
    %v8278 = vrot.slane %v8277, 4
    %v8279 = vrot.slane %v7093, 5
    %v8280 = vsel %vm2537, %v8278, %v8279
    %v8281 = vrot.slane %v8279, 4
    %v8282 = vrot.slane %v7145, 5
    %v8283 = vsel %vm2537, %v8281, %v8282
    %v8284 = vrot.slane %v8046, 5
    %v8285 = vrot.slane %v8284, 4
    %v8286 = vrot.slane %v7095, 5
    %v8287 = vsel %vm2537, %v8285, %v8286
    %v8288 = vrot.slane %v8286, 4
    %v8289 = vrot.slane %v7146, 5
    %v8290 = vsel %vm2537, %v8288, %v8289
    %v8291 = vrot.slane %v8047, 5
    %v8292 = vrot.slane %v8291, 4
    %v8293 = vrot.slane %v7097, 5
    %v8294 = vsel %vm2537, %v8292, %v8293
    %v8295 = vrot.slane %v8293, 4
    %v8296 = vrot.slane %v7147, 5
    %v8297 = vsel %vm2537, %v8295, %v8296
    %v8298 = vrot.slane %v8048, 5
    %v8299 = vrot.slane %v8298, 4
    %v8300 = vrot.slane %v7099, 5
    %v8301 = vsel %vm2537, %v8299, %v8300
    %v8302 = vrot.slane %v8300, 4
    %v8303 = vrot.slane %v7148, 5
    %v8304 = vsel %vm2537, %v8302, %v8303
    %v8305 = vrot.slane %v8049, 5
    %v8306 = vrot.slane %v8305, 4
    %v8307 = vrot.slane %v7101, 5
    %v8308 = vsel %vm2537, %v8306, %v8307
    %v8309 = vrot.slane %v8307, 4
    %v8310 = vrot.slane %v7149, 5
    %v8311 = vsel %vm2537, %v8309, %v8310
    %v8312 = vrot.slane %v8050, 5
    %v8313 = vrot.slane %v8312, 4
    %v8314 = vrot.slane %v7103, 5
    %v8315 = vsel %vm2537, %v8313, %v8314
    %v8316 = vrot.slane %v8314, 4
    %v8317 = vrot.slane %v7150, 5
    %v8318 = vsel %vm2537, %v8316, %v8317
    %v8319 = vrot.slane %v8051, 5
    %v8320 = vrot.slane %v8319, 4
    %v8321 = vrot.slane %v7105, 5
    %v8322 = vsel %vm2537, %v8320, %v8321
    %v8323 = vrot.slane %v8321, 4
    %v8324 = vrot.slane %v7151, 5
    %v8325 = vsel %vm2537, %v8323, %v8324
    %v8326 = vrot.slane %v8052, 5
    %v8327 = vrot.slane %v8326, 4
    %v8328 = vrot.slane %v7107, 5
    %v8329 = vsel %vm2537, %v8327, %v8328
    %v8330 = vrot.slane %v8328, 4
    %v8331 = vrot.slane %v7152, 5
    %v8332 = vsel %vm2537, %v8330, %v8331
    %v8333 = vrot.slane %v8053, 5
    %v8334 = vrot.slane %v8333, 4
    %v8335 = vrot.slane %v7109, 5
    %v8336 = vsel %vm2537, %v8334, %v8335
    %v8337 = vrot.slane %v8335, 4
    %v8338 = vrot.slane %v7153, 5
    %v8339 = vsel %vm2537, %v8337, %v8338
    %v8340 = vrot.slane %v8054, 5
    %v8341 = vrot.slane %v8340, 4
    %v8342 = vrot.slane %v7111, 5
    %v8343 = vsel %vm2537, %v8341, %v8342
    %v8344 = vrot.slane %v8342, 4
    %v8345 = vrot.slane %v7154, 5
    %v8346 = vsel %vm2537, %v8344, %v8345
    %v8347 = vrot.slane %v8055, 5
    %v8348 = vrot.slane %v8347, 4
    %v8349 = vrot.slane %v7113, 5
    %v8350 = vsel %vm2537, %v8348, %v8349
    %v8351 = vrot.slane %v8349, 4
    %v8352 = vrot.slane %v7155, 5
    %v8353 = vsel %vm2537, %v8351, %v8352
    %v8354 = vrot.slane %v8056, 5
    %v8355 = vrot.slane %v8354, 4
    %v8356 = vrot.slane %v7115, 5
    %v8357 = vsel %vm2537, %v8355, %v8356
    %v8358 = vrot.slane %v8356, 4
    %v8359 = vrot.slane %v7156, 5
    %v8360 = vsel %vm2537, %v8358, %v8359
    %v8361 = vrot.slane %v8057, 5
    %v8362 = vrot.slane %v8361, 4
    %v8363 = vrot.slane %v7117, 5
    %v8364 = vsel %vm2537, %v8362, %v8363
    %v8365 = vrot.slane %v8363, 4
    %v8366 = vrot.slane %v7157, 5
    %v8367 = vsel %vm2537, %v8365, %v8366
    %v8368 = vrot.slane %v8058, 5
    %v8369 = vrot.slane %v8368, 4
    %v8370 = vrot.slane %v7119, 5
    %v8371 = vsel %vm2537, %v8369, %v8370
    %v8372 = vrot.slane %v8370, 4
    %v8373 = vrot.slane %v7158, 5
    %v8374 = vsel %vm2537, %v8372, %v8373
    %v8375 = vrot.slane %v8059, 5
    %v8376 = vrot.slane %v8375, 4
    %v8377 = vrot.slane %v7121, 5
    %v8378 = vsel %vm2537, %v8376, %v8377
    %v8379 = vrot.slane %v8377, 4
    %v8380 = vrot.slane %v7159, 5
    %v8381 = vsel %vm2537, %v8379, %v8380
    %v8388 = vrot.slane %v8042, 5
    %v8389 = vrot.slane %v8388, 4
    %v8390 = vrot.slane %v7087, 5
    %v8391 = vsel %vm2537, %v8389, %v8390
    %v8392 = vrot.slane %v8390, 4
    %v8393 = vrot.slane %v7142, 5
    %v8394 = vsel %vm2537, %v8392, %v8393
    %v8395 = vrot.slane %v8060, 5
    %v8396 = vrot.slane %v8395, 4
    %v8397 = vrot.slane %v7123, 5
    %v8398 = vsel %vm2537, %v8396, %v8397
    %v8399 = vrot.slane %v8397, 4
    %v8400 = vrot.slane %v7160, 5
    %v8401 = vsel %vm2537, %v8399, %v8400
    %v8408 = vrot.slane %v8043, 5
    %v8409 = vrot.slane %v8408, 4
    %v8410 = vrot.slane %v7089, 5
    %v8411 = vsel %vm2537, %v8409, %v8410
    %v8412 = vrot.slane %v8410, 4
    %v8413 = vrot.slane %v7143, 5
    %v8414 = vsel %vm2537, %v8412, %v8413
    %v8415 = vrot.slane %v8061, 5
    %v8416 = vrot.slane %v8415, 4
    %v8417 = vrot.slane %v7125, 5
    %v8418 = vsel %vm2537, %v8416, %v8417
    %v8419 = vrot.slane %v8417, 4
    %v8420 = vrot.slane %v7161, 5
    %v8421 = vsel %vm2537, %v8419, %v8420
    %v8454 = vunpack.c.l.b16 %v7054
    %v8455 = vunpack.c.l.b16 %v7055
    %v8456 = vunpack.c.l.b16 %v7056
    %v8457 = vunpack.c.l.b16 %v7057
    %v8458 = vunpack.c.l.b16 %v7058
    %v8459 = vunpack.c.l.b16 %v7059
    %v8460 = vunpack.c.l.b16 %v7060
    %v8461 = vunpack.c.l.b16 %v7061
    %v8462 = vunpack.c.l.b16 %v7062
    %v8463 = vunpack.c.l.b16 %v7063
    %v8464 = vunpack.c.l.b16 %v7064
    %v8465 = vunpack.c.l.b16 %v7065
    %v8466 = vunpack.c.l.b16 %v7066
    %v8467 = vunpack.c.l.b16 %v7067
    %v8468 = vunpack.c.l.b16 %v7068
    %v8469 = vunpack.c.l.b16 %v7069
    %v8470 = vunpack.c.l.b16 %v7070
    %v8471 = vunpack.c.l.b16 %v7071
    %v8472 = vunpack.c.l.b16 %v7072
    %v8473 = vunpack.c.l.b16 %v7073
    %v8474 = vunpack.c.l.b16 %v7074
    %v8475 = vunpack.c.l.b16 %v7075
    %v8476 = vunpack.c.l.b16 %v7076
    %v8477 = vunpack.c.l.b16 %v7077
    %v8478 = vunpack.c.l.b16 %v7078
    %v8479 = vunpack.c.l.b16 %v7079
    %v8480 = vunpack.c.l.b16 %v7080
    %v8481 = vunpack.c.l.b16 %v7081
    %v8482 = vunpack.c.l.b16 %v7082
    %v8483 = vunpack.c.l.b16 %v7083
    %v8484 = vunpack.c.l.b16 %v7084
    %v8485 = vunpack.c.l.b16 %v7085
    %v8486 = vunpack.c.l.b16 %v7090
    %v8487 = vunpack.c.l.b16 %v7091
    %v8488 = vunpack.c.l.b16 %v7092
    %v8489 = vunpack.c.l.b16 %v7093
    %v8490 = vunpack.c.l.b16 %v7094
    %v8491 = vunpack.c.l.b16 %v7095
    %v8492 = vunpack.c.l.b16 %v7096
    %v8493 = vunpack.c.l.b16 %v7097
    %v8494 = vunpack.c.l.b16 %v7098
    %v8495 = vunpack.c.l.b16 %v7099
    %v8496 = vunpack.c.l.b16 %v7100
    %v8497 = vunpack.c.l.b16 %v7101
    %v8498 = vunpack.c.l.b16 %v7102
    %v8499 = vunpack.c.l.b16 %v7103
    %v8500 = vunpack.c.l.b16 %v7104
    %v8501 = vunpack.c.l.b16 %v7105
    %v8502 = vunpack.c.l.b16 %v7106
    %v8503 = vunpack.c.l.b16 %v7107
    %v8504 = vunpack.c.l.b16 %v7108
    %v8505 = vunpack.c.l.b16 %v7109
    %v8506 = vunpack.c.l.b16 %v7110
    %v8507 = vunpack.c.l.b16 %v7111
    %v8508 = vunpack.c.l.b16 %v7112
    %v8509 = vunpack.c.l.b16 %v7113
    %v8510 = vunpack.c.l.b16 %v7114
    %v8511 = vunpack.c.l.b16 %v7115
    %v8512 = vunpack.c.l.b16 %v7116
    %v8513 = vunpack.c.l.b16 %v7117
    %v8514 = vunpack.c.l.b16 %v7118
    %v8515 = vunpack.c.l.b16 %v7119
    %v8516 = vunpack.c.l.b16 %v7120
    %v8517 = vunpack.c.l.b16 %v7121
    %v8518 = vpack.c.b16 %v8455, %v8454
    %v8519 = vpack.c.b16 %v8457, %v8456
    %v8520 = vpack.c.b16 %v8459, %v8458
    %v8521 = vpack.c.b16 %v8461, %v8460
    %v8522 = vpack.c.b16 %v8463, %v8462
    %v8523 = vpack.c.b16 %v8465, %v8464
    %v8524 = vpack.c.b16 %v8467, %v8466
    %v8525 = vpack.c.b16 %v8469, %v8468
    %v8526 = vpack.c.b16 %v8471, %v8470
    %v8527 = vpack.c.b16 %v8473, %v8472
    %v8528 = vpack.c.b16 %v8475, %v8474
    %v8529 = vpack.c.b16 %v8477, %v8476
    %v8530 = vpack.c.b16 %v8479, %v8478
    %v8531 = vpack.c.b16 %v8481, %v8480
    %v8532 = vpack.c.b16 %v8483, %v8482
    %v8533 = vpack.c.b16 %v8485, %v8484
    %v8534 = vpack.c.b16 %v8487, %v8486
    %v8535 = vpack.c.b16 %v8489, %v8488
    %v8536 = vpack.c.b16 %v8491, %v8490
    %v8537 = vpack.c.b16 %v8493, %v8492
    %v8538 = vpack.c.b16 %v8495, %v8494
    %v8539 = vpack.c.b16 %v8497, %v8496
    %v8540 = vpack.c.b16 %v8499, %v8498
    %v8541 = vpack.c.b16 %v8501, %v8500
    %v8542 = vpack.c.b16 %v8503, %v8502
    %v8543 = vpack.c.b16 %v8505, %v8504
    %v8544 = vpack.c.b16 %v8507, %v8506
    %v8545 = vpack.c.b16 %v8509, %v8508
    %v8546 = vpack.c.b16 %v8511, %v8510
    %v8547 = vpack.c.b16 %v8513, %v8512
    %v8548 = vpack.c.b16 %v8515, %v8514
    %v8549 = vpack.c.b16 %v8517, %v8516
    %v8582 = vunpack.c.l.b16 %v7175
    %v8583 = vunpack.c.l.b16 %v7185
    %v8584 = vunpack.c.l.b16 %v7199
    %v8585 = vunpack.c.l.b16 %v7209
    %v8586 = vunpack.c.l.b16 %v7223
    %v8587 = vunpack.c.l.b16 %v7233
    %v8588 = vunpack.c.l.b16 %v7247
    %v8589 = vunpack.c.l.b16 %v7257
    %v8590 = vunpack.c.l.b16 %v7271
    %v8591 = vunpack.c.l.b16 %v7281
    %v8592 = vunpack.c.l.b16 %v7295
    %v8593 = vunpack.c.l.b16 %v7305
    %v8594 = vunpack.c.l.b16 %v7319
    %v8595 = vunpack.c.l.b16 %v7329
    %v8596 = vunpack.c.l.b16 %v7343
    %v8597 = vunpack.c.l.b16 %v7353
    %v8598 = vunpack.c.l.b16 %v7367
    %v8599 = vunpack.c.l.b16 %v7377
    %v8600 = vunpack.c.l.b16 %v7391
    %v8601 = vunpack.c.l.b16 %v7401
    %v8602 = vunpack.c.l.b16 %v7415
    %v8603 = vunpack.c.l.b16 %v7425
    %v8604 = vunpack.c.l.b16 %v7439
    %v8605 = vunpack.c.l.b16 %v7449
    %v8606 = vunpack.c.l.b16 %v7463
    %v8607 = vunpack.c.l.b16 %v7473
    %v8608 = vunpack.c.l.b16 %v7487
    %v8609 = vunpack.c.l.b16 %v7497
    %v8610 = vunpack.c.l.b16 %v7511
    %v8611 = vunpack.c.l.b16 %v7521
    %v8612 = vunpack.c.l.b16 %v7535
    %v8613 = vunpack.c.l.b16 %v7545
    %v8614 = vunpack.c.l.b16 %v7559
    %v8615 = vunpack.c.l.b16 %v7569
    %v8616 = vunpack.c.l.b16 %v7583
    %v8617 = vunpack.c.l.b16 %v7593
    %v8618 = vunpack.c.l.b16 %v7607
    %v8619 = vunpack.c.l.b16 %v7617
    %v8620 = vunpack.c.l.b16 %v7631
    %v8621 = vunpack.c.l.b16 %v7641
    %v8622 = vunpack.c.l.b16 %v7655
    %v8623 = vunpack.c.l.b16 %v7665
    %v8624 = vunpack.c.l.b16 %v7679
    %v8625 = vunpack.c.l.b16 %v7689
    %v8626 = vunpack.c.l.b16 %v7703
    %v8627 = vunpack.c.l.b16 %v7713
    %v8628 = vunpack.c.l.b16 %v7727
    %v8629 = vunpack.c.l.b16 %v7737
    %v8630 = vunpack.c.l.b16 %v7751
    %v8631 = vunpack.c.l.b16 %v7761
    %v8632 = vunpack.c.l.b16 %v7775
    %v8633 = vunpack.c.l.b16 %v7785
    %v8634 = vunpack.c.l.b16 %v7799
    %v8635 = vunpack.c.l.b16 %v7809
    %v8636 = vunpack.c.l.b16 %v7823
    %v8637 = vunpack.c.l.b16 %v7833
    %v8638 = vunpack.c.l.b16 %v7847
    %v8639 = vunpack.c.l.b16 %v7857
    %v8640 = vunpack.c.l.b16 %v7871
    %v8641 = vunpack.c.l.b16 %v7881
    %v8642 = vunpack.c.l.b16 %v7895
    %v8643 = vunpack.c.l.b16 %v7905
    %v8644 = vunpack.c.l.b16 %v7919
    %v8645 = vunpack.c.l.b16 %v7929
    %v8646 = vpack.c.b16 %v8583, %v8582
    %v8647 = vpack.c.b16 %v8585, %v8584
    %v8648 = vpack.c.b16 %v8587, %v8586
    %v8649 = vpack.c.b16 %v8589, %v8588
    %v8650 = vpack.c.b16 %v8591, %v8590
    %v8651 = vpack.c.b16 %v8593, %v8592
    %v8652 = vpack.c.b16 %v8595, %v8594
    %v8653 = vpack.c.b16 %v8597, %v8596
    %v8654 = vpack.c.b16 %v8599, %v8598
    %v8655 = vpack.c.b16 %v8601, %v8600
    %v8656 = vpack.c.b16 %v8603, %v8602
    %v8657 = vpack.c.b16 %v8605, %v8604
    %v8658 = vpack.c.b16 %v8607, %v8606
    %v8659 = vpack.c.b16 %v8609, %v8608
    %v8660 = vpack.c.b16 %v8611, %v8610
    %v8661 = vpack.c.b16 %v8613, %v8612
    %v8662 = vpack.c.b16 %v8615, %v8614
    %v8663 = vpack.c.b16 %v8617, %v8616
    %v8664 = vpack.c.b16 %v8619, %v8618
    %v8665 = vpack.c.b16 %v8621, %v8620
    %v8666 = vpack.c.b16 %v8623, %v8622
    %v8667 = vpack.c.b16 %v8625, %v8624
    %v8668 = vpack.c.b16 %v8627, %v8626
    %v8669 = vpack.c.b16 %v8629, %v8628
    %v8670 = vpack.c.b16 %v8631, %v8630
    %v8671 = vpack.c.b16 %v8633, %v8632
    %v8672 = vpack.c.b16 %v8635, %v8634
    %v8673 = vpack.c.b16 %v8637, %v8636
    %v8674 = vpack.c.b16 %v8639, %v8638
    %v8675 = vpack.c.b16 %v8641, %v8640
    %v8676 = vpack.c.b16 %v8643, %v8642
    %v8677 = vpack.c.b16 %v8645, %v8644
    %v8710 = vunpack.c.l.b16 %v8161
    %v8711 = vunpack.c.l.b16 %v8164
    %v8712 = vunpack.c.l.b16 %v8168
    %v8713 = vunpack.c.l.b16 %v8171
    %v8714 = vunpack.c.l.b16 %v8175
    %v8715 = vunpack.c.l.b16 %v8178
    %v8716 = vunpack.c.l.b16 %v8182
    %v8717 = vunpack.c.l.b16 %v8185
    %v8718 = vunpack.c.l.b16 %v8189
    %v8719 = vunpack.c.l.b16 %v8192
    %v8720 = vunpack.c.l.b16 %v8196
    %v8721 = vunpack.c.l.b16 %v8199
    %v8722 = vunpack.c.l.b16 %v8203
    %v8723 = vunpack.c.l.b16 %v8206
    %v8724 = vunpack.c.l.b16 %v8210
    %v8725 = vunpack.c.l.b16 %v8213
    %v8726 = vunpack.c.l.b16 %v8217
    %v8727 = vunpack.c.l.b16 %v8220
    %v8728 = vunpack.c.l.b16 %v8224
    %v8729 = vunpack.c.l.b16 %v8227
    %v8730 = vunpack.c.l.b16 %v8231
    %v8731 = vunpack.c.l.b16 %v8234
    %v8732 = vunpack.c.l.b16 %v8238
    %v8733 = vunpack.c.l.b16 %v8241
    %v8734 = vunpack.c.l.b16 %v8245
    %v8735 = vunpack.c.l.b16 %v8248
    %v8736 = vunpack.c.l.b16 %v8252
    %v8737 = vunpack.c.l.b16 %v8255
    %v8738 = vunpack.c.l.b16 %v8259
    %v8739 = vunpack.c.l.b16 %v8262
    %v8740 = vunpack.c.l.b16 %v8266
    %v8741 = vunpack.c.l.b16 %v8269
    %v8742 = vunpack.c.l.b16 %v8273
    %v8743 = vunpack.c.l.b16 %v8276
    %v8744 = vunpack.c.l.b16 %v8280
    %v8745 = vunpack.c.l.b16 %v8283
    %v8746 = vunpack.c.l.b16 %v8287
    %v8747 = vunpack.c.l.b16 %v8290
    %v8748 = vunpack.c.l.b16 %v8294
    %v8749 = vunpack.c.l.b16 %v8297
    %v8750 = vunpack.c.l.b16 %v8301
    %v8751 = vunpack.c.l.b16 %v8304
    %v8752 = vunpack.c.l.b16 %v8308
    %v8753 = vunpack.c.l.b16 %v8311
    %v8754 = vunpack.c.l.b16 %v8315
    %v8755 = vunpack.c.l.b16 %v8318
    %v8756 = vunpack.c.l.b16 %v8322
    %v8757 = vunpack.c.l.b16 %v8325
    %v8758 = vunpack.c.l.b16 %v8329
    %v8759 = vunpack.c.l.b16 %v8332
    %v8760 = vunpack.c.l.b16 %v8336
    %v8761 = vunpack.c.l.b16 %v8339
    %v8762 = vunpack.c.l.b16 %v8343
    %v8763 = vunpack.c.l.b16 %v8346
    %v8764 = vunpack.c.l.b16 %v8350
    %v8765 = vunpack.c.l.b16 %v8353
    %v8766 = vunpack.c.l.b16 %v8357
    %v8767 = vunpack.c.l.b16 %v8360
    %v8768 = vunpack.c.l.b16 %v8364
    %v8769 = vunpack.c.l.b16 %v8367
    %v8770 = vunpack.c.l.b16 %v8371
    %v8771 = vunpack.c.l.b16 %v8374
    %v8772 = vunpack.c.l.b16 %v8378
    %v8773 = vunpack.c.l.b16 %v8381
    %v8774 = vpack.c.b16 %v8711, %v8710
    %v8775 = vpack.c.b16 %v8713, %v8712
    %v8776 = vpack.c.b16 %v8715, %v8714
    %v8777 = vpack.c.b16 %v8717, %v8716
    %v8778 = vpack.c.b16 %v8719, %v8718
    %v8779 = vpack.c.b16 %v8721, %v8720
    %v8780 = vpack.c.b16 %v8723, %v8722
    %v8781 = vpack.c.b16 %v8725, %v8724
    %v8782 = vpack.c.b16 %v8727, %v8726
    %v8783 = vpack.c.b16 %v8729, %v8728
    %v8784 = vpack.c.b16 %v8731, %v8730
    %v8785 = vpack.c.b16 %v8733, %v8732
    %v8786 = vpack.c.b16 %v8735, %v8734
    %v8787 = vpack.c.b16 %v8737, %v8736
    %v8788 = vpack.c.b16 %v8739, %v8738
    %v8789 = vpack.c.b16 %v8741, %v8740
    %v8790 = vpack.c.b16 %v8743, %v8742
    %v8791 = vpack.c.b16 %v8745, %v8744
    %v8792 = vpack.c.b16 %v8747, %v8746
    %v8793 = vpack.c.b16 %v8749, %v8748
    %v8794 = vpack.c.b16 %v8751, %v8750
    %v8795 = vpack.c.b16 %v8753, %v8752
    %v8796 = vpack.c.b16 %v8755, %v8754
    %v8797 = vpack.c.b16 %v8757, %v8756
    %v8798 = vpack.c.b16 %v8759, %v8758
    %v8799 = vpack.c.b16 %v8761, %v8760
    %v8800 = vpack.c.b16 %v8763, %v8762
    %v8801 = vpack.c.b16 %v8765, %v8764
    %v8802 = vpack.c.b16 %v8767, %v8766
    %v8803 = vpack.c.b16 %v8769, %v8768
    %v8804 = vpack.c.b16 %v8771, %v8770
    %v8805 = vpack.c.b16 %v8773, %v8772
    %v8840 = vunpack.c.l.b16 %v7086
    %v8841 = vunpack.c.l.b16 %v7087
    %v8842 = vunpack.c.l.b16 %v7122
    %v8843 = vunpack.c.l.b16 %v7123
    %v8844 = vpack.c.b16 %v8841, %v8840
    %v8845 = vpack.c.b16 %v8843, %v8842
    %v8848 = vunpack.c.l.b16 %v7943
    %v8849 = vunpack.c.l.b16 %v7953
    %v8850 = vunpack.c.l.b16 %v7967
    %v8851 = vunpack.c.l.b16 %v7977
    %v8852 = vpack.c.b16 %v8849, %v8848
    %v8853 = vpack.c.b16 %v8851, %v8850
    %v8856 = vunpack.c.l.b16 %v8391
    %v8857 = vunpack.c.l.b16 %v8394
    %v8858 = vunpack.c.l.b16 %v8398
    %v8859 = vunpack.c.l.b16 %v8401
    %v8860 = vpack.c.b16 %v8857, %v8856
    %v8861 = vpack.c.b16 %v8859, %v8858
    %v8866 = vunpack.c.l.b16 %v7088
    %v8867 = vunpack.c.l.b16 %v7089
    %v8868 = vunpack.c.l.b16 %v7124
    %v8869 = vunpack.c.l.b16 %v7125
    %v8870 = vpack.c.b16 %v8867, %v8866
    %v8871 = vpack.c.b16 %v8869, %v8868
    %v8874 = vunpack.c.l.b16 %v7991
    %v8875 = vunpack.c.l.b16 %v8001
    %v8876 = vunpack.c.l.b16 %v8015
    %v8877 = vunpack.c.l.b16 %v8025
    %v8878 = vpack.c.b16 %v8875, %v8874
    %v8879 = vpack.c.b16 %v8877, %v8876
    %v8882 = vunpack.c.l.b16 %v8411
    %v8883 = vunpack.c.l.b16 %v8414
    %v8884 = vunpack.c.l.b16 %v8418
    %v8885 = vunpack.c.l.b16 %v8421
    %v8886 = vpack.c.b16 %v8883, %v8882
    %v8887 = vpack.c.b16 %v8885, %v8884
    %v8890 = vld [vmem:[#allocation9] sm:$0xf]
    %v8891 = vld [vmem:[#allocation9 + $0x4] sm:$0xf]
    %v8892 = vld [vmem:[#allocation9 + $0x8] sm:$0xf]
    %v8893 = vld [vmem:[#allocation9 + $0xc] sm:$0xf]
    %v8894 = vld [vmem:[#allocation9 + $0x10] sm:$0xf]
    %v8895 = vld [vmem:[#allocation9 + $0x14] sm:$0xf]
    %v8896 = vld [vmem:[#allocation9 + $0x18] sm:$0xf]
    %v8897 = vld [vmem:[#allocation9 + $0x1c] sm:$0xf]
    %v8898 = vld [vmem:[#allocation9 + $0x20] sm:$0xf]
    %v8899 = vld [vmem:[#allocation9 + $0x24] sm:$0xf]
    %v8900 = vld [vmem:[#allocation9 + $0x28] sm:$0xf]
    %v8901 = vld [vmem:[#allocation9 + $0x2c] sm:$0xf]
    %v8902 = vld [vmem:[#allocation9 + $0x30] sm:$0xf]
    %v8903 = vld [vmem:[#allocation9 + $0x34] sm:$0xf]
    %v8904 = vld [vmem:[#allocation9 + $0x38] sm:$0xf]
    %v8905 = vld [vmem:[#allocation9 + $0x3c] sm:$0xf]
    %v8906 = vld [vmem:[#allocation9 + $0x40] sm:$0xf]
    %v8907 = vld [vmem:[#allocation9 + $0x44] sm:$0xf]
    %v8908 = vld [vmem:[#allocation9 + $0x48] sm:$0xf]
    %v8909 = vld [vmem:[#allocation9 + $0x4c] sm:$0xf]
    %v8910 = vld [vmem:[#allocation9 + $0x50] sm:$0xf]
    %v8911 = vld [vmem:[#allocation9 + $0x54] sm:$0xf]
    %v8912 = vld [vmem:[#allocation9 + $0x58] sm:$0xf]
    %v8913 = vld [vmem:[#allocation9 + $0x5c] sm:$0xf]
    %v8914 = vld [vmem:[#allocation9 + $0x60] sm:$0xf]
    %v8915 = vld [vmem:[#allocation9 + $0x64] sm:$0xf]
    %v8916 = vld [vmem:[#allocation9 + $0x68] sm:$0xf]
    %v8917 = vld [vmem:[#allocation9 + $0x6c] sm:$0xf]
    %v8918 = vld [vmem:[#allocation9 + $0x70] sm:$0xf]
    %v8919 = vld [vmem:[#allocation9 + $0x74] sm:$0xf]
    %v8920 = vld [vmem:[#allocation9 + $0x78] sm:$0xf]
    %v8921 = vld [vmem:[#allocation9 + $0x7c] sm:$0xf]
    %v8922 = vld [vmem:[#allocation9 + $0x80] sm:$0xf]
    %v8923 = vld [vmem:[#allocation9 + $0x84] sm:$0xf]
    %v8924 = vld [vmem:[#allocation9 + $0x88] sm:$0xf]
    %v8925 = vld [vmem:[#allocation9 + $0x8c] sm:$0xf]
    %v8926 = vld [vmem:[#allocation9 + $0x90] sm:$0xf]
    %v8927 = vld [vmem:[#allocation9 + $0x94] sm:$0xf]
    %v8928 = vld [vmem:[#allocation9 + $0x98] sm:$0xf]
    %v8929 = vld [vmem:[#allocation9 + $0x9c] sm:$0xf]
    %v8930 = vld [vmem:[#allocation9 + $0xa0] sm:$0xf]
    %v8931 = vld [vmem:[#allocation9 + $0xa4] sm:$0xf]
    %v8932 = vld [vmem:[#allocation9 + $0xa8] sm:$0xf]
    %v8933 = vld [vmem:[#allocation9 + $0xac] sm:$0xf]
    %v8934 = vld [vmem:[#allocation9 + $0xb0] sm:$0xf]
    %v8935 = vld [vmem:[#allocation9 + $0xb4] sm:$0xf]
    %v8936 = vld [vmem:[#allocation9 + $0xb8] sm:$0xf]
    %v8937 = vld [vmem:[#allocation9 + $0xbc] sm:$0xf]
    %v8938 = vld [vmem:[#allocation9 + $0xc0] sm:$0xf]
    %v8939 = vld [vmem:[#allocation9 + $0xc4] sm:$0xf]
    %v8940 = vld [vmem:[#allocation9 + $0xc8] sm:$0xf]
    %v8941 = vld [vmem:[#allocation9 + $0xcc] sm:$0xf]
    %v8942 = vld [vmem:[#allocation9 + $0xd0] sm:$0xf]
    %v8943 = vld [vmem:[#allocation9 + $0xd4] sm:$0xf]
    %v8944 = vld [vmem:[#allocation9 + $0xd8] sm:$0xf]
    %v8945 = vld [vmem:[#allocation9 + $0xdc] sm:$0xf]
    %v8946 = vld [vmem:[#allocation9 + $0xe0] sm:$0xf]
    %v8947 = vld [vmem:[#allocation9 + $0xe4] sm:$0xf]
    %v8948 = vld [vmem:[#allocation9 + $0xe8] sm:$0xf]
    %v8949 = vld [vmem:[#allocation9 + $0xec] sm:$0xf]
    %v8950 = vld [vmem:[#allocation9 + $0xf0] sm:$0xf]
    %v8951 = vld [vmem:[#allocation9 + $0xf4] sm:$0xf]
    %v8952 = vld [vmem:[#allocation9 + $0xf8] sm:$0xf]
    %v8953 = vld [vmem:[#allocation9 + $0xfc] sm:$0xf]
    %v8954 = vld [vmem:[#allocation9 + $0x100] sm:$0xf]
    %v8955 = vld [vmem:[#allocation9 + $0x104] sm:$0xf]
    %v8956 = vld [vmem:[#allocation9 + $0x108] sm:$0xf]
    %v8957 = vld [vmem:[#allocation9 + $0x10c] sm:$0xf]
    %v8958 = vld [vmem:[#allocation9 + $0x110] sm:$0xf]
    %v8959 = vld [vmem:[#allocation9 + $0x114] sm:$0xf]
    %v8960 = vld [vmem:[#allocation9 + $0x118] sm:$0xf]
    %v8961 = vld [vmem:[#allocation9 + $0x11c] sm:$0xf]
    %v8962 = vld [vmem:[#allocation9 + $0x120] sm:$0xf]
    %v8963 = vld [vmem:[#allocation9 + $0x124] sm:$0xf]
    %v8964 = vld [vmem:[#allocation9 + $0x128] sm:$0xf]
    %v8965 = vld [vmem:[#allocation9 + $0x12c] sm:$0xf]
    %v8966 = vld [vmem:[#allocation9 + $0x130] sm:$0xf]
    %v8967 = vld [vmem:[#allocation9 + $0x134] sm:$0xf]
    %v8968 = vld [vmem:[#allocation9 + $0x138] sm:$0xf]
    %v8969 = vld [vmem:[#allocation9 + $0x13c] sm:$0xf]
    %v8970 = vld [vmem:[#allocation9 + $0x140] sm:$0xf]
    %v8971 = vld [vmem:[#allocation9 + $0x144] sm:$0xf]
    %v8972 = vld [vmem:[#allocation9 + $0x148] sm:$0xf]
    %v8973 = vld [vmem:[#allocation9 + $0x14c] sm:$0xf]
    %v8974 = vld [vmem:[#allocation9 + $0x150] sm:$0xf]
    %v8975 = vld [vmem:[#allocation9 + $0x154] sm:$0xf]
    %v8976 = vld [vmem:[#allocation9 + $0x158] sm:$0xf]
    %v8977 = vld [vmem:[#allocation9 + $0x15c] sm:$0xf]
    %v8978 = vld [vmem:[#allocation9 + $0x160] sm:$0xf]
    %v8979 = vld [vmem:[#allocation9 + $0x164] sm:$0xf]
    %v8980 = vld [vmem:[#allocation9 + $0x168] sm:$0xf]
    %v8981 = vld [vmem:[#allocation9 + $0x16c] sm:$0xf]
    %v8982 = vld [vmem:[#allocation9 + $0x170] sm:$0xf]
    %v8983 = vld [vmem:[#allocation9 + $0x174] sm:$0xf]
    %v8984 = vld [vmem:[#allocation9 + $0x178] sm:$0xf]
    %v8985 = vld [vmem:[#allocation9 + $0x17c] sm:$0xf]
    %v8986 = vld [vmem:[#allocation9 + $0x180] sm:$0xf]
    %v8987 = vld [vmem:[#allocation9 + $0x184] sm:$0xf]
    %v8988 = vld [vmem:[#allocation9 + $0x188] sm:$0xf]
    %v8989 = vld [vmem:[#allocation9 + $0x18c] sm:$0xf]
    %v8990 = vld [vmem:[#allocation9 + $0x190] sm:$0xf]
    %v8991 = vld [vmem:[#allocation9 + $0x194] sm:$0xf]
    %v8992 = vld [vmem:[#allocation9 + $0x198] sm:$0xf]
    %v8993 = vld [vmem:[#allocation9 + $0x19c] sm:$0xf]
    %v8994 = vld [vmem:[#allocation9 + $0x1a0] sm:$0xf]
    %v8995 = vld [vmem:[#allocation9 + $0x1a4] sm:$0xf]
    %v8996 = vld [vmem:[#allocation9 + $0x1a8] sm:$0xf]
    %v8997 = vld [vmem:[#allocation9 + $0x1ac] sm:$0xf]
    %v8998 = vld [vmem:[#allocation9 + $0x1b0] sm:$0xf]
    %v8999 = vld [vmem:[#allocation9 + $0x1b4] sm:$0xf]
    %v9000 = vld [vmem:[#allocation9 + $0x1b8] sm:$0xf]
    %v9001 = vld [vmem:[#allocation9 + $0x1bc] sm:$0xf]
    %v9002 = vld [vmem:[#allocation9 + $0x1c0] sm:$0xf]
    %v9003 = vld [vmem:[#allocation9 + $0x1c4] sm:$0xf]
    %v9004 = vld [vmem:[#allocation9 + $0x1c8] sm:$0xf]
    %v9005 = vld [vmem:[#allocation9 + $0x1cc] sm:$0xf]
    %v9006 = vld [vmem:[#allocation9 + $0x1d0] sm:$0xf]
    %v9007 = vld [vmem:[#allocation9 + $0x1d4] sm:$0xf]
    %v9008 = vld [vmem:[#allocation9 + $0x1d8] sm:$0xf]
    %v9009 = vld [vmem:[#allocation9 + $0x1dc] sm:$0xf]
    %v9010 = vld [vmem:[#allocation9 + $0x1e0] sm:$0xf]
    %v9011 = vld [vmem:[#allocation9 + $0x1e4] sm:$0xf]
    %v9012 = vld [vmem:[#allocation9 + $0x1e8] sm:$0xf]
    %v9013 = vld [vmem:[#allocation9 + $0x1ec] sm:$0xf]
    %v9014 = vld [vmem:[#allocation9 + $0x1f0] sm:$0xf]
    %v9015 = vld [vmem:[#allocation9 + $0x1f4] sm:$0xf]
    %v9016 = vld [vmem:[#allocation9 + $0x1f8] sm:$0xf]
    %v9017 = vld [vmem:[#allocation9 + $0x1fc] sm:$0xf]
    %v9018 = vld [vmem:[#allocation9 + $0x200] sm:$0xf]
    %v9019 = vld [vmem:[#allocation9 + $0x204] sm:$0xf]
    %v9020 = vld [vmem:[#allocation9 + $0x208] sm:$0xf]
    %v9021 = vld [vmem:[#allocation9 + $0x20c] sm:$0xf]
    %v9022 = vld [vmem:[#allocation9 + $0x210] sm:$0xf]
    %v9023 = vld [vmem:[#allocation9 + $0x214] sm:$0xf]
    %v9024 = vld [vmem:[#allocation9 + $0x218] sm:$0xf]
    %v9025 = vld [vmem:[#allocation9 + $0x21c] sm:$0xf]
    %v9026 = vld [vmem:[#allocation9 + $0x220] sm:$0xf]
    %v9027 = vld [vmem:[#allocation9 + $0x224] sm:$0xf]
    %v9028 = vld [vmem:[#allocation9 + $0x228] sm:$0xf]
    %v9029 = vld [vmem:[#allocation9 + $0x22c] sm:$0xf]
    %v9030 = vld [vmem:[#allocation9 + $0x230] sm:$0xf]
    %v9031 = vld [vmem:[#allocation9 + $0x234] sm:$0xf]
    %v9032 = vld [vmem:[#allocation9 + $0x238] sm:$0xf]
    %v9033 = vld [vmem:[#allocation9 + $0x23c] sm:$0xf]
    %v9178 = vunpack.c.l.b16 %v8890
    %v9179 = vunpack.c.l.b16 %v8891
    %v9180 = vunpack.c.l.b16 %v8892
    %v9181 = vunpack.c.l.b16 %v8893
    %v9182 = vunpack.c.l.b16 %v8894
    %v9183 = vunpack.c.l.b16 %v8895
    %v9184 = vunpack.c.l.b16 %v8896
    %v9185 = vunpack.c.l.b16 %v8897
    %v9186 = vunpack.c.l.b16 %v8898
    %v9187 = vunpack.c.l.b16 %v8899
    %v9188 = vunpack.c.l.b16 %v8900
    %v9189 = vunpack.c.l.b16 %v8901
    %v9190 = vunpack.c.l.b16 %v8902
    %v9191 = vunpack.c.l.b16 %v8903
    %v9192 = vunpack.c.l.b16 %v8904
    %v9193 = vunpack.c.l.b16 %v8905
    %v9194 = vunpack.c.l.b16 %v8906
    %v9195 = vunpack.c.l.b16 %v8907
    %v9196 = vunpack.c.l.b16 %v8908
    %v9197 = vunpack.c.l.b16 %v8909
    %v9198 = vunpack.c.l.b16 %v8910
    %v9199 = vunpack.c.l.b16 %v8911
    %v9200 = vunpack.c.l.b16 %v8912
    %v9201 = vunpack.c.l.b16 %v8913
    %v9202 = vunpack.c.l.b16 %v8914
    %v9203 = vunpack.c.l.b16 %v8915
    %v9204 = vunpack.c.l.b16 %v8916
    %v9205 = vunpack.c.l.b16 %v8917
    %v9206 = vunpack.c.l.b16 %v8918
    %v9207 = vunpack.c.l.b16 %v8919
    %v9208 = vunpack.c.l.b16 %v8920
    %v9209 = vunpack.c.l.b16 %v8921
    %v9210 = vunpack.c.l.b16 %v8922
    %v9211 = vunpack.c.l.b16 %v8923
    %v9212 = vunpack.c.l.b16 %v8924
    %v9213 = vunpack.c.l.b16 %v8925
    %v9214 = vunpack.c.l.b16 %v8926
    %v9215 = vunpack.c.l.b16 %v8927
    %v9216 = vunpack.c.l.b16 %v8928
    %v9217 = vunpack.c.l.b16 %v8929
    %v9218 = vunpack.c.l.b16 %v8930
    %v9219 = vunpack.c.l.b16 %v8931
    %v9220 = vunpack.c.l.b16 %v8932
    %v9221 = vunpack.c.l.b16 %v8933
    %v9222 = vunpack.c.l.b16 %v8934
    %v9223 = vunpack.c.l.b16 %v8935
    %v9224 = vunpack.c.l.b16 %v8936
    %v9225 = vunpack.c.l.b16 %v8937
    %v9226 = vunpack.c.l.b16 %v8938
    %v9227 = vunpack.c.l.b16 %v8939
    %v9228 = vunpack.c.l.b16 %v8940
    %v9229 = vunpack.c.l.b16 %v8941
    %v9230 = vunpack.c.l.b16 %v8942
    %v9231 = vunpack.c.l.b16 %v8943
    %v9232 = vunpack.c.l.b16 %v8944
    %v9233 = vunpack.c.l.b16 %v8945
    %v9234 = vunpack.c.l.b16 %v8946
    %v9235 = vunpack.c.l.b16 %v8947
    %v9236 = vunpack.c.l.b16 %v8948
    %v9237 = vunpack.c.l.b16 %v8949
    %v9238 = vunpack.c.l.b16 %v8950
    %v9239 = vunpack.c.l.b16 %v8951
    %v9240 = vunpack.c.l.b16 %v8952
    %v9241 = vunpack.c.l.b16 %v8953
    %v9242 = vunpack.c.l.b16 %v8954
    %v9243 = vunpack.c.l.b16 %v8955
    %v9244 = vunpack.c.l.b16 %v8956
    %v9245 = vunpack.c.l.b16 %v8957
    %v9246 = vunpack.c.l.b16 %v8958
    %v9247 = vunpack.c.l.b16 %v8959
    %v9248 = vunpack.c.l.b16 %v8960
    %v9249 = vunpack.c.l.b16 %v8961
    %v9250 = vunpack.c.l.b16 %v8962
    %v9251 = vunpack.c.l.b16 %v8963
    %v9252 = vunpack.c.l.b16 %v8964
    %v9253 = vunpack.c.l.b16 %v8965
    %v9254 = vunpack.c.l.b16 %v8966
    %v9255 = vunpack.c.l.b16 %v8967
    %v9256 = vunpack.c.l.b16 %v8968
    %v9257 = vunpack.c.l.b16 %v8969
    %v9258 = vunpack.c.l.b16 %v8970
    %v9259 = vunpack.c.l.b16 %v8971
    %v9260 = vunpack.c.l.b16 %v8972
    %v9261 = vunpack.c.l.b16 %v8973
    %v9262 = vunpack.c.l.b16 %v8974
    %v9263 = vunpack.c.l.b16 %v8975
    %v9264 = vunpack.c.l.b16 %v8976
    %v9265 = vunpack.c.l.b16 %v8977
    %v9266 = vunpack.c.l.b16 %v8978
    %v9267 = vunpack.c.l.b16 %v8979
    %v9268 = vunpack.c.l.b16 %v8980
    %v9269 = vunpack.c.l.b16 %v8981
    %v9270 = vunpack.c.l.b16 %v8982
    %v9271 = vunpack.c.l.b16 %v8983
    %v9272 = vunpack.c.l.b16 %v8984
    %v9273 = vunpack.c.l.b16 %v8985
    %v9274 = vunpack.c.l.b16 %v8986
    %v9275 = vunpack.c.l.b16 %v8987
    %v9276 = vunpack.c.l.b16 %v8988
    %v9277 = vunpack.c.l.b16 %v8989
    %v9278 = vunpack.c.l.b16 %v8990
    %v9279 = vunpack.c.l.b16 %v8991
    %v9280 = vunpack.c.l.b16 %v8992
    %v9281 = vunpack.c.l.b16 %v8993
    %v9282 = vunpack.c.l.b16 %v8994
    %v9283 = vunpack.c.l.b16 %v8995
    %v9284 = vunpack.c.l.b16 %v8996
    %v9285 = vunpack.c.l.b16 %v8997
    %v9286 = vunpack.c.l.b16 %v8998
    %v9287 = vunpack.c.l.b16 %v8999
    %v9288 = vunpack.c.l.b16 %v9000
    %v9289 = vunpack.c.l.b16 %v9001
    %v9290 = vunpack.c.l.b16 %v9002
    %v9291 = vunpack.c.l.b16 %v9003
    %v9292 = vunpack.c.l.b16 %v9004
    %v9293 = vunpack.c.l.b16 %v9005
    %v9294 = vunpack.c.l.b16 %v9006
    %v9295 = vunpack.c.l.b16 %v9007
    %v9296 = vunpack.c.l.b16 %v9008
    %v9297 = vunpack.c.l.b16 %v9009
    %v9298 = vunpack.c.l.b16 %v9010
    %v9299 = vunpack.c.l.b16 %v9011
    %v9300 = vunpack.c.l.b16 %v9012
    %v9301 = vunpack.c.l.b16 %v9013
    %v9302 = vunpack.c.l.b16 %v9014
    %v9303 = vunpack.c.l.b16 %v9015
    %v9304 = vunpack.c.l.b16 %v9016
    %v9305 = vunpack.c.l.b16 %v9017
    %v9306 = vunpack.c.l.b16 %v9018
    %v9307 = vunpack.c.l.b16 %v9019
    %v9308 = vunpack.c.l.b16 %v9020
    %v9309 = vunpack.c.l.b16 %v9021
    %v9310 = vunpack.c.l.b16 %v9022
    %v9311 = vunpack.c.l.b16 %v9023
    %v9312 = vunpack.c.l.b16 %v9024
    %v9313 = vunpack.c.l.b16 %v9025
    %v9314 = vunpack.c.l.b16 %v9026
    %v9315 = vunpack.c.l.b16 %v9027
    %v9316 = vunpack.c.l.b16 %v9028
    %v9317 = vunpack.c.l.b16 %v9029
    %v9318 = vunpack.c.l.b16 %v9030
    %v9319 = vunpack.c.l.b16 %v9031
    %v9320 = vunpack.c.l.b16 %v9032
    %v9321 = vunpack.c.l.b16 %v9033
    %v9322 = vpack.c.b16 %v9179, %v9178
    %v9323 = vpack.c.b16 %v9181, %v9180
    %v9324 = vpack.c.b16 %v9183, %v9182
    %v9325 = vpack.c.b16 %v9185, %v9184
    %v9326 = vpack.c.b16 %v9187, %v9186
    %v9327 = vpack.c.b16 %v9189, %v9188
    %v9328 = vpack.c.b16 %v9191, %v9190
    %v9329 = vpack.c.b16 %v9193, %v9192
    %v9330 = vpack.c.b16 %v9195, %v9194
    %v9331 = vpack.c.b16 %v9197, %v9196
    %v9332 = vpack.c.b16 %v9199, %v9198
    %v9333 = vpack.c.b16 %v9201, %v9200
    %v9334 = vpack.c.b16 %v9203, %v9202
    %v9335 = vpack.c.b16 %v9205, %v9204
    %v9336 = vpack.c.b16 %v9207, %v9206
    %v9337 = vpack.c.b16 %v9209, %v9208
    %v9338 = vpack.c.b16 %v9211, %v9210
    %v9339 = vpack.c.b16 %v9213, %v9212
    %v9340 = vpack.c.b16 %v9215, %v9214
    %v9341 = vpack.c.b16 %v9217, %v9216
    %v9342 = vpack.c.b16 %v9219, %v9218
    %v9343 = vpack.c.b16 %v9221, %v9220
    %v9344 = vpack.c.b16 %v9223, %v9222
    %v9345 = vpack.c.b16 %v9225, %v9224
    %v9346 = vpack.c.b16 %v9227, %v9226
    %v9347 = vpack.c.b16 %v9229, %v9228
    %v9348 = vpack.c.b16 %v9231, %v9230
    %v9349 = vpack.c.b16 %v9233, %v9232
    %v9350 = vpack.c.b16 %v9235, %v9234
    %v9351 = vpack.c.b16 %v9237, %v9236
    %v9352 = vpack.c.b16 %v9239, %v9238
    %v9353 = vpack.c.b16 %v9241, %v9240
    %v9354 = vpack.c.b16 %v9243, %v9242
    %v9355 = vpack.c.b16 %v9245, %v9244
    %v9356 = vpack.c.b16 %v9247, %v9246
    %v9357 = vpack.c.b16 %v9249, %v9248
    %v9358 = vpack.c.b16 %v9251, %v9250
    %v9359 = vpack.c.b16 %v9253, %v9252
    %v9360 = vpack.c.b16 %v9255, %v9254
    %v9361 = vpack.c.b16 %v9257, %v9256
    %v9362 = vpack.c.b16 %v9259, %v9258
    %v9363 = vpack.c.b16 %v9261, %v9260
    %v9364 = vpack.c.b16 %v9263, %v9262
    %v9365 = vpack.c.b16 %v9265, %v9264
    %v9366 = vpack.c.b16 %v9267, %v9266
    %v9367 = vpack.c.b16 %v9269, %v9268
    %v9368 = vpack.c.b16 %v9271, %v9270
    %v9369 = vpack.c.b16 %v9273, %v9272
    %v9370 = vpack.c.b16 %v9275, %v9274
    %v9371 = vpack.c.b16 %v9277, %v9276
    %v9372 = vpack.c.b16 %v9279, %v9278
    %v9373 = vpack.c.b16 %v9281, %v9280
    %v9374 = vpack.c.b16 %v9283, %v9282
    %v9375 = vpack.c.b16 %v9285, %v9284
    %v9376 = vpack.c.b16 %v9287, %v9286
    %v9377 = vpack.c.b16 %v9289, %v9288
    %v9378 = vpack.c.b16 %v9291, %v9290
    %v9379 = vpack.c.b16 %v9293, %v9292
    %v9380 = vpack.c.b16 %v9295, %v9294
    %v9381 = vpack.c.b16 %v9297, %v9296
    %v9382 = vpack.c.b16 %v9299, %v9298
    %v9383 = vpack.c.b16 %v9301, %v9300
    %v9384 = vpack.c.b16 %v9303, %v9302
    %v9385 = vpack.c.b16 %v9305, %v9304
    %v9386 = vpack.c.b16 %v9307, %v9306
    %v9387 = vpack.c.b16 %v9309, %v9308
    %v9388 = vpack.c.b16 %v9311, %v9310
    %v9389 = vpack.c.b16 %v9313, %v9312
    %v9390 = vpack.c.b16 %v9315, %v9314
    %v9391 = vpack.c.b16 %v9317, %v9316
    %v9392 = vpack.c.b16 %v9319, %v9318
    %v9393 = vpack.c.b16 %v9321, %v9320
    %9466 = vmatprep.subr.bf16.mxu0 0
    %9467 = vmatpush1.bf16.msra.mxu0 %v9329
    %9468 = vmatprep.subr.bf16.mxu0 0
    %9469 = vmatpush1.bf16.msra.mxu0 %v9328
    %9470 = vmatprep.subr.bf16.mxu0 0
    %9471 = vmatpush1.bf16.msra.mxu0 %v9327
    %9472 = vmatprep.subr.bf16.mxu0 0
    %9473 = vmatpush1.bf16.msra.mxu0 %v9326
    %9474 = vmatprep.subr.bf16.mxu0 0
    %9475 = vmatpush1.bf16.msra.mxu0 %v9325
    %9476 = vmatprep.subr.bf16.mxu0 0
    %9477 = vmatpush1.bf16.msra.mxu0 %v9324
    %9478 = vmatprep.subr.bf16.mxu0 0
    %9479 = vmatpush1.bf16.msra.mxu0 %v9323
    %9480 = vmatprep.subr.bf16.mxu0 0
    %9481 = vmatpush1.bf16.msra.mxu0 %v9322
    %9482 = vmatprep.subr.bf16.mxu0 0
    %9483 = vmatpush2.bf16.msra.mxu0 %v9337
    %9484 = vmatprep.subr.bf16.mxu0 0
    %9485 = vmatpush2.bf16.msra.mxu0 %v9336
    %9486 = vmatprep.subr.bf16.mxu0 0
    %9487 = vmatpush2.bf16.msra.mxu0 %v9335
    %9488 = vmatprep.subr.bf16.mxu0 0
    %9489 = vmatpush2.bf16.msra.mxu0 %v9334
    %9490 = vmatprep.subr.bf16.mxu0 0
    %9491 = vmatpush2.bf16.msra.mxu0 %v9333
    %9492 = vmatprep.subr.bf16.mxu0 0
    %9493 = vmatpush2.bf16.msra.mxu0 %v9332
    %9494 = vmatprep.subr.bf16.mxu0 0
    %9495 = vmatpush2.bf16.msra.mxu0 %v9331
    %9496 = vmatprep.subr.bf16.mxu0 0
    %9497 = vmatpush2.bf16.msra.mxu0 %v9330
    %9498 = vmatprep.mubr.bf16.mxu0 %v8646
    %9499 = vmatmul.mubr.bf16.gmra.mxu0 %v8518
    %v9500 = vpop.f32.mrf.mxu0
    %v9501 = vadd.f32 0.0, %v9500
    %v9502 = vpop.f32.mrf.mxu0
    %v9503 = vpop.f32.mrf.mxu0
    %v9504 = vadd.f32 0.0, %v9503
    %v9505 = vpop.f32.mrf.mxu0
    %9506 = vmatprep.mubr.bf16.mxu0 %v8647
    %9507 = vmatmul.mubr.bf16.gmra.mxu0 %v8519
    %v9508 = vpop.f32.mrf.mxu0
    %v9509 = vadd.f32 0.0, %v9508
    %v9510 = vpop.f32.mrf.mxu0
    %v9511 = vpop.f32.mrf.mxu0
    %v9512 = vadd.f32 0.0, %v9511
    %v9513 = vpop.f32.mrf.mxu0
    %9514 = vmatprep.mubr.bf16.mxu0 %v8648
    %9515 = vmatmul.mubr.bf16.gmra.mxu0 %v8520
    %v9516 = vpop.f32.mrf.mxu0
    %v9517 = vadd.f32 0.0, %v9516
    %v9518 = vpop.f32.mrf.mxu0
    %v9519 = vpop.f32.mrf.mxu0
    %v9520 = vadd.f32 0.0, %v9519
    %v9521 = vpop.f32.mrf.mxu0
    %9522 = vmatprep.mubr.bf16.mxu0 %v8649
    %9523 = vmatmul.mubr.bf16.gmra.mxu0 %v8521
    %v9524 = vpop.f32.mrf.mxu0
    %v9525 = vadd.f32 0.0, %v9524
    %v9526 = vpop.f32.mrf.mxu0
    %v9527 = vpop.f32.mrf.mxu0
    %v9528 = vadd.f32 0.0, %v9527
    %v9529 = vpop.f32.mrf.mxu0
    %9530 = vmatprep.mubr.bf16.mxu0 %v8650
    %9531 = vmatmul.mubr.bf16.gmra.mxu0 %v8522
    %v9532 = vpop.f32.mrf.mxu0
    %v9533 = vadd.f32 0.0, %v9532
    %v9534 = vpop.f32.mrf.mxu0
    %v9535 = vpop.f32.mrf.mxu0
    %v9536 = vadd.f32 0.0, %v9535
    %v9537 = vpop.f32.mrf.mxu0
    %9538 = vmatprep.mubr.bf16.mxu0 %v8651
    %9539 = vmatmul.mubr.bf16.gmra.mxu0 %v8523
    %v9540 = vpop.f32.mrf.mxu0
    %v9541 = vadd.f32 0.0, %v9540
    %v9542 = vpop.f32.mrf.mxu0
    %v9543 = vpop.f32.mrf.mxu0
    %v9544 = vadd.f32 0.0, %v9543
    %v9545 = vpop.f32.mrf.mxu0
    %9546 = vmatprep.mubr.bf16.mxu0 %v8652
    %9547 = vmatmul.mubr.bf16.gmra.mxu0 %v8524
    %v9548 = vpop.f32.mrf.mxu0
    %v9549 = vadd.f32 0.0, %v9548
    %v9550 = vpop.f32.mrf.mxu0
    %v9551 = vpop.f32.mrf.mxu0
    %v9552 = vadd.f32 0.0, %v9551
    %v9553 = vpop.f32.mrf.mxu0
    %9554 = vmatprep.mubr.bf16.mxu0 %v8653
    %9555 = vmatmul.mubr.bf16.gmra.mxu0 %v8525
    %v9556 = vpop.f32.mrf.mxu0
    %v9557 = vadd.f32 0.0, %v9556
    %v9558 = vpop.f32.mrf.mxu0
    %v9559 = vpop.f32.mrf.mxu0
    %v9560 = vadd.f32 0.0, %v9559
    %v9561 = vpop.f32.mrf.mxu0
    %9562 = vmatprep.mubr.bf16.mxu0 %v8654
    %9563 = vmatmul.mubr.bf16.gmra.mxu0 %v8526
    %v9564 = vpop.f32.mrf.mxu0
    %v9565 = vadd.f32 0.0, %v9564
    %v9566 = vpop.f32.mrf.mxu0
    %v9567 = vpop.f32.mrf.mxu0
    %v9568 = vadd.f32 0.0, %v9567
    %v9569 = vpop.f32.mrf.mxu0
    %9570 = vmatprep.mubr.bf16.mxu0 %v8655
    %9571 = vmatmul.mubr.bf16.gmra.mxu0 %v8527
    %v9572 = vpop.f32.mrf.mxu0
    %v9573 = vadd.f32 0.0, %v9572
    %v9574 = vpop.f32.mrf.mxu0
    %v9575 = vpop.f32.mrf.mxu0
    %v9576 = vadd.f32 0.0, %v9575
    %v9577 = vpop.f32.mrf.mxu0
    %9578 = vmatprep.mubr.bf16.mxu0 %v8656
    %9579 = vmatmul.mubr.bf16.gmra.mxu0 %v8528
    %v9580 = vpop.f32.mrf.mxu0
    %v9581 = vadd.f32 0.0, %v9580
    %v9582 = vpop.f32.mrf.mxu0
    %v9583 = vpop.f32.mrf.mxu0
    %v9584 = vadd.f32 0.0, %v9583
    %v9585 = vpop.f32.mrf.mxu0
    %9586 = vmatprep.mubr.bf16.mxu0 %v8657
    %9587 = vmatmul.mubr.bf16.gmra.mxu0 %v8529
    %v9588 = vpop.f32.mrf.mxu0
    %v9589 = vadd.f32 0.0, %v9588
    %v9590 = vpop.f32.mrf.mxu0
    %v9591 = vpop.f32.mrf.mxu0
    %v9592 = vadd.f32 0.0, %v9591
    %v9593 = vpop.f32.mrf.mxu0
    %9594 = vmatprep.mubr.bf16.mxu0 %v8658
    %9595 = vmatmul.mubr.bf16.gmra.mxu0 %v8530
    %v9596 = vpop.f32.mrf.mxu0
    %v9597 = vadd.f32 0.0, %v9596
    %v9598 = vpop.f32.mrf.mxu0
    %v9599 = vpop.f32.mrf.mxu0
    %v9600 = vadd.f32 0.0, %v9599
    %v9601 = vpop.f32.mrf.mxu0
    %9602 = vmatprep.mubr.bf16.mxu0 %v8659
    %9603 = vmatmul.mubr.bf16.gmra.mxu0 %v8531
    %v9604 = vpop.f32.mrf.mxu0
    %v9605 = vadd.f32 0.0, %v9604
    %v9606 = vpop.f32.mrf.mxu0
    %v9607 = vpop.f32.mrf.mxu0
    %v9608 = vadd.f32 0.0, %v9607
    %v9609 = vpop.f32.mrf.mxu0
    %9610 = vmatprep.mubr.bf16.mxu0 %v8660
    %9611 = vmatmul.mubr.bf16.gmra.mxu0 %v8532
    %v9612 = vpop.f32.mrf.mxu0
    %v9613 = vadd.f32 0.0, %v9612
    %v9614 = vpop.f32.mrf.mxu0
    %v9615 = vpop.f32.mrf.mxu0
    %v9616 = vadd.f32 0.0, %v9615
    %v9617 = vpop.f32.mrf.mxu0
    %9618 = vmatprep.mubr.bf16.mxu0 %v8661
    %9619 = vmatmul.mubr.bf16.gmra.mxu0 %v8533
    %v9620 = vpop.f32.mrf.mxu0
    %v9621 = vadd.f32 0.0, %v9620
    %v9622 = vpop.f32.mrf.mxu0
    %v9623 = vpop.f32.mrf.mxu0
    %v9624 = vadd.f32 0.0, %v9623
    %v9625 = vpop.f32.mrf.mxu0
    %9626 = vmatprep.mubr.bf16.mxu0 %v8662
    %9627 = vmatmul.mubr.bf16.gmra.mxu0 %v8534
    %v9628 = vpop.f32.mrf.mxu0
    %v9629 = vadd.f32 0.0, %v9628
    %v9630 = vpop.f32.mrf.mxu0
    %v9631 = vpop.f32.mrf.mxu0
    %v9632 = vadd.f32 0.0, %v9631
    %v9633 = vpop.f32.mrf.mxu0
    %9634 = vmatprep.mubr.bf16.mxu0 %v8663
    %9635 = vmatmul.mubr.bf16.gmra.mxu0 %v8535
    %v9636 = vpop.f32.mrf.mxu0
    %v9637 = vadd.f32 0.0, %v9636
    %v9638 = vpop.f32.mrf.mxu0
    %v9639 = vpop.f32.mrf.mxu0
    %v9640 = vadd.f32 0.0, %v9639
    %v9641 = vpop.f32.mrf.mxu0
    %9642 = vmatprep.mubr.bf16.mxu0 %v8664
    %9643 = vmatmul.mubr.bf16.gmra.mxu0 %v8536
    %v9644 = vpop.f32.mrf.mxu0
    %v9645 = vadd.f32 0.0, %v9644
    %v9646 = vpop.f32.mrf.mxu0
    %v9647 = vpop.f32.mrf.mxu0
    %v9648 = vadd.f32 0.0, %v9647
    %v9649 = vpop.f32.mrf.mxu0
    %9650 = vmatprep.mubr.bf16.mxu0 %v8665
    %9651 = vmatmul.mubr.bf16.gmra.mxu0 %v8537
    %v9652 = vpop.f32.mrf.mxu0
    %v9653 = vadd.f32 0.0, %v9652
    %v9654 = vpop.f32.mrf.mxu0
    %v9655 = vpop.f32.mrf.mxu0
    %v9656 = vadd.f32 0.0, %v9655
    %v9657 = vpop.f32.mrf.mxu0
    %9658 = vmatprep.mubr.bf16.mxu0 %v8666
    %9659 = vmatmul.mubr.bf16.gmra.mxu0 %v8538
    %v9660 = vpop.f32.mrf.mxu0
    %v9661 = vadd.f32 0.0, %v9660
    %v9662 = vpop.f32.mrf.mxu0
    %v9663 = vpop.f32.mrf.mxu0
    %v9664 = vadd.f32 0.0, %v9663
    %v9665 = vpop.f32.mrf.mxu0
    %9666 = vmatprep.mubr.bf16.mxu0 %v8667
    %9667 = vmatmul.mubr.bf16.gmra.mxu0 %v8539
    %v9668 = vpop.f32.mrf.mxu0
    %v9669 = vadd.f32 0.0, %v9668
    %v9670 = vpop.f32.mrf.mxu0
    %v9671 = vpop.f32.mrf.mxu0
    %v9672 = vadd.f32 0.0, %v9671
    %v9673 = vpop.f32.mrf.mxu0
    %9674 = vmatprep.mubr.bf16.mxu0 %v8668
    %9675 = vmatmul.mubr.bf16.gmra.mxu0 %v8540
    %v9676 = vpop.f32.mrf.mxu0
    %v9677 = vadd.f32 0.0, %v9676
    %v9678 = vpop.f32.mrf.mxu0
    %v9679 = vpop.f32.mrf.mxu0
    %v9680 = vadd.f32 0.0, %v9679
    %v9681 = vpop.f32.mrf.mxu0
    %9682 = vmatprep.mubr.bf16.mxu0 %v8669
    %9683 = vmatmul.mubr.bf16.gmra.mxu0 %v8541
    %v9684 = vpop.f32.mrf.mxu0
    %v9685 = vadd.f32 0.0, %v9684
    %v9686 = vpop.f32.mrf.mxu0
    %v9687 = vpop.f32.mrf.mxu0
    %v9688 = vadd.f32 0.0, %v9687
    %v9689 = vpop.f32.mrf.mxu0
    %9690 = vmatprep.mubr.bf16.mxu0 %v8670
    %9691 = vmatmul.mubr.bf16.gmra.mxu0 %v8542
    %v9692 = vpop.f32.mrf.mxu0
    %v9693 = vadd.f32 0.0, %v9692
    %v9694 = vpop.f32.mrf.mxu0
    %v9695 = vpop.f32.mrf.mxu0
    %v9696 = vadd.f32 0.0, %v9695
    %v9697 = vpop.f32.mrf.mxu0
    %9698 = vmatprep.mubr.bf16.mxu0 %v8671
    %9699 = vmatmul.mubr.bf16.gmra.mxu0 %v8543
    %v9700 = vpop.f32.mrf.mxu0
    %v9701 = vadd.f32 0.0, %v9700
    %v9702 = vpop.f32.mrf.mxu0
    %v9703 = vpop.f32.mrf.mxu0
    %v9704 = vadd.f32 0.0, %v9703
    %v9705 = vpop.f32.mrf.mxu0
    %9706 = vmatprep.mubr.bf16.mxu0 %v8672
    %9707 = vmatmul.mubr.bf16.gmra.mxu0 %v8544
    %v9708 = vpop.f32.mrf.mxu0
    %v9709 = vadd.f32 0.0, %v9708
    %v9710 = vpop.f32.mrf.mxu0
    %v9711 = vpop.f32.mrf.mxu0
    %v9712 = vadd.f32 0.0, %v9711
    %v9713 = vpop.f32.mrf.mxu0
    %9714 = vmatprep.mubr.bf16.mxu0 %v8673
    %9715 = vmatmul.mubr.bf16.gmra.mxu0 %v8545
    %v9716 = vpop.f32.mrf.mxu0
    %v9717 = vadd.f32 0.0, %v9716
    %v9718 = vpop.f32.mrf.mxu0
    %v9719 = vpop.f32.mrf.mxu0
    %v9720 = vadd.f32 0.0, %v9719
    %v9721 = vpop.f32.mrf.mxu0
    %9722 = vmatprep.mubr.bf16.mxu0 %v8674
    %9723 = vmatmul.mubr.bf16.gmra.mxu0 %v8546
    %v9724 = vpop.f32.mrf.mxu0
    %v9725 = vadd.f32 0.0, %v9724
    %v9726 = vpop.f32.mrf.mxu0
    %v9727 = vpop.f32.mrf.mxu0
    %v9728 = vadd.f32 0.0, %v9727
    %v9729 = vpop.f32.mrf.mxu0
    %9730 = vmatprep.mubr.bf16.mxu0 %v8675
    %9731 = vmatmul.mubr.bf16.gmra.mxu0 %v8547
    %v9732 = vpop.f32.mrf.mxu0
    %v9733 = vadd.f32 0.0, %v9732
    %v9734 = vpop.f32.mrf.mxu0
    %v9735 = vpop.f32.mrf.mxu0
    %v9736 = vadd.f32 0.0, %v9735
    %v9737 = vpop.f32.mrf.mxu0
    %9738 = vmatprep.mubr.bf16.mxu0 %v8676
    %9739 = vmatmul.mubr.bf16.gmra.mxu0 %v8548
    %v9740 = vpop.f32.mrf.mxu0
    %v9741 = vadd.f32 0.0, %v9740
    %v9742 = vpop.f32.mrf.mxu0
    %v9743 = vpop.f32.mrf.mxu0
    %v9744 = vadd.f32 0.0, %v9743
    %v9745 = vpop.f32.mrf.mxu0
    %9746 = vmatprep.mubr.bf16.mxu0 %v8677
    %9747 = vmatmul.mubr.bf16.gmra.mxu0 %v8549
    %v9748 = vpop.f32.mrf.mxu0
    %v9749 = vadd.f32 0.0, %v9748
    %v9750 = vpop.f32.mrf.mxu0
    %v9751 = vpop.f32.mrf.mxu0
    %v9752 = vadd.f32 0.0, %v9751
    %v9753 = vpop.f32.mrf.mxu0
    %9754 = vdwg.mxu0
    %9755 = vmatprep.subr.bf16.mxu0 0
    %9756 = vmatpush1.bf16.msra.mxu0 %v9345
    %9757 = vmatprep.subr.bf16.mxu0 0
    %9758 = vmatpush1.bf16.msra.mxu0 %v9344
    %9759 = vmatprep.subr.bf16.mxu0 0
    %9760 = vmatpush1.bf16.msra.mxu0 %v9343
    %9761 = vmatprep.subr.bf16.mxu0 0
    %9762 = vmatpush1.bf16.msra.mxu0 %v9342
    %9763 = vmatprep.subr.bf16.mxu0 0
    %9764 = vmatpush1.bf16.msra.mxu0 %v9341
    %9765 = vmatprep.subr.bf16.mxu0 0
    %9766 = vmatpush1.bf16.msra.mxu0 %v9340
    %9767 = vmatprep.subr.bf16.mxu0 0
    %9768 = vmatpush1.bf16.msra.mxu0 %v9339
    %9769 = vmatprep.subr.bf16.mxu0 0
    %9770 = vmatpush1.bf16.msra.mxu0 %v9338
    %9771 = vmatprep.subr.bf16.mxu0 0
    %9772 = vmatpush2.bf16.msra.mxu0 %v9353
    %9773 = vmatprep.subr.bf16.mxu0 0
    %9774 = vmatpush2.bf16.msra.mxu0 %v9352
    %9775 = vmatprep.subr.bf16.mxu0 0
    %9776 = vmatpush2.bf16.msra.mxu0 %v9351
    %9777 = vmatprep.subr.bf16.mxu0 0
    %9778 = vmatpush2.bf16.msra.mxu0 %v9350
    %9779 = vmatprep.subr.bf16.mxu0 0
    %9780 = vmatpush2.bf16.msra.mxu0 %v9349
    %9781 = vmatprep.subr.bf16.mxu0 0
    %9782 = vmatpush2.bf16.msra.mxu0 %v9348
    %9783 = vmatprep.subr.bf16.mxu0 0
    %9784 = vmatpush2.bf16.msra.mxu0 %v9347
    %9785 = vmatprep.subr.bf16.mxu0 0
    %9786 = vmatpush2.bf16.msra.mxu0 %v9346
    %9787 = vmatprep.mubr.bf16.mxu0 %v8519
    %9788 = vmatmul.mubr.bf16.gmra.mxu0 %v8774
    %v9789 = vpop.f32.mrf.mxu0
    %v9790 = vadd.f32 %v9501, %v9789
    %v9791 = vpop.f32.mrf.mxu0
    %v9792 = vpop.f32.mrf.mxu0
    %v9793 = vadd.f32 %v9504, %v9792
    %v9794 = vpop.f32.mrf.mxu0
    %9795 = vmatprep.mubr.bf16.mxu0 %v8520
    %9796 = vmatmul.mubr.bf16.gmra.mxu0 %v8775
    %v9797 = vpop.f32.mrf.mxu0
    %v9798 = vadd.f32 %v9509, %v9797
    %v9799 = vpop.f32.mrf.mxu0
    %v9800 = vpop.f32.mrf.mxu0
    %v9801 = vadd.f32 %v9512, %v9800
    %v9802 = vpop.f32.mrf.mxu0
    %9803 = vmatprep.mubr.bf16.mxu0 %v8521
    %9804 = vmatmul.mubr.bf16.gmra.mxu0 %v8776
    %v9805 = vpop.f32.mrf.mxu0
    %v9806 = vadd.f32 %v9517, %v9805
    %v9807 = vpop.f32.mrf.mxu0
    %v9808 = vpop.f32.mrf.mxu0
    %v9809 = vadd.f32 %v9520, %v9808
    %v9810 = vpop.f32.mrf.mxu0
    %9811 = vmatprep.mubr.bf16.mxu0 %v8522
    %9812 = vmatmul.mubr.bf16.gmra.mxu0 %v8777
    %v9813 = vpop.f32.mrf.mxu0
    %v9814 = vadd.f32 %v9525, %v9813
    %v9815 = vpop.f32.mrf.mxu0
    %v9816 = vpop.f32.mrf.mxu0
    %v9817 = vadd.f32 %v9528, %v9816
    %v9818 = vpop.f32.mrf.mxu0
    %9819 = vmatprep.mubr.bf16.mxu0 %v8523
    %9820 = vmatmul.mubr.bf16.gmra.mxu0 %v8778
    %v9821 = vpop.f32.mrf.mxu0
    %v9822 = vadd.f32 %v9533, %v9821
    %v9823 = vpop.f32.mrf.mxu0
    %v9824 = vpop.f32.mrf.mxu0
    %v9825 = vadd.f32 %v9536, %v9824
    %v9826 = vpop.f32.mrf.mxu0
    %9827 = vmatprep.mubr.bf16.mxu0 %v8524
    %9828 = vmatmul.mubr.bf16.gmra.mxu0 %v8779
    %v9829 = vpop.f32.mrf.mxu0
    %v9830 = vadd.f32 %v9541, %v9829
    %v9831 = vpop.f32.mrf.mxu0
    %v9832 = vpop.f32.mrf.mxu0
    %v9833 = vadd.f32 %v9544, %v9832
    %v9834 = vpop.f32.mrf.mxu0
    %9835 = vmatprep.mubr.bf16.mxu0 %v8525
    %9836 = vmatmul.mubr.bf16.gmra.mxu0 %v8780
    %v9837 = vpop.f32.mrf.mxu0
    %v9838 = vadd.f32 %v9549, %v9837
    %v9839 = vpop.f32.mrf.mxu0
    %v9840 = vpop.f32.mrf.mxu0
    %v9841 = vadd.f32 %v9552, %v9840
    %v9842 = vpop.f32.mrf.mxu0
    %9843 = vmatprep.mubr.bf16.mxu0 %v8526
    %9844 = vmatmul.mubr.bf16.gmra.mxu0 %v8781
    %v9845 = vpop.f32.mrf.mxu0
    %v9846 = vadd.f32 %v9557, %v9845
    %v9847 = vpop.f32.mrf.mxu0
    %v9848 = vpop.f32.mrf.mxu0
    %v9849 = vadd.f32 %v9560, %v9848
    %v9850 = vpop.f32.mrf.mxu0
    %9851 = vmatprep.mubr.bf16.mxu0 %v8527
    %9852 = vmatmul.mubr.bf16.gmra.mxu0 %v8782
    %v9853 = vpop.f32.mrf.mxu0
    %v9854 = vadd.f32 %v9565, %v9853
    %v9855 = vpop.f32.mrf.mxu0
    %v9856 = vpop.f32.mrf.mxu0
    %v9857 = vadd.f32 %v9568, %v9856
    %v9858 = vpop.f32.mrf.mxu0
    %9859 = vmatprep.mubr.bf16.mxu0 %v8528
    %9860 = vmatmul.mubr.bf16.gmra.mxu0 %v8783
    %v9861 = vpop.f32.mrf.mxu0
    %v9862 = vadd.f32 %v9573, %v9861
    %v9863 = vpop.f32.mrf.mxu0
    %v9864 = vpop.f32.mrf.mxu0
    %v9865 = vadd.f32 %v9576, %v9864
    %v9866 = vpop.f32.mrf.mxu0
    %9867 = vmatprep.mubr.bf16.mxu0 %v8529
    %9868 = vmatmul.mubr.bf16.gmra.mxu0 %v8784
    %v9869 = vpop.f32.mrf.mxu0
    %v9870 = vadd.f32 %v9581, %v9869
    %v9871 = vpop.f32.mrf.mxu0
    %v9872 = vpop.f32.mrf.mxu0
    %v9873 = vadd.f32 %v9584, %v9872
    %v9874 = vpop.f32.mrf.mxu0
    %9875 = vmatprep.mubr.bf16.mxu0 %v8530
    %9876 = vmatmul.mubr.bf16.gmra.mxu0 %v8785
    %v9877 = vpop.f32.mrf.mxu0
    %v9878 = vadd.f32 %v9589, %v9877
    %v9879 = vpop.f32.mrf.mxu0
    %v9880 = vpop.f32.mrf.mxu0
    %v9881 = vadd.f32 %v9592, %v9880
    %v9882 = vpop.f32.mrf.mxu0
    %9883 = vmatprep.mubr.bf16.mxu0 %v8531
    %9884 = vmatmul.mubr.bf16.gmra.mxu0 %v8786
    %v9885 = vpop.f32.mrf.mxu0
    %v9886 = vadd.f32 %v9597, %v9885
    %v9887 = vpop.f32.mrf.mxu0
    %v9888 = vpop.f32.mrf.mxu0
    %v9889 = vadd.f32 %v9600, %v9888
    %v9890 = vpop.f32.mrf.mxu0
    %9891 = vmatprep.mubr.bf16.mxu0 %v8532
    %9892 = vmatmul.mubr.bf16.gmra.mxu0 %v8787
    %v9893 = vpop.f32.mrf.mxu0
    %v9894 = vadd.f32 %v9605, %v9893
    %v9895 = vpop.f32.mrf.mxu0
    %v9896 = vpop.f32.mrf.mxu0
    %v9897 = vadd.f32 %v9608, %v9896
    %v9898 = vpop.f32.mrf.mxu0
    %9899 = vmatprep.mubr.bf16.mxu0 %v8533
    %9900 = vmatmul.mubr.bf16.gmra.mxu0 %v8788
    %v9901 = vpop.f32.mrf.mxu0
    %v9902 = vadd.f32 %v9613, %v9901
    %v9903 = vpop.f32.mrf.mxu0
    %v9904 = vpop.f32.mrf.mxu0
    %v9905 = vadd.f32 %v9616, %v9904
    %v9906 = vpop.f32.mrf.mxu0
    %9907 = vmatprep.mubr.bf16.mxu0 %v8844
    %9908 = vmatmul.mubr.bf16.gmra.mxu0 %v8789
    %v9909 = vpop.f32.mrf.mxu0
    %v9910 = vadd.f32 %v9621, %v9909
    %v9911 = vpop.f32.mrf.mxu0
    %v9912 = vpop.f32.mrf.mxu0
    %v9913 = vadd.f32 %v9624, %v9912
    %v9914 = vpop.f32.mrf.mxu0
    %9915 = vmatprep.mubr.bf16.mxu0 %v8535
    %9916 = vmatmul.mubr.bf16.gmra.mxu0 %v8790
    %v9917 = vpop.f32.mrf.mxu0
    %v9918 = vadd.f32 %v9629, %v9917
    %v9919 = vpop.f32.mrf.mxu0
    %v9920 = vpop.f32.mrf.mxu0
    %v9921 = vadd.f32 %v9632, %v9920
    %v9922 = vpop.f32.mrf.mxu0
    %9923 = vmatprep.mubr.bf16.mxu0 %v8536
    %9924 = vmatmul.mubr.bf16.gmra.mxu0 %v8791
    %v9925 = vpop.f32.mrf.mxu0
    %v9926 = vadd.f32 %v9637, %v9925
    %v9927 = vpop.f32.mrf.mxu0
    %v9928 = vpop.f32.mrf.mxu0
    %v9929 = vadd.f32 %v9640, %v9928
    %v9930 = vpop.f32.mrf.mxu0
    %9931 = vmatprep.mubr.bf16.mxu0 %v8537
    %9932 = vmatmul.mubr.bf16.gmra.mxu0 %v8792
    %v9933 = vpop.f32.mrf.mxu0
    %v9934 = vadd.f32 %v9645, %v9933
    %v9935 = vpop.f32.mrf.mxu0
    %v9936 = vpop.f32.mrf.mxu0
    %v9937 = vadd.f32 %v9648, %v9936
    %v9938 = vpop.f32.mrf.mxu0
    %9939 = vmatprep.mubr.bf16.mxu0 %v8538
    %9940 = vmatmul.mubr.bf16.gmra.mxu0 %v8793
    %v9941 = vpop.f32.mrf.mxu0
    %v9942 = vadd.f32 %v9653, %v9941
    %v9943 = vpop.f32.mrf.mxu0
    %v9944 = vpop.f32.mrf.mxu0
    %v9945 = vadd.f32 %v9656, %v9944
    %v9946 = vpop.f32.mrf.mxu0
    %9947 = vmatprep.mubr.bf16.mxu0 %v8539
    %9948 = vmatmul.mubr.bf16.gmra.mxu0 %v8794
    %v9949 = vpop.f32.mrf.mxu0
    %v9950 = vadd.f32 %v9661, %v9949
    %v9951 = vpop.f32.mrf.mxu0
    %v9952 = vpop.f32.mrf.mxu0
    %v9953 = vadd.f32 %v9664, %v9952
    %v9954 = vpop.f32.mrf.mxu0
    %9955 = vmatprep.mubr.bf16.mxu0 %v8540
    %9956 = vmatmul.mubr.bf16.gmra.mxu0 %v8795
    %v9957 = vpop.f32.mrf.mxu0
    %v9958 = vadd.f32 %v9669, %v9957
    %v9959 = vpop.f32.mrf.mxu0
    %v9960 = vpop.f32.mrf.mxu0
    %v9961 = vadd.f32 %v9672, %v9960
    %v9962 = vpop.f32.mrf.mxu0
    %9963 = vmatprep.mubr.bf16.mxu0 %v8541
    %9964 = vmatmul.mubr.bf16.gmra.mxu0 %v8796
    %v9965 = vpop.f32.mrf.mxu0
    %v9966 = vadd.f32 %v9677, %v9965
    %v9967 = vpop.f32.mrf.mxu0
    %v9968 = vpop.f32.mrf.mxu0
    %v9969 = vadd.f32 %v9680, %v9968
    %v9970 = vpop.f32.mrf.mxu0
    %9971 = vmatprep.mubr.bf16.mxu0 %v8542
    %9972 = vmatmul.mubr.bf16.gmra.mxu0 %v8797
    %v9973 = vpop.f32.mrf.mxu0
    %v9974 = vadd.f32 %v9685, %v9973
    %v9975 = vpop.f32.mrf.mxu0
    %v9976 = vpop.f32.mrf.mxu0
    %v9977 = vadd.f32 %v9688, %v9976
    %v9978 = vpop.f32.mrf.mxu0
    %9979 = vmatprep.mubr.bf16.mxu0 %v8543
    %9980 = vmatmul.mubr.bf16.gmra.mxu0 %v8798
    %v9981 = vpop.f32.mrf.mxu0
    %v9982 = vadd.f32 %v9693, %v9981
    %v9983 = vpop.f32.mrf.mxu0
    %v9984 = vpop.f32.mrf.mxu0
    %v9985 = vadd.f32 %v9696, %v9984
    %v9986 = vpop.f32.mrf.mxu0
    %9987 = vmatprep.mubr.bf16.mxu0 %v8544
    %9988 = vmatmul.mubr.bf16.gmra.mxu0 %v8799
    %v9989 = vpop.f32.mrf.mxu0
    %v9990 = vadd.f32 %v9701, %v9989
    %v9991 = vpop.f32.mrf.mxu0
    %v9992 = vpop.f32.mrf.mxu0
    %v9993 = vadd.f32 %v9704, %v9992
    %v9994 = vpop.f32.mrf.mxu0
    %9995 = vmatprep.mubr.bf16.mxu0 %v8545
    %9996 = vmatmul.mubr.bf16.gmra.mxu0 %v8800
    %v9997 = vpop.f32.mrf.mxu0
    %v9998 = vadd.f32 %v9709, %v9997
    %v9999 = vpop.f32.mrf.mxu0
    %v10000 = vpop.f32.mrf.mxu0
    %v10001 = vadd.f32 %v9712, %v10000
    %v10002 = vpop.f32.mrf.mxu0
    %10003 = vmatprep.mubr.bf16.mxu0 %v8546
    %10004 = vmatmul.mubr.bf16.gmra.mxu0 %v8801
    %v10005 = vpop.f32.mrf.mxu0
    %v10006 = vadd.f32 %v9717, %v10005
    %v10007 = vpop.f32.mrf.mxu0
    %v10008 = vpop.f32.mrf.mxu0
    %v10009 = vadd.f32 %v9720, %v10008
    %v10010 = vpop.f32.mrf.mxu0
    %10011 = vmatprep.mubr.bf16.mxu0 %v8547
    %10012 = vmatmul.mubr.bf16.gmra.mxu0 %v8802
    %v10013 = vpop.f32.mrf.mxu0
    %v10014 = vadd.f32 %v9725, %v10013
    %v10015 = vpop.f32.mrf.mxu0
    %v10016 = vpop.f32.mrf.mxu0
    %v10017 = vadd.f32 %v9728, %v10016
    %v10018 = vpop.f32.mrf.mxu0
    %10019 = vmatprep.mubr.bf16.mxu0 %v8548
    %10020 = vmatmul.mubr.bf16.gmra.mxu0 %v8803
    %v10021 = vpop.f32.mrf.mxu0
    %v10022 = vadd.f32 %v9733, %v10021
    %v10023 = vpop.f32.mrf.mxu0
    %v10024 = vpop.f32.mrf.mxu0
    %v10025 = vadd.f32 %v9736, %v10024
    %v10026 = vpop.f32.mrf.mxu0
    %10027 = vmatprep.mubr.bf16.mxu0 %v8549
    %10028 = vmatmul.mubr.bf16.gmra.mxu0 %v8804
    %v10029 = vpop.f32.mrf.mxu0
    %v10030 = vadd.f32 %v9741, %v10029
    %v10031 = vpop.f32.mrf.mxu0
    %v10032 = vpop.f32.mrf.mxu0
    %v10033 = vadd.f32 %v9744, %v10032
    %v10034 = vpop.f32.mrf.mxu0
    %10035 = vmatprep.mubr.bf16.mxu0 %v8845
    %10036 = vmatmul.mubr.bf16.gmra.mxu0 %v8805
    %v10037 = vpop.f32.mrf.mxu0
    %v10038 = vadd.f32 %v9749, %v10037
    %v10039 = vpop.f32.mrf.mxu0
    %v10040 = vpop.f32.mrf.mxu0
    %v10041 = vadd.f32 %v9752, %v10040
    %v10042 = vpop.f32.mrf.mxu0
    %10043 = vdwg.mxu0
    %10044 = vmatprep.subr.bf16.mxu0 0
    %10045 = vmatpush1.bf16.msra.mxu0 %v9361
    %10046 = vmatprep.subr.bf16.mxu0 0
    %10047 = vmatpush1.bf16.msra.mxu0 %v9360
    %10048 = vmatprep.subr.bf16.mxu0 0
    %10049 = vmatpush1.bf16.msra.mxu0 %v9359
    %10050 = vmatprep.subr.bf16.mxu0 0
    %10051 = vmatpush1.bf16.msra.mxu0 %v9358
    %10052 = vmatprep.subr.bf16.mxu0 0
    %10053 = vmatpush1.bf16.msra.mxu0 %v9357
    %10054 = vmatprep.subr.bf16.mxu0 0
    %10055 = vmatpush1.bf16.msra.mxu0 %v9356
    %10056 = vmatprep.subr.bf16.mxu0 0
    %10057 = vmatpush1.bf16.msra.mxu0 %v9355
    %10058 = vmatprep.subr.bf16.mxu0 0
    %10059 = vmatpush1.bf16.msra.mxu0 %v9354
    %10060 = vmatprep.subr.bf16.mxu0 0
    %10061 = vmatpush2.bf16.msra.mxu0 %v9369
    %10062 = vmatprep.subr.bf16.mxu0 0
    %10063 = vmatpush2.bf16.msra.mxu0 %v9368
    %10064 = vmatprep.subr.bf16.mxu0 0
    %10065 = vmatpush2.bf16.msra.mxu0 %v9367
    %10066 = vmatprep.subr.bf16.mxu0 0
    %10067 = vmatpush2.bf16.msra.mxu0 %v9366
    %10068 = vmatprep.subr.bf16.mxu0 0
    %10069 = vmatpush2.bf16.msra.mxu0 %v9365
    %10070 = vmatprep.subr.bf16.mxu0 0
    %10071 = vmatpush2.bf16.msra.mxu0 %v9364
    %10072 = vmatprep.subr.bf16.mxu0 0
    %10073 = vmatpush2.bf16.msra.mxu0 %v9363
    %10074 = vmatprep.subr.bf16.mxu0 0
    %10075 = vmatpush2.bf16.msra.mxu0 %v9362
    %10076 = vmatprep.mubr.bf16.mxu0 %v8775
    %10077 = vmatmul.mubr.bf16.gmra.mxu0 %v8647
    %v10078 = vpop.f32.mrf.mxu0
    %v10079 = vadd.f32 %v9790, %v10078
    %v10080 = vpop.f32.mrf.mxu0
    %v10081 = vpop.f32.mrf.mxu0
    %v10082 = vadd.f32 %v9793, %v10081
    %v10083 = vpop.f32.mrf.mxu0
    %10084 = vmatprep.mubr.bf16.mxu0 %v8776
    %10085 = vmatmul.mubr.bf16.gmra.mxu0 %v8648
    %v10086 = vpop.f32.mrf.mxu0
    %v10087 = vadd.f32 %v9798, %v10086
    %v10088 = vpop.f32.mrf.mxu0
    %v10089 = vpop.f32.mrf.mxu0
    %v10090 = vadd.f32 %v9801, %v10089
    %v10091 = vpop.f32.mrf.mxu0
    %10092 = vmatprep.mubr.bf16.mxu0 %v8777
    %10093 = vmatmul.mubr.bf16.gmra.mxu0 %v8649
    %v10094 = vpop.f32.mrf.mxu0
    %v10095 = vadd.f32 %v9806, %v10094
    %v10096 = vpop.f32.mrf.mxu0
    %v10097 = vpop.f32.mrf.mxu0
    %v10098 = vadd.f32 %v9809, %v10097
    %v10099 = vpop.f32.mrf.mxu0
    %10100 = vmatprep.mubr.bf16.mxu0 %v8778
    %10101 = vmatmul.mubr.bf16.gmra.mxu0 %v8650
    %v10102 = vpop.f32.mrf.mxu0
    %v10103 = vadd.f32 %v9814, %v10102
    %v10104 = vpop.f32.mrf.mxu0
    %v10105 = vpop.f32.mrf.mxu0
    %v10106 = vadd.f32 %v9817, %v10105
    %v10107 = vpop.f32.mrf.mxu0
    %10108 = vmatprep.mubr.bf16.mxu0 %v8779
    %10109 = vmatmul.mubr.bf16.gmra.mxu0 %v8651
    %v10110 = vpop.f32.mrf.mxu0
    %v10111 = vadd.f32 %v9822, %v10110
    %v10112 = vpop.f32.mrf.mxu0
    %v10113 = vpop.f32.mrf.mxu0
    %v10114 = vadd.f32 %v9825, %v10113
    %v10115 = vpop.f32.mrf.mxu0
    %10116 = vmatprep.mubr.bf16.mxu0 %v8780
    %10117 = vmatmul.mubr.bf16.gmra.mxu0 %v8652
    %v10118 = vpop.f32.mrf.mxu0
    %v10119 = vadd.f32 %v9830, %v10118
    %v10120 = vpop.f32.mrf.mxu0
    %v10121 = vpop.f32.mrf.mxu0
    %v10122 = vadd.f32 %v9833, %v10121
    %v10123 = vpop.f32.mrf.mxu0
    %10124 = vmatprep.mubr.bf16.mxu0 %v8781
    %10125 = vmatmul.mubr.bf16.gmra.mxu0 %v8653
    %v10126 = vpop.f32.mrf.mxu0
    %v10127 = vadd.f32 %v9838, %v10126
    %v10128 = vpop.f32.mrf.mxu0
    %v10129 = vpop.f32.mrf.mxu0
    %v10130 = vadd.f32 %v9841, %v10129
    %v10131 = vpop.f32.mrf.mxu0
    %10132 = vmatprep.mubr.bf16.mxu0 %v8782
    %10133 = vmatmul.mubr.bf16.gmra.mxu0 %v8654
    %v10134 = vpop.f32.mrf.mxu0
    %v10135 = vadd.f32 %v9846, %v10134
    %v10136 = vpop.f32.mrf.mxu0
    %v10137 = vpop.f32.mrf.mxu0
    %v10138 = vadd.f32 %v9849, %v10137
    %v10139 = vpop.f32.mrf.mxu0
    %10140 = vmatprep.mubr.bf16.mxu0 %v8783
    %10141 = vmatmul.mubr.bf16.gmra.mxu0 %v8655
    %v10142 = vpop.f32.mrf.mxu0
    %v10143 = vadd.f32 %v9854, %v10142
    %v10144 = vpop.f32.mrf.mxu0
    %v10145 = vpop.f32.mrf.mxu0
    %v10146 = vadd.f32 %v9857, %v10145
    %v10147 = vpop.f32.mrf.mxu0
    %10148 = vmatprep.mubr.bf16.mxu0 %v8784
    %10149 = vmatmul.mubr.bf16.gmra.mxu0 %v8656
    %v10150 = vpop.f32.mrf.mxu0
    %v10151 = vadd.f32 %v9862, %v10150
    %v10152 = vpop.f32.mrf.mxu0
    %v10153 = vpop.f32.mrf.mxu0
    %v10154 = vadd.f32 %v9865, %v10153
    %v10155 = vpop.f32.mrf.mxu0
    %10156 = vmatprep.mubr.bf16.mxu0 %v8785
    %10157 = vmatmul.mubr.bf16.gmra.mxu0 %v8657
    %v10158 = vpop.f32.mrf.mxu0
    %v10159 = vadd.f32 %v9870, %v10158
    %v10160 = vpop.f32.mrf.mxu0
    %v10161 = vpop.f32.mrf.mxu0
    %v10162 = vadd.f32 %v9873, %v10161
    %v10163 = vpop.f32.mrf.mxu0
    %10164 = vmatprep.mubr.bf16.mxu0 %v8786
    %10165 = vmatmul.mubr.bf16.gmra.mxu0 %v8658
    %v10166 = vpop.f32.mrf.mxu0
    %v10167 = vadd.f32 %v9878, %v10166
    %v10168 = vpop.f32.mrf.mxu0
    %v10169 = vpop.f32.mrf.mxu0
    %v10170 = vadd.f32 %v9881, %v10169
    %v10171 = vpop.f32.mrf.mxu0
    %10172 = vmatprep.mubr.bf16.mxu0 %v8787
    %10173 = vmatmul.mubr.bf16.gmra.mxu0 %v8659
    %v10174 = vpop.f32.mrf.mxu0
    %v10175 = vadd.f32 %v9886, %v10174
    %v10176 = vpop.f32.mrf.mxu0
    %v10177 = vpop.f32.mrf.mxu0
    %v10178 = vadd.f32 %v9889, %v10177
    %v10179 = vpop.f32.mrf.mxu0
    %10180 = vmatprep.mubr.bf16.mxu0 %v8788
    %10181 = vmatmul.mubr.bf16.gmra.mxu0 %v8660
    %v10182 = vpop.f32.mrf.mxu0
    %v10183 = vadd.f32 %v9894, %v10182
    %v10184 = vpop.f32.mrf.mxu0
    %v10185 = vpop.f32.mrf.mxu0
    %v10186 = vadd.f32 %v9897, %v10185
    %v10187 = vpop.f32.mrf.mxu0
    %10188 = vmatprep.mubr.bf16.mxu0 %v8789
    %10189 = vmatmul.mubr.bf16.gmra.mxu0 %v8661
    %v10190 = vpop.f32.mrf.mxu0
    %v10191 = vadd.f32 %v9902, %v10190
    %v10192 = vpop.f32.mrf.mxu0
    %v10193 = vpop.f32.mrf.mxu0
    %v10194 = vadd.f32 %v9905, %v10193
    %v10195 = vpop.f32.mrf.mxu0
    %10196 = vmatprep.mubr.bf16.mxu0 %v8860
    %10197 = vmatmul.mubr.bf16.gmra.mxu0 %v8852
    %v10198 = vpop.f32.mrf.mxu0
    %v10199 = vadd.f32 %v9910, %v10198
    %v10200 = vpop.f32.mrf.mxu0
    %v10201 = vpop.f32.mrf.mxu0
    %v10202 = vadd.f32 %v9913, %v10201
    %v10203 = vpop.f32.mrf.mxu0
    %10204 = vmatprep.mubr.bf16.mxu0 %v8791
    %10205 = vmatmul.mubr.bf16.gmra.mxu0 %v8663
    %v10206 = vpop.f32.mrf.mxu0
    %v10207 = vadd.f32 %v9918, %v10206
    %v10208 = vpop.f32.mrf.mxu0
    %v10209 = vpop.f32.mrf.mxu0
    %v10210 = vadd.f32 %v9921, %v10209
    %v10211 = vpop.f32.mrf.mxu0
    %10212 = vmatprep.mubr.bf16.mxu0 %v8792
    %10213 = vmatmul.mubr.bf16.gmra.mxu0 %v8664
    %v10214 = vpop.f32.mrf.mxu0
    %v10215 = vadd.f32 %v9926, %v10214
    %v10216 = vpop.f32.mrf.mxu0
    %v10217 = vpop.f32.mrf.mxu0
    %v10218 = vadd.f32 %v9929, %v10217
    %v10219 = vpop.f32.mrf.mxu0
    %10220 = vmatprep.mubr.bf16.mxu0 %v8793
    %10221 = vmatmul.mubr.bf16.gmra.mxu0 %v8665
    %v10222 = vpop.f32.mrf.mxu0
    %v10223 = vadd.f32 %v9934, %v10222
    %v10224 = vpop.f32.mrf.mxu0
    %v10225 = vpop.f32.mrf.mxu0
    %v10226 = vadd.f32 %v9937, %v10225
    %v10227 = vpop.f32.mrf.mxu0
    %10228 = vmatprep.mubr.bf16.mxu0 %v8794
    %10229 = vmatmul.mubr.bf16.gmra.mxu0 %v8666
    %v10230 = vpop.f32.mrf.mxu0
    %v10231 = vadd.f32 %v9942, %v10230
    %v10232 = vpop.f32.mrf.mxu0
    %v10233 = vpop.f32.mrf.mxu0
    %v10234 = vadd.f32 %v9945, %v10233
    %v10235 = vpop.f32.mrf.mxu0
    %10236 = vmatprep.mubr.bf16.mxu0 %v8795
    %10237 = vmatmul.mubr.bf16.gmra.mxu0 %v8667
    %v10238 = vpop.f32.mrf.mxu0
    %v10239 = vadd.f32 %v9950, %v10238
    %v10240 = vpop.f32.mrf.mxu0
    %v10241 = vpop.f32.mrf.mxu0
    %v10242 = vadd.f32 %v9953, %v10241
    %v10243 = vpop.f32.mrf.mxu0
    %10244 = vmatprep.mubr.bf16.mxu0 %v8796
    %10245 = vmatmul.mubr.bf16.gmra.mxu0 %v8668
    %v10246 = vpop.f32.mrf.mxu0
    %v10247 = vadd.f32 %v9958, %v10246
    %v10248 = vpop.f32.mrf.mxu0
    %v10249 = vpop.f32.mrf.mxu0
    %v10250 = vadd.f32 %v9961, %v10249
    %v10251 = vpop.f32.mrf.mxu0
    %10252 = vmatprep.mubr.bf16.mxu0 %v8797
    %10253 = vmatmul.mubr.bf16.gmra.mxu0 %v8669
    %v10254 = vpop.f32.mrf.mxu0
    %v10255 = vadd.f32 %v9966, %v10254
    %v10256 = vpop.f32.mrf.mxu0
    %v10257 = vpop.f32.mrf.mxu0
    %v10258 = vadd.f32 %v9969, %v10257
    %v10259 = vpop.f32.mrf.mxu0
    %10260 = vmatprep.mubr.bf16.mxu0 %v8798
    %10261 = vmatmul.mubr.bf16.gmra.mxu0 %v8670
    %v10262 = vpop.f32.mrf.mxu0
    %v10263 = vadd.f32 %v9974, %v10262
    %v10264 = vpop.f32.mrf.mxu0
    %v10265 = vpop.f32.mrf.mxu0
    %v10266 = vadd.f32 %v9977, %v10265
    %v10267 = vpop.f32.mrf.mxu0
    %10268 = vmatprep.mubr.bf16.mxu0 %v8799
    %10269 = vmatmul.mubr.bf16.gmra.mxu0 %v8671
    %v10270 = vpop.f32.mrf.mxu0
    %v10271 = vadd.f32 %v9982, %v10270
    %v10272 = vpop.f32.mrf.mxu0
    %v10273 = vpop.f32.mrf.mxu0
    %v10274 = vadd.f32 %v9985, %v10273
    %v10275 = vpop.f32.mrf.mxu0
    %10276 = vmatprep.mubr.bf16.mxu0 %v8800
    %10277 = vmatmul.mubr.bf16.gmra.mxu0 %v8672
    %v10278 = vpop.f32.mrf.mxu0
    %v10279 = vadd.f32 %v9990, %v10278
    %v10280 = vpop.f32.mrf.mxu0
    %v10281 = vpop.f32.mrf.mxu0
    %v10282 = vadd.f32 %v9993, %v10281
    %v10283 = vpop.f32.mrf.mxu0
    %10284 = vmatprep.mubr.bf16.mxu0 %v8801
    %10285 = vmatmul.mubr.bf16.gmra.mxu0 %v8673
    %v10286 = vpop.f32.mrf.mxu0
    %v10287 = vadd.f32 %v9998, %v10286
    %v10288 = vpop.f32.mrf.mxu0
    %v10289 = vpop.f32.mrf.mxu0
    %v10290 = vadd.f32 %v10001, %v10289
    %v10291 = vpop.f32.mrf.mxu0
    %10292 = vmatprep.mubr.bf16.mxu0 %v8802
    %10293 = vmatmul.mubr.bf16.gmra.mxu0 %v8674
    %v10294 = vpop.f32.mrf.mxu0
    %v10295 = vadd.f32 %v10006, %v10294
    %v10296 = vpop.f32.mrf.mxu0
    %v10297 = vpop.f32.mrf.mxu0
    %v10298 = vadd.f32 %v10009, %v10297
    %v10299 = vpop.f32.mrf.mxu0
    %10300 = vmatprep.mubr.bf16.mxu0 %v8803
    %10301 = vmatmul.mubr.bf16.gmra.mxu0 %v8675
    %v10302 = vpop.f32.mrf.mxu0
    %v10303 = vadd.f32 %v10014, %v10302
    %v10304 = vpop.f32.mrf.mxu0
    %v10305 = vpop.f32.mrf.mxu0
    %v10306 = vadd.f32 %v10017, %v10305
    %v10307 = vpop.f32.mrf.mxu0
    %10308 = vmatprep.mubr.bf16.mxu0 %v8804
    %10309 = vmatmul.mubr.bf16.gmra.mxu0 %v8676
    %v10310 = vpop.f32.mrf.mxu0
    %v10311 = vadd.f32 %v10022, %v10310
    %v10312 = vpop.f32.mrf.mxu0
    %v10313 = vpop.f32.mrf.mxu0
    %v10314 = vadd.f32 %v10025, %v10313
    %v10315 = vpop.f32.mrf.mxu0
    %10316 = vmatprep.mubr.bf16.mxu0 %v8805
    %10317 = vmatmul.mubr.bf16.gmra.mxu0 %v8677
    %v10318 = vpop.f32.mrf.mxu0
    %v10319 = vadd.f32 %v10030, %v10318
    %v10320 = vpop.f32.mrf.mxu0
    %v10321 = vpop.f32.mrf.mxu0
    %v10322 = vadd.f32 %v10033, %v10321
    %v10323 = vpop.f32.mrf.mxu0
    %10324 = vmatprep.mubr.bf16.mxu0 %v8861
    %10325 = vmatmul.mubr.bf16.gmra.mxu0 %v8853
    %v10326 = vpop.f32.mrf.mxu0
    %v10327 = vadd.f32 %v10038, %v10326
    %v10328 = vpop.f32.mrf.mxu0
    %v10329 = vpop.f32.mrf.mxu0
    %v10330 = vadd.f32 %v10041, %v10329
    %v10331 = vpop.f32.mrf.mxu0
    %10332 = vdwg.mxu0
    %10333 = vmatprep.subr.bf16.mxu0 0
    %10334 = vmatpush1.bf16.msra.mxu0 %v9377
    %10335 = vmatprep.subr.bf16.mxu0 0
    %10336 = vmatpush1.bf16.msra.mxu0 %v9376
    %10337 = vmatprep.subr.bf16.mxu0 0
    %10338 = vmatpush1.bf16.msra.mxu0 %v9375
    %10339 = vmatprep.subr.bf16.mxu0 0
    %10340 = vmatpush1.bf16.msra.mxu0 %v9374
    %10341 = vmatprep.subr.bf16.mxu0 0
    %10342 = vmatpush1.bf16.msra.mxu0 %v9373
    %10343 = vmatprep.subr.bf16.mxu0 0
    %10344 = vmatpush1.bf16.msra.mxu0 %v9372
    %10345 = vmatprep.subr.bf16.mxu0 0
    %10346 = vmatpush1.bf16.msra.mxu0 %v9371
    %10347 = vmatprep.subr.bf16.mxu0 0
    %10348 = vmatpush1.bf16.msra.mxu0 %v9370
    %10349 = vmatprep.subr.bf16.mxu0 0
    %10350 = vmatpush2.bf16.msra.mxu0 %v9385
    %10351 = vmatprep.subr.bf16.mxu0 0
    %10352 = vmatpush2.bf16.msra.mxu0 %v9384
    %10353 = vmatprep.subr.bf16.mxu0 0
    %10354 = vmatpush2.bf16.msra.mxu0 %v9383
    %10355 = vmatprep.subr.bf16.mxu0 0
    %10356 = vmatpush2.bf16.msra.mxu0 %v9382
    %10357 = vmatprep.subr.bf16.mxu0 0
    %10358 = vmatpush2.bf16.msra.mxu0 %v9381
    %10359 = vmatprep.subr.bf16.mxu0 0
    %10360 = vmatpush2.bf16.msra.mxu0 %v9380
    %10361 = vmatprep.subr.bf16.mxu0 0
    %10362 = vmatpush2.bf16.msra.mxu0 %v9379
    %10363 = vmatprep.subr.bf16.mxu0 0
    %10364 = vmatpush2.bf16.msra.mxu0 %v9378
    %10365 = vmatprep.mubr.bf16.mxu0 %v8648
    %10366 = vmatmul.mubr.bf16.gmra.mxu0 %v8520
    %v10367 = vpop.f32.mrf.mxu0
    %v10368 = vadd.f32 %v10079, %v10367
    %v10369 = vpop.f32.mrf.mxu0
    %v10370 = vpop.f32.mrf.mxu0
    %v10371 = vadd.f32 %v10082, %v10370
    %v10372 = vpop.f32.mrf.mxu0
    %10373 = vmatprep.mubr.bf16.mxu0 %v8649
    %10374 = vmatmul.mubr.bf16.gmra.mxu0 %v8521
    %v10375 = vpop.f32.mrf.mxu0
    %v10376 = vadd.f32 %v10087, %v10375
    %v10377 = vpop.f32.mrf.mxu0
    %v10378 = vpop.f32.mrf.mxu0
    %v10379 = vadd.f32 %v10090, %v10378
    %v10380 = vpop.f32.mrf.mxu0
    %10381 = vmatprep.mubr.bf16.mxu0 %v8650
    %10382 = vmatmul.mubr.bf16.gmra.mxu0 %v8522
    %v10383 = vpop.f32.mrf.mxu0
    %v10384 = vadd.f32 %v10095, %v10383
    %v10385 = vpop.f32.mrf.mxu0
    %v10386 = vpop.f32.mrf.mxu0
    %v10387 = vadd.f32 %v10098, %v10386
    %v10388 = vpop.f32.mrf.mxu0
    %10389 = vmatprep.mubr.bf16.mxu0 %v8651
    %10390 = vmatmul.mubr.bf16.gmra.mxu0 %v8523
    %v10391 = vpop.f32.mrf.mxu0
    %v10392 = vadd.f32 %v10103, %v10391
    %v10393 = vpop.f32.mrf.mxu0
    %v10394 = vpop.f32.mrf.mxu0
    %v10395 = vadd.f32 %v10106, %v10394
    %v10396 = vpop.f32.mrf.mxu0
    %10397 = vmatprep.mubr.bf16.mxu0 %v8652
    %10398 = vmatmul.mubr.bf16.gmra.mxu0 %v8524
    %v10399 = vpop.f32.mrf.mxu0
    %v10400 = vadd.f32 %v10111, %v10399
    %v10401 = vpop.f32.mrf.mxu0
    %v10402 = vpop.f32.mrf.mxu0
    %v10403 = vadd.f32 %v10114, %v10402
    %v10404 = vpop.f32.mrf.mxu0
    %10405 = vmatprep.mubr.bf16.mxu0 %v8653
    %10406 = vmatmul.mubr.bf16.gmra.mxu0 %v8525
    %v10407 = vpop.f32.mrf.mxu0
    %v10408 = vadd.f32 %v10119, %v10407
    %v10409 = vpop.f32.mrf.mxu0
    %v10410 = vpop.f32.mrf.mxu0
    %v10411 = vadd.f32 %v10122, %v10410
    %v10412 = vpop.f32.mrf.mxu0
    %10413 = vmatprep.mubr.bf16.mxu0 %v8654
    %10414 = vmatmul.mubr.bf16.gmra.mxu0 %v8526
    %v10415 = vpop.f32.mrf.mxu0
    %v10416 = vadd.f32 %v10127, %v10415
    %v10417 = vpop.f32.mrf.mxu0
    %v10418 = vpop.f32.mrf.mxu0
    %v10419 = vadd.f32 %v10130, %v10418
    %v10420 = vpop.f32.mrf.mxu0
    %10421 = vmatprep.mubr.bf16.mxu0 %v8655
    %10422 = vmatmul.mubr.bf16.gmra.mxu0 %v8527
    %v10423 = vpop.f32.mrf.mxu0
    %v10424 = vadd.f32 %v10135, %v10423
    %v10425 = vpop.f32.mrf.mxu0
    %v10426 = vpop.f32.mrf.mxu0
    %v10427 = vadd.f32 %v10138, %v10426
    %v10428 = vpop.f32.mrf.mxu0
    %10429 = vmatprep.mubr.bf16.mxu0 %v8656
    %10430 = vmatmul.mubr.bf16.gmra.mxu0 %v8528
    %v10431 = vpop.f32.mrf.mxu0
    %v10432 = vadd.f32 %v10143, %v10431
    %v10433 = vpop.f32.mrf.mxu0
    %v10434 = vpop.f32.mrf.mxu0
    %v10435 = vadd.f32 %v10146, %v10434
    %v10436 = vpop.f32.mrf.mxu0
    %10437 = vmatprep.mubr.bf16.mxu0 %v8657
    %10438 = vmatmul.mubr.bf16.gmra.mxu0 %v8529
    %v10439 = vpop.f32.mrf.mxu0
    %v10440 = vadd.f32 %v10151, %v10439
    %v10441 = vpop.f32.mrf.mxu0
    %v10442 = vpop.f32.mrf.mxu0
    %v10443 = vadd.f32 %v10154, %v10442
    %v10444 = vpop.f32.mrf.mxu0
    %10445 = vmatprep.mubr.bf16.mxu0 %v8658
    %10446 = vmatmul.mubr.bf16.gmra.mxu0 %v8530
    %v10447 = vpop.f32.mrf.mxu0
    %v10448 = vadd.f32 %v10159, %v10447
    %v10449 = vpop.f32.mrf.mxu0
    %v10450 = vpop.f32.mrf.mxu0
    %v10451 = vadd.f32 %v10162, %v10450
    %v10452 = vpop.f32.mrf.mxu0
    %10453 = vmatprep.mubr.bf16.mxu0 %v8659
    %10454 = vmatmul.mubr.bf16.gmra.mxu0 %v8531
    %v10455 = vpop.f32.mrf.mxu0
    %v10456 = vadd.f32 %v10167, %v10455
    %v10457 = vpop.f32.mrf.mxu0
    %v10458 = vpop.f32.mrf.mxu0
    %v10459 = vadd.f32 %v10170, %v10458
    %v10460 = vpop.f32.mrf.mxu0
    %10461 = vmatprep.mubr.bf16.mxu0 %v8660
    %10462 = vmatmul.mubr.bf16.gmra.mxu0 %v8532
    %v10463 = vpop.f32.mrf.mxu0
    %v10464 = vadd.f32 %v10175, %v10463
    %v10465 = vpop.f32.mrf.mxu0
    %v10466 = vpop.f32.mrf.mxu0
    %v10467 = vadd.f32 %v10178, %v10466
    %v10468 = vpop.f32.mrf.mxu0
    %10469 = vmatprep.mubr.bf16.mxu0 %v8661
    %10470 = vmatmul.mubr.bf16.gmra.mxu0 %v8533
    %v10471 = vpop.f32.mrf.mxu0
    %v10472 = vadd.f32 %v10183, %v10471
    %v10473 = vpop.f32.mrf.mxu0
    %v10474 = vpop.f32.mrf.mxu0
    %v10475 = vadd.f32 %v10186, %v10474
    %v10476 = vpop.f32.mrf.mxu0
    %10477 = vmatprep.mubr.bf16.mxu0 %v8852
    %10478 = vmatmul.mubr.bf16.gmra.mxu0 %v8844
    %v10479 = vpop.f32.mrf.mxu0
    %v10480 = vadd.f32 %v10191, %v10479
    %v10481 = vpop.f32.mrf.mxu0
    %v10482 = vpop.f32.mrf.mxu0
    %v10483 = vadd.f32 %v10194, %v10482
    %v10484 = vpop.f32.mrf.mxu0
    %10485 = vmatprep.mubr.bf16.mxu0 %v8878
    %10486 = vmatmul.mubr.bf16.gmra.mxu0 %v8870
    %v10487 = vpop.f32.mrf.mxu0
    %v10488 = vadd.f32 %v10199, %v10487
    %v10489 = vpop.f32.mrf.mxu0
    %v10490 = vpop.f32.mrf.mxu0
    %v10491 = vadd.f32 %v10202, %v10490
    %v10492 = vpop.f32.mrf.mxu0
    %10493 = vmatprep.mubr.bf16.mxu0 %v8664
    %10494 = vmatmul.mubr.bf16.gmra.mxu0 %v8536
    %v10495 = vpop.f32.mrf.mxu0
    %v10496 = vadd.f32 %v10207, %v10495
    %v10497 = vpop.f32.mrf.mxu0
    %v10498 = vpop.f32.mrf.mxu0
    %v10499 = vadd.f32 %v10210, %v10498
    %v10500 = vpop.f32.mrf.mxu0
    %10501 = vmatprep.mubr.bf16.mxu0 %v8665
    %10502 = vmatmul.mubr.bf16.gmra.mxu0 %v8537
    %v10503 = vpop.f32.mrf.mxu0
    %v10504 = vadd.f32 %v10215, %v10503
    %v10505 = vpop.f32.mrf.mxu0
    %v10506 = vpop.f32.mrf.mxu0
    %v10507 = vadd.f32 %v10218, %v10506
    %v10508 = vpop.f32.mrf.mxu0
    %10509 = vmatprep.mubr.bf16.mxu0 %v8666
    %10510 = vmatmul.mubr.bf16.gmra.mxu0 %v8538
    %v10511 = vpop.f32.mrf.mxu0
    %v10512 = vadd.f32 %v10223, %v10511
    %v10513 = vpop.f32.mrf.mxu0
    %v10514 = vpop.f32.mrf.mxu0
    %v10515 = vadd.f32 %v10226, %v10514
    %v10516 = vpop.f32.mrf.mxu0
    %10517 = vmatprep.mubr.bf16.mxu0 %v8667
    %10518 = vmatmul.mubr.bf16.gmra.mxu0 %v8539
    %v10519 = vpop.f32.mrf.mxu0
    %v10520 = vadd.f32 %v10231, %v10519
    %v10521 = vpop.f32.mrf.mxu0
    %v10522 = vpop.f32.mrf.mxu0
    %v10523 = vadd.f32 %v10234, %v10522
    %v10524 = vpop.f32.mrf.mxu0
    %10525 = vmatprep.mubr.bf16.mxu0 %v8668
    %10526 = vmatmul.mubr.bf16.gmra.mxu0 %v8540
    %v10527 = vpop.f32.mrf.mxu0
    %v10528 = vadd.f32 %v10239, %v10527
    %v10529 = vpop.f32.mrf.mxu0
    %v10530 = vpop.f32.mrf.mxu0
    %v10531 = vadd.f32 %v10242, %v10530
    %v10532 = vpop.f32.mrf.mxu0
    %10533 = vmatprep.mubr.bf16.mxu0 %v8669
    %10534 = vmatmul.mubr.bf16.gmra.mxu0 %v8541
    %v10535 = vpop.f32.mrf.mxu0
    %v10536 = vadd.f32 %v10247, %v10535
    %v10537 = vpop.f32.mrf.mxu0
    %v10538 = vpop.f32.mrf.mxu0
    %v10539 = vadd.f32 %v10250, %v10538
    %v10540 = vpop.f32.mrf.mxu0
    %10541 = vmatprep.mubr.bf16.mxu0 %v8670
    %10542 = vmatmul.mubr.bf16.gmra.mxu0 %v8542
    %v10543 = vpop.f32.mrf.mxu0
    %v10544 = vadd.f32 %v10255, %v10543
    %v10545 = vpop.f32.mrf.mxu0
    %v10546 = vpop.f32.mrf.mxu0
    %v10547 = vadd.f32 %v10258, %v10546
    %v10548 = vpop.f32.mrf.mxu0
    %10549 = vmatprep.mubr.bf16.mxu0 %v8671
    %10550 = vmatmul.mubr.bf16.gmra.mxu0 %v8543
    %v10551 = vpop.f32.mrf.mxu0
    %v10552 = vadd.f32 %v10263, %v10551
    %v10553 = vpop.f32.mrf.mxu0
    %v10554 = vpop.f32.mrf.mxu0
    %v10555 = vadd.f32 %v10266, %v10554
    %v10556 = vpop.f32.mrf.mxu0
    %10557 = vmatprep.mubr.bf16.mxu0 %v8672
    %10558 = vmatmul.mubr.bf16.gmra.mxu0 %v8544
    %v10559 = vpop.f32.mrf.mxu0
    %v10560 = vadd.f32 %v10271, %v10559
    %v10561 = vpop.f32.mrf.mxu0
    %v10562 = vpop.f32.mrf.mxu0
    %v10563 = vadd.f32 %v10274, %v10562
    %v10564 = vpop.f32.mrf.mxu0
    %10565 = vmatprep.mubr.bf16.mxu0 %v8673
    %10566 = vmatmul.mubr.bf16.gmra.mxu0 %v8545
    %v10567 = vpop.f32.mrf.mxu0
    %v10568 = vadd.f32 %v10279, %v10567
    %v10569 = vpop.f32.mrf.mxu0
    %v10570 = vpop.f32.mrf.mxu0
    %v10571 = vadd.f32 %v10282, %v10570
    %v10572 = vpop.f32.mrf.mxu0
    %10573 = vmatprep.mubr.bf16.mxu0 %v8674
    %10574 = vmatmul.mubr.bf16.gmra.mxu0 %v8546
    %v10575 = vpop.f32.mrf.mxu0
    %v10576 = vadd.f32 %v10287, %v10575
    %v10577 = vpop.f32.mrf.mxu0
    %v10578 = vpop.f32.mrf.mxu0
    %v10579 = vadd.f32 %v10290, %v10578
    %v10580 = vpop.f32.mrf.mxu0
    %10581 = vmatprep.mubr.bf16.mxu0 %v8675
    %10582 = vmatmul.mubr.bf16.gmra.mxu0 %v8547
    %v10583 = vpop.f32.mrf.mxu0
    %v10584 = vadd.f32 %v10295, %v10583
    %v10585 = vpop.f32.mrf.mxu0
    %v10586 = vpop.f32.mrf.mxu0
    %v10587 = vadd.f32 %v10298, %v10586
    %v10588 = vpop.f32.mrf.mxu0
    %10589 = vmatprep.mubr.bf16.mxu0 %v8676
    %10590 = vmatmul.mubr.bf16.gmra.mxu0 %v8548
    %v10591 = vpop.f32.mrf.mxu0
    %v10592 = vadd.f32 %v10303, %v10591
    %v10593 = vpop.f32.mrf.mxu0
    %v10594 = vpop.f32.mrf.mxu0
    %v10595 = vadd.f32 %v10306, %v10594
    %v10596 = vpop.f32.mrf.mxu0
    %10597 = vmatprep.mubr.bf16.mxu0 %v8677
    %10598 = vmatmul.mubr.bf16.gmra.mxu0 %v8549
    %v10599 = vpop.f32.mrf.mxu0
    %v10600 = vadd.f32 %v10311, %v10599
    %v10601 = vpop.f32.mrf.mxu0
    %v10602 = vpop.f32.mrf.mxu0
    %v10603 = vadd.f32 %v10314, %v10602
    %v10604 = vpop.f32.mrf.mxu0
    %10605 = vmatprep.mubr.bf16.mxu0 %v8853
    %10606 = vmatmul.mubr.bf16.gmra.mxu0 %v8845
    %v10607 = vpop.f32.mrf.mxu0
    %v10608 = vadd.f32 %v10319, %v10607
    %v10609 = vpop.f32.mrf.mxu0
    %v10610 = vpop.f32.mrf.mxu0
    %v10611 = vadd.f32 %v10322, %v10610
    %v10612 = vpop.f32.mrf.mxu0
    %10613 = vmatprep.mubr.bf16.mxu0 %v8879
    %10614 = vmatmul.mubr.bf16.gmra.mxu0 %v8871
    %v10615 = vpop.f32.mrf.mxu0
    %v10616 = vadd.f32 %v10327, %v10615
    %v10617 = vpop.f32.mrf.mxu0
    %v10618 = vpop.f32.mrf.mxu0
    %v10619 = vadd.f32 %v10330, %v10618
    %v10620 = vpop.f32.mrf.mxu0
    %10621 = vdwg.mxu0
    %10622 = vmatprep.subr.bf16.mxu0 0
    %10623 = vmatpush1.bf16.msra.mxu0 %v9393
    %10624 = vmatprep.subr.bf16.mxu0 0
    %10625 = vmatpush1.bf16.msra.mxu0 %v9392
    %10626 = vmatprep.subr.bf16.mxu0 0
    %10627 = vmatpush1.bf16.msra.mxu0 %v9391
    %10628 = vmatprep.subr.bf16.mxu0 0
    %10629 = vmatpush1.bf16.msra.mxu0 %v9390
    %10630 = vmatprep.subr.bf16.mxu0 0
    %10631 = vmatpush1.bf16.msra.mxu0 %v9389
    %10632 = vmatprep.subr.bf16.mxu0 0
    %10633 = vmatpush1.bf16.msra.mxu0 %v9388
    %10634 = vmatprep.subr.bf16.mxu0 0
    %10635 = vmatpush1.bf16.msra.mxu0 %v9387
    %10636 = vmatprep.subr.bf16.mxu0 0
    %10637 = vmatpush1.bf16.msra.mxu0 %v9386
    %10638 = vmatprep.subr.bf16.mxu0 0
    %10639 = vmatpush2.bf16.msra.mxu0 0
    %10640 = vmatprep.subr.bf16.mxu0 0
    %10641 = vmatpush2.bf16.msra.mxu0 0
    %10642 = vmatprep.subr.bf16.mxu0 0
    %10643 = vmatpush2.bf16.msra.mxu0 0
    %10644 = vmatprep.subr.bf16.mxu0 0
    %10645 = vmatpush2.bf16.msra.mxu0 0
    %10646 = vmatprep.subr.bf16.mxu0 0
    %10647 = vmatpush2.bf16.msra.mxu0 0
    %10648 = vmatprep.subr.bf16.mxu0 0
    %10649 = vmatpush2.bf16.msra.mxu0 0
    %10650 = vmatprep.subr.bf16.mxu0 0
    %10651 = vmatpush2.bf16.msra.mxu0 0
    %10652 = vmatprep.subr.bf16.mxu0 0
    %10653 = vmatpush2.bf16.msra.mxu0 0
    %10654 = vmatprep.mubr.bf16.mxu0 0
    %10655 = vmatmul.mubr.bf16.gmra.mxu0 %v8776
    %v10656 = vpop.f32.mrf.mxu0
    %v10657 = vadd.f32 %v10368, %v10656
    %v10658 = vpop.f32.mrf.mxu0
    %v10659 = vpop.f32.mrf.mxu0
    %v10660 = vadd.f32 %v10371, %v10659
    %v10661 = vpop.f32.mrf.mxu0
    %10662 = vmatprep.mubr.bf16.mxu0 0
    %10663 = vmatmul.mubr.bf16.gmra.mxu0 %v8777
    %v10664 = vpop.f32.mrf.mxu0
    %v10665 = vadd.f32 %v10376, %v10664
    %v10666 = vpop.f32.mrf.mxu0
    %v10667 = vpop.f32.mrf.mxu0
    %v10668 = vadd.f32 %v10379, %v10667
    %v10669 = vpop.f32.mrf.mxu0
    %10670 = vmatprep.mubr.bf16.mxu0 0
    %10671 = vmatmul.mubr.bf16.gmra.mxu0 %v8778
    %v10672 = vpop.f32.mrf.mxu0
    %v10673 = vadd.f32 %v10384, %v10672
    %v10674 = vpop.f32.mrf.mxu0
    %v10675 = vpop.f32.mrf.mxu0
    %v10676 = vadd.f32 %v10387, %v10675
    %v10677 = vpop.f32.mrf.mxu0
    %10678 = vmatprep.mubr.bf16.mxu0 0
    %10679 = vmatmul.mubr.bf16.gmra.mxu0 %v8779
    %v10680 = vpop.f32.mrf.mxu0
    %v10681 = vadd.f32 %v10392, %v10680
    %v10682 = vpop.f32.mrf.mxu0
    %v10683 = vpop.f32.mrf.mxu0
    %v10684 = vadd.f32 %v10395, %v10683
    %v10685 = vpop.f32.mrf.mxu0
    %10686 = vmatprep.mubr.bf16.mxu0 0
    %10687 = vmatmul.mubr.bf16.gmra.mxu0 %v8780
    %v10688 = vpop.f32.mrf.mxu0
    %v10689 = vadd.f32 %v10400, %v10688
    %v10690 = vpop.f32.mrf.mxu0
    %v10691 = vpop.f32.mrf.mxu0
    %v10692 = vadd.f32 %v10403, %v10691
    %v10693 = vpop.f32.mrf.mxu0
    %10694 = vmatprep.mubr.bf16.mxu0 0
    %10695 = vmatmul.mubr.bf16.gmra.mxu0 %v8781
    %v10696 = vpop.f32.mrf.mxu0
    %v10697 = vadd.f32 %v10408, %v10696
    %v10698 = vpop.f32.mrf.mxu0
    %v10699 = vpop.f32.mrf.mxu0
    %v10700 = vadd.f32 %v10411, %v10699
    %v10701 = vpop.f32.mrf.mxu0
    %10702 = vmatprep.mubr.bf16.mxu0 0
    %10703 = vmatmul.mubr.bf16.gmra.mxu0 %v8782
    %v10704 = vpop.f32.mrf.mxu0
    %v10705 = vadd.f32 %v10416, %v10704
    %v10706 = vpop.f32.mrf.mxu0
    %v10707 = vpop.f32.mrf.mxu0
    %v10708 = vadd.f32 %v10419, %v10707
    %v10709 = vpop.f32.mrf.mxu0
    %10710 = vmatprep.mubr.bf16.mxu0 0
    %10711 = vmatmul.mubr.bf16.gmra.mxu0 %v8783
    %v10712 = vpop.f32.mrf.mxu0
    %v10713 = vadd.f32 %v10424, %v10712
    %v10714 = vpop.f32.mrf.mxu0
    %v10715 = vpop.f32.mrf.mxu0
    %v10716 = vadd.f32 %v10427, %v10715
    %v10717 = vpop.f32.mrf.mxu0
    %10718 = vmatprep.mubr.bf16.mxu0 0
    %10719 = vmatmul.mubr.bf16.gmra.mxu0 %v8784
    %v10720 = vpop.f32.mrf.mxu0
    %v10721 = vadd.f32 %v10432, %v10720
    %v10722 = vpop.f32.mrf.mxu0
    %v10723 = vpop.f32.mrf.mxu0
    %v10724 = vadd.f32 %v10435, %v10723
    %v10725 = vpop.f32.mrf.mxu0
    %10726 = vmatprep.mubr.bf16.mxu0 0
    %10727 = vmatmul.mubr.bf16.gmra.mxu0 %v8785
    %v10728 = vpop.f32.mrf.mxu0
    %v10729 = vadd.f32 %v10440, %v10728
    %v10730 = vpop.f32.mrf.mxu0
    %v10731 = vpop.f32.mrf.mxu0
    %v10732 = vadd.f32 %v10443, %v10731
    %v10733 = vpop.f32.mrf.mxu0
    %10734 = vmatprep.mubr.bf16.mxu0 0
    %10735 = vmatmul.mubr.bf16.gmra.mxu0 %v8786
    %v10736 = vpop.f32.mrf.mxu0
    %v10737 = vadd.f32 %v10448, %v10736
    %v10738 = vpop.f32.mrf.mxu0
    %v10739 = vpop.f32.mrf.mxu0
    %v10740 = vadd.f32 %v10451, %v10739
    %v10741 = vpop.f32.mrf.mxu0
    %10742 = vmatprep.mubr.bf16.mxu0 0
    %10743 = vmatmul.mubr.bf16.gmra.mxu0 %v8787
    %v10744 = vpop.f32.mrf.mxu0
    %v10745 = vadd.f32 %v10456, %v10744
    %v10746 = vpop.f32.mrf.mxu0
    %v10747 = vpop.f32.mrf.mxu0
    %v10748 = vadd.f32 %v10459, %v10747
    %v10749 = vpop.f32.mrf.mxu0
    %10750 = vmatprep.mubr.bf16.mxu0 0
    %10751 = vmatmul.mubr.bf16.gmra.mxu0 %v8788
    %v10752 = vpop.f32.mrf.mxu0
    %v10753 = vadd.f32 %v10464, %v10752
    %v10754 = vpop.f32.mrf.mxu0
    %v10755 = vpop.f32.mrf.mxu0
    %v10756 = vadd.f32 %v10467, %v10755
    %v10757 = vpop.f32.mrf.mxu0
    %10758 = vmatprep.mubr.bf16.mxu0 0
    %10759 = vmatmul.mubr.bf16.gmra.mxu0 %v8789
    %v10760 = vpop.f32.mrf.mxu0
    %v10761 = vadd.f32 %v10472, %v10760
    %v10762 = vpop.f32.mrf.mxu0
    %v10763 = vpop.f32.mrf.mxu0
    %v10764 = vadd.f32 %v10475, %v10763
    %v10765 = vpop.f32.mrf.mxu0
    %10766 = vmatprep.mubr.bf16.mxu0 0
    %10767 = vmatmul.mubr.bf16.gmra.mxu0 %v8860
    %v10768 = vpop.f32.mrf.mxu0
    %v10769 = vadd.f32 %v10480, %v10768
    %v10770 = vpop.f32.mrf.mxu0
    %v10771 = vpop.f32.mrf.mxu0
    %v10772 = vadd.f32 %v10483, %v10771
    %v10773 = vpop.f32.mrf.mxu0
    %10774 = vmatprep.mubr.bf16.mxu0 0
    %10775 = vmatmul.mubr.bf16.gmra.mxu0 %v8886
    %v10776 = vpop.f32.mrf.mxu0
    %v10777 = vadd.f32 %v10488, %v10776
    %v10778 = vpop.f32.mrf.mxu0
    %v10779 = vpop.f32.mrf.mxu0
    %v10780 = vadd.f32 %v10491, %v10779
    %v10781 = vpop.f32.mrf.mxu0
    %10782 = vmatprep.mubr.bf16.mxu0 0
    %10783 = vmatmul.mubr.bf16.gmra.mxu0 %v8792
    %v10784 = vpop.f32.mrf.mxu0
    %v10785 = vadd.f32 %v10496, %v10784
    %v10786 = vpop.f32.mrf.mxu0
    %v10787 = vpop.f32.mrf.mxu0
    %v10788 = vadd.f32 %v10499, %v10787
    %v10789 = vpop.f32.mrf.mxu0
    %10790 = vmatprep.mubr.bf16.mxu0 0
    %10791 = vmatmul.mubr.bf16.gmra.mxu0 %v8793
    %v10792 = vpop.f32.mrf.mxu0
    %v10793 = vadd.f32 %v10504, %v10792
    %v10794 = vpop.f32.mrf.mxu0
    %v10795 = vpop.f32.mrf.mxu0
    %v10796 = vadd.f32 %v10507, %v10795
    %v10797 = vpop.f32.mrf.mxu0
    %10798 = vmatprep.mubr.bf16.mxu0 0
    %10799 = vmatmul.mubr.bf16.gmra.mxu0 %v8794
    %v10800 = vpop.f32.mrf.mxu0
    %v10801 = vadd.f32 %v10512, %v10800
    %v10802 = vpop.f32.mrf.mxu0
    %v10803 = vpop.f32.mrf.mxu0
    %v10804 = vadd.f32 %v10515, %v10803
    %v10805 = vpop.f32.mrf.mxu0
    %10806 = vmatprep.mubr.bf16.mxu0 0
    %10807 = vmatmul.mubr.bf16.gmra.mxu0 %v8795
    %v10808 = vpop.f32.mrf.mxu0
    %v10809 = vadd.f32 %v10520, %v10808
    %v10810 = vpop.f32.mrf.mxu0
    %v10811 = vpop.f32.mrf.mxu0
    %v10812 = vadd.f32 %v10523, %v10811
    %v10813 = vpop.f32.mrf.mxu0
    %10814 = vmatprep.mubr.bf16.mxu0 0
    %10815 = vmatmul.mubr.bf16.gmra.mxu0 %v8796
    %v10816 = vpop.f32.mrf.mxu0
    %v10817 = vadd.f32 %v10528, %v10816
    %v10818 = vpop.f32.mrf.mxu0
    %v10819 = vpop.f32.mrf.mxu0
    %v10820 = vadd.f32 %v10531, %v10819
    %v10821 = vpop.f32.mrf.mxu0
    %10822 = vmatprep.mubr.bf16.mxu0 0
    %10823 = vmatmul.mubr.bf16.gmra.mxu0 %v8797
    %v10824 = vpop.f32.mrf.mxu0
    %v10825 = vadd.f32 %v10536, %v10824
    %v10826 = vpop.f32.mrf.mxu0
    %v10827 = vpop.f32.mrf.mxu0
    %v10828 = vadd.f32 %v10539, %v10827
    %v10829 = vpop.f32.mrf.mxu0
    %10830 = vmatprep.mubr.bf16.mxu0 0
    %10831 = vmatmul.mubr.bf16.gmra.mxu0 %v8798
    %v10832 = vpop.f32.mrf.mxu0
    %v10833 = vadd.f32 %v10544, %v10832
    %v10834 = vpop.f32.mrf.mxu0
    %v10835 = vpop.f32.mrf.mxu0
    %v10836 = vadd.f32 %v10547, %v10835
    %v10837 = vpop.f32.mrf.mxu0
    %10838 = vmatprep.mubr.bf16.mxu0 0
    %10839 = vmatmul.mubr.bf16.gmra.mxu0 %v8799
    %v10840 = vpop.f32.mrf.mxu0
    %v10841 = vadd.f32 %v10552, %v10840
    %v10842 = vpop.f32.mrf.mxu0
    %v10843 = vpop.f32.mrf.mxu0
    %v10844 = vadd.f32 %v10555, %v10843
    %v10845 = vpop.f32.mrf.mxu0
    %10846 = vmatprep.mubr.bf16.mxu0 0
    %10847 = vmatmul.mubr.bf16.gmra.mxu0 %v8800
    %v10848 = vpop.f32.mrf.mxu0
    %v10849 = vadd.f32 %v10560, %v10848
    %v10850 = vpop.f32.mrf.mxu0
    %v10851 = vpop.f32.mrf.mxu0
    %v10852 = vadd.f32 %v10563, %v10851
    %v10853 = vpop.f32.mrf.mxu0
    %10854 = vmatprep.mubr.bf16.mxu0 0
    %10855 = vmatmul.mubr.bf16.gmra.mxu0 %v8801
    %v10856 = vpop.f32.mrf.mxu0
    %v10857 = vadd.f32 %v10568, %v10856
    %v10858 = vpop.f32.mrf.mxu0
    %v10859 = vpop.f32.mrf.mxu0
    %v10860 = vadd.f32 %v10571, %v10859
    %v10861 = vpop.f32.mrf.mxu0
    %10862 = vmatprep.mubr.bf16.mxu0 0
    %10863 = vmatmul.mubr.bf16.gmra.mxu0 %v8802
    %v10864 = vpop.f32.mrf.mxu0
    %v10865 = vadd.f32 %v10576, %v10864
    %v10866 = vpop.f32.mrf.mxu0
    %v10867 = vpop.f32.mrf.mxu0
    %v10868 = vadd.f32 %v10579, %v10867
    %v10869 = vpop.f32.mrf.mxu0
    %10870 = vmatprep.mubr.bf16.mxu0 0
    %10871 = vmatmul.mubr.bf16.gmra.mxu0 %v8803
    %v10872 = vpop.f32.mrf.mxu0
    %v10873 = vadd.f32 %v10584, %v10872
    %v10874 = vpop.f32.mrf.mxu0
    %v10875 = vpop.f32.mrf.mxu0
    %v10876 = vadd.f32 %v10587, %v10875
    %v10877 = vpop.f32.mrf.mxu0
    %10878 = vmatprep.mubr.bf16.mxu0 0
    %10879 = vmatmul.mubr.bf16.gmra.mxu0 %v8804
    %v10880 = vpop.f32.mrf.mxu0
    %v10881 = vadd.f32 %v10592, %v10880
    %v10882 = vpop.f32.mrf.mxu0
    %v10883 = vpop.f32.mrf.mxu0
    %v10884 = vadd.f32 %v10595, %v10883
    %v10885 = vpop.f32.mrf.mxu0
    %10886 = vmatprep.mubr.bf16.mxu0 0
    %10887 = vmatmul.mubr.bf16.gmra.mxu0 %v8805
    %v10888 = vpop.f32.mrf.mxu0
    %v10889 = vadd.f32 %v10600, %v10888
    %v10890 = vpop.f32.mrf.mxu0
    %v10891 = vpop.f32.mrf.mxu0
    %v10892 = vadd.f32 %v10603, %v10891
    %v10893 = vpop.f32.mrf.mxu0
    %10894 = vmatprep.mubr.bf16.mxu0 0
    %10895 = vmatmul.mubr.bf16.gmra.mxu0 %v8861
    %v10896 = vpop.f32.mrf.mxu0
    %v10897 = vadd.f32 %v10608, %v10896
    %v10898 = vpop.f32.mrf.mxu0
    %v10899 = vpop.f32.mrf.mxu0
    %v10900 = vadd.f32 %v10611, %v10899
    %v10901 = vpop.f32.mrf.mxu0
    %10902 = vmatprep.mubr.bf16.mxu0 0
    %10903 = vmatmul.mubr.bf16.gmra.mxu0 %v8887
    %v10904 = vpop.f32.mrf.mxu0
    %v10905 = vadd.f32 %v10616, %v10904
    %v10906 = vpop.f32.mrf.mxu0
    %v10907 = vpop.f32.mrf.mxu0
    %v10908 = vadd.f32 %v10619, %v10907
    %v10909 = vpop.f32.mrf.mxu0
    %10910 = vdwg.mxu0
    %v10911 = vadd.f32 %v10657, %v10660
    %v10912 = vadd.f32 %v10911, %v10665
    %v10913 = vadd.f32 %v10912, %v10668
    %v10914 = vadd.f32 %v10913, %v10673
    %v10915 = vadd.f32 %v10914, %v10676
    %v10916 = vadd.f32 %v10915, %v10681
    %v10917 = vadd.f32 %v10916, %v10684
    %v10918 = vadd.f32 %v10917, %v10689
    %v10919 = vadd.f32 %v10918, %v10692
    %v10920 = vadd.f32 %v10919, %v10697
    %v10921 = vadd.f32 %v10920, %v10700
    %v10922 = vadd.f32 %v10921, %v10705
    %v10923 = vadd.f32 %v10922, %v10708
    %v10924 = vadd.f32 %v10923, %v10713
    %v10925 = vadd.f32 %v10924, %v10716
    %v10926 = vadd.f32 %v10925, %v10721
    %v10927 = vadd.f32 %v10926, %v10724
    %v10928 = vadd.f32 %v10927, %v10729
    %v10929 = vadd.f32 %v10928, %v10732
    %v10930 = vadd.f32 %v10929, %v10737
    %v10931 = vadd.f32 %v10930, %v10740
    %v10932 = vadd.f32 %v10931, %v10745
    %v10933 = vadd.f32 %v10932, %v10748
    %v10934 = vadd.f32 %v10933, %v10753
    %v10935 = vadd.f32 %v10934, %v10756
    %v10936 = vadd.f32 %v10935, %v10761
    %v10937 = vadd.f32 %v10936, %v10764
    %v10938 = vadd.f32 %v10937, %v10769
    %v10939 = vadd.f32 %v10938, %v10772
    %v10940 = vadd.f32 %v10939, %v10777
    %v10941 = vadd.f32 %v10940, %v10780
    %v10942 = vadd.f32 %v10941, %v10785
    %v10943 = vadd.f32 %v10942, %v10788
    %v10944 = vadd.f32 %v10943, %v10793
    %v10945 = vadd.f32 %v10944, %v10796
    %v10946 = vadd.f32 %v10945, %v10801
    %v10947 = vadd.f32 %v10946, %v10804
    %v10948 = vadd.f32 %v10947, %v10809
    %v10949 = vadd.f32 %v10948, %v10812
    %v10950 = vadd.f32 %v10949, %v10817
    %v10951 = vadd.f32 %v10950, %v10820
    %v10952 = vadd.f32 %v10951, %v10825
    %v10953 = vadd.f32 %v10952, %v10828
    %v10954 = vadd.f32 %v10953, %v10833
    %v10955 = vadd.f32 %v10954, %v10836
    %v10956 = vadd.f32 %v10955, %v10841
    %v10957 = vadd.f32 %v10956, %v10844
    %v10958 = vadd.f32 %v10957, %v10849
    %v10959 = vadd.f32 %v10958, %v10852
    %v10960 = vadd.f32 %v10959, %v10857
    %v10961 = vadd.f32 %v10960, %v10860
    %v10962 = vadd.f32 %v10961, %v10865
    %v10963 = vadd.f32 %v10962, %v10868
    %v10964 = vadd.f32 %v10963, %v10873
    %v10965 = vadd.f32 %v10964, %v10876
    %v10966 = vadd.f32 %v10965, %v10881
    %v10967 = vadd.f32 %v10966, %v10884
    %v10968 = vadd.f32 %v10967, %v10889
    %v10969 = vadd.f32 %v10968, %v10892
    %v10970 = vadd.f32 %v10969, %v10897
    %v10971 = vadd.f32 %v10970, %v10900
    %v10972 = vadd.f32 %v10971, %v10905
    %v10973 = vadd.f32 %v10972, %v10908
    %v10974 = vrot.slane %v10973, 4
    %v10975 = vadd.f32 %v10973, %v10974
    %v10976 = vrot.slane %v10975, 2
    %v10977 = vadd.f32 %v10975, %v10976
    %v10978 = vrot.slane %v10977, 1
    %v10979 = vadd.f32 %v10977, %v10978
    %v10980 = vmul.f32 %v10979, 0.001953125
    %v10981 = vsub.f32 %v10657, %v10980
    %v10982 = vsub.f32 %v10660, %v10980
    %v10983 = vsub.f32 %v10665, %v10980
    %v10984 = vsub.f32 %v10668, %v10980
    %v10985 = vsub.f32 %v10673, %v10980
    %v10986 = vsub.f32 %v10676, %v10980
    %v10987 = vsub.f32 %v10681, %v10980
    %v10988 = vsub.f32 %v10684, %v10980
    %v10989 = vsub.f32 %v10689, %v10980
    %v10990 = vsub.f32 %v10692, %v10980
    %v10991 = vsub.f32 %v10697, %v10980
    %v10992 = vsub.f32 %v10700, %v10980
    %v10993 = vsub.f32 %v10705, %v10980
    %v10994 = vsub.f32 %v10708, %v10980
    %v10995 = vsub.f32 %v10713, %v10980
    %v10996 = vsub.f32 %v10716, %v10980
    %v10997 = vsub.f32 %v10721, %v10980
    %v10998 = vsub.f32 %v10724, %v10980
    %v10999 = vsub.f32 %v10729, %v10980
    %v11000 = vsub.f32 %v10732, %v10980
    %v11001 = vsub.f32 %v10737, %v10980
    %v11002 = vsub.f32 %v10740, %v10980
    %v11003 = vsub.f32 %v10745, %v10980
    %v11004 = vsub.f32 %v10748, %v10980
    %v11005 = vsub.f32 %v10753, %v10980
    %v11006 = vsub.f32 %v10756, %v10980
    %v11007 = vsub.f32 %v10761, %v10980
    %v11008 = vsub.f32 %v10764, %v10980
    %v11009 = vsub.f32 %v10769, %v10980
    %v11010 = vsub.f32 %v10772, %v10980
    %v11011 = vsub.f32 %v10777, %v10980
    %v11012 = vsub.f32 %v10780, %v10980
    %v11013 = vsub.f32 %v10785, %v10980
    %v11014 = vsub.f32 %v10788, %v10980
    %v11015 = vsub.f32 %v10793, %v10980
    %v11016 = vsub.f32 %v10796, %v10980
    %v11017 = vsub.f32 %v10801, %v10980
    %v11018 = vsub.f32 %v10804, %v10980
    %v11019 = vsub.f32 %v10809, %v10980
    %v11020 = vsub.f32 %v10812, %v10980
    %v11021 = vsub.f32 %v10817, %v10980
    %v11022 = vsub.f32 %v10820, %v10980
    %v11023 = vsub.f32 %v10825, %v10980
    %v11024 = vsub.f32 %v10828, %v10980
    %v11025 = vsub.f32 %v10833, %v10980
    %v11026 = vsub.f32 %v10836, %v10980
    %v11027 = vsub.f32 %v10841, %v10980
    %v11028 = vsub.f32 %v10844, %v10980
    %v11029 = vsub.f32 %v10849, %v10980
    %v11030 = vsub.f32 %v10852, %v10980
    %v11031 = vsub.f32 %v10857, %v10980
    %v11032 = vsub.f32 %v10860, %v10980
    %v11033 = vsub.f32 %v10865, %v10980
    %v11034 = vsub.f32 %v10868, %v10980
    %v11035 = vsub.f32 %v10873, %v10980
    %v11036 = vsub.f32 %v10876, %v10980
    %v11037 = vsub.f32 %v10881, %v10980
    %v11038 = vsub.f32 %v10884, %v10980
    %v11039 = vsub.f32 %v10889, %v10980
    %v11040 = vsub.f32 %v10892, %v10980
    %v11041 = vsub.f32 %v10897, %v10980
    %v11042 = vsub.f32 %v10900, %v10980
    %v11043 = vsub.f32 %v10905, %v10980
    %v11044 = vsub.f32 %v10908, %v10980
    %v11045 = vmul.f32 %v10981, %v10981
    %v11046 = vmul.f32 %v10982, %v10982
    %v11047 = vmul.f32 %v10983, %v10983
    %v11048 = vmul.f32 %v10984, %v10984
    %v11049 = vmul.f32 %v10985, %v10985
    %v11050 = vmul.f32 %v10986, %v10986
    %v11051 = vmul.f32 %v10987, %v10987
    %v11052 = vmul.f32 %v10988, %v10988
    %v11053 = vmul.f32 %v10989, %v10989
    %v11054 = vmul.f32 %v10990, %v10990
    %v11055 = vmul.f32 %v10991, %v10991
    %v11056 = vmul.f32 %v10992, %v10992
    %v11057 = vmul.f32 %v10993, %v10993
    %v11058 = vmul.f32 %v10994, %v10994
    %v11059 = vmul.f32 %v10995, %v10995
    %v11060 = vmul.f32 %v10996, %v10996
    %v11061 = vmul.f32 %v10997, %v10997
    %v11062 = vmul.f32 %v10998, %v10998
    %v11063 = vmul.f32 %v10999, %v10999
    %v11064 = vmul.f32 %v11000, %v11000
    %v11065 = vmul.f32 %v11001, %v11001
    %v11066 = vmul.f32 %v11002, %v11002
    %v11067 = vmul.f32 %v11003, %v11003
    %v11068 = vmul.f32 %v11004, %v11004
    %v11069 = vmul.f32 %v11005, %v11005
    %v11070 = vmul.f32 %v11006, %v11006
    %v11071 = vmul.f32 %v11007, %v11007
    %v11072 = vmul.f32 %v11008, %v11008
    %v11073 = vmul.f32 %v11009, %v11009
    %v11074 = vmul.f32 %v11010, %v11010
    %v11075 = vmul.f32 %v11011, %v11011
    %v11076 = vmul.f32 %v11012, %v11012
    %v11077 = vmul.f32 %v11013, %v11013
    %v11078 = vmul.f32 %v11014, %v11014
    %v11079 = vmul.f32 %v11015, %v11015
    %v11080 = vmul.f32 %v11016, %v11016
    %v11081 = vmul.f32 %v11017, %v11017
    %v11082 = vmul.f32 %v11018, %v11018
    %v11083 = vmul.f32 %v11019, %v11019
    %v11084 = vmul.f32 %v11020, %v11020
    %v11085 = vmul.f32 %v11021, %v11021
    %v11086 = vmul.f32 %v11022, %v11022
    %v11087 = vmul.f32 %v11023, %v11023
    %v11088 = vmul.f32 %v11024, %v11024
    %v11089 = vmul.f32 %v11025, %v11025
    %v11090 = vmul.f32 %v11026, %v11026
    %v11091 = vmul.f32 %v11027, %v11027
    %v11092 = vmul.f32 %v11028, %v11028
    %v11093 = vmul.f32 %v11029, %v11029
    %v11094 = vmul.f32 %v11030, %v11030
    %v11095 = vmul.f32 %v11031, %v11031
    %v11096 = vmul.f32 %v11032, %v11032
    %v11097 = vmul.f32 %v11033, %v11033
    %v11098 = vmul.f32 %v11034, %v11034
    %v11099 = vmul.f32 %v11035, %v11035
    %v11100 = vmul.f32 %v11036, %v11036
    %v11101 = vmul.f32 %v11037, %v11037
    %v11102 = vmul.f32 %v11038, %v11038
    %v11103 = vmul.f32 %v11039, %v11039
    %v11104 = vmul.f32 %v11040, %v11040
    %v11105 = vmul.f32 %v11041, %v11041
    %v11106 = vmul.f32 %v11042, %v11042
    %v11107 = vmul.f32 %v11043, %v11043
    %v11108 = vmul.f32 %v11044, %v11044
    %v11109 = vadd.f32 %v11045, %v11046
    %v11110 = vadd.f32 %v11109, %v11047
    %v11111 = vadd.f32 %v11110, %v11048
    %v11112 = vadd.f32 %v11111, %v11049
    %v11113 = vadd.f32 %v11112, %v11050
    %v11114 = vadd.f32 %v11113, %v11051
    %v11115 = vadd.f32 %v11114, %v11052
    %v11116 = vadd.f32 %v11115, %v11053
    %v11117 = vadd.f32 %v11116, %v11054
    %v11118 = vadd.f32 %v11117, %v11055
    %v11119 = vadd.f32 %v11118, %v11056
    %v11120 = vadd.f32 %v11119, %v11057
    %v11121 = vadd.f32 %v11120, %v11058
    %v11122 = vadd.f32 %v11121, %v11059
    %v11123 = vadd.f32 %v11122, %v11060
    %v11124 = vadd.f32 %v11123, %v11061
    %v11125 = vadd.f32 %v11124, %v11062
    %v11126 = vadd.f32 %v11125, %v11063
    %v11127 = vadd.f32 %v11126, %v11064
    %v11128 = vadd.f32 %v11127, %v11065
    %v11129 = vadd.f32 %v11128, %v11066
    %v11130 = vadd.f32 %v11129, %v11067
    %v11131 = vadd.f32 %v11130, %v11068
    %v11132 = vadd.f32 %v11131, %v11069
    %v11133 = vadd.f32 %v11132, %v11070
    %v11134 = vadd.f32 %v11133, %v11071
    %v11135 = vadd.f32 %v11134, %v11072
    %v11136 = vadd.f32 %v11135, %v11073
    %v11137 = vadd.f32 %v11136, %v11074
    %v11138 = vadd.f32 %v11137, %v11075
    %v11139 = vadd.f32 %v11138, %v11076
    %v11140 = vadd.f32 %v11139, %v11077
    %v11141 = vadd.f32 %v11140, %v11078
    %v11142 = vadd.f32 %v11141, %v11079
    %v11143 = vadd.f32 %v11142, %v11080
    %v11144 = vadd.f32 %v11143, %v11081
    %v11145 = vadd.f32 %v11144, %v11082
    %v11146 = vadd.f32 %v11145, %v11083
    %v11147 = vadd.f32 %v11146, %v11084
    %v11148 = vadd.f32 %v11147, %v11085
    %v11149 = vadd.f32 %v11148, %v11086
    %v11150 = vadd.f32 %v11149, %v11087
    %v11151 = vadd.f32 %v11150, %v11088
    %v11152 = vadd.f32 %v11151, %v11089
    %v11153 = vadd.f32 %v11152, %v11090
    %v11154 = vadd.f32 %v11153, %v11091
    %v11155 = vadd.f32 %v11154, %v11092
    %v11156 = vadd.f32 %v11155, %v11093
    %v11157 = vadd.f32 %v11156, %v11094
    %v11158 = vadd.f32 %v11157, %v11095
    %v11159 = vadd.f32 %v11158, %v11096
    %v11160 = vadd.f32 %v11159, %v11097
    %v11161 = vadd.f32 %v11160, %v11098
    %v11162 = vadd.f32 %v11161, %v11099
    %v11163 = vadd.f32 %v11162, %v11100
    %v11164 = vadd.f32 %v11163, %v11101
    %v11165 = vadd.f32 %v11164, %v11102
    %v11166 = vadd.f32 %v11165, %v11103
    %v11167 = vadd.f32 %v11166, %v11104
    %v11168 = vadd.f32 %v11167, %v11105
    %v11169 = vadd.f32 %v11168, %v11106
    %v11170 = vadd.f32 %v11169, %v11107
    %v11171 = vadd.f32 %v11170, %v11108
    %v11172 = vrot.slane %v11171, 4
    %v11173 = vadd.f32 %v11171, %v11172
    %v11174 = vrot.slane %v11173, 2
    %v11175 = vadd.f32 %v11173, %v11174
    %v11176 = vrot.slane %v11175, 1
    %v11177 = vadd.f32 %v11175, %v11176
    %v11178 = vmul.f32 %v11177, 0.001953125
    %v11179 = vld [vmem:[%s5] sm:$0x1]
    %v11180 = vadd.f32 %v11178, 1e-05
    %v11181 = vrsqrt.pop %v11180
    %v11182 = vmul.f32 %v11179, %v11181
    %v11184 = vlaneseq
    %v11185 = vshrl.u32 %v11184, 7
    %v11186 = vsub.s32 0, %v11185
    %v11187 = vrot.slane %v11182, %v11186
    %v11189 = vmul.f32 %v10981, %v11187
    %v11190 = vmul.f32 %v10982, %v11187
    %v11191 = vmul.f32 %v10983, %v11187
    %v11192 = vmul.f32 %v10984, %v11187
    %v11193 = vmul.f32 %v10985, %v11187
    %v11194 = vmul.f32 %v10986, %v11187
    %v11195 = vmul.f32 %v10987, %v11187
    %v11196 = vmul.f32 %v10988, %v11187
    %v11197 = vmul.f32 %v10989, %v11187
    %v11198 = vmul.f32 %v10990, %v11187
    %v11199 = vmul.f32 %v10991, %v11187
    %v11200 = vmul.f32 %v10992, %v11187
    %v11201 = vmul.f32 %v10993, %v11187
    %v11202 = vmul.f32 %v10994, %v11187
    %v11203 = vmul.f32 %v10995, %v11187
    %v11204 = vmul.f32 %v10996, %v11187
    %v11205 = vmul.f32 %v10997, %v11187
    %v11206 = vmul.f32 %v10998, %v11187
    %v11207 = vmul.f32 %v10999, %v11187
    %v11208 = vmul.f32 %v11000, %v11187
    %v11209 = vmul.f32 %v11001, %v11187
    %v11210 = vmul.f32 %v11002, %v11187
    %v11211 = vmul.f32 %v11003, %v11187
    %v11212 = vmul.f32 %v11004, %v11187
    %v11213 = vmul.f32 %v11005, %v11187
    %v11214 = vmul.f32 %v11006, %v11187
    %v11215 = vmul.f32 %v11007, %v11187
    %v11216 = vmul.f32 %v11008, %v11187
    %v11217 = vmul.f32 %v11009, %v11187
    %v11218 = vmul.f32 %v11010, %v11187
    %v11219 = vmul.f32 %v11011, %v11187
    %v11220 = vmul.f32 %v11012, %v11187
    %v11221 = vmul.f32 %v11013, %v11187
    %v11222 = vmul.f32 %v11014, %v11187
    %v11223 = vmul.f32 %v11015, %v11187
    %v11224 = vmul.f32 %v11016, %v11187
    %v11225 = vmul.f32 %v11017, %v11187
    %v11226 = vmul.f32 %v11018, %v11187
    %v11227 = vmul.f32 %v11019, %v11187
    %v11228 = vmul.f32 %v11020, %v11187
    %v11229 = vmul.f32 %v11021, %v11187
    %v11230 = vmul.f32 %v11022, %v11187
    %v11231 = vmul.f32 %v11023, %v11187
    %v11232 = vmul.f32 %v11024, %v11187
    %v11233 = vmul.f32 %v11025, %v11187
    %v11234 = vmul.f32 %v11026, %v11187
    %v11235 = vmul.f32 %v11027, %v11187
    %v11236 = vmul.f32 %v11028, %v11187
    %v11237 = vmul.f32 %v11029, %v11187
    %v11238 = vmul.f32 %v11030, %v11187
    %v11239 = vmul.f32 %v11031, %v11187
    %v11240 = vmul.f32 %v11032, %v11187
    %v11241 = vmul.f32 %v11033, %v11187
    %v11242 = vmul.f32 %v11034, %v11187
    %v11243 = vmul.f32 %v11035, %v11187
    %v11244 = vmul.f32 %v11036, %v11187
    %v11245 = vmul.f32 %v11037, %v11187
    %v11246 = vmul.f32 %v11038, %v11187
    %v11247 = vmul.f32 %v11039, %v11187
    %v11248 = vmul.f32 %v11040, %v11187
    %v11249 = vmul.f32 %v11041, %v11187
    %v11250 = vmul.f32 %v11042, %v11187
    %v11251 = vmul.f32 %v11043, %v11187
    %v11252 = vmul.f32 %v11044, %v11187
    %v11253 = vld [vmem:[%s6] sm:$0x1]
    %v11255 = vlaneseq
    %v11256 = vshrl.u32 %v11255, 7
    %v11257 = vsub.s32 0, %v11256
    %v11258 = vrot.slane %v11253, %v11257
    %v11260 = vadd.f32 %v11189, %v11258
    %v11261 = vadd.f32 %v11190, %v11258
    %v11262 = vadd.f32 %v11191, %v11258
    %v11263 = vadd.f32 %v11192, %v11258
    %v11264 = vadd.f32 %v11193, %v11258
    %v11265 = vadd.f32 %v11194, %v11258
    %v11266 = vadd.f32 %v11195, %v11258
    %v11267 = vadd.f32 %v11196, %v11258
    %v11268 = vadd.f32 %v11197, %v11258
    %v11269 = vadd.f32 %v11198, %v11258
    %v11270 = vadd.f32 %v11199, %v11258
    %v11271 = vadd.f32 %v11200, %v11258
    %v11272 = vadd.f32 %v11201, %v11258
    %v11273 = vadd.f32 %v11202, %v11258
    %v11274 = vadd.f32 %v11203, %v11258
    %v11275 = vadd.f32 %v11204, %v11258
    %v11276 = vadd.f32 %v11205, %v11258
    %v11277 = vadd.f32 %v11206, %v11258
    %v11278 = vadd.f32 %v11207, %v11258
    %v11279 = vadd.f32 %v11208, %v11258
    %v11280 = vadd.f32 %v11209, %v11258
    %v11281 = vadd.f32 %v11210, %v11258
    %v11282 = vadd.f32 %v11211, %v11258
    %v11283 = vadd.f32 %v11212, %v11258
    %v11284 = vadd.f32 %v11213, %v11258
    %v11285 = vadd.f32 %v11214, %v11258
    %v11286 = vadd.f32 %v11215, %v11258
    %v11287 = vadd.f32 %v11216, %v11258
    %v11288 = vadd.f32 %v11217, %v11258
    %v11289 = vadd.f32 %v11218, %v11258
    %v11290 = vadd.f32 %v11219, %v11258
    %v11291 = vadd.f32 %v11220, %v11258
    %v11292 = vadd.f32 %v11221, %v11258
    %v11293 = vadd.f32 %v11222, %v11258
    %v11294 = vadd.f32 %v11223, %v11258
    %v11295 = vadd.f32 %v11224, %v11258
    %v11296 = vadd.f32 %v11225, %v11258
    %v11297 = vadd.f32 %v11226, %v11258
    %v11298 = vadd.f32 %v11227, %v11258
    %v11299 = vadd.f32 %v11228, %v11258
    %v11300 = vadd.f32 %v11229, %v11258
    %v11301 = vadd.f32 %v11230, %v11258
    %v11302 = vadd.f32 %v11231, %v11258
    %v11303 = vadd.f32 %v11232, %v11258
    %v11304 = vadd.f32 %v11233, %v11258
    %v11305 = vadd.f32 %v11234, %v11258
    %v11306 = vadd.f32 %v11235, %v11258
    %v11307 = vadd.f32 %v11236, %v11258
    %v11308 = vadd.f32 %v11237, %v11258
    %v11309 = vadd.f32 %v11238, %v11258
    %v11310 = vadd.f32 %v11239, %v11258
    %v11311 = vadd.f32 %v11240, %v11258
    %v11312 = vadd.f32 %v11241, %v11258
    %v11313 = vadd.f32 %v11242, %v11258
    %v11314 = vadd.f32 %v11243, %v11258
    %v11315 = vadd.f32 %v11244, %v11258
    %v11316 = vadd.f32 %v11245, %v11258
    %v11317 = vadd.f32 %v11246, %v11258
    %v11318 = vadd.f32 %v11247, %v11258
    %v11319 = vadd.f32 %v11248, %v11258
    %v11320 = vadd.f32 %v11249, %v11258
    %v11321 = vadd.f32 %v11250, %v11258
    %v11322 = vadd.f32 %v11251, %v11258
    %v11323 = vadd.f32 %v11252, %v11258
    %v11324 = vld [vmem:[#allocation4] sm:$0xff]
    %v11325 = vld [vmem:[#allocation4 + $0x8] sm:$0xff]
    %v11326 = vld [vmem:[#allocation4 + $0x10] sm:$0xff]
    %v11327 = vld [vmem:[#allocation4 + $0x18] sm:$0xff]
    %v11328 = vld [vmem:[#allocation4 + $0x20] sm:$0xff]
    %v11329 = vld [vmem:[#allocation4 + $0x28] sm:$0xff]
    %v11330 = vld [vmem:[#allocation4 + $0x30] sm:$0xff]
    %v11331 = vld [vmem:[#allocation4 + $0x38] sm:$0xff]
    %v11332 = vld [vmem:[#allocation4 + $0x40] sm:$0xff]
    %v11333 = vld [vmem:[#allocation4 + $0x48] sm:$0xff]
    %v11334 = vld [vmem:[#allocation4 + $0x50] sm:$0xff]
    %v11335 = vld [vmem:[#allocation4 + $0x58] sm:$0xff]
    %v11336 = vld [vmem:[#allocation4 + $0x60] sm:$0xff]
    %v11337 = vld [vmem:[#allocation4 + $0x68] sm:$0xff]
    %v11338 = vld [vmem:[#allocation4 + $0x70] sm:$0xff]
    %v11339 = vld [vmem:[#allocation4 + $0x78] sm:$0xff]
    %v11340 = vld [vmem:[#allocation4 + $0x80] sm:$0xff]
    %v11341 = vld [vmem:[#allocation4 + $0x88] sm:$0xff]
    %v11342 = vld [vmem:[#allocation4 + $0x90] sm:$0xff]
    %v11343 = vld [vmem:[#allocation4 + $0x98] sm:$0xff]
    %v11344 = vld [vmem:[#allocation4 + $0xa0] sm:$0xff]
    %v11345 = vld [vmem:[#allocation4 + $0xa8] sm:$0xff]
    %v11346 = vld [vmem:[#allocation4 + $0xb0] sm:$0xff]
    %v11347 = vld [vmem:[#allocation4 + $0xb8] sm:$0xff]
    %v11348 = vld [vmem:[#allocation4 + $0xc0] sm:$0xff]
    %v11349 = vld [vmem:[#allocation4 + $0xc8] sm:$0xff]
    %v11350 = vld [vmem:[#allocation4 + $0xd0] sm:$0xff]
    %v11351 = vld [vmem:[#allocation4 + $0xd8] sm:$0xff]
    %v11352 = vld [vmem:[#allocation4 + $0xe0] sm:$0xff]
    %v11353 = vld [vmem:[#allocation4 + $0xe8] sm:$0xff]
    %v11354 = vld [vmem:[#allocation4 + $0xf0] sm:$0xff]
    %v11355 = vld [vmem:[#allocation4 + $0xf8] sm:$0xff]
    %v11356 = vld [vmem:[#allocation4 + $0x100] sm:$0xff]
    %v11357 = vld [vmem:[#allocation4 + $0x108] sm:$0xff]
    %v11358 = vld [vmem:[#allocation4 + $0x110] sm:$0xff]
    %v11359 = vld [vmem:[#allocation4 + $0x118] sm:$0xff]
    %v11360 = vld [vmem:[#allocation4 + $0x120] sm:$0xff]
    %v11361 = vld [vmem:[#allocation4 + $0x128] sm:$0xff]
    %v11362 = vld [vmem:[#allocation4 + $0x130] sm:$0xff]
    %v11363 = vld [vmem:[#allocation4 + $0x138] sm:$0xff]
    %v11364 = vld [vmem:[#allocation4 + $0x140] sm:$0xff]
    %v11365 = vld [vmem:[#allocation4 + $0x148] sm:$0xff]
    %v11366 = vld [vmem:[#allocation4 + $0x150] sm:$0xff]
    %v11367 = vld [vmem:[#allocation4 + $0x158] sm:$0xff]
    %v11368 = vld [vmem:[#allocation4 + $0x160] sm:$0xff]
    %v11369 = vld [vmem:[#allocation4 + $0x168] sm:$0xff]
    %v11370 = vld [vmem:[#allocation4 + $0x170] sm:$0xff]
    %v11371 = vld [vmem:[#allocation4 + $0x178] sm:$0xff]
    %v11372 = vld [vmem:[#allocation4 + $0x180] sm:$0xff]
    %v11373 = vld [vmem:[#allocation4 + $0x188] sm:$0xff]
    %v11374 = vld [vmem:[#allocation4 + $0x190] sm:$0xff]
    %v11375 = vld [vmem:[#allocation4 + $0x198] sm:$0xff]
    %v11376 = vld [vmem:[#allocation4 + $0x1a0] sm:$0xff]
    %v11377 = vld [vmem:[#allocation4 + $0x1a8] sm:$0xff]
    %v11378 = vld [vmem:[#allocation4 + $0x1b0] sm:$0xff]
    %v11379 = vld [vmem:[#allocation4 + $0x1b8] sm:$0xff]
    %v11380 = vld [vmem:[#allocation4 + $0x1c0] sm:$0xff]
    %v11381 = vld [vmem:[#allocation4 + $0x1c8] sm:$0xff]
    %v11382 = vld [vmem:[#allocation4 + $0x1d0] sm:$0xff]
    %v11383 = vld [vmem:[#allocation4 + $0x1d8] sm:$0xff]
    %v11384 = vld [vmem:[#allocation4 + $0x1e0] sm:$0xff]
    %v11385 = vld [vmem:[#allocation4 + $0x1e8] sm:$0xff]
    %v11386 = vld [vmem:[#allocation4 + $0x1f0] sm:$0xff]
    %v11387 = vld [vmem:[#allocation4 + $0x1f8] sm:$0xff]
    %v11388 = vadd.f32 %v11260, %v11324
    %v11389 = vadd.f32 %v11261, %v11325
    %v11390 = vadd.f32 %v11262, %v11326
    %v11391 = vadd.f32 %v11263, %v11327
    %v11392 = vadd.f32 %v11264, %v11328
    %v11393 = vadd.f32 %v11265, %v11329
    %v11394 = vadd.f32 %v11266, %v11330
    %v11395 = vadd.f32 %v11267, %v11331
    %v11396 = vadd.f32 %v11268, %v11332
    %v11397 = vadd.f32 %v11269, %v11333
    %v11398 = vadd.f32 %v11270, %v11334
    %v11399 = vadd.f32 %v11271, %v11335
    %v11400 = vadd.f32 %v11272, %v11336
    %v11401 = vadd.f32 %v11273, %v11337
    %v11402 = vadd.f32 %v11274, %v11338
    %v11403 = vadd.f32 %v11275, %v11339
    %v11404 = vadd.f32 %v11276, %v11340
    %v11405 = vadd.f32 %v11277, %v11341
    %v11406 = vadd.f32 %v11278, %v11342
    %v11407 = vadd.f32 %v11279, %v11343
    %v11408 = vadd.f32 %v11280, %v11344
    %v11409 = vadd.f32 %v11281, %v11345
    %v11410 = vadd.f32 %v11282, %v11346
    %v11411 = vadd.f32 %v11283, %v11347
    %v11412 = vadd.f32 %v11284, %v11348
    %v11413 = vadd.f32 %v11285, %v11349
    %v11414 = vadd.f32 %v11286, %v11350
    %v11415 = vadd.f32 %v11287, %v11351
    %v11416 = vadd.f32 %v11288, %v11352
    %v11417 = vadd.f32 %v11289, %v11353
    %v11418 = vadd.f32 %v11290, %v11354
    %v11419 = vadd.f32 %v11291, %v11355
    %v11420 = vadd.f32 %v11292, %v11356
    %v11421 = vadd.f32 %v11293, %v11357
    %v11422 = vadd.f32 %v11294, %v11358
    %v11423 = vadd.f32 %v11295, %v11359
    %v11424 = vadd.f32 %v11296, %v11360
    %v11425 = vadd.f32 %v11297, %v11361
    %v11426 = vadd.f32 %v11298, %v11362
    %v11427 = vadd.f32 %v11299, %v11363
    %v11428 = vadd.f32 %v11300, %v11364
    %v11429 = vadd.f32 %v11301, %v11365
    %v11430 = vadd.f32 %v11302, %v11366
    %v11431 = vadd.f32 %v11303, %v11367
    %v11432 = vadd.f32 %v11304, %v11368
    %v11433 = vadd.f32 %v11305, %v11369
    %v11434 = vadd.f32 %v11306, %v11370
    %v11435 = vadd.f32 %v11307, %v11371
    %v11436 = vadd.f32 %v11308, %v11372
    %v11437 = vadd.f32 %v11309, %v11373
    %v11438 = vadd.f32 %v11310, %v11374
    %v11439 = vadd.f32 %v11311, %v11375
    %v11440 = vadd.f32 %v11312, %v11376
    %v11441 = vadd.f32 %v11313, %v11377
    %v11442 = vadd.f32 %v11314, %v11378
    %v11443 = vadd.f32 %v11315, %v11379
    %v11444 = vadd.f32 %v11316, %v11380
    %v11445 = vadd.f32 %v11317, %v11381
    %v11446 = vadd.f32 %v11318, %v11382
    %v11447 = vadd.f32 %v11319, %v11383
    %v11448 = vadd.f32 %v11320, %v11384
    %v11449 = vadd.f32 %v11321, %v11385
    %v11450 = vadd.f32 %v11322, %v11386
    %v11451 = vadd.f32 %v11323, %v11387
    %v11452 = vmax.f32 %v11388, 0.0
    %v11453 = vmax.f32 %v11389, 0.0
    %v11454 = vmax.f32 %v11390, 0.0
    %v11455 = vmax.f32 %v11391, 0.0
    %v11456 = vmax.f32 %v11392, 0.0
    %v11457 = vmax.f32 %v11393, 0.0
    %v11458 = vmax.f32 %v11394, 0.0
    %v11459 = vmax.f32 %v11395, 0.0
    %v11460 = vmax.f32 %v11396, 0.0
    %v11461 = vmax.f32 %v11397, 0.0
    %v11462 = vmax.f32 %v11398, 0.0
    %v11463 = vmax.f32 %v11399, 0.0
    %v11464 = vmax.f32 %v11400, 0.0
    %v11465 = vmax.f32 %v11401, 0.0
    %v11466 = vmax.f32 %v11402, 0.0
    %v11467 = vmax.f32 %v11403, 0.0
    %v11468 = vmax.f32 %v11404, 0.0
    %v11469 = vmax.f32 %v11405, 0.0
    %v11470 = vmax.f32 %v11406, 0.0
    %v11471 = vmax.f32 %v11407, 0.0
    %v11472 = vmax.f32 %v11408, 0.0
    %v11473 = vmax.f32 %v11409, 0.0
    %v11474 = vmax.f32 %v11410, 0.0
    %v11475 = vmax.f32 %v11411, 0.0
    %v11476 = vmax.f32 %v11412, 0.0
    %v11477 = vmax.f32 %v11413, 0.0
    %v11478 = vmax.f32 %v11414, 0.0
    %v11479 = vmax.f32 %v11415, 0.0
    %v11480 = vmax.f32 %v11416, 0.0
    %v11481 = vmax.f32 %v11417, 0.0
    %v11482 = vmax.f32 %v11418, 0.0
    %v11483 = vmax.f32 %v11419, 0.0
    %v11484 = vmax.f32 %v11420, 0.0
    %v11485 = vmax.f32 %v11421, 0.0
    %v11486 = vmax.f32 %v11422, 0.0
    %v11487 = vmax.f32 %v11423, 0.0
    %v11488 = vmax.f32 %v11424, 0.0
    %v11489 = vmax.f32 %v11425, 0.0
    %v11490 = vmax.f32 %v11426, 0.0
    %v11491 = vmax.f32 %v11427, 0.0
    %v11492 = vmax.f32 %v11428, 0.0
    %v11493 = vmax.f32 %v11429, 0.0
    %v11494 = vmax.f32 %v11430, 0.0
    %v11495 = vmax.f32 %v11431, 0.0
    %v11496 = vmax.f32 %v11432, 0.0
    %v11497 = vmax.f32 %v11433, 0.0
    %v11498 = vmax.f32 %v11434, 0.0
    %v11499 = vmax.f32 %v11435, 0.0
    %v11500 = vmax.f32 %v11436, 0.0
    %v11501 = vmax.f32 %v11437, 0.0
    %v11502 = vmax.f32 %v11438, 0.0
    %v11503 = vmax.f32 %v11439, 0.0
    %v11504 = vmax.f32 %v11440, 0.0
    %v11505 = vmax.f32 %v11441, 0.0
    %v11506 = vmax.f32 %v11442, 0.0
    %v11507 = vmax.f32 %v11443, 0.0
    %v11508 = vmax.f32 %v11444, 0.0
    %v11509 = vmax.f32 %v11445, 0.0
    %v11510 = vmax.f32 %v11446, 0.0
    %v11511 = vmax.f32 %v11447, 0.0
    %v11512 = vmax.f32 %v11448, 0.0
    %v11513 = vmax.f32 %v11449, 0.0
    %v11514 = vmax.f32 %v11450, 0.0
    %v11515 = vmax.f32 %v11451, 0.0
    %11516 = vst [vmem:[#allocation10] sm:$0xff] %v11452
    %11517 = vst [vmem:[#allocation10 + $0x8] sm:$0xff] %v11453
    %11518 = vst [vmem:[#allocation10 + $0x10] sm:$0xff] %v11454
    %11519 = vst [vmem:[#allocation10 + $0x18] sm:$0xff] %v11455
    %11520 = vst [vmem:[#allocation10 + $0x20] sm:$0xff] %v11456
    %11521 = vst [vmem:[#allocation10 + $0x28] sm:$0xff] %v11457
    %11522 = vst [vmem:[#allocation10 + $0x30] sm:$0xff] %v11458
    %11523 = vst [vmem:[#allocation10 + $0x38] sm:$0xff] %v11459
    %11524 = vst [vmem:[#allocation10 + $0x40] sm:$0xff] %v11460
    %11525 = vst [vmem:[#allocation10 + $0x48] sm:$0xff] %v11461
    %11526 = vst [vmem:[#allocation10 + $0x50] sm:$0xff] %v11462
    %11527 = vst [vmem:[#allocation10 + $0x58] sm:$0xff] %v11463
    %11528 = vst [vmem:[#allocation10 + $0x60] sm:$0xff] %v11464
    %11529 = vst [vmem:[#allocation10 + $0x68] sm:$0xff] %v11465
    %11530 = vst [vmem:[#allocation10 + $0x70] sm:$0xff] %v11466
    %11531 = vst [vmem:[#allocation10 + $0x78] sm:$0xff] %v11467
    %11532 = vst [vmem:[#allocation10 + $0x80] sm:$0xff] %v11468
    %11533 = vst [vmem:[#allocation10 + $0x88] sm:$0xff] %v11469
    %11534 = vst [vmem:[#allocation10 + $0x90] sm:$0xff] %v11470
    %11535 = vst [vmem:[#allocation10 + $0x98] sm:$0xff] %v11471
    %11536 = vst [vmem:[#allocation10 + $0xa0] sm:$0xff] %v11472
    %11537 = vst [vmem:[#allocation10 + $0xa8] sm:$0xff] %v11473
    %11538 = vst [vmem:[#allocation10 + $0xb0] sm:$0xff] %v11474
    %11539 = vst [vmem:[#allocation10 + $0xb8] sm:$0xff] %v11475
    %11540 = vst [vmem:[#allocation10 + $0xc0] sm:$0xff] %v11476
    %11541 = vst [vmem:[#allocation10 + $0xc8] sm:$0xff] %v11477
    %11542 = vst [vmem:[#allocation10 + $0xd0] sm:$0xff] %v11478
    %11543 = vst [vmem:[#allocation10 + $0xd8] sm:$0xff] %v11479
    %11544 = vst [vmem:[#allocation10 + $0xe0] sm:$0xff] %v11480
    %11545 = vst [vmem:[#allocation10 + $0xe8] sm:$0xff] %v11481
    %11546 = vst [vmem:[#allocation10 + $0xf0] sm:$0xff] %v11482
    %11547 = vst [vmem:[#allocation10 + $0xf8] sm:$0xff] %v11483
    %11548 = vst [vmem:[#allocation10 + $0x100] sm:$0xff] %v11484
    %11549 = vst [vmem:[#allocation10 + $0x108] sm:$0xff] %v11485
    %11550 = vst [vmem:[#allocation10 + $0x110] sm:$0xff] %v11486
    %11551 = vst [vmem:[#allocation10 + $0x118] sm:$0xff] %v11487
    %11552 = vst [vmem:[#allocation10 + $0x120] sm:$0xff] %v11488
    %11553 = vst [vmem:[#allocation10 + $0x128] sm:$0xff] %v11489
    %11554 = vst [vmem:[#allocation10 + $0x130] sm:$0xff] %v11490
    %11555 = vst [vmem:[#allocation10 + $0x138] sm:$0xff] %v11491
    %11556 = vst [vmem:[#allocation10 + $0x140] sm:$0xff] %v11492
    %11557 = vst [vmem:[#allocation10 + $0x148] sm:$0xff] %v11493
    %11558 = vst [vmem:[#allocation10 + $0x150] sm:$0xff] %v11494
    %11559 = vst [vmem:[#allocation10 + $0x158] sm:$0xff] %v11495
    %11560 = vst [vmem:[#allocation10 + $0x160] sm:$0xff] %v11496
    %11561 = vst [vmem:[#allocation10 + $0x168] sm:$0xff] %v11497
    %11562 = vst [vmem:[#allocation10 + $0x170] sm:$0xff] %v11498
    %11563 = vst [vmem:[#allocation10 + $0x178] sm:$0xff] %v11499
    %11564 = vst [vmem:[#allocation10 + $0x180] sm:$0xff] %v11500
    %11565 = vst [vmem:[#allocation10 + $0x188] sm:$0xff] %v11501
    %11566 = vst [vmem:[#allocation10 + $0x190] sm:$0xff] %v11502
    %11567 = vst [vmem:[#allocation10 + $0x198] sm:$0xff] %v11503
    %11568 = vst [vmem:[#allocation10 + $0x1a0] sm:$0xff] %v11504
    %11569 = vst [vmem:[#allocation10 + $0x1a8] sm:$0xff] %v11505
    %11570 = vst [vmem:[#allocation10 + $0x1b0] sm:$0xff] %v11506
    %11571 = vst [vmem:[#allocation10 + $0x1b8] sm:$0xff] %v11507
    %11572 = vst [vmem:[#allocation10 + $0x1c0] sm:$0xff] %v11508
    %11573 = vst [vmem:[#allocation10 + $0x1c8] sm:$0xff] %v11509
    %11574 = vst [vmem:[#allocation10 + $0x1d0] sm:$0xff] %v11510
    %11575 = vst [vmem:[#allocation10 + $0x1d8] sm:$0xff] %v11511
    %11576 = vst [vmem:[#allocation10 + $0x1e0] sm:$0xff] %v11512
    %11577 = vst [vmem:[#allocation10 + $0x1e8] sm:$0xff] %v11513
    %11578 = vst [vmem:[#allocation10 + $0x1f0] sm:$0xff] %v11514
    %11579 = vst [vmem:[#allocation10 + $0x1f8] sm:$0xff] %v11515
    // Predicated region
    $region42: #{tpu_custom_call.1} parent=1 // pred_check
      _
    $region43: #{tpu_custom_call.1} parent=1 // pred_check_branch
      %11581 = sbr.rel (0) target = $region45
    $region44: #{tpu_custom_call.1} parent=1 // pred_region
      %s11583 = ssub.s32 8192, 8192
      %11584 = vsyncadd [#allocation6], %s11583
      %s11585 = sshll.u32 [#allocation10], 4
      %s11586 = int_to_ptr.vmem [resolvable:$true] %s11585
      %11591 = dma.vmem_to_hbm [thread:$0]  %s11586, 8192, %s7, [#allocation6], 128, 128, 8
    $region45: #{tpu_custom_call.1} parent=1 // pred_fallthru
      _
    // Predicated region
    $region46: #{tpu_custom_call.1} parent=1 // pred_check
      _
    $region47: #{tpu_custom_call.1} parent=1 // pred_check_branch
      %11593 = sbr.rel (0) target = $region49
    $region48: #{tpu_custom_call.1} parent=1 // pred_region
      %11594 = dma.done [#allocation6], 8192
    $region49: #{tpu_custom_call.1} parent=1 // pred_fallthru
      _
    %11595 = vsyncpa [#allocation5], 1
    %11596 = vsyncpa [#allocation8], 1
    %11597 = vsyncpa [#allocation6], 1

</llo_original>
